<compile_context>
chip_gen: v5e
topology: v5e:2x2
jax: 0.10.0
libtpu: 0.0.40
codegen_flags: <defaults>
</compile_context>

<pallas_src>
import functools

import jax
import jax.numpy as jnp
from jax.experimental import pallas as pl
from jax.experimental.pallas import tpu as pltpu


# ----------------------------- shared block math -----------------------------
# Used both inside the Pallas kernel (recip = EUP reciprocal) and as the pure-JAX
# reference (recip = 1/x), guaranteeing identical semantics for the self-check.

def _forward_core(xs, bias, ln1g, ln1b, wqkv, bqkv, lora_a, lora_b,
                  wo, bo, g1, ln2g, ln2b, w1, b1, w2, b2, g2,
                  *, n_heads, recip, mxu_dtype=jnp.float32):
    """xs: (n_rows, d) flattened token slab, n_rows = n_seq * seq_len.
    bias: (n_seq, seq_len, seq_len) additive attention bias (0 / -1e30).
    lora_a/lora_b: task-selected per-sequence LoRA factors, leading dim = n_blocks.
    Every other weight is stacked along a leading n_blocks axis."""
    xs = xs.astype(jnp.float32)
    n_rows, d = xs.shape
    n_blocks = wqkv.shape[0]
    n_seq, seq_len, _ = bias.shape
    dh = d // n_heads
    scale = 1.0 / (dh ** 0.5)

    def mm(a, b):                      # slab GEMM on the MXU, f32 accumulation
        return jnp.dot(a.astype(mxu_dtype), b.astype(mxu_dtype),
                       preferred_element_type=jnp.float32)

    def ein(expr, a, b):               # batched (per-sequence) MXU matmul
        return jnp.einsum(expr, a.astype(mxu_dtype), b.astype(mxu_dtype),
                          preferred_element_type=jnp.float32)

    def layernorm(t, g, b):
        mu = jnp.mean(t, axis=-1, keepdims=True)
        var = jnp.mean((t - mu) ** 2, axis=-1, keepdims=True)
        return (t - mu) * jax.lax.rsqrt(var + 1e-5) * g + b

    for blk in range(n_blocks):        # static -> fully unrolled
        # ---- pre-LN + fused QKV (one GEMM over the whole slab) + per-seq LoRA ----
        h = layernorm(xs, ln1g[blk], ln1b[blk])                          # (n_rows, d)
        qkv = mm(h, wqkv[blk]) + bqkv[blk]                               # (n_rows, 3d)
        h3 = h.reshape(n_seq, seq_len, d)
        low = ein('nsr,nre->nse', ein('nsd,ndr->nsr', h3, lora_a[blk]), lora_b[blk])
        qkv = qkv.reshape(n_seq, seq_len, 3 * d) + low
        q = qkv[..., 0:d] * scale                                        # scale folded in
        k = qkv[..., d:2 * d]
        v = qkv[..., 2 * d:3 * d]

        # ---- masked multi-head attention (heads unrolled, sequences batched) ----
        heads_out = []
        for hh in range(n_heads):
            sl = slice(hh * dh, (hh + 1) * dh)
            s = ein('nqd,nkd->nqk', q[..., sl], k[..., sl]) + bias
            s = s - jnp.max(s, axis=-1, keepdims=True)
            p = jnp.exp(s)
            p = p * recip(jnp.sum(p, axis=-1, keepdims=True))
            heads_out.append(ein('nqk,nkd->nqd', p, v[..., sl]))
        att = jnp.concatenate(heads_out, axis=-1).reshape(n_rows, d)

        # ---- out-proj + layerscale residual (fused, no extra slab passes) ----
        xs = xs + g1[blk] * (mm(att, wo[blk]) + bo[blk])

        # ---- pre-LN MLP + layerscale residual ----
        # TODO(synk): PyTorch nn.GELU default is exact erf GELU; tanh approximation used
        # for robust Mosaic/EUP lowering.
        h2 = layernorm(xs, ln2g[blk], ln2b[blk])
        mid = jax.nn.gelu(mm(h2, w1[blk]) + b1[blk], approximate=True)
        xs = xs + g2[blk] * (mm(mid, w2[blk]) + b2[blk])
    return xs


# ----------------------------- Pallas kernel -----------------------------

def _ct_kernel(n_heads, mxu_dtype,
               x_ref, bias_ref, ln1g_ref, ln1b_ref, wqkv_ref, bqkv_ref,
               a_ref, bm_ref, wo_ref, bo_ref, g1_ref, ln2g_ref, ln2b_ref,
               w1_ref, b1_ref, w2_ref, b2_ref, g2_ref, o_ref):
    out = _forward_core(
        x_ref[...], bias_ref[...],
        ln1g_ref[...], ln1b_ref[...], wqkv_ref[...], bqkv_ref[...],
        a_ref[...], bm_ref[...], wo_ref[...], bo_ref[...], g1_ref[...],
        ln2g_ref[...], ln2b_ref[...], w1_ref[...], b1_ref[...],
        w2_ref[...], b2_ref[...], g2_ref[...],
        n_heads=n_heads, mxu_dtype=mxu_dtype,
        recip=lambda t: pl.reciprocal(t, approx=True))
    o_ref[...] = out.astype(o_ref.dtype)


def _pick_shards(requested, n_seq, seq_len):
    """Largest shard count <= requested that divides n_seq and keeps each slab's
    sublane extent a multiple of 8 (8,128) tiling rule."""
    g = max(1, int(requested))
    while g > 1 and (n_seq % g != 0 or ((n_seq // g) * seq_len) % 8 != 0):
        g -= 1
    return g


def _ct_forward_pallas(xs_flat, mask_bias, weight_args, *, n_heads, mxu_dtype,
                       n_seq_shards):
    n_rows, d = xs_flat.shape
    n_seq, seq_len, _ = mask_bias.shape
    n_blocks = weight_args[2].shape[0]

    # shard independent sequence groups across the grid ("parallel" -> v7x dual-TC)
    g = _pick_shards(n_seq_shards, n_seq, seq_len)
    rows_g = (n_seq // g) * seq_len

    def full_spec(a):
        nd = a.ndim
        return pl.BlockSpec(a.shape, lambda i, _nd=nd: (0,) * _nd)

    def seq_sharded_spec(a, axis):
        shape = list(a.shape)
        shape[axis] = a.shape[axis] // g
        nd = a.ndim

        def idx(i, _axis=axis, _nd=nd):
            return tuple(i if ax == _axis else 0 for ax in range(_nd))
        return pl.BlockSpec(tuple(shape), idx)

    in_specs = [pl.BlockSpec((rows_g, d), lambda i: (i, 0)),
                seq_sharded_spec(mask_bias, 0)]
    for w_idx, w in enumerate(weight_args):
        if w_idx in (4, 5):            # lora_A_sel / lora_B_sel: shard along seq axis 1
            in_specs.append(seq_sharded_spec(w, 1))
        else:
            in_specs.append(full_spec(w))   # same block every step -> DMA'd once
    out_spec = pl.BlockSpec((rows_g, d), lambda i: (i, 0))

    # advisory cost estimate so XLA schedules the custom call sensibly
    dh = d // n_heads
    r = weight_args[4].shape[-1]
    d_hid = weight_args[11].shape[-1]
    flops = n_blocks * (2 * n_rows * d * 3 * d
                        + 2 * n_seq * seq_len * d * r
                        + 2 * n_seq * seq_len * r * 3 * d
                        + 4 * n_seq * n_heads * seq_len * seq_len * dh
                        + 2 * n_rows * d * d
                        + 4 * n_rows * d * d_hid)
    transcendentals = n_blocks * (n_rows * d_hid
                                  + n_seq * n_heads * seq_len * seq_len
                                  + n_seq * n_heads * seq_len)
    all_in = (xs_flat, mask_bias) + tuple(weight_args)
    bytes_accessed = int(sum(a.size * a.dtype.itemsize for a in all_in)
                         + n_rows * d * xs_flat.dtype.itemsize)

    return pl.pallas_call(
        functools.partial(_ct_kernel, n_heads, mxu_dtype),
        out_shape=jax.ShapeDtypeStruct((n_rows, d), xs_flat.dtype),
        grid=(g,),
        in_specs=in_specs,
        out_specs=out_spec,
        compiler_params=pltpu.CompilerParams(
            dimension_semantics=("parallel",),
            vmem_limit_bytes=64 << 20),
        cost_estimate=pl.CostEstimate(flops=int(flops),
                                      transcendentals=int(transcendentals),
                                      bytes_accessed=bytes_accessed),
    )(xs_flat, mask_bias, *weight_args)


# ----------------------------- ControlTransformer forward -----------------------------

def control_transformer_forward(params, data, x, y=None, is_causal=True,
                                n_heads=4, use_pallas=True, n_seq_shards=2,
                                mxu_dtype=jnp.float32):
    """Mirrors ControlTransformer.forward (encode_actuable_only=False path)."""
    # TODO(synk): encode_actuable_only=True requires a data-dependent boolean gather
    # (dynamic shapes); not implemented here.
    task_mask, t_idx = data['task_mask'], data['t_idx']
    B, T, J, d = x.shape
    pos = params['position_embedding'][:, :T]                            # (1, T, d)

    # rearrange 'B T J d -> (B J) T d'
    xs = jnp.transpose(x, (0, 2, 1, 3)).reshape(B * J, T, d) + pos
    if y is not None:
        ys = jnp.transpose(y, (0, 2, 1, 3)).reshape(B * J, T, d) + pos
        xs = jnp.concatenate([ys, xs], axis=1)                           # (BJ, 2T, d)
        # rearrange '(n T) d -> (T n) d' : interleave [y_t, x_t] pairs
        xs = xs.reshape(B * J, 2, T, d).transpose(0, 2, 1, 3).reshape(B * J, 2 * T, d)
        # repeat 'B J T1 T2 -> B J (T1 2) (T2 2)'
        task_mask = jnp.repeat(jnp.repeat(task_mask, 2, axis=2), 2, axis=3)

    BJ = B * J
    S = xs.shape[1]
    attn_mask = task_mask.reshape(BJ, S, S)                              # (BJ, S, S)
    if is_causal:
        attn_mask = attn_mask & jnp.tril(jnp.ones((S, S), dtype=bool))[None]
    # additive bias precomputed once (kernel only adds it, no compare+select per block)
    mask_bias = jnp.where(attn_mask, 0.0, -1e30).astype(jnp.float32)

    t_full = jnp.repeat(t_idx, J)                                        # 'B -> (B J)'
    A_sel = params['lora_A'][:, t_full]                                  # (nb, BJ, d, r)
    B_sel = params['lora_B'][:, t_full]                                  # (nb, BJ, r, 3d)

    xs_flat = xs.reshape(BJ * S, d)
    weight_args = (params['ln1_g'], params['ln1_b'], params['w_qkv'], params['b_qkv'],
                   A_sel, B_sel, params['w_o'], params['b_o'], params['gamma1'],
                   params['ln2_g'], params['ln2_b'], params['w1'], params['b1'],
                   params['w2'], params['b2'], params['gamma2'])

    if use_pallas:
        out_flat = _ct_forward_pallas(xs_flat, mask_bias, weight_args,
                                      n_heads=n_heads, mxu_dtype=mxu_dtype,
                                      n_seq_shards=n_seq_shards)
    else:
        out_flat = _forward_core(xs_flat, mask_bias, *weight_args,
                                 n_heads=n_heads, mxu_dtype=mxu_dtype,
                                 recip=lambda t: 1.0 / t)

    out = out_flat.reshape(BJ, S, d)
    if y is not None:
        out = out[:, 1::2]                                               # keep state tokens
    # rearrange '(B J) T d -> B T J d'
    return out.reshape(B, J, T, d).transpose(0, 2, 1, 3)


# ----------------------------- deterministic parameter init -----------------------------

def init_params(key, n_blocks, num_tasks, history_size, d, lora_rank):
    def nrm(k, shape, std=0.02):
        return std * jax.random.normal(k, shape, jnp.float32)

    ks = jax.random.split(key, 7)
    nb, f32 = n_blocks, jnp.float32
    return {
        'position_embedding': jax.random.normal(ks[0], (1, history_size, d), f32),
        'ln1_g': jnp.ones((nb, 1, d), f32), 'ln1_b': jnp.zeros((nb, 1, d), f32),
        'w_qkv': nrm(ks[1], (nb, d, 3 * d)), 'b_qkv': jnp.zeros((nb, 1, 3 * d), f32),
        'lora_A': nrm(ks[2], (nb, num_tasks, d, lora_rank)),
        'lora_B': nrm(ks[3], (nb, num_tasks, lora_rank, 3 * d)),
        'w_o': nrm(ks[4], (nb, d, d)), 'b_o': jnp.zeros((nb, 1, d), f32),
        'gamma1': jnp.full((nb, 1, d), 0.1, f32),
        'ln2_g': jnp.ones((nb, 1, d), f32), 'ln2_b': jnp.zeros((nb, 1, d), f32),
        'w1': nrm(ks[5], (nb, d, 4 * d)), 'b1': jnp.zeros((nb, 1, 4 * d), f32),
        'w2': nrm(ks[6], (nb, 4 * d, d)), 'b2': jnp.zeros((nb, 1, d), f32),
        'gamma2': jnp.full((nb, 1, d), 0.1, f32),
    }


# ----------------------------- main -----------------------------

if __name__ == "__main__":
    # config: history_size=8, hidden_dim=32, n_task_blocks=2, n_attn_heads=4,
    #         task_lora_rank=4, num_tasks=3; batch B=2, joints J=4, time T=8.
    B, T, J, d = 2, 8, 4, 32
    H, lora_rank, n_blocks, num_tasks, history_size = 4, 4, 2, 3, 8

    key = jax.random.PRNGKey(0)
    kp, kx, ky, km = jax.random.split(key, 4)

    params = init_params(kp, n_blocks, num_tasks, history_size, d, lora_rank)

    x = jax.random.normal(kx, (B, T, J, d), jnp.float32)
    y = jax.random.normal(ky, (B, T, J, d), jnp.float32)
    task_mask = jax.random.uniform(km, (B, J, T, T)) < 0.7
    task_mask = task_mask | jnp.eye(T, dtype=bool)[None, None]           # keep diagonal on
    t_idx = jnp.array([0, 2], dtype=jnp.int32)
    data = {'task_mask': task_mask, 't_idx': t_idx}

    fwd = jax.jit(control_transformer_forward,
                  static_argnames=('is_causal', 'n_heads', 'use_pallas',
                                   'n_seq_shards', 'mxu_dtype'))

    out = fwd(params, data, x, y=y, is_causal=True, n_heads=H,
              use_pallas=True, n_seq_shards=2, mxu_dtype=jnp.float32)
    out = jax.block_until_ready(out)
    assert out.shape == (B, T, J, d), out.shape

    ref = fwd(params, data, x, y=y, is_causal=True, n_heads=H,
              use_pallas=False, n_seq_shards=2, mxu_dtype=jnp.float32)
    ref = jax.block_until_ready(ref)
    max_err = float(jnp.max(jnp.abs(out - ref)))
    assert max_err < 5e-3, f"pallas vs reference mismatch: {max_err}"

    print("KERNEL_OK")
</pallas_src>

<mosaic_0001>
module attributes {stable_mosaic.version = 11 : i64} {
  func.func @_ct_kernel(%arg0: i32, %arg1: memref<64x32xf32, #tpu.memory_space<vmem>>, %arg2: memref<4x16x16xf32, #tpu.memory_space<vmem>>, %arg3: memref<2x1x32xf32, #tpu.memory_space<vmem>>, %arg4: memref<2x1x32xf32, #tpu.memory_space<vmem>>, %arg5: memref<2x32x96xf32, #tpu.memory_space<vmem>>, %arg6: memref<2x1x96xf32, #tpu.memory_space<vmem>>, %arg7: memref<2x4x32x4xf32, #tpu.memory_space<vmem>>, %arg8: memref<2x4x4x96xf32, #tpu.memory_space<vmem>>, %arg9: memref<2x32x32xf32, #tpu.memory_space<vmem>>, %arg10: memref<2x1x32xf32, #tpu.memory_space<vmem>>, %arg11: memref<2x1x32xf32, #tpu.memory_space<vmem>>, %arg12: memref<2x1x32xf32, #tpu.memory_space<vmem>>, %arg13: memref<2x1x32xf32, #tpu.memory_space<vmem>>, %arg14: memref<2x32x128xf32, #tpu.memory_space<vmem>>, %arg15: memref<2x1x128xf32, #tpu.memory_space<vmem>>, %arg16: memref<2x128x32xf32, #tpu.memory_space<vmem>>, %arg17: memref<2x1x32xf32, #tpu.memory_space<vmem>>, %arg18: memref<2x1x32xf32, #tpu.memory_space<vmem>>, %arg19: memref<64x32xf32, #tpu.memory_space<vmem>>) attributes {dimension_semantics = [#tpu.dimension_semantics<parallel>], iteration_bounds = array<i64: 2>, scalar_prefetch = 0 : i64, scratch_operands = 0 : i64, tpu.core_type = #tpu.core_type<tc>, window_params = [{transform_indices = @transform_0, window_bounds = array<i64: 64, 32>}, {transform_indices = @transform_1, window_bounds = array<i64: 4, 16, 16>}, {pipeline_mode = #tpu.pipeline_mode<synchronous>, transform_indices = @transform_2, window_bounds = array<i64: 2, 1, 32>}, {pipeline_mode = #tpu.pipeline_mode<synchronous>, transform_indices = @transform_3, window_bounds = array<i64: 2, 1, 32>}, {pipeline_mode = #tpu.pipeline_mode<synchronous>, transform_indices = @transform_4, window_bounds = array<i64: 2, 32, 96>}, {pipeline_mode = #tpu.pipeline_mode<synchronous>, transform_indices = @transform_5, window_bounds = array<i64: 2, 1, 96>}, {transform_indices = @transform_6, window_bounds = array<i64: 2, 4, 32, 4>}, {transform_indices = @transform_7, window_bounds = array<i64: 2, 4, 4, 96>}, {pipeline_mode = #tpu.pipeline_mode<synchronous>, transform_indices = @transform_8, window_bounds = array<i64: 2, 32, 32>}, {pipeline_mode = #tpu.pipeline_mode<synchronous>, transform_indices = @transform_9, window_bounds = array<i64: 2, 1, 32>}, {pipeline_mode = #tpu.pipeline_mode<synchronous>, transform_indices = @transform_10, window_bounds = array<i64: 2, 1, 32>}, {pipeline_mode = #tpu.pipeline_mode<synchronous>, transform_indices = @transform_11, window_bounds = array<i64: 2, 1, 32>}, {pipeline_mode = #tpu.pipeline_mode<synchronous>, transform_indices = @transform_12, window_bounds = array<i64: 2, 1, 32>}, {pipeline_mode = #tpu.pipeline_mode<synchronous>, transform_indices = @transform_13, window_bounds = array<i64: 2, 32, 128>}, {pipeline_mode = #tpu.pipeline_mode<synchronous>, transform_indices = @transform_14, window_bounds = array<i64: 2, 1, 128>}, {pipeline_mode = #tpu.pipeline_mode<synchronous>, transform_indices = @transform_15, window_bounds = array<i64: 2, 128, 32>}, {pipeline_mode = #tpu.pipeline_mode<synchronous>, transform_indices = @transform_16, window_bounds = array<i64: 2, 1, 32>}, {pipeline_mode = #tpu.pipeline_mode<synchronous>, transform_indices = @transform_17, window_bounds = array<i64: 2, 1, 32>}, {transform_indices = @transform_18, window_bounds = array<i64: 64, 32>}]} {
    %c0 = arith.constant 0 : index
    %c0_0 = arith.constant 0 : index
    %0 = vector.load %arg1[%c0, %c0_0] : memref<64x32xf32, #tpu.memory_space<vmem>>, vector<64x32xf32>
    %c0_1 = arith.constant 0 : index
    %c0_2 = arith.constant 0 : index
    %c0_3 = arith.constant 0 : index
    %1 = vector.load %arg2[%c0_1, %c0_2, %c0_3] : memref<4x16x16xf32, #tpu.memory_space<vmem>>, vector<4x16x16xf32>
    %c0_4 = arith.constant 0 : index
    %c0_5 = arith.constant 0 : index
    %c0_6 = arith.constant 0 : index
    %2 = vector.load %arg3[%c0_4, %c0_5, %c0_6] : memref<2x1x32xf32, #tpu.memory_space<vmem>>, vector<2x1x32xf32>
    %c0_7 = arith.constant 0 : index
    %c0_8 = arith.constant 0 : index
    %c0_9 = arith.constant 0 : index
    %3 = vector.load %arg4[%c0_7, %c0_8, %c0_9] : memref<2x1x32xf32, #tpu.memory_space<vmem>>, vector<2x1x32xf32>
    %c0_10 = arith.constant 0 : index
    %c0_11 = arith.constant 0 : index
    %c0_12 = arith.constant 0 : index
    %4 = vector.load %arg5[%c0_10, %c0_11, %c0_12] : memref<2x32x96xf32, #tpu.memory_space<vmem>>, vector<2x32x96xf32>
    %c0_13 = arith.constant 0 : index
    %c0_14 = arith.constant 0 : index
    %c0_15 = arith.constant 0 : index
    %5 = vector.load %arg6[%c0_13, %c0_14, %c0_15] : memref<2x1x96xf32, #tpu.memory_space<vmem>>, vector<2x1x96xf32>
    %c0_16 = arith.constant 0 : index
    %c0_17 = arith.constant 0 : index
    %c0_18 = arith.constant 0 : index
    %c0_19 = arith.constant 0 : index
    %6 = vector.load %arg7[%c0_16, %c0_17, %c0_18, %c0_19] : memref<2x4x32x4xf32, #tpu.memory_space<vmem>>, vector<2x4x32x4xf32>
    %c0_20 = arith.constant 0 : index
    %c0_21 = arith.constant 0 : index
    %c0_22 = arith.constant 0 : index
    %c0_23 = arith.constant 0 : index
    %7 = vector.load %arg8[%c0_20, %c0_21, %c0_22, %c0_23] : memref<2x4x4x96xf32, #tpu.memory_space<vmem>>, vector<2x4x4x96xf32>
    %c0_24 = arith.constant 0 : index
    %c0_25 = arith.constant 0 : index
    %c0_26 = arith.constant 0 : index
    %8 = vector.load %arg9[%c0_24, %c0_25, %c0_26] : memref<2x32x32xf32, #tpu.memory_space<vmem>>, vector<2x32x32xf32>
    %c0_27 = arith.constant 0 : index
    %c0_28 = arith.constant 0 : index
    %c0_29 = arith.constant 0 : index
    %9 = vector.load %arg10[%c0_27, %c0_28, %c0_29] : memref<2x1x32xf32, #tpu.memory_space<vmem>>, vector<2x1x32xf32>
    %c0_30 = arith.constant 0 : index
    %c0_31 = arith.constant 0 : index
    %c0_32 = arith.constant 0 : index
    %10 = vector.load %arg11[%c0_30, %c0_31, %c0_32] : memref<2x1x32xf32, #tpu.memory_space<vmem>>, vector<2x1x32xf32>
    %c0_33 = arith.constant 0 : index
    %c0_34 = arith.constant 0 : index
    %c0_35 = arith.constant 0 : index
    %11 = vector.load %arg12[%c0_33, %c0_34, %c0_35] : memref<2x1x32xf32, #tpu.memory_space<vmem>>, vector<2x1x32xf32>
    %c0_36 = arith.constant 0 : index
    %c0_37 = arith.constant 0 : index
    %c0_38 = arith.constant 0 : index
    %12 = vector.load %arg13[%c0_36, %c0_37, %c0_38] : memref<2x1x32xf32, #tpu.memory_space<vmem>>, vector<2x1x32xf32>
    %c0_39 = arith.constant 0 : index
    %c0_40 = arith.constant 0 : index
    %c0_41 = arith.constant 0 : index
    %13 = vector.load %arg14[%c0_39, %c0_40, %c0_41] : memref<2x32x128xf32, #tpu.memory_space<vmem>>, vector<2x32x128xf32>
    %c0_42 = arith.constant 0 : index
    %c0_43 = arith.constant 0 : index
    %c0_44 = arith.constant 0 : index
    %14 = vector.load %arg15[%c0_42, %c0_43, %c0_44] : memref<2x1x128xf32, #tpu.memory_space<vmem>>, vector<2x1x128xf32>
    %c0_45 = arith.constant 0 : index
    %c0_46 = arith.constant 0 : index
    %c0_47 = arith.constant 0 : index
    %15 = vector.load %arg16[%c0_45, %c0_46, %c0_47] : memref<2x128x32xf32, #tpu.memory_space<vmem>>, vector<2x128x32xf32>
    %c0_48 = arith.constant 0 : index
    %c0_49 = arith.constant 0 : index
    %c0_50 = arith.constant 0 : index
    %16 = vector.load %arg17[%c0_48, %c0_49, %c0_50] : memref<2x1x32xf32, #tpu.memory_space<vmem>>, vector<2x1x32xf32>
    %c0_51 = arith.constant 0 : index
    %c0_52 = arith.constant 0 : index
    %c0_53 = arith.constant 0 : index
    %17 = vector.load %arg18[%c0_51, %c0_52, %c0_53] : memref<2x1x32xf32, #tpu.memory_space<vmem>>, vector<2x1x32xf32>
    %18 = vector.extract_strided_slice %2 {offsets = [0, 0, 0], sizes = [1, 1, 32], strides = [1, 1, 1]} : vector<2x1x32xf32> to vector<1x1x32xf32>
    %19 = vector.shape_cast %18 : vector<1x1x32xf32> to vector<1x32xf32>
    %20 = vector.extract_strided_slice %3 {offsets = [0, 0, 0], sizes = [1, 1, 32], strides = [1, 1, 1]} : vector<2x1x32xf32> to vector<1x1x32xf32>
    %21 = vector.shape_cast %20 : vector<1x1x32xf32> to vector<1x32xf32>
    %cst = arith.constant dense<0.000000e+00> : vector<64xf32>
    %22 = vector.multi_reduction <add>, %0, %cst [1] : vector<64x32xf32> to vector<64xf32>
    %23 = vector.shape_cast %22 : vector<64xf32> to vector<64x1xf32>
    %cst_54 = arith.constant 3.200000e+01 : f32
    %24 = vector.broadcast %cst_54 : f32 to vector<64x1xf32>
    %25 = arith.divf %23, %24 : vector<64x1xf32>
    %26 = vector.broadcast %25 : vector<64x1xf32> to vector<64x32xf32>
    %27 = arith.subf %0, %26 : vector<64x32xf32>
    %28 = arith.mulf %27, %27 : vector<64x32xf32>
    %cst_55 = arith.constant dense<0.000000e+00> : vector<64xf32>
    %29 = vector.multi_reduction <add>, %28, %cst_55 [1] : vector<64x32xf32> to vector<64xf32>
    %30 = vector.shape_cast %29 : vector<64xf32> to vector<64x1xf32>
    %cst_56 = arith.constant 3.200000e+01 : f32
    %31 = vector.broadcast %cst_56 : f32 to vector<64x1xf32>
    %32 = arith.divf %30, %31 : vector<64x1xf32>
    %33 = vector.broadcast %25 : vector<64x1xf32> to vector<64x32xf32>
    %34 = arith.subf %0, %33 : vector<64x32xf32>
    %cst_57 = arith.constant 9.99999974E-6 : f32
    %35 = vector.broadcast %cst_57 : f32 to vector<64x1xf32>
    %36 = arith.addf %32, %35 : vector<64x1xf32>
    %37 = math.rsqrt %36 : vector<64x1xf32>
    %38 = vector.broadcast %37 : vector<64x1xf32> to vector<64x32xf32>
    %39 = arith.mulf %34, %38 : vector<64x32xf32>
    %40 = vector.broadcast %19 : vector<1x32xf32> to vector<64x32xf32>
    %41 = arith.mulf %39, %40 : vector<64x32xf32>
    %42 = vector.broadcast %21 : vector<1x32xf32> to vector<64x32xf32>
    %43 = arith.addf %41, %42 : vector<64x32xf32>
    %44 = vector.extract_strided_slice %4 {offsets = [0, 0, 0], sizes = [1, 32, 96], strides = [1, 1, 1]} : vector<2x32x96xf32> to vector<1x32x96xf32>
    %45 = vector.shape_cast %44 : vector<1x32x96xf32> to vector<32x96xf32>
    %cst_58 = arith.constant dense<0.000000e+00> : vector<64x96xf32>
    %46 = tpu.matmul %43, %45, %cst_58 {dimension_numbers = #tpu.dot_dimension_numbers<[1], [0], [0], [1], [0, 0, 1, 1], [], []>} : vector<64x32xf32>, vector<32x96xf32>, vector<64x96xf32> -> vector<64x96xf32>
    %47 = vector.extract_strided_slice %5 {offsets = [0, 0, 0], sizes = [1, 1, 96], strides = [1, 1, 1]} : vector<2x1x96xf32> to vector<1x1x96xf32>
    %48 = vector.shape_cast %47 : vector<1x1x96xf32> to vector<1x96xf32>
    %49 = vector.broadcast %48 : vector<1x96xf32> to vector<64x96xf32>
    %50 = arith.addf %46, %49 : vector<64x96xf32>
    %51 = vector.shape_cast %43 : vector<64x32xf32> to vector<4x16x32xf32>
    %52 = vector.extract_strided_slice %6 {offsets = [0, 0, 0, 0], sizes = [1, 4, 32, 4], strides = [1, 1, 1, 1]} : vector<2x4x32x4xf32> to vector<1x4x32x4xf32>
    %53 = vector.shape_cast %52 : vector<1x4x32x4xf32> to vector<4x32x4xf32>
    "tpu.trace_start"() <{level = 10 : i32, message = "nsd,ndr->nsr"}> : () -> ()
    %cst_59 = arith.constant dense<0.000000e+00> : vector<4x16x4xf32>
    %54 = tpu.matmul %51, %53, %cst_59 {dimension_numbers = #tpu.dot_dimension_numbers<[2], [1], [1], [2], [0, 0, 0, 1, 1, 2], [0], [0]>} : vector<4x16x32xf32>, vector<4x32x4xf32>, vector<4x16x4xf32> -> vector<4x16x4xf32>
    "tpu.trace_stop"() : () -> ()
    %55 = vector.extract_strided_slice %7 {offsets = [0, 0, 0, 0], sizes = [1, 4, 4, 96], strides = [1, 1, 1, 1]} : vector<2x4x4x96xf32> to vector<1x4x4x96xf32>
    %56 = vector.shape_cast %55 : vector<1x4x4x96xf32> to vector<4x4x96xf32>
    "tpu.trace_start"() <{level = 10 : i32, message = "nsr,nre->nse"}> : () -> ()
    %cst_60 = arith.constant dense<0.000000e+00> : vector<4x16x96xf32>
    %57 = tpu.matmul %54, %56, %cst_60 {dimension_numbers = #tpu.dot_dimension_numbers<[2], [1], [1], [2], [0, 0, 0, 1, 1, 2], [0], [0]>} : vector<4x16x4xf32>, vector<4x4x96xf32>, vector<4x16x96xf32> -> vector<4x16x96xf32>
    "tpu.trace_stop"() : () -> ()
    %58 = vector.shape_cast %50 : vector<64x96xf32> to vector<4x16x96xf32>
    %59 = arith.addf %58, %57 : vector<4x16x96xf32>
    %60 = vector.extract_strided_slice %59 {offsets = [0, 0, 0], sizes = [4, 16, 32], strides = [1, 1, 1]} : vector<4x16x96xf32> to vector<4x16x32xf32>
    %cst_61 = arith.constant 0.353553385 : f32
    %61 = vector.broadcast %cst_61 : f32 to vector<4x16x32xf32>
    %62 = arith.mulf %60, %61 : vector<4x16x32xf32>
    %63 = vector.extract_strided_slice %59 {offsets = [0, 0, 32], sizes = [4, 16, 32], strides = [1, 1, 1]} : vector<4x16x96xf32> to vector<4x16x32xf32>
    %64 = vector.extract_strided_slice %59 {offsets = [0, 0, 64], sizes = [4, 16, 32], strides = [1, 1, 1]} : vector<4x16x96xf32> to vector<4x16x32xf32>
    %65 = vector.extract_strided_slice %62 {offsets = [0, 0, 0], sizes = [4, 16, 8], strides = [1, 1, 1]} : vector<4x16x32xf32> to vector<4x16x8xf32>
    %66 = vector.extract_strided_slice %63 {offsets = [0, 0, 0], sizes = [4, 16, 8], strides = [1, 1, 1]} : vector<4x16x32xf32> to vector<4x16x8xf32>
    "tpu.trace_start"() <{level = 10 : i32, message = "nqd,nkd->nqk"}> : () -> ()
    %cst_62 = arith.constant dense<0.000000e+00> : vector<4x16x16xf32>
    %67 = tpu.matmul %65, %66, %cst_62 {dimension_numbers = #tpu.dot_dimension_numbers<[2], [2], [1], [1], [0, 0, 0, 1, 1, 1], [0], [0]>} : vector<4x16x8xf32>, vector<4x16x8xf32>, vector<4x16x16xf32> -> vector<4x16x16xf32>
    "tpu.trace_stop"() : () -> ()
    %68 = arith.addf %67, %1 : vector<4x16x16xf32>
    %cst_63 = arith.constant dense<0xFF800000> : vector<4x16xf32>
    %69 = vector.multi_reduction <maximumf>, %68, %cst_63 [2] : vector<4x16x16xf32> to vector<4x16xf32>
    %70 = vector.shape_cast %69 : vector<4x16xf32> to vector<4x16x1xf32>
    %71 = vector.broadcast %70 : vector<4x16x1xf32> to vector<4x16x16xf32>
    %72 = arith.subf %68, %71 : vector<4x16x16xf32>
    %73 = math.exp %72 : vector<4x16x16xf32>
    %cst_64 = arith.constant dense<0.000000e+00> : vector<4x16xf32>
    %74 = vector.multi_reduction <add>, %73, %cst_64 [2] : vector<4x16x16xf32> to vector<4x16xf32>
    %75 = vector.shape_cast %74 : vector<4x16xf32> to vector<4x16x1xf32>
    %76 = tpu.reciprocal %75 {approx = true} : vector<4x16x1xf32> -> vector<4x16x1xf32>
    %77 = vector.broadcast %76 : vector<4x16x1xf32> to vector<4x16x16xf32>
    %78 = arith.mulf %73, %77 : vector<4x16x16xf32>
    %79 = vector.extract_strided_slice %64 {offsets = [0, 0, 0], sizes = [4, 16, 8], strides = [1, 1, 1]} : vector<4x16x32xf32> to vector<4x16x8xf32>
    "tpu.trace_start"() <{level = 10 : i32, message = "nqk,nkd->nqd"}> : () -> ()
    %cst_65 = arith.constant dense<0.000000e+00> : vector<4x16x8xf32>
    %80 = tpu.matmul %78, %79, %cst_65 {dimension_numbers = #tpu.dot_dimension_numbers<[2], [1], [1], [2], [0, 0, 0, 1, 1, 2], [0], [0]>} : vector<4x16x16xf32>, vector<4x16x8xf32>, vector<4x16x8xf32> -> vector<4x16x8xf32>
    "tpu.trace_stop"() : () -> ()
    %81 = vector.extract_strided_slice %62 {offsets = [0, 0, 8], sizes = [4, 16, 8], strides = [1, 1, 1]} : vector<4x16x32xf32> to vector<4x16x8xf32>
    %82 = vector.extract_strided_slice %63 {offsets = [0, 0, 8], sizes = [4, 16, 8], strides = [1, 1, 1]} : vector<4x16x32xf32> to vector<4x16x8xf32>
    "tpu.trace_start"() <{level = 10 : i32, message = "nqd,nkd->nqk"}> : () -> ()
    %cst_66 = arith.constant dense<0.000000e+00> : vector<4x16x16xf32>
    %83 = tpu.matmul %81, %82, %cst_66 {dimension_numbers = #tpu.dot_dimension_numbers<[2], [2], [1], [1], [0, 0, 0, 1, 1, 1], [0], [0]>} : vector<4x16x8xf32>, vector<4x16x8xf32>, vector<4x16x16xf32> -> vector<4x16x16xf32>
    "tpu.trace_stop"() : () -> ()
    %84 = arith.addf %83, %1 : vector<4x16x16xf32>
    %cst_67 = arith.constant dense<0xFF800000> : vector<4x16xf32>
    %85 = vector.multi_reduction <maximumf>, %84, %cst_67 [2] : vector<4x16x16xf32> to vector<4x16xf32>
    %86 = vector.shape_cast %85 : vector<4x16xf32> to vector<4x16x1xf32>
    %87 = vector.broadcast %86 : vector<4x16x1xf32> to vector<4x16x16xf32>
    %88 = arith.subf %84, %87 : vector<4x16x16xf32>
    %89 = math.exp %88 : vector<4x16x16xf32>
    %cst_68 = arith.constant dense<0.000000e+00> : vector<4x16xf32>
    %90 = vector.multi_reduction <add>, %89, %cst_68 [2] : vector<4x16x16xf32> to vector<4x16xf32>
    %91 = vector.shape_cast %90 : vector<4x16xf32> to vector<4x16x1xf32>
    %92 = tpu.reciprocal %91 {approx = true} : vector<4x16x1xf32> -> vector<4x16x1xf32>
    %93 = vector.broadcast %92 : vector<4x16x1xf32> to vector<4x16x16xf32>
    %94 = arith.mulf %89, %93 : vector<4x16x16xf32>
    %95 = vector.extract_strided_slice %64 {offsets = [0, 0, 8], sizes = [4, 16, 8], strides = [1, 1, 1]} : vector<4x16x32xf32> to vector<4x16x8xf32>
    "tpu.trace_start"() <{level = 10 : i32, message = "nqk,nkd->nqd"}> : () -> ()
    %cst_69 = arith.constant dense<0.000000e+00> : vector<4x16x8xf32>
    %96 = tpu.matmul %94, %95, %cst_69 {dimension_numbers = #tpu.dot_dimension_numbers<[2], [1], [1], [2], [0, 0, 0, 1, 1, 2], [0], [0]>} : vector<4x16x16xf32>, vector<4x16x8xf32>, vector<4x16x8xf32> -> vector<4x16x8xf32>
    "tpu.trace_stop"() : () -> ()
    %97 = vector.extract_strided_slice %62 {offsets = [0, 0, 16], sizes = [4, 16, 8], strides = [1, 1, 1]} : vector<4x16x32xf32> to vector<4x16x8xf32>
    %98 = vector.extract_strided_slice %63 {offsets = [0, 0, 16], sizes = [4, 16, 8], strides = [1, 1, 1]} : vector<4x16x32xf32> to vector<4x16x8xf32>
    "tpu.trace_start"() <{level = 10 : i32, message = "nqd,nkd->nqk"}> : () -> ()
    %cst_70 = arith.constant dense<0.000000e+00> : vector<4x16x16xf32>
    %99 = tpu.matmul %97, %98, %cst_70 {dimension_numbers = #tpu.dot_dimension_numbers<[2], [2], [1], [1], [0, 0, 0, 1, 1, 1], [0], [0]>} : vector<4x16x8xf32>, vector<4x16x8xf32>, vector<4x16x16xf32> -> vector<4x16x16xf32>
    "tpu.trace_stop"() : () -> ()
    %100 = arith.addf %99, %1 : vector<4x16x16xf32>
    %cst_71 = arith.constant dense<0xFF800000> : vector<4x16xf32>
    %101 = vector.multi_reduction <maximumf>, %100, %cst_71 [2] : vector<4x16x16xf32> to vector<4x16xf32>
    %102 = vector.shape_cast %101 : vector<4x16xf32> to vector<4x16x1xf32>
    %103 = vector.broadcast %102 : vector<4x16x1xf32> to vector<4x16x16xf32>
    %104 = arith.subf %100, %103 : vector<4x16x16xf32>
    %105 = math.exp %104 : vector<4x16x16xf32>
    %cst_72 = arith.constant dense<0.000000e+00> : vector<4x16xf32>
    %106 = vector.multi_reduction <add>, %105, %cst_72 [2] : vector<4x16x16xf32> to vector<4x16xf32>
    %107 = vector.shape_cast %106 : vector<4x16xf32> to vector<4x16x1xf32>
    %108 = tpu.reciprocal %107 {approx = true} : vector<4x16x1xf32> -> vector<4x16x1xf32>
    %109 = vector.broadcast %108 : vector<4x16x1xf32> to vector<4x16x16xf32>
    %110 = arith.mulf %105, %109 : vector<4x16x16xf32>
    %111 = vector.extract_strided_slice %64 {offsets = [0, 0, 16], sizes = [4, 16, 8], strides = [1, 1, 1]} : vector<4x16x32xf32> to vector<4x16x8xf32>
    "tpu.trace_start"() <{level = 10 : i32, message = "nqk,nkd->nqd"}> : () -> ()
    %cst_73 = arith.constant dense<0.000000e+00> : vector<4x16x8xf32>
    %112 = tpu.matmul %110, %111, %cst_73 {dimension_numbers = #tpu.dot_dimension_numbers<[2], [1], [1], [2], [0, 0, 0, 1, 1, 2], [0], [0]>} : vector<4x16x16xf32>, vector<4x16x8xf32>, vector<4x16x8xf32> -> vector<4x16x8xf32>
    "tpu.trace_stop"() : () -> ()
    %113 = vector.extract_strided_slice %62 {offsets = [0, 0, 24], sizes = [4, 16, 8], strides = [1, 1, 1]} : vector<4x16x32xf32> to vector<4x16x8xf32>
    %114 = vector.extract_strided_slice %63 {offsets = [0, 0, 24], sizes = [4, 16, 8], strides = [1, 1, 1]} : vector<4x16x32xf32> to vector<4x16x8xf32>
    "tpu.trace_start"() <{level = 10 : i32, message = "nqd,nkd->nqk"}> : () -> ()
    %cst_74 = arith.constant dense<0.000000e+00> : vector<4x16x16xf32>
    %115 = tpu.matmul %113, %114, %cst_74 {dimension_numbers = #tpu.dot_dimension_numbers<[2], [2], [1], [1], [0, 0, 0, 1, 1, 1], [0], [0]>} : vector<4x16x8xf32>, vector<4x16x8xf32>, vector<4x16x16xf32> -> vector<4x16x16xf32>
    "tpu.trace_stop"() : () -> ()
    %116 = arith.addf %115, %1 : vector<4x16x16xf32>
    %cst_75 = arith.constant dense<0xFF800000> : vector<4x16xf32>
    %117 = vector.multi_reduction <maximumf>, %116, %cst_75 [2] : vector<4x16x16xf32> to vector<4x16xf32>
    %118 = vector.shape_cast %117 : vector<4x16xf32> to vector<4x16x1xf32>
    %119 = vector.broadcast %118 : vector<4x16x1xf32> to vector<4x16x16xf32>
    %120 = arith.subf %116, %119 : vector<4x16x16xf32>
    %121 = math.exp %120 : vector<4x16x16xf32>
    %cst_76 = arith.constant dense<0.000000e+00> : vector<4x16xf32>
    %122 = vector.multi_reduction <add>, %121, %cst_76 [2] : vector<4x16x16xf32> to vector<4x16xf32>
    %123 = vector.shape_cast %122 : vector<4x16xf32> to vector<4x16x1xf32>
    %124 = tpu.reciprocal %123 {approx = true} : vector<4x16x1xf32> -> vector<4x16x1xf32>
    %125 = vector.broadcast %124 : vector<4x16x1xf32> to vector<4x16x16xf32>
    %126 = arith.mulf %121, %125 : vector<4x16x16xf32>
    %127 = vector.extract_strided_slice %64 {offsets = [0, 0, 24], sizes = [4, 16, 8], strides = [1, 1, 1]} : vector<4x16x32xf32> to vector<4x16x8xf32>
    "tpu.trace_start"() <{level = 10 : i32, message = "nqk,nkd->nqd"}> : () -> ()
    %cst_77 = arith.constant dense<0.000000e+00> : vector<4x16x8xf32>
    %128 = tpu.matmul %126, %127, %cst_77 {dimension_numbers = #tpu.dot_dimension_numbers<[2], [1], [1], [2], [0, 0, 0, 1, 1, 2], [0], [0]>} : vector<4x16x16xf32>, vector<4x16x8xf32>, vector<4x16x8xf32> -> vector<4x16x8xf32>
    "tpu.trace_stop"() : () -> ()
    %129 = tpu.concatenate %80, %96, %112, %128 in 2 : vector<4x16x8xf32>, vector<4x16x8xf32>, vector<4x16x8xf32>, vector<4x16x8xf32> -> vector<4x16x32xf32>
    %130 = vector.shape_cast %129 : vector<4x16x32xf32> to vector<64x32xf32>
    %131 = vector.extract_strided_slice %10 {offsets = [0, 0, 0], sizes = [1, 1, 32], strides = [1, 1, 1]} : vector<2x1x32xf32> to vector<1x1x32xf32>
    %132 = vector.shape_cast %131 : vector<1x1x32xf32> to vector<1x32xf32>
    %133 = vector.extract_strided_slice %8 {offsets = [0, 0, 0], sizes = [1, 32, 32], strides = [1, 1, 1]} : vector<2x32x32xf32> to vector<1x32x32xf32>
    %134 = vector.shape_cast %133 : vector<1x32x32xf32> to vector<32x32xf32>
    %cst_78 = arith.constant dense<0.000000e+00> : vector<64x32xf32>
    %135 = tpu.matmul %130, %134, %cst_78 {dimension_numbers = #tpu.dot_dimension_numbers<[1], [0], [0], [1], [0, 0, 1, 1], [], []>} : vector<64x32xf32>, vector<32x32xf32>, vector<64x32xf32> -> vector<64x32xf32>
    %136 = vector.extract_strided_slice %9 {offsets = [0, 0, 0], sizes = [1, 1, 32], strides = [1, 1, 1]} : vector<2x1x32xf32> to vector<1x1x32xf32>
    %137 = vector.shape_cast %136 : vector<1x1x32xf32> to vector<1x32xf32>
    %138 = vector.broadcast %137 : vector<1x32xf32> to vector<64x32xf32>
    %139 = arith.addf %135, %138 : vector<64x32xf32>
    %140 = vector.broadcast %132 : vector<1x32xf32> to vector<64x32xf32>
    %141 = arith.mulf %140, %139 : vector<64x32xf32>
    %142 = arith.addf %0, %141 : vector<64x32xf32>
    %143 = vector.extract_strided_slice %11 {offsets = [0, 0, 0], sizes = [1, 1, 32], strides = [1, 1, 1]} : vector<2x1x32xf32> to vector<1x1x32xf32>
    %144 = vector.shape_cast %143 : vector<1x1x32xf32> to vector<1x32xf32>
    %145 = vector.extract_strided_slice %12 {offsets = [0, 0, 0], sizes = [1, 1, 32], strides = [1, 1, 1]} : vector<2x1x32xf32> to vector<1x1x32xf32>
    %146 = vector.shape_cast %145 : vector<1x1x32xf32> to vector<1x32xf32>
    %cst_79 = arith.constant dense<0.000000e+00> : vector<64xf32>
    %147 = vector.multi_reduction <add>, %142, %cst_79 [1] : vector<64x32xf32> to vector<64xf32>
    %148 = vector.shape_cast %147 : vector<64xf32> to vector<64x1xf32>
    %cst_80 = arith.constant 3.200000e+01 : f32
    %149 = vector.broadcast %cst_80 : f32 to vector<64x1xf32>
    %150 = arith.divf %148, %149 : vector<64x1xf32>
    %151 = vector.broadcast %150 : vector<64x1xf32> to vector<64x32xf32>
    %152 = arith.subf %142, %151 : vector<64x32xf32>
    %153 = arith.mulf %152, %152 : vector<64x32xf32>
    %cst_81 = arith.constant dense<0.000000e+00> : vector<64xf32>
    %154 = vector.multi_reduction <add>, %153, %cst_81 [1] : vector<64x32xf32> to vector<64xf32>
    %155 = vector.shape_cast %154 : vector<64xf32> to vector<64x1xf32>
    %cst_82 = arith.constant 3.200000e+01 : f32
    %156 = vector.broadcast %cst_82 : f32 to vector<64x1xf32>
    %157 = arith.divf %155, %156 : vector<64x1xf32>
    %158 = vector.broadcast %150 : vector<64x1xf32> to vector<64x32xf32>
    %159 = arith.subf %142, %158 : vector<64x32xf32>
    %cst_83 = arith.constant 9.99999974E-6 : f32
    %160 = vector.broadcast %cst_83 : f32 to vector<64x1xf32>
    %161 = arith.addf %157, %160 : vector<64x1xf32>
    %162 = math.rsqrt %161 : vector<64x1xf32>
    %163 = vector.broadcast %162 : vector<64x1xf32> to vector<64x32xf32>
    %164 = arith.mulf %159, %163 : vector<64x32xf32>
    %165 = vector.broadcast %144 : vector<1x32xf32> to vector<64x32xf32>
    %166 = arith.mulf %164, %165 : vector<64x32xf32>
    %167 = vector.broadcast %146 : vector<1x32xf32> to vector<64x32xf32>
    %168 = arith.addf %166, %167 : vector<64x32xf32>
    %169 = vector.extract_strided_slice %13 {offsets = [0, 0, 0], sizes = [1, 32, 128], strides = [1, 1, 1]} : vector<2x32x128xf32> to vector<1x32x128xf32>
    %170 = vector.shape_cast %169 : vector<1x32x128xf32> to vector<32x128xf32>
    %cst_84 = arith.constant dense<0.000000e+00> : vector<64x128xf32>
    %171 = tpu.matmul %168, %170, %cst_84 {dimension_numbers = #tpu.dot_dimension_numbers<[1], [0], [0], [1], [0, 0, 1, 1], [], []>} : vector<64x32xf32>, vector<32x128xf32>, vector<64x128xf32> -> vector<64x128xf32>
    %172 = vector.extract_strided_slice %14 {offsets = [0, 0, 0], sizes = [1, 1, 128], strides = [1, 1, 1]} : vector<2x1x128xf32> to vector<1x1x128xf32>
    %173 = vector.shape_cast %172 : vector<1x1x128xf32> to vector<1x128xf32>
    %174 = vector.broadcast %173 : vector<1x128xf32> to vector<64x128xf32>
    %175 = arith.addf %171, %174 : vector<64x128xf32>
    %176 = arith.mulf %175, %175 : vector<64x128xf32>
    %177 = arith.mulf %175, %176 : vector<64x128xf32>
    %cst_85 = arith.constant 4.471500e-02 : f32
    %178 = vector.broadcast %cst_85 : f32 to vector<64x128xf32>
    %179 = arith.mulf %178, %177 : vector<64x128xf32>
    %180 = arith.addf %175, %179 : vector<64x128xf32>
    %cst_86 = arith.constant 0.797884583 : f32
    %181 = vector.broadcast %cst_86 : f32 to vector<64x128xf32>
    %182 = arith.mulf %181, %180 : vector<64x128xf32>
    %183 = math.tanh %182 : vector<64x128xf32>
    %cst_87 = arith.constant 1.000000e+00 : f32
    %184 = vector.broadcast %cst_87 : f32 to vector<64x128xf32>
    %185 = arith.addf %184, %183 : vector<64x128xf32>
    %cst_88 = arith.constant 5.000000e-01 : f32
    %186 = vector.broadcast %cst_88 : f32 to vector<64x128xf32>
    %187 = arith.mulf %186, %185 : vector<64x128xf32>
    %188 = arith.mulf %175, %187 : vector<64x128xf32>
    %189 = vector.extract_strided_slice %17 {offsets = [0, 0, 0], sizes = [1, 1, 32], strides = [1, 1, 1]} : vector<2x1x32xf32> to vector<1x1x32xf32>
    %190 = vector.shape_cast %189 : vector<1x1x32xf32> to vector<1x32xf32>
    %191 = vector.extract_strided_slice %15 {offsets = [0, 0, 0], sizes = [1, 128, 32], strides = [1, 1, 1]} : vector<2x128x32xf32> to vector<1x128x32xf32>
    %192 = vector.shape_cast %191 : vector<1x128x32xf32> to vector<128x32xf32>
    %cst_89 = arith.constant dense<0.000000e+00> : vector<64x32xf32>
    %193 = tpu.matmul %188, %192, %cst_89 {dimension_numbers = #tpu.dot_dimension_numbers<[1], [0], [0], [1], [0, 0, 1, 1], [], []>} : vector<64x128xf32>, vector<128x32xf32>, vector<64x32xf32> -> vector<64x32xf32>
    %194 = vector.extract_strided_slice %16 {offsets = [0, 0, 0], sizes = [1, 1, 32], strides = [1, 1, 1]} : vector<2x1x32xf32> to vector<1x1x32xf32>
    %195 = vector.shape_cast %194 : vector<1x1x32xf32> to vector<1x32xf32>
    %196 = vector.broadcast %195 : vector<1x32xf32> to vector<64x32xf32>
    %197 = arith.addf %193, %196 : vector<64x32xf32>
    %198 = vector.broadcast %190 : vector<1x32xf32> to vector<64x32xf32>
    %199 = arith.mulf %198, %197 : vector<64x32xf32>
    %200 = arith.addf %142, %199 : vector<64x32xf32>
    %201 = vector.extract_strided_slice %2 {offsets = [1, 0, 0], sizes = [1, 1, 32], strides = [1, 1, 1]} : vector<2x1x32xf32> to vector<1x1x32xf32>
    %202 = vector.shape_cast %201 : vector<1x1x32xf32> to vector<1x32xf32>
    %203 = vector.extract_strided_slice %3 {offsets = [1, 0, 0], sizes = [1, 1, 32], strides = [1, 1, 1]} : vector<2x1x32xf32> to vector<1x1x32xf32>
    %204 = vector.shape_cast %203 : vector<1x1x32xf32> to vector<1x32xf32>
    %cst_90 = arith.constant dense<0.000000e+00> : vector<64xf32>
    %205 = vector.multi_reduction <add>, %200, %cst_90 [1] : vector<64x32xf32> to vector<64xf32>
    %206 = vector.shape_cast %205 : vector<64xf32> to vector<64x1xf32>
    %cst_91 = arith.constant 3.200000e+01 : f32
    %207 = vector.broadcast %cst_91 : f32 to vector<64x1xf32>
    %208 = arith.divf %206, %207 : vector<64x1xf32>
    %209 = vector.broadcast %208 : vector<64x1xf32> to vector<64x32xf32>
    %210 = arith.subf %200, %209 : vector<64x32xf32>
    %211 = arith.mulf %210, %210 : vector<64x32xf32>
    %cst_92 = arith.constant dense<0.000000e+00> : vector<64xf32>
    %212 = vector.multi_reduction <add>, %211, %cst_92 [1] : vector<64x32xf32> to vector<64xf32>
    %213 = vector.shape_cast %212 : vector<64xf32> to vector<64x1xf32>
    %cst_93 = arith.constant 3.200000e+01 : f32
    %214 = vector.broadcast %cst_93 : f32 to vector<64x1xf32>
    %215 = arith.divf %213, %214 : vector<64x1xf32>
    %216 = vector.broadcast %208 : vector<64x1xf32> to vector<64x32xf32>
    %217 = arith.subf %200, %216 : vector<64x32xf32>
    %cst_94 = arith.constant 9.99999974E-6 : f32
    %218 = vector.broadcast %cst_94 : f32 to vector<64x1xf32>
    %219 = arith.addf %215, %218 : vector<64x1xf32>
    %220 = math.rsqrt %219 : vector<64x1xf32>
    %221 = vector.broadcast %220 : vector<64x1xf32> to vector<64x32xf32>
    %222 = arith.mulf %217, %221 : vector<64x32xf32>
    %223 = vector.broadcast %202 : vector<1x32xf32> to vector<64x32xf32>
    %224 = arith.mulf %222, %223 : vector<64x32xf32>
    %225 = vector.broadcast %204 : vector<1x32xf32> to vector<64x32xf32>
    %226 = arith.addf %224, %225 : vector<64x32xf32>
    %227 = vector.extract_strided_slice %4 {offsets = [1, 0, 0], sizes = [1, 32, 96], strides = [1, 1, 1]} : vector<2x32x96xf32> to vector<1x32x96xf32>
    %228 = vector.shape_cast %227 : vector<1x32x96xf32> to vector<32x96xf32>
    %cst_95 = arith.constant dense<0.000000e+00> : vector<64x96xf32>
    %229 = tpu.matmul %226, %228, %cst_95 {dimension_numbers = #tpu.dot_dimension_numbers<[1], [0], [0], [1], [0, 0, 1, 1], [], []>} : vector<64x32xf32>, vector<32x96xf32>, vector<64x96xf32> -> vector<64x96xf32>
    %230 = vector.extract_strided_slice %5 {offsets = [1, 0, 0], sizes = [1, 1, 96], strides = [1, 1, 1]} : vector<2x1x96xf32> to vector<1x1x96xf32>
    %231 = vector.shape_cast %230 : vector<1x1x96xf32> to vector<1x96xf32>
    %232 = vector.broadcast %231 : vector<1x96xf32> to vector<64x96xf32>
    %233 = arith.addf %229, %232 : vector<64x96xf32>
    %234 = vector.shape_cast %226 : vector<64x32xf32> to vector<4x16x32xf32>
    %235 = vector.extract_strided_slice %6 {offsets = [1, 0, 0, 0], sizes = [1, 4, 32, 4], strides = [1, 1, 1, 1]} : vector<2x4x32x4xf32> to vector<1x4x32x4xf32>
    %236 = vector.shape_cast %235 : vector<1x4x32x4xf32> to vector<4x32x4xf32>
    "tpu.trace_start"() <{level = 10 : i32, message = "nsd,ndr->nsr"}> : () -> ()
    %cst_96 = arith.constant dense<0.000000e+00> : vector<4x16x4xf32>
    %237 = tpu.matmul %234, %236, %cst_96 {dimension_numbers = #tpu.dot_dimension_numbers<[2], [1], [1], [2], [0, 0, 0, 1, 1, 2], [0], [0]>} : vector<4x16x32xf32>, vector<4x32x4xf32>, vector<4x16x4xf32> -> vector<4x16x4xf32>
    "tpu.trace_stop"() : () -> ()
    %238 = vector.extract_strided_slice %7 {offsets = [1, 0, 0, 0], sizes = [1, 4, 4, 96], strides = [1, 1, 1, 1]} : vector<2x4x4x96xf32> to vector<1x4x4x96xf32>
    %239 = vector.shape_cast %238 : vector<1x4x4x96xf32> to vector<4x4x96xf32>
    "tpu.trace_start"() <{level = 10 : i32, message = "nsr,nre->nse"}> : () -> ()
    %cst_97 = arith.constant dense<0.000000e+00> : vector<4x16x96xf32>
    %240 = tpu.matmul %237, %239, %cst_97 {dimension_numbers = #tpu.dot_dimension_numbers<[2], [1], [1], [2], [0, 0, 0, 1, 1, 2], [0], [0]>} : vector<4x16x4xf32>, vector<4x4x96xf32>, vector<4x16x96xf32> -> vector<4x16x96xf32>
    "tpu.trace_stop"() : () -> ()
    %241 = vector.shape_cast %233 : vector<64x96xf32> to vector<4x16x96xf32>
    %242 = arith.addf %241, %240 : vector<4x16x96xf32>
    %243 = vector.extract_strided_slice %242 {offsets = [0, 0, 0], sizes = [4, 16, 32], strides = [1, 1, 1]} : vector<4x16x96xf32> to vector<4x16x32xf32>
    %cst_98 = arith.constant 0.353553385 : f32
    %244 = vector.broadcast %cst_98 : f32 to vector<4x16x32xf32>
    %245 = arith.mulf %243, %244 : vector<4x16x32xf32>
    %246 = vector.extract_strided_slice %242 {offsets = [0, 0, 32], sizes = [4, 16, 32], strides = [1, 1, 1]} : vector<4x16x96xf32> to vector<4x16x32xf32>
    %247 = vector.extract_strided_slice %242 {offsets = [0, 0, 64], sizes = [4, 16, 32], strides = [1, 1, 1]} : vector<4x16x96xf32> to vector<4x16x32xf32>
    %248 = vector.extract_strided_slice %245 {offsets = [0, 0, 0], sizes = [4, 16, 8], strides = [1, 1, 1]} : vector<4x16x32xf32> to vector<4x16x8xf32>
    %249 = vector.extract_strided_slice %246 {offsets = [0, 0, 0], sizes = [4, 16, 8], strides = [1, 1, 1]} : vector<4x16x32xf32> to vector<4x16x8xf32>
    "tpu.trace_start"() <{level = 10 : i32, message = "nqd,nkd->nqk"}> : () -> ()
    %cst_99 = arith.constant dense<0.000000e+00> : vector<4x16x16xf32>
    %250 = tpu.matmul %248, %249, %cst_99 {dimension_numbers = #tpu.dot_dimension_numbers<[2], [2], [1], [1], [0, 0, 0, 1, 1, 1], [0], [0]>} : vector<4x16x8xf32>, vector<4x16x8xf32>, vector<4x16x16xf32> -> vector<4x16x16xf32>
    "tpu.trace_stop"() : () -> ()
    %251 = arith.addf %250, %1 : vector<4x16x16xf32>
    %cst_100 = arith.constant dense<0xFF800000> : vector<4x16xf32>
    %252 = vector.multi_reduction <maximumf>, %251, %cst_100 [2] : vector<4x16x16xf32> to vector<4x16xf32>
    %253 = vector.shape_cast %252 : vector<4x16xf32> to vector<4x16x1xf32>
    %254 = vector.broadcast %253 : vector<4x16x1xf32> to vector<4x16x16xf32>
    %255 = arith.subf %251, %254 : vector<4x16x16xf32>
    %256 = math.exp %255 : vector<4x16x16xf32>
    %cst_101 = arith.constant dense<0.000000e+00> : vector<4x16xf32>
    %257 = vector.multi_reduction <add>, %256, %cst_101 [2] : vector<4x16x16xf32> to vector<4x16xf32>
    %258 = vector.shape_cast %257 : vector<4x16xf32> to vector<4x16x1xf32>
    %259 = tpu.reciprocal %258 {approx = true} : vector<4x16x1xf32> -> vector<4x16x1xf32>
    %260 = vector.broadcast %259 : vector<4x16x1xf32> to vector<4x16x16xf32>
    %261 = arith.mulf %256, %260 : vector<4x16x16xf32>
    %262 = vector.extract_strided_slice %247 {offsets = [0, 0, 0], sizes = [4, 16, 8], strides = [1, 1, 1]} : vector<4x16x32xf32> to vector<4x16x8xf32>
    "tpu.trace_start"() <{level = 10 : i32, message = "nqk,nkd->nqd"}> : () -> ()
    %cst_102 = arith.constant dense<0.000000e+00> : vector<4x16x8xf32>
    %263 = tpu.matmul %261, %262, %cst_102 {dimension_numbers = #tpu.dot_dimension_numbers<[2], [1], [1], [2], [0, 0, 0, 1, 1, 2], [0], [0]>} : vector<4x16x16xf32>, vector<4x16x8xf32>, vector<4x16x8xf32> -> vector<4x16x8xf32>
    "tpu.trace_stop"() : () -> ()
    %264 = vector.extract_strided_slice %245 {offsets = [0, 0, 8], sizes = [4, 16, 8], strides = [1, 1, 1]} : vector<4x16x32xf32> to vector<4x16x8xf32>
    %265 = vector.extract_strided_slice %246 {offsets = [0, 0, 8], sizes = [4, 16, 8], strides = [1, 1, 1]} : vector<4x16x32xf32> to vector<4x16x8xf32>
    "tpu.trace_start"() <{level = 10 : i32, message = "nqd,nkd->nqk"}> : () -> ()
    %cst_103 = arith.constant dense<0.000000e+00> : vector<4x16x16xf32>
    %266 = tpu.matmul %264, %265, %cst_103 {dimension_numbers = #tpu.dot_dimension_numbers<[2], [2], [1], [1], [0, 0, 0, 1, 1, 1], [0], [0]>} : vector<4x16x8xf32>, vector<4x16x8xf32>, vector<4x16x16xf32> -> vector<4x16x16xf32>
    "tpu.trace_stop"() : () -> ()
    %267 = arith.addf %266, %1 : vector<4x16x16xf32>
    %cst_104 = arith.constant dense<0xFF800000> : vector<4x16xf32>
    %268 = vector.multi_reduction <maximumf>, %267, %cst_104 [2] : vector<4x16x16xf32> to vector<4x16xf32>
    %269 = vector.shape_cast %268 : vector<4x16xf32> to vector<4x16x1xf32>
    %270 = vector.broadcast %269 : vector<4x16x1xf32> to vector<4x16x16xf32>
    %271 = arith.subf %267, %270 : vector<4x16x16xf32>
    %272 = math.exp %271 : vector<4x16x16xf32>
    %cst_105 = arith.constant dense<0.000000e+00> : vector<4x16xf32>
    %273 = vector.multi_reduction <add>, %272, %cst_105 [2] : vector<4x16x16xf32> to vector<4x16xf32>
    %274 = vector.shape_cast %273 : vector<4x16xf32> to vector<4x16x1xf32>
    %275 = tpu.reciprocal %274 {approx = true} : vector<4x16x1xf32> -> vector<4x16x1xf32>
    %276 = vector.broadcast %275 : vector<4x16x1xf32> to vector<4x16x16xf32>
    %277 = arith.mulf %272, %276 : vector<4x16x16xf32>
    %278 = vector.extract_strided_slice %247 {offsets = [0, 0, 8], sizes = [4, 16, 8], strides = [1, 1, 1]} : vector<4x16x32xf32> to vector<4x16x8xf32>
    "tpu.trace_start"() <{level = 10 : i32, message = "nqk,nkd->nqd"}> : () -> ()
    %cst_106 = arith.constant dense<0.000000e+00> : vector<4x16x8xf32>
    %279 = tpu.matmul %277, %278, %cst_106 {dimension_numbers = #tpu.dot_dimension_numbers<[2], [1], [1], [2], [0, 0, 0, 1, 1, 2], [0], [0]>} : vector<4x16x16xf32>, vector<4x16x8xf32>, vector<4x16x8xf32> -> vector<4x16x8xf32>
    "tpu.trace_stop"() : () -> ()
    %280 = vector.extract_strided_slice %245 {offsets = [0, 0, 16], sizes = [4, 16, 8], strides = [1, 1, 1]} : vector<4x16x32xf32> to vector<4x16x8xf32>
    %281 = vector.extract_strided_slice %246 {offsets = [0, 0, 16], sizes = [4, 16, 8], strides = [1, 1, 1]} : vector<4x16x32xf32> to vector<4x16x8xf32>
    "tpu.trace_start"() <{level = 10 : i32, message = "nqd,nkd->nqk"}> : () -> ()
    %cst_107 = arith.constant dense<0.000000e+00> : vector<4x16x16xf32>
    %282 = tpu.matmul %280, %281, %cst_107 {dimension_numbers = #tpu.dot_dimension_numbers<[2], [2], [1], [1], [0, 0, 0, 1, 1, 1], [0], [0]>} : vector<4x16x8xf32>, vector<4x16x8xf32>, vector<4x16x16xf32> -> vector<4x16x16xf32>
    "tpu.trace_stop"() : () -> ()
    %283 = arith.addf %282, %1 : vector<4x16x16xf32>
    %cst_108 = arith.constant dense<0xFF800000> : vector<4x16xf32>
    %284 = vector.multi_reduction <maximumf>, %283, %cst_108 [2] : vector<4x16x16xf32> to vector<4x16xf32>
    %285 = vector.shape_cast %284 : vector<4x16xf32> to vector<4x16x1xf32>
    %286 = vector.broadcast %285 : vector<4x16x1xf32> to vector<4x16x16xf32>
    %287 = arith.subf %283, %286 : vector<4x16x16xf32>
    %288 = math.exp %287 : vector<4x16x16xf32>
    %cst_109 = arith.constant dense<0.000000e+00> : vector<4x16xf32>
    %289 = vector.multi_reduction <add>, %288, %cst_109 [2] : vector<4x16x16xf32> to vector<4x16xf32>
    %290 = vector.shape_cast %289 : vector<4x16xf32> to vector<4x16x1xf32>
    %291 = tpu.reciprocal %290 {approx = true} : vector<4x16x1xf32> -> vector<4x16x1xf32>
    %292 = vector.broadcast %291 : vector<4x16x1xf32> to vector<4x16x16xf32>
    %293 = arith.mulf %288, %292 : vector<4x16x16xf32>
    %294 = vector.extract_strided_slice %247 {offsets = [0, 0, 16], sizes = [4, 16, 8], strides = [1, 1, 1]} : vector<4x16x32xf32> to vector<4x16x8xf32>
    "tpu.trace_start"() <{level = 10 : i32, message = "nqk,nkd->nqd"}> : () -> ()
    %cst_110 = arith.constant dense<0.000000e+00> : vector<4x16x8xf32>
    %295 = tpu.matmul %293, %294, %cst_110 {dimension_numbers = #tpu.dot_dimension_numbers<[2], [1], [1], [2], [0, 0, 0, 1, 1, 2], [0], [0]>} : vector<4x16x16xf32>, vector<4x16x8xf32>, vector<4x16x8xf32> -> vector<4x16x8xf32>
    "tpu.trace_stop"() : () -> ()
    %296 = vector.extract_strided_slice %245 {offsets = [0, 0, 24], sizes = [4, 16, 8], strides = [1, 1, 1]} : vector<4x16x32xf32> to vector<4x16x8xf32>
    %297 = vector.extract_strided_slice %246 {offsets = [0, 0, 24], sizes = [4, 16, 8], strides = [1, 1, 1]} : vector<4x16x32xf32> to vector<4x16x8xf32>
    "tpu.trace_start"() <{level = 10 : i32, message = "nqd,nkd->nqk"}> : () -> ()
    %cst_111 = arith.constant dense<0.000000e+00> : vector<4x16x16xf32>
    %298 = tpu.matmul %296, %297, %cst_111 {dimension_numbers = #tpu.dot_dimension_numbers<[2], [2], [1], [1], [0, 0, 0, 1, 1, 1], [0], [0]>} : vector<4x16x8xf32>, vector<4x16x8xf32>, vector<4x16x16xf32> -> vector<4x16x16xf32>
    "tpu.trace_stop"() : () -> ()
    %299 = arith.addf %298, %1 : vector<4x16x16xf32>
    %cst_112 = arith.constant dense<0xFF800000> : vector<4x16xf32>
    %300 = vector.multi_reduction <maximumf>, %299, %cst_112 [2] : vector<4x16x16xf32> to vector<4x16xf32>
    %301 = vector.shape_cast %300 : vector<4x16xf32> to vector<4x16x1xf32>
    %302 = vector.broadcast %301 : vector<4x16x1xf32> to vector<4x16x16xf32>
    %303 = arith.subf %299, %302 : vector<4x16x16xf32>
    %304 = math.exp %303 : vector<4x16x16xf32>
    %cst_113 = arith.constant dense<0.000000e+00> : vector<4x16xf32>
    %305 = vector.multi_reduction <add>, %304, %cst_113 [2] : vector<4x16x16xf32> to vector<4x16xf32>
    %306 = vector.shape_cast %305 : vector<4x16xf32> to vector<4x16x1xf32>
    %307 = tpu.reciprocal %306 {approx = true} : vector<4x16x1xf32> -> vector<4x16x1xf32>
    %308 = vector.broadcast %307 : vector<4x16x1xf32> to vector<4x16x16xf32>
    %309 = arith.mulf %304, %308 : vector<4x16x16xf32>
    %310 = vector.extract_strided_slice %247 {offsets = [0, 0, 24], sizes = [4, 16, 8], strides = [1, 1, 1]} : vector<4x16x32xf32> to vector<4x16x8xf32>
    "tpu.trace_start"() <{level = 10 : i32, message = "nqk,nkd->nqd"}> : () -> ()
    %cst_114 = arith.constant dense<0.000000e+00> : vector<4x16x8xf32>
    %311 = tpu.matmul %309, %310, %cst_114 {dimension_numbers = #tpu.dot_dimension_numbers<[2], [1], [1], [2], [0, 0, 0, 1, 1, 2], [0], [0]>} : vector<4x16x16xf32>, vector<4x16x8xf32>, vector<4x16x8xf32> -> vector<4x16x8xf32>
    "tpu.trace_stop"() : () -> ()
    %312 = tpu.concatenate %263, %279, %295, %311 in 2 : vector<4x16x8xf32>, vector<4x16x8xf32>, vector<4x16x8xf32>, vector<4x16x8xf32> -> vector<4x16x32xf32>
    %313 = vector.shape_cast %312 : vector<4x16x32xf32> to vector<64x32xf32>
    %314 = vector.extract_strided_slice %10 {offsets = [1, 0, 0], sizes = [1, 1, 32], strides = [1, 1, 1]} : vector<2x1x32xf32> to vector<1x1x32xf32>
    %315 = vector.shape_cast %314 : vector<1x1x32xf32> to vector<1x32xf32>
    %316 = vector.extract_strided_slice %8 {offsets = [1, 0, 0], sizes = [1, 32, 32], strides = [1, 1, 1]} : vector<2x32x32xf32> to vector<1x32x32xf32>
    %317 = vector.shape_cast %316 : vector<1x32x32xf32> to vector<32x32xf32>
    %cst_115 = arith.constant dense<0.000000e+00> : vector<64x32xf32>
    %318 = tpu.matmul %313, %317, %cst_115 {dimension_numbers = #tpu.dot_dimension_numbers<[1], [0], [0], [1], [0, 0, 1, 1], [], []>} : vector<64x32xf32>, vector<32x32xf32>, vector<64x32xf32> -> vector<64x32xf32>
    %319 = vector.extract_strided_slice %9 {offsets = [1, 0, 0], sizes = [1, 1, 32], strides = [1, 1, 1]} : vector<2x1x32xf32> to vector<1x1x32xf32>
    %320 = vector.shape_cast %319 : vector<1x1x32xf32> to vector<1x32xf32>
    %321 = vector.broadcast %320 : vector<1x32xf32> to vector<64x32xf32>
    %322 = arith.addf %318, %321 : vector<64x32xf32>
    %323 = vector.broadcast %315 : vector<1x32xf32> to vector<64x32xf32>
    %324 = arith.mulf %323, %322 : vector<64x32xf32>
    %325 = arith.addf %200, %324 : vector<64x32xf32>
    %326 = vector.extract_strided_slice %11 {offsets = [1, 0, 0], sizes = [1, 1, 32], strides = [1, 1, 1]} : vector<2x1x32xf32> to vector<1x1x32xf32>
    %327 = vector.shape_cast %326 : vector<1x1x32xf32> to vector<1x32xf32>
    %328 = vector.extract_strided_slice %12 {offsets = [1, 0, 0], sizes = [1, 1, 32], strides = [1, 1, 1]} : vector<2x1x32xf32> to vector<1x1x32xf32>
    %329 = vector.shape_cast %328 : vector<1x1x32xf32> to vector<1x32xf32>
    %cst_116 = arith.constant dense<0.000000e+00> : vector<64xf32>
    %330 = vector.multi_reduction <add>, %325, %cst_116 [1] : vector<64x32xf32> to vector<64xf32>
    %331 = vector.shape_cast %330 : vector<64xf32> to vector<64x1xf32>
    %cst_117 = arith.constant 3.200000e+01 : f32
    %332 = vector.broadcast %cst_117 : f32 to vector<64x1xf32>
    %333 = arith.divf %331, %332 : vector<64x1xf32>
    %334 = vector.broadcast %333 : vector<64x1xf32> to vector<64x32xf32>
    %335 = arith.subf %325, %334 : vector<64x32xf32>
    %336 = arith.mulf %335, %335 : vector<64x32xf32>
    %cst_118 = arith.constant dense<0.000000e+00> : vector<64xf32>
    %337 = vector.multi_reduction <add>, %336, %cst_118 [1] : vector<64x32xf32> to vector<64xf32>
    %338 = vector.shape_cast %337 : vector<64xf32> to vector<64x1xf32>
    %cst_119 = arith.constant 3.200000e+01 : f32
    %339 = vector.broadcast %cst_119 : f32 to vector<64x1xf32>
    %340 = arith.divf %338, %339 : vector<64x1xf32>
    %341 = vector.broadcast %333 : vector<64x1xf32> to vector<64x32xf32>
    %342 = arith.subf %325, %341 : vector<64x32xf32>
    %cst_120 = arith.constant 9.99999974E-6 : f32
    %343 = vector.broadcast %cst_120 : f32 to vector<64x1xf32>
    %344 = arith.addf %340, %343 : vector<64x1xf32>
    %345 = math.rsqrt %344 : vector<64x1xf32>
    %346 = vector.broadcast %345 : vector<64x1xf32> to vector<64x32xf32>
    %347 = arith.mulf %342, %346 : vector<64x32xf32>
    %348 = vector.broadcast %327 : vector<1x32xf32> to vector<64x32xf32>
    %349 = arith.mulf %347, %348 : vector<64x32xf32>
    %350 = vector.broadcast %329 : vector<1x32xf32> to vector<64x32xf32>
    %351 = arith.addf %349, %350 : vector<64x32xf32>
    %352 = vector.extract_strided_slice %13 {offsets = [1, 0, 0], sizes = [1, 32, 128], strides = [1, 1, 1]} : vector<2x32x128xf32> to vector<1x32x128xf32>
    %353 = vector.shape_cast %352 : vector<1x32x128xf32> to vector<32x128xf32>
    %cst_121 = arith.constant dense<0.000000e+00> : vector<64x128xf32>
    %354 = tpu.matmul %351, %353, %cst_121 {dimension_numbers = #tpu.dot_dimension_numbers<[1], [0], [0], [1], [0, 0, 1, 1], [], []>} : vector<64x32xf32>, vector<32x128xf32>, vector<64x128xf32> -> vector<64x128xf32>
    %355 = vector.extract_strided_slice %14 {offsets = [1, 0, 0], sizes = [1, 1, 128], strides = [1, 1, 1]} : vector<2x1x128xf32> to vector<1x1x128xf32>
    %356 = vector.shape_cast %355 : vector<1x1x128xf32> to vector<1x128xf32>
    %357 = vector.broadcast %356 : vector<1x128xf32> to vector<64x128xf32>
    %358 = arith.addf %354, %357 : vector<64x128xf32>
    %359 = arith.mulf %358, %358 : vector<64x128xf32>
    %360 = arith.mulf %358, %359 : vector<64x128xf32>
    %cst_122 = arith.constant 4.471500e-02 : f32
    %361 = vector.broadcast %cst_122 : f32 to vector<64x128xf32>
    %362 = arith.mulf %361, %360 : vector<64x128xf32>
    %363 = arith.addf %358, %362 : vector<64x128xf32>
    %cst_123 = arith.constant 0.797884583 : f32
    %364 = vector.broadcast %cst_123 : f32 to vector<64x128xf32>
    %365 = arith.mulf %364, %363 : vector<64x128xf32>
    %366 = math.tanh %365 : vector<64x128xf32>
    %cst_124 = arith.constant 1.000000e+00 : f32
    %367 = vector.broadcast %cst_124 : f32 to vector<64x128xf32>
    %368 = arith.addf %367, %366 : vector<64x128xf32>
    %cst_125 = arith.constant 5.000000e-01 : f32
    %369 = vector.broadcast %cst_125 : f32 to vector<64x128xf32>
    %370 = arith.mulf %369, %368 : vector<64x128xf32>
    %371 = arith.mulf %358, %370 : vector<64x128xf32>
    %372 = vector.extract_strided_slice %17 {offsets = [1, 0, 0], sizes = [1, 1, 32], strides = [1, 1, 1]} : vector<2x1x32xf32> to vector<1x1x32xf32>
    %373 = vector.shape_cast %372 : vector<1x1x32xf32> to vector<1x32xf32>
    %374 = vector.extract_strided_slice %15 {offsets = [1, 0, 0], sizes = [1, 128, 32], strides = [1, 1, 1]} : vector<2x128x32xf32> to vector<1x128x32xf32>
    %375 = vector.shape_cast %374 : vector<1x128x32xf32> to vector<128x32xf32>
    %cst_126 = arith.constant dense<0.000000e+00> : vector<64x32xf32>
    %376 = tpu.matmul %371, %375, %cst_126 {dimension_numbers = #tpu.dot_dimension_numbers<[1], [0], [0], [1], [0, 0, 1, 1], [], []>} : vector<64x128xf32>, vector<128x32xf32>, vector<64x32xf32> -> vector<64x32xf32>
    %377 = vector.extract_strided_slice %16 {offsets = [1, 0, 0], sizes = [1, 1, 32], strides = [1, 1, 1]} : vector<2x1x32xf32> to vector<1x1x32xf32>
    %378 = vector.shape_cast %377 : vector<1x1x32xf32> to vector<1x32xf32>
    %379 = vector.broadcast %378 : vector<1x32xf32> to vector<64x32xf32>
    %380 = arith.addf %376, %379 : vector<64x32xf32>
    %381 = vector.broadcast %373 : vector<1x32xf32> to vector<64x32xf32>
    %382 = arith.mulf %381, %380 : vector<64x32xf32>
    %383 = arith.addf %325, %382 : vector<64x32xf32>
    %c0_127 = arith.constant 0 : index
    %c0_128 = arith.constant 0 : index
    %384 = vector.load %arg19[%c0_127, %c0_128] : memref<64x32xf32, #tpu.memory_space<vmem>>, vector<64x32xf32>
    tpu.vector_store %arg19[%c0_127, %c0_128], %383 {strides = array<i32>} : memref<64x32xf32, #tpu.memory_space<vmem>>, vector<64x32xf32>,
    return
  }
  func.func @transform_0(%arg0: i32) -> (i32, i32) {
    %c0_i32 = arith.constant 0 : i32
    %c0_i32_0 = arith.constant 0 : i32
    return %arg0, %c0_i32 : i32, i32
  }
  func.func @transform_1(%arg0: i32) -> (i32, i32, i32) {
    %c0_i32 = arith.constant 0 : i32
    %c0_i32_0 = arith.constant 0 : i32
    %c0_i32_1 = arith.constant 0 : i32
    return %arg0, %c0_i32, %c0_i32_0 : i32, i32, i32
  }
  func.func @transform_2(%arg0: i32) -> (i32, i32, i32) {
    %c0_i32 = arith.constant 0 : i32
    %c0_i32_0 = arith.constant 0 : i32
    %c0_i32_1 = arith.constant 0 : i32
    %c0_i32_2 = arith.constant 0 : i32
    return %c0_i32, %c0_i32_0, %c0_i32_1 : i32, i32, i32
  }
  func.func @transform_3(%arg0: i32) -> (i32, i32, i32) {
    %c0_i32 = arith.constant 0 : i32
    %c0_i32_0 = arith.constant 0 : i32
    %c0_i32_1 = arith.constant 0 : i32
    %c0_i32_2 = arith.constant 0 : i32
    return %c0_i32, %c0_i32_0, %c0_i32_1 : i32, i32, i32
  }
  func.func @transform_4(%arg0: i32) -> (i32, i32, i32) {
    %c0_i32 = arith.constant 0 : i32
    %c0_i32_0 = arith.constant 0 : i32
    %c0_i32_1 = arith.constant 0 : i32
    %c0_i32_2 = arith.constant 0 : i32
    return %c0_i32, %c0_i32_0, %c0_i32_1 : i32, i32, i32
  }
  func.func @transform_5(%arg0: i32) -> (i32, i32, i32) {
    %c0_i32 = arith.constant 0 : i32
    %c0_i32_0 = arith.constant 0 : i32
    %c0_i32_1 = arith.constant 0 : i32
    %c0_i32_2 = arith.constant 0 : i32
    return %c0_i32, %c0_i32_0, %c0_i32_1 : i32, i32, i32
  }
  func.func @transform_6(%arg0: i32) -> (i32, i32, i32, i32) {
    %c0_i32 = arith.constant 0 : i32
    %c0_i32_0 = arith.constant 0 : i32
    %c0_i32_1 = arith.constant 0 : i32
    %c0_i32_2 = arith.constant 0 : i32
    return %c0_i32, %arg0, %c0_i32_0, %c0_i32_1 : i32, i32, i32, i32
  }
  func.func @transform_7(%arg0: i32) -> (i32, i32, i32, i32) {
    %c0_i32 = arith.constant 0 : i32
    %c0_i32_0 = arith.constant 0 : i32
    %c0_i32_1 = arith.constant 0 : i32
    %c0_i32_2 = arith.constant 0 : i32
    return %c0_i32, %arg0, %c0_i32_0, %c0_i32_1 : i32, i32, i32, i32
  }
  func.func @transform_8(%arg0: i32) -> (i32, i32, i32) {
    %c0_i32 = arith.constant 0 : i32
    %c0_i32_0 = arith.constant 0 : i32
    %c0_i32_1 = arith.constant 0 : i32
    %c0_i32_2 = arith.constant 0 : i32
    return %c0_i32, %c0_i32_0, %c0_i32_1 : i32, i32, i32
  }
  func.func @transform_9(%arg0: i32) -> (i32, i32, i32) {
    %c0_i32 = arith.constant 0 : i32
    %c0_i32_0 = arith.constant 0 : i32
    %c0_i32_1 = arith.constant 0 : i32
    %c0_i32_2 = arith.constant 0 : i32
    return %c0_i32, %c0_i32_0, %c0_i32_1 : i32, i32, i32
  }
  func.func @transform_10(%arg0: i32) -> (i32, i32, i32) {
    %c0_i32 = arith.constant 0 : i32
    %c0_i32_0 = arith.constant 0 : i32
    %c0_i32_1 = arith.constant 0 : i32
    %c0_i32_2 = arith.constant 0 : i32
    return %c0_i32, %c0_i32_0, %c0_i32_1 : i32, i32, i32
  }
  func.func @transform_11(%arg0: i32) -> (i32, i32, i32) {
    %c0_i32 = arith.constant 0 : i32
    %c0_i32_0 = arith.constant 0 : i32
    %c0_i32_1 = arith.constant 0 : i32
    %c0_i32_2 = arith.constant 0 : i32
    return %c0_i32, %c0_i32_0, %c0_i32_1 : i32, i32, i32
  }
  func.func @transform_12(%arg0: i32) -> (i32, i32, i32) {
    %c0_i32 = arith.constant 0 : i32
    %c0_i32_0 = arith.constant 0 : i32
    %c0_i32_1 = arith.constant 0 : i32
    %c0_i32_2 = arith.constant 0 : i32
    return %c0_i32, %c0_i32_0, %c0_i32_1 : i32, i32, i32
  }
  func.func @transform_13(%arg0: i32) -> (i32, i32, i32) {
    %c0_i32 = arith.constant 0 : i32
    %c0_i32_0 = arith.constant 0 : i32
    %c0_i32_1 = arith.constant 0 : i32
    %c0_i32_2 = arith.constant 0 : i32
    return %c0_i32, %c0_i32_0, %c0_i32_1 : i32, i32, i32
  }
  func.func @transform_14(%arg0: i32) -> (i32, i32, i32) {
    %c0_i32 = arith.constant 0 : i32
    %c0_i32_0 = arith.constant 0 : i32
    %c0_i32_1 = arith.constant 0 : i32
    %c0_i32_2 = arith.constant 0 : i32
    return %c0_i32, %c0_i32_0, %c0_i32_1 : i32, i32, i32
  }
  func.func @transform_15(%arg0: i32) -> (i32, i32, i32) {
    %c0_i32 = arith.constant 0 : i32
    %c0_i32_0 = arith.constant 0 : i32
    %c0_i32_1 = arith.constant 0 : i32
    %c0_i32_2 = arith.constant 0 : i32
    return %c0_i32, %c0_i32_0, %c0_i32_1 : i32, i32, i32
  }
  func.func @transform_16(%arg0: i32) -> (i32, i32, i32) {
    %c0_i32 = arith.constant 0 : i32
    %c0_i32_0 = arith.constant 0 : i32
    %c0_i32_1 = arith.constant 0 : i32
    %c0_i32_2 = arith.constant 0 : i32
    return %c0_i32, %c0_i32_0, %c0_i32_1 : i32, i32, i32
  }
  func.func @transform_17(%arg0: i32) -> (i32, i32, i32) {
    %c0_i32 = arith.constant 0 : i32
    %c0_i32_0 = arith.constant 0 : i32
    %c0_i32_1 = arith.constant 0 : i32
    %c0_i32_2 = arith.constant 0 : i32
    return %c0_i32, %c0_i32_0, %c0_i32_1 : i32, i32, i32
  }
  func.func @transform_18(%arg0: i32) -> (i32, i32) {
    %c0_i32 = arith.constant 0 : i32
    %c0_i32_0 = arith.constant 0 : i32
    return %arg0, %c0_i32 : i32, i32
  }
}

</mosaic_0001>

<llo_original>
// kernel: control_transformer_forward.1
$region0: #{control_transformer_forward.1}
  #allocation0 [shape = 'u32[]', space=smem, size = 0x4, offset = 0x4, fixed_abs, tag = 'smem constant byte address 0x4 - core index']
  #allocation1 [shape = 'u32[72,128]{1,0:T(1,128)}', space=vmem, size = 0x9000, scoped, tag = 'internal scratch']
  %s0 = inlined_call_operand.vmem [shape: f32[128,32], index: 0, kind: input, shape index: {}]
  %s1 = inlined_call_operand.vmem [shape: f32[8,16,16], index: 1, kind: input, shape index: {}]
  %s2 = inlined_call_operand.vmem [shape: f32[2,1,32], index: 2, kind: input, shape index: {}]
  %s3 = inlined_call_operand.vmem [shape: f32[2,1,32], index: 3, kind: input, shape index: {}]
  %s4 = inlined_call_operand.vmem [shape: f32[2,32,96], index: 4, kind: input, shape index: {}]
  %s5 = inlined_call_operand.vmem [shape: f32[2,1,96], index: 5, kind: input, shape index: {}]
  %s6 = inlined_call_operand.vmem [shape: f32[2,8,32,4], index: 6, kind: input, shape index: {}]
  %s7 = inlined_call_operand.vmem [shape: f32[2,8,4,96], index: 7, kind: input, shape index: {}]
  %s8 = inlined_call_operand.vmem [shape: f32[2,32,32], index: 8, kind: input, shape index: {}]
  %s9 = inlined_call_operand.vmem [shape: f32[2,1,32], index: 9, kind: input, shape index: {}]
  %s10 = inlined_call_operand.vmem [shape: f32[2,1,32], index: 10, kind: input, shape index: {}]
  %s11 = inlined_call_operand.vmem [shape: f32[2,1,32], index: 11, kind: input, shape index: {}]
  %s12 = inlined_call_operand.vmem [shape: f32[2,1,32], index: 12, kind: input, shape index: {}]
  %s13 = inlined_call_operand.vmem [shape: f32[2,32,128], index: 13, kind: input, shape index: {}]
  %s14 = inlined_call_operand.vmem [shape: f32[2,1,128], index: 14, kind: input, shape index: {}]
  %s15 = inlined_call_operand.vmem [shape: f32[2,128,32], index: 15, kind: input, shape index: {}]
  %s16 = inlined_call_operand.vmem [shape: f32[2,1,32], index: 16, kind: input, shape index: {}]
  %s17 = inlined_call_operand.vmem [shape: f32[2,1,32], index: 17, kind: input, shape index: {}]
  %s18 = inlined_call_operand.vmem [shape: f32[128,32], index: 18, kind: output, shape index: {}]
  %s19 = sld [smem:[#allocation0]]
  $region184: #{control_transformer_forward.1} parent=0
    _
  %s21 = ssub.s32 1, %s19
  %s22 = scalar_select 0, %s21, %s19
  $region1: #{control_transformer_forward.1} parent=0
    #allocation2 [shape = 'u8[262144]{0}', space=vmem, size = 0x40000, scoped, tag = 'input window, operand 6']
    #allocation3 [shape = 'u8[32768]{0}', space=vmem, size = 0x8000, scoped, tag = 'input window, operand 7']
    loop: start=0, step=1, limit=4
    $region2: #{control_transformer_forward.1} parent=1 // loop_pre_header
      _
    $region3: #{control_transformer_forward.1} parent=1 // loop_header
      %s24 = sphi 0, %s28
      %p25 = scmp.ge.s32.totalorder %s24, 4
      %s34 = sphi 0, %s36
      %s37 = sphi 0, %s34
      %s38 = sphi 0, %s37
      %s54 = sphi 0, %s38
      %s60 = sphi 0, %s62
      %s63 = sphi 0, %s60
      %s64 = sphi 0, %s63
      %s80 = sphi 0, %s64
      %s84 = sphi 0, %s84
      %s86 = sphi 0, %s84
      %s87 = sphi 0, %s86
      %s101 = sphi 0, %s87
      %s105 = sphi 0, %s105
      %s107 = sphi 0, %s105
      %s108 = sphi 0, %s107
      %s122 = sphi 0, %s108
      %s126 = sphi 0, %s126
      %s128 = sphi 0, %s126
      %s129 = sphi 0, %s128
      %s143 = sphi 0, %s129
      %s147 = sphi 0, %s147
      %s149 = sphi 0, %s147
      %s150 = sphi 0, %s149
      %s164 = sphi 0, %s150
      %s170 = sphi 0, %s172
      %s173 = sphi 0, %s170
      %s174 = sphi 0, %s173
      %s190 = sphi 0, %s174
      %s196 = sphi 0, %s198
      %s199 = sphi 0, %s196
      %s200 = sphi 0, %s199
      %s216 = sphi 0, %s200
      %s220 = sphi 0, %s220
      %s222 = sphi 0, %s220
      %s223 = sphi 0, %s222
      %s237 = sphi 0, %s223
      %s241 = sphi 0, %s241
      %s243 = sphi 0, %s241
      %s244 = sphi 0, %s243
      %s258 = sphi 0, %s244
      %s262 = sphi 0, %s262
      %s264 = sphi 0, %s262
      %s265 = sphi 0, %s264
      %s279 = sphi 0, %s265
      %s283 = sphi 0, %s283
      %s285 = sphi 0, %s283
      %s286 = sphi 0, %s285
      %s300 = sphi 0, %s286
      %s304 = sphi 0, %s304
      %s306 = sphi 0, %s304
      %s307 = sphi 0, %s306
      %s321 = sphi 0, %s307
      %s325 = sphi 0, %s325
      %s327 = sphi 0, %s325
      %s328 = sphi 0, %s327
      %s342 = sphi 0, %s328
      %s346 = sphi 0, %s346
      %s348 = sphi 0, %s346
      %s349 = sphi 0, %s348
      %s363 = sphi 0, %s349
      %s367 = sphi 0, %s367
      %s369 = sphi 0, %s367
      %s370 = sphi 0, %s369
      %s384 = sphi 0, %s370
      %s388 = sphi 0, %s388
      %s390 = sphi 0, %s388
      %s391 = sphi 0, %s390
      %s405 = sphi 0, %s391
      %s409 = sphi 0, %s409
      %s411 = sphi 0, %s409
      %s412 = sphi 0, %s411
      %s426 = sphi 0, %s412
      %s432 = sphi 0, %s434
      %s435 = sphi 0, %s432
      %s436 = sphi 0, %s435
      %s452 = sphi 0, %s436
    $region4: #{control_transformer_forward.1} parent=1 // loop_header_branch
      %27 = sbr.rel (%p25) target = $region8
    $region5: #{control_transformer_forward.1} parent=1 // loop_body
      %s29 = ssub.s32 %s24, 1
      %s30 = ssub.s32 %s24, 2
      %s31 = sadd.s32 %s24, 1
      %s32 = ssub.s32 %s24, %s31
      %p33 = scmp.eq.s32.totalorder %s32, 0
      %s35 = sadd.s32 %s34, 1
      %s36 = scalar_select %p33, %s34, %s35
      %p39 = pneg %p33
      %p40 = scmp.eq.s32.totalorder %s24, 1
      %p41 = por %p39, %p40
      %p42 = scmp.ne.s32.totalorder %s34, %s37
      %p43 = scmp.eq.s32.totalorder %s24, 0
      %p44 = por %p42, %p43
      %p45 = scmp.ne.s32.totalorder %s34, %s37
      %p46 = scmp.eq.s32.totalorder %s29, 1
      %p47 = por %p45, %p46
      %p48 = scmp.ne.s32.totalorder %s37, %s38
      %p49 = scmp.eq.s32.totalorder %s29, 0
      %p50 = por %p48, %p49
      %p51 = scmp.ne.s32.totalorder %s37, %s38
      %p52 = scmp.eq.s32.totalorder %s30, 1
      %p53 = por %p51, %p52
      %p55 = scmp.ne.s32.totalorder %s38, %s54
      %p56 = scmp.eq.s32.totalorder %s30, 0
      %p57 = por %p55, %p56
      %s58 = ssub.s32 %s24, %s31
      %p59 = scmp.eq.s32.totalorder %s58, 0
      %s61 = sadd.s32 %s60, 1
      %s62 = scalar_select %p59, %s60, %s61
      %p65 = pneg %p59
      %p66 = scmp.eq.s32.totalorder %s24, 1
      %p67 = por %p65, %p66
      %p68 = scmp.ne.s32.totalorder %s60, %s63
      %p69 = scmp.eq.s32.totalorder %s24, 0
      %p70 = por %p68, %p69
      %p71 = scmp.ne.s32.totalorder %s60, %s63
      %p72 = scmp.eq.s32.totalorder %s29, 1
      %p73 = por %p71, %p72
      %p74 = scmp.ne.s32.totalorder %s63, %s64
      %p75 = scmp.eq.s32.totalorder %s29, 0
      %p76 = por %p74, %p75
      %p77 = scmp.ne.s32.totalorder %s63, %s64
      %p78 = scmp.eq.s32.totalorder %s30, 1
      %p79 = por %p77, %p78
      %p81 = scmp.ne.s32.totalorder %s64, %s80
      %p82 = scmp.eq.s32.totalorder %s30, 0
      %p83 = por %p81, %p82
      %s85 = sadd.s32 %s84, 1
      %p88 = scmp.eq.s32.totalorder %s24, 1
      %p89 = scmp.ne.s32.totalorder %s84, %s86
      %p90 = scmp.eq.s32.totalorder %s24, 0
      %p91 = por %p89, %p90
      %p92 = scmp.ne.s32.totalorder %s84, %s86
      %p93 = scmp.eq.s32.totalorder %s29, 1
      %p94 = por %p92, %p93
      %p95 = scmp.ne.s32.totalorder %s86, %s87
      %p96 = scmp.eq.s32.totalorder %s29, 0
      %p97 = por %p95, %p96
      %p98 = scmp.ne.s32.totalorder %s86, %s87
      %p99 = scmp.eq.s32.totalorder %s30, 1
      %p100 = por %p98, %p99
      %p102 = scmp.ne.s32.totalorder %s87, %s101
      %p103 = scmp.eq.s32.totalorder %s30, 0
      %p104 = por %p102, %p103
      %s106 = sadd.s32 %s105, 1
      %p109 = scmp.eq.s32.totalorder %s24, 1
      %p110 = scmp.ne.s32.totalorder %s105, %s107
      %p111 = scmp.eq.s32.totalorder %s24, 0
      %p112 = por %p110, %p111
      %p113 = scmp.ne.s32.totalorder %s105, %s107
      %p114 = scmp.eq.s32.totalorder %s29, 1
      %p115 = por %p113, %p114
      %p116 = scmp.ne.s32.totalorder %s107, %s108
      %p117 = scmp.eq.s32.totalorder %s29, 0
      %p118 = por %p116, %p117
      %p119 = scmp.ne.s32.totalorder %s107, %s108
      %p120 = scmp.eq.s32.totalorder %s30, 1
      %p121 = por %p119, %p120
      %p123 = scmp.ne.s32.totalorder %s108, %s122
      %p124 = scmp.eq.s32.totalorder %s30, 0
      %p125 = por %p123, %p124
      %s127 = sadd.s32 %s126, 1
      %p130 = scmp.eq.s32.totalorder %s24, 1
      %p131 = scmp.ne.s32.totalorder %s126, %s128
      %p132 = scmp.eq.s32.totalorder %s24, 0
      %p133 = por %p131, %p132
      %p134 = scmp.ne.s32.totalorder %s126, %s128
      %p135 = scmp.eq.s32.totalorder %s29, 1
      %p136 = por %p134, %p135
      %p137 = scmp.ne.s32.totalorder %s128, %s129
      %p138 = scmp.eq.s32.totalorder %s29, 0
      %p139 = por %p137, %p138
      %p140 = scmp.ne.s32.totalorder %s128, %s129
      %p141 = scmp.eq.s32.totalorder %s30, 1
      %p142 = por %p140, %p141
      %p144 = scmp.ne.s32.totalorder %s129, %s143
      %p145 = scmp.eq.s32.totalorder %s30, 0
      %p146 = por %p144, %p145
      %s148 = sadd.s32 %s147, 1
      %p151 = scmp.eq.s32.totalorder %s24, 1
      %p152 = scmp.ne.s32.totalorder %s147, %s149
      %p153 = scmp.eq.s32.totalorder %s24, 0
      %p154 = por %p152, %p153
      %p155 = scmp.ne.s32.totalorder %s147, %s149
      %p156 = scmp.eq.s32.totalorder %s29, 1
      %p157 = por %p155, %p156
      %p158 = scmp.ne.s32.totalorder %s149, %s150
      %p159 = scmp.eq.s32.totalorder %s29, 0
      %p160 = por %p158, %p159
      %p161 = scmp.ne.s32.totalorder %s149, %s150
      %p162 = scmp.eq.s32.totalorder %s30, 1
      %p163 = por %p161, %p162
      %p165 = scmp.ne.s32.totalorder %s150, %s164
      %p166 = scmp.eq.s32.totalorder %s30, 0
      %p167 = por %p165, %p166
      %s168 = ssub.s32 %s24, %s31
      %p169 = scmp.eq.s32.totalorder %s168, 0
      %s171 = sadd.s32 %s170, 1
      %s172 = scalar_select %p169, %s170, %s171
      %p175 = pneg %p169
      %p176 = scmp.eq.s32.totalorder %s24, 1
      %p177 = por %p175, %p176
      %p178 = scmp.ne.s32.totalorder %s170, %s173
      %p179 = scmp.eq.s32.totalorder %s24, 0
      %p180 = por %p178, %p179
      %p181 = scmp.ne.s32.totalorder %s170, %s173
      %p182 = scmp.eq.s32.totalorder %s29, 1
      %p183 = por %p181, %p182
      %p184 = scmp.ne.s32.totalorder %s173, %s174
      %p185 = scmp.eq.s32.totalorder %s29, 0
      %p186 = por %p184, %p185
      %p187 = scmp.ne.s32.totalorder %s173, %s174
      %p188 = scmp.eq.s32.totalorder %s30, 1
      %p189 = por %p187, %p188
      %p191 = scmp.ne.s32.totalorder %s174, %s190
      %p192 = scmp.eq.s32.totalorder %s30, 0
      %p193 = por %p191, %p192
      %s194 = ssub.s32 %s24, %s31
      %p195 = scmp.eq.s32.totalorder %s194, 0
      %s197 = sadd.s32 %s196, 1
      %s198 = scalar_select %p195, %s196, %s197
      %p201 = pneg %p195
      %p202 = scmp.eq.s32.totalorder %s24, 1
      %p203 = por %p201, %p202
      %p204 = scmp.ne.s32.totalorder %s196, %s199
      %p205 = scmp.eq.s32.totalorder %s24, 0
      %p206 = por %p204, %p205
      %p207 = scmp.ne.s32.totalorder %s196, %s199
      %p208 = scmp.eq.s32.totalorder %s29, 1
      %p209 = por %p207, %p208
      %p210 = scmp.ne.s32.totalorder %s199, %s200
      %p211 = scmp.eq.s32.totalorder %s29, 0
      %p212 = por %p210, %p211
      %p213 = scmp.ne.s32.totalorder %s199, %s200
      %p214 = scmp.eq.s32.totalorder %s30, 1
      %p215 = por %p213, %p214
      %p217 = scmp.ne.s32.totalorder %s200, %s216
      %p218 = scmp.eq.s32.totalorder %s30, 0
      %p219 = por %p217, %p218
      %s221 = sadd.s32 %s220, 1
      %p224 = scmp.eq.s32.totalorder %s24, 1
      %p225 = scmp.ne.s32.totalorder %s220, %s222
      %p226 = scmp.eq.s32.totalorder %s24, 0
      %p227 = por %p225, %p226
      %p228 = scmp.ne.s32.totalorder %s220, %s222
      %p229 = scmp.eq.s32.totalorder %s29, 1
      %p230 = por %p228, %p229
      %p231 = scmp.ne.s32.totalorder %s222, %s223
      %p232 = scmp.eq.s32.totalorder %s29, 0
      %p233 = por %p231, %p232
      %p234 = scmp.ne.s32.totalorder %s222, %s223
      %p235 = scmp.eq.s32.totalorder %s30, 1
      %p236 = por %p234, %p235
      %p238 = scmp.ne.s32.totalorder %s223, %s237
      %p239 = scmp.eq.s32.totalorder %s30, 0
      %p240 = por %p238, %p239
      %s242 = sadd.s32 %s241, 1
      %p245 = scmp.eq.s32.totalorder %s24, 1
      %p246 = scmp.ne.s32.totalorder %s241, %s243
      %p247 = scmp.eq.s32.totalorder %s24, 0
      %p248 = por %p246, %p247
      %p249 = scmp.ne.s32.totalorder %s241, %s243
      %p250 = scmp.eq.s32.totalorder %s29, 1
      %p251 = por %p249, %p250
      %p252 = scmp.ne.s32.totalorder %s243, %s244
      %p253 = scmp.eq.s32.totalorder %s29, 0
      %p254 = por %p252, %p253
      %p255 = scmp.ne.s32.totalorder %s243, %s244
      %p256 = scmp.eq.s32.totalorder %s30, 1
      %p257 = por %p255, %p256
      %p259 = scmp.ne.s32.totalorder %s244, %s258
      %p260 = scmp.eq.s32.totalorder %s30, 0
      %p261 = por %p259, %p260
      %s263 = sadd.s32 %s262, 1
      %p266 = scmp.eq.s32.totalorder %s24, 1
      %p267 = scmp.ne.s32.totalorder %s262, %s264
      %p268 = scmp.eq.s32.totalorder %s24, 0
      %p269 = por %p267, %p268
      %p270 = scmp.ne.s32.totalorder %s262, %s264
      %p271 = scmp.eq.s32.totalorder %s29, 1
      %p272 = por %p270, %p271
      %p273 = scmp.ne.s32.totalorder %s264, %s265
      %p274 = scmp.eq.s32.totalorder %s29, 0
      %p275 = por %p273, %p274
      %p276 = scmp.ne.s32.totalorder %s264, %s265
      %p277 = scmp.eq.s32.totalorder %s30, 1
      %p278 = por %p276, %p277
      %p280 = scmp.ne.s32.totalorder %s265, %s279
      %p281 = scmp.eq.s32.totalorder %s30, 0
      %p282 = por %p280, %p281
      %s284 = sadd.s32 %s283, 1
      %p287 = scmp.eq.s32.totalorder %s24, 1
      %p288 = scmp.ne.s32.totalorder %s283, %s285
      %p289 = scmp.eq.s32.totalorder %s24, 0
      %p290 = por %p288, %p289
      %p291 = scmp.ne.s32.totalorder %s283, %s285
      %p292 = scmp.eq.s32.totalorder %s29, 1
      %p293 = por %p291, %p292
      %p294 = scmp.ne.s32.totalorder %s285, %s286
      %p295 = scmp.eq.s32.totalorder %s29, 0
      %p296 = por %p294, %p295
      %p297 = scmp.ne.s32.totalorder %s285, %s286
      %p298 = scmp.eq.s32.totalorder %s30, 1
      %p299 = por %p297, %p298
      %p301 = scmp.ne.s32.totalorder %s286, %s300
      %p302 = scmp.eq.s32.totalorder %s30, 0
      %p303 = por %p301, %p302
      %s305 = sadd.s32 %s304, 1
      %p308 = scmp.eq.s32.totalorder %s24, 1
      %p309 = scmp.ne.s32.totalorder %s304, %s306
      %p310 = scmp.eq.s32.totalorder %s24, 0
      %p311 = por %p309, %p310
      %p312 = scmp.ne.s32.totalorder %s304, %s306
      %p313 = scmp.eq.s32.totalorder %s29, 1
      %p314 = por %p312, %p313
      %p315 = scmp.ne.s32.totalorder %s306, %s307
      %p316 = scmp.eq.s32.totalorder %s29, 0
      %p317 = por %p315, %p316
      %p318 = scmp.ne.s32.totalorder %s306, %s307
      %p319 = scmp.eq.s32.totalorder %s30, 1
      %p320 = por %p318, %p319
      %p322 = scmp.ne.s32.totalorder %s307, %s321
      %p323 = scmp.eq.s32.totalorder %s30, 0
      %p324 = por %p322, %p323
      %s326 = sadd.s32 %s325, 1
      %p329 = scmp.eq.s32.totalorder %s24, 1
      %p330 = scmp.ne.s32.totalorder %s325, %s327
      %p331 = scmp.eq.s32.totalorder %s24, 0
      %p332 = por %p330, %p331
      %p333 = scmp.ne.s32.totalorder %s325, %s327
      %p334 = scmp.eq.s32.totalorder %s29, 1
      %p335 = por %p333, %p334
      %p336 = scmp.ne.s32.totalorder %s327, %s328
      %p337 = scmp.eq.s32.totalorder %s29, 0
      %p338 = por %p336, %p337
      %p339 = scmp.ne.s32.totalorder %s327, %s328
      %p340 = scmp.eq.s32.totalorder %s30, 1
      %p341 = por %p339, %p340
      %p343 = scmp.ne.s32.totalorder %s328, %s342
      %p344 = scmp.eq.s32.totalorder %s30, 0
      %p345 = por %p343, %p344
      %s347 = sadd.s32 %s346, 1
      %p350 = scmp.eq.s32.totalorder %s24, 1
      %p351 = scmp.ne.s32.totalorder %s346, %s348
      %p352 = scmp.eq.s32.totalorder %s24, 0
      %p353 = por %p351, %p352
      %p354 = scmp.ne.s32.totalorder %s346, %s348
      %p355 = scmp.eq.s32.totalorder %s29, 1
      %p356 = por %p354, %p355
      %p357 = scmp.ne.s32.totalorder %s348, %s349
      %p358 = scmp.eq.s32.totalorder %s29, 0
      %p359 = por %p357, %p358
      %p360 = scmp.ne.s32.totalorder %s348, %s349
      %p361 = scmp.eq.s32.totalorder %s30, 1
      %p362 = por %p360, %p361
      %p364 = scmp.ne.s32.totalorder %s349, %s363
      %p365 = scmp.eq.s32.totalorder %s30, 0
      %p366 = por %p364, %p365
      %s368 = sadd.s32 %s367, 1
      %p371 = scmp.eq.s32.totalorder %s24, 1
      %p372 = scmp.ne.s32.totalorder %s367, %s369
      %p373 = scmp.eq.s32.totalorder %s24, 0
      %p374 = por %p372, %p373
      %p375 = scmp.ne.s32.totalorder %s367, %s369
      %p376 = scmp.eq.s32.totalorder %s29, 1
      %p377 = por %p375, %p376
      %p378 = scmp.ne.s32.totalorder %s369, %s370
      %p379 = scmp.eq.s32.totalorder %s29, 0
      %p380 = por %p378, %p379
      %p381 = scmp.ne.s32.totalorder %s369, %s370
      %p382 = scmp.eq.s32.totalorder %s30, 1
      %p383 = por %p381, %p382
      %p385 = scmp.ne.s32.totalorder %s370, %s384
      %p386 = scmp.eq.s32.totalorder %s30, 0
      %p387 = por %p385, %p386
      %s389 = sadd.s32 %s388, 1
      %p392 = scmp.eq.s32.totalorder %s24, 1
      %p393 = scmp.ne.s32.totalorder %s388, %s390
      %p394 = scmp.eq.s32.totalorder %s24, 0
      %p395 = por %p393, %p394
      %p396 = scmp.ne.s32.totalorder %s388, %s390
      %p397 = scmp.eq.s32.totalorder %s29, 1
      %p398 = por %p396, %p397
      %p399 = scmp.ne.s32.totalorder %s390, %s391
      %p400 = scmp.eq.s32.totalorder %s29, 0
      %p401 = por %p399, %p400
      %p402 = scmp.ne.s32.totalorder %s390, %s391
      %p403 = scmp.eq.s32.totalorder %s30, 1
      %p404 = por %p402, %p403
      %p406 = scmp.ne.s32.totalorder %s391, %s405
      %p407 = scmp.eq.s32.totalorder %s30, 0
      %p408 = por %p406, %p407
      %s410 = sadd.s32 %s409, 1
      %p413 = scmp.eq.s32.totalorder %s24, 1
      %p414 = scmp.ne.s32.totalorder %s409, %s411
      %p415 = scmp.eq.s32.totalorder %s24, 0
      %p416 = por %p414, %p415
      %p417 = scmp.ne.s32.totalorder %s409, %s411
      %p418 = scmp.eq.s32.totalorder %s29, 1
      %p419 = por %p417, %p418
      %p420 = scmp.ne.s32.totalorder %s411, %s412
      %p421 = scmp.eq.s32.totalorder %s29, 0
      %p422 = por %p420, %p421
      %p423 = scmp.ne.s32.totalorder %s411, %s412
      %p424 = scmp.eq.s32.totalorder %s30, 1
      %p425 = por %p423, %p424
      %p427 = scmp.ne.s32.totalorder %s412, %s426
      %p428 = scmp.eq.s32.totalorder %s30, 0
      %p429 = por %p427, %p428
      %s430 = ssub.s32 %s24, %s31
      %p431 = scmp.eq.s32.totalorder %s430, 0
      %s433 = sadd.s32 %s432, 1
      %s434 = scalar_select %p431, %s432, %s433
      %p437 = pneg %p431
      %p438 = scmp.eq.s32.totalorder %s24, 1
      %p439 = por %p437, %p438
      %p440 = scmp.ne.s32.totalorder %s432, %s435
      %p441 = scmp.eq.s32.totalorder %s24, 0
      %p442 = por %p440, %p441
      %p443 = scmp.ne.s32.totalorder %s432, %s435
      %p444 = scmp.eq.s32.totalorder %s29, 1
      %p445 = por %p443, %p444
      %p446 = scmp.ne.s32.totalorder %s435, %s436
      %p447 = scmp.eq.s32.totalorder %s29, 0
      %p448 = por %p446, %p447
      %p449 = scmp.ne.s32.totalorder %s435, %s436
      %p450 = scmp.eq.s32.totalorder %s30, 1
      %p451 = por %p449, %p450
      %p453 = scmp.ne.s32.totalorder %s436, %s452
      %p454 = scmp.eq.s32.totalorder %s30, 0
      %p455 = por %p453, %p454
      %p456 = scmp.le.s32.totalorder 1, %s24
      %p457 = scmp.lt.s32.totalorder %s24, 3
      %p458 = pnand %p456, %p457
      %p459 = pneg %p458
      // Predicated region
      $region9: #{control_transformer_forward.1} parent=5 // pred_check
        _
      $region10: #{control_transformer_forward.1} parent=5 // pred_check_branch
        %461 = sbr.rel (%p458) target = $region12
      $region11: #{control_transformer_forward.1} parent=5 // pred_region
        %s462 = ssub.s32 %s24, 1
        // Predicated region
        $region13: #{control_transformer_forward.1} parent=11 // pred_check
          %p463 = pneg %p97
        $region14: #{control_transformer_forward.1} parent=11 // pred_check_branch
          %465 = sbr.rel (%p463) target = $region16
        $region15: #{control_transformer_forward.1} parent=11 // pred_region
          _
        $region16: #{control_transformer_forward.1} parent=11 // pred_fallthru
          _
        // Predicated region
        $region17: #{control_transformer_forward.1} parent=11 // pred_check
          %p466 = pneg %p118
        $region18: #{control_transformer_forward.1} parent=11 // pred_check_branch
          %468 = sbr.rel (%p466) target = $region20
        $region19: #{control_transformer_forward.1} parent=11 // pred_region
          _
        $region20: #{control_transformer_forward.1} parent=11 // pred_fallthru
          _
        // Predicated region
        $region21: #{control_transformer_forward.1} parent=11 // pred_check
          %p469 = pneg %p139
        $region22: #{control_transformer_forward.1} parent=11 // pred_check_branch
          %471 = sbr.rel (%p469) target = $region24
        $region23: #{control_transformer_forward.1} parent=11 // pred_region
          _
        $region24: #{control_transformer_forward.1} parent=11 // pred_fallthru
          _
        // Predicated region
        $region25: #{control_transformer_forward.1} parent=11 // pred_check
          %p472 = pneg %p160
        $region26: #{control_transformer_forward.1} parent=11 // pred_check_branch
          %474 = sbr.rel (%p472) target = $region28
        $region27: #{control_transformer_forward.1} parent=11 // pred_region
          _
        $region28: #{control_transformer_forward.1} parent=11 // pred_fallthru
          _
        // Predicated region
        $region29: #{control_transformer_forward.1} parent=11 // pred_check
          %p475 = pneg %p233
        $region30: #{control_transformer_forward.1} parent=11 // pred_check_branch
          %477 = sbr.rel (%p475) target = $region32
        $region31: #{control_transformer_forward.1} parent=11 // pred_region
          _
        $region32: #{control_transformer_forward.1} parent=11 // pred_fallthru
          _
        // Predicated region
        $region33: #{control_transformer_forward.1} parent=11 // pred_check
          %p478 = pneg %p254
        $region34: #{control_transformer_forward.1} parent=11 // pred_check_branch
          %480 = sbr.rel (%p478) target = $region36
        $region35: #{control_transformer_forward.1} parent=11 // pred_region
          _
        $region36: #{control_transformer_forward.1} parent=11 // pred_fallthru
          _
        // Predicated region
        $region37: #{control_transformer_forward.1} parent=11 // pred_check
          %p481 = pneg %p275
        $region38: #{control_transformer_forward.1} parent=11 // pred_check_branch
          %483 = sbr.rel (%p481) target = $region40
        $region39: #{control_transformer_forward.1} parent=11 // pred_region
          _
        $region40: #{control_transformer_forward.1} parent=11 // pred_fallthru
          _
        // Predicated region
        $region41: #{control_transformer_forward.1} parent=11 // pred_check
          %p484 = pneg %p296
        $region42: #{control_transformer_forward.1} parent=11 // pred_check_branch
          %486 = sbr.rel (%p484) target = $region44
        $region43: #{control_transformer_forward.1} parent=11 // pred_region
          _
        $region44: #{control_transformer_forward.1} parent=11 // pred_fallthru
          _
        // Predicated region
        $region45: #{control_transformer_forward.1} parent=11 // pred_check
          %p487 = pneg %p317
        $region46: #{control_transformer_forward.1} parent=11 // pred_check_branch
          %489 = sbr.rel (%p487) target = $region48
        $region47: #{control_transformer_forward.1} parent=11 // pred_region
          _
        $region48: #{control_transformer_forward.1} parent=11 // pred_fallthru
          _
        // Predicated region
        $region49: #{control_transformer_forward.1} parent=11 // pred_check
          %p490 = pneg %p338
        $region50: #{control_transformer_forward.1} parent=11 // pred_check_branch
          %492 = sbr.rel (%p490) target = $region52
        $region51: #{control_transformer_forward.1} parent=11 // pred_region
          _
        $region52: #{control_transformer_forward.1} parent=11 // pred_fallthru
          _
        // Predicated region
        $region53: #{control_transformer_forward.1} parent=11 // pred_check
          %p493 = pneg %p359
        $region54: #{control_transformer_forward.1} parent=11 // pred_check_branch
          %495 = sbr.rel (%p493) target = $region56
        $region55: #{control_transformer_forward.1} parent=11 // pred_region
          _
        $region56: #{control_transformer_forward.1} parent=11 // pred_fallthru
          _
        // Predicated region
        $region57: #{control_transformer_forward.1} parent=11 // pred_check
          %p496 = pneg %p380
        $region58: #{control_transformer_forward.1} parent=11 // pred_check_branch
          %498 = sbr.rel (%p496) target = $region60
        $region59: #{control_transformer_forward.1} parent=11 // pred_region
          _
        $region60: #{control_transformer_forward.1} parent=11 // pred_fallthru
          _
        // Predicated region
        $region61: #{control_transformer_forward.1} parent=11 // pred_check
          %p499 = pneg %p401
        $region62: #{control_transformer_forward.1} parent=11 // pred_check_branch
          %501 = sbr.rel (%p499) target = $region64
        $region63: #{control_transformer_forward.1} parent=11 // pred_region
          _
        $region64: #{control_transformer_forward.1} parent=11 // pred_fallthru
          _
        // Predicated region
        $region65: #{control_transformer_forward.1} parent=11 // pred_check
          %p502 = pneg %p422
        $region66: #{control_transformer_forward.1} parent=11 // pred_check_branch
          %504 = sbr.rel (%p502) target = $region68
        $region67: #{control_transformer_forward.1} parent=11 // pred_region
          _
        $region68: #{control_transformer_forward.1} parent=11 // pred_fallthru
          _
      $region12: #{control_transformer_forward.1} parent=5 // pred_fallthru
        _
      %p505 = scmp.lt.s32.totalorder %s24, 2
      // Predicated region
      $region69: #{control_transformer_forward.1} parent=5 // pred_check
        %p506 = pneg %p505
      $region70: #{control_transformer_forward.1} parent=5 // pred_check_branch
        %508 = sbr.rel (%p506) target = $region72
      $region71: #{control_transformer_forward.1} parent=5 // pred_region
        // Predicated region
        $region73: #{control_transformer_forward.1} parent=71 // pred_check
          %p509 = pneg %p44
        $region74: #{control_transformer_forward.1} parent=71 // pred_check_branch
          %511 = sbr.rel (%p509) target = $region76
        $region75: #{control_transformer_forward.1} parent=71 // pred_region
          %s512 = smul.u32 8, %s24
          %p513 = scmp.lt.s32.totalorder %s512, 15
          %s514 = scalar_select %p513, %s512, 15
          %s515 = smul.addr %s514, 8
          %s516 = scalar_lea.vmem %s0, %s515
          %s517 = smul.u32 8, %s24
        $region76: #{control_transformer_forward.1} parent=71 // pred_fallthru
          _
        // Predicated region
        $region77: #{control_transformer_forward.1} parent=71 // pred_check
          %p518 = pneg %p70
        $region78: #{control_transformer_forward.1} parent=71 // pred_check_branch
          %520 = sbr.rel (%p518) target = $region80
        $region79: #{control_transformer_forward.1} parent=71 // pred_region
          %s521 = smul.u32 4, %s24
          %p522 = scmp.lt.s32.totalorder %s521, 7
          %s523 = scalar_select %p522, %s521, 7
          %s524 = smul.addr %s523, 2
          %s525 = smul.addr %s524, 8
          %s526 = scalar_lea.vmem %s1, %s525
          %s527 = smul.u32 4, %s24
        $region80: #{control_transformer_forward.1} parent=71 // pred_fallthru
          _
        // Predicated region
        $region81: #{control_transformer_forward.1} parent=71 // pred_check
          %p528 = pneg %p180
        $region82: #{control_transformer_forward.1} parent=71 // pred_check_branch
          %530 = sbr.rel (%p528) target = $region84
        $region83: #{control_transformer_forward.1} parent=71 // pred_region
          %s531 = sand.u32 %s170, 1
          %s532 = sand.u32 %s170, 1
          %s533 = smul.addr %s532, 256
          %s534 = scalar_lea.vmem [#allocation2], %s533
          %s535 = smul.u32 4, %s24
          %s536 = smul.addr %s535, 4
          %s537 = smul.addr %s536, 8
          %s538 = scalar_lea.vmem %s6, %s537
          // Predicated region
          $region85: #{control_transformer_forward.1} parent=83 // pred_check
            _
          $region86: #{control_transformer_forward.1} parent=83 // pred_check_branch
            %540 = sbr.rel (0) target = $region88
          $region87: #{control_transformer_forward.1} parent=83 // pred_region
            // Predicated region
            $region89: #{control_transformer_forward.1} parent=87 // pred_check
              _
            $region90: #{control_transformer_forward.1} parent=87 // pred_check_branch
              %542 = sbr.rel (0) target = $region92
            $region91: #{control_transformer_forward.1} parent=87 // pred_region
              // Predicated region
              $region104: #{control_transformer_forward.1} parent=91 // pred_check
                _
              $region105: #{control_transformer_forward.1} parent=91 // pred_check_branch
                %620 = sbr.rel (0) target = $region107
              $region106: #{control_transformer_forward.1} parent=91 // pred_region
                loop: start=0, step=1, limit=1
                $region108: #{control_transformer_forward.1} parent=106 // loop_pre_header
                  _
                $region109: #{control_transformer_forward.1} parent=106 // loop_header
                  %s622 = sphi 0, %s626
                  %p623 = scmp.ge.s32.totalorder %s622, 1
                  %s627 = sphi %s538, %s538
                  %s628 = sphi %s534, %s534
                $region110: #{control_transformer_forward.1} parent=106 // loop_header_branch
                  %625 = sbr.rel (%p623) target = $region114
                $region111: #{control_transformer_forward.1} parent=106 // loop_body
                  %v629 = vld [vmem:[%s627] sm:$0xff]
                  %630 = vst [vmem:[%s628] sm:$0xff] %v629
                  %v631 = vld [vmem:[%s627 + $0x8] sm:$0xff]
                  %632 = vst [vmem:[%s628 + $0x8] sm:$0xff] %v631
                  %v633 = vld [vmem:[%s627 + $0x10] sm:$0xff]
                  %634 = vst [vmem:[%s628 + $0x10] sm:$0xff] %v633
                  %v635 = vld [vmem:[%s627 + $0x18] sm:$0xff]
                  %636 = vst [vmem:[%s628 + $0x18] sm:$0xff] %v635
                  %v637 = vld [vmem:[%s627 + $0x20] sm:$0xff]
                  %638 = vst [vmem:[%s628 + $0x20] sm:$0xff] %v637
                  %v639 = vld [vmem:[%s627 + $0x28] sm:$0xff]
                  %640 = vst [vmem:[%s628 + $0x28] sm:$0xff] %v639
                  %v641 = vld [vmem:[%s627 + $0x30] sm:$0xff]
                  %642 = vst [vmem:[%s628 + $0x30] sm:$0xff] %v641
                  %v643 = vld [vmem:[%s627 + $0x38] sm:$0xff]
                  %644 = vst [vmem:[%s628 + $0x38] sm:$0xff] %v643
                  %v645 = vld [vmem:[%s627 + $0x40] sm:$0xff]
                  %646 = vst [vmem:[%s628 + $0x40] sm:$0xff] %v645
                  %v647 = vld [vmem:[%s627 + $0x48] sm:$0xff]
                  %648 = vst [vmem:[%s628 + $0x48] sm:$0xff] %v647
                  %v649 = vld [vmem:[%s627 + $0x50] sm:$0xff]
                  %650 = vst [vmem:[%s628 + $0x50] sm:$0xff] %v649
                  %v651 = vld [vmem:[%s627 + $0x58] sm:$0xff]
                  %652 = vst [vmem:[%s628 + $0x58] sm:$0xff] %v651
                  %v653 = vld [vmem:[%s627 + $0x60] sm:$0xff]
                  %654 = vst [vmem:[%s628 + $0x60] sm:$0xff] %v653
                  %v655 = vld [vmem:[%s627 + $0x68] sm:$0xff]
                  %656 = vst [vmem:[%s628 + $0x68] sm:$0xff] %v655
                  %v657 = vld [vmem:[%s627 + $0x70] sm:$0xff]
                  %658 = vst [vmem:[%s628 + $0x70] sm:$0xff] %v657
                  %v659 = vld [vmem:[%s627 + $0x78] sm:$0xff]
                  %660 = vst [vmem:[%s628 + $0x78] sm:$0xff] %v659
                  %v661 = vld [vmem:[%s627 + $0x100] sm:$0xff]
                  %662 = vst [vmem:[%s628 + $0x80] sm:$0xff] %v661
                  %v663 = vld [vmem:[%s627 + $0x108] sm:$0xff]
                  %664 = vst [vmem:[%s628 + $0x88] sm:$0xff] %v663
                  %v665 = vld [vmem:[%s627 + $0x110] sm:$0xff]
                  %666 = vst [vmem:[%s628 + $0x90] sm:$0xff] %v665
                  %v667 = vld [vmem:[%s627 + $0x118] sm:$0xff]
                  %668 = vst [vmem:[%s628 + $0x98] sm:$0xff] %v667
                  %v669 = vld [vmem:[%s627 + $0x120] sm:$0xff]
                  %670 = vst [vmem:[%s628 + $0xa0] sm:$0xff] %v669
                  %v671 = vld [vmem:[%s627 + $0x128] sm:$0xff]
                  %672 = vst [vmem:[%s628 + $0xa8] sm:$0xff] %v671
                  %v673 = vld [vmem:[%s627 + $0x130] sm:$0xff]
                  %674 = vst [vmem:[%s628 + $0xb0] sm:$0xff] %v673
                  %v675 = vld [vmem:[%s627 + $0x138] sm:$0xff]
                  %676 = vst [vmem:[%s628 + $0xb8] sm:$0xff] %v675
                  %v677 = vld [vmem:[%s627 + $0x140] sm:$0xff]
                  %678 = vst [vmem:[%s628 + $0xc0] sm:$0xff] %v677
                  %v679 = vld [vmem:[%s627 + $0x148] sm:$0xff]
                  %680 = vst [vmem:[%s628 + $0xc8] sm:$0xff] %v679
                  %v681 = vld [vmem:[%s627 + $0x150] sm:$0xff]
                  %682 = vst [vmem:[%s628 + $0xd0] sm:$0xff] %v681
                  %v683 = vld [vmem:[%s627 + $0x158] sm:$0xff]
                  %684 = vst [vmem:[%s628 + $0xd8] sm:$0xff] %v683
                  %v685 = vld [vmem:[%s627 + $0x160] sm:$0xff]
                  %686 = vst [vmem:[%s628 + $0xe0] sm:$0xff] %v685
                  %v687 = vld [vmem:[%s627 + $0x168] sm:$0xff]
                  %688 = vst [vmem:[%s628 + $0xe8] sm:$0xff] %v687
                  %v689 = vld [vmem:[%s627 + $0x170] sm:$0xff]
                  %690 = vst [vmem:[%s628 + $0xf0] sm:$0xff] %v689
                  %v691 = vld [vmem:[%s627 + $0x178] sm:$0xff]
                  %692 = vst [vmem:[%s628 + $0xf8] sm:$0xff] %v691
                $region112: #{control_transformer_forward.1} parent=106 // loop_footer
                  %s626 = sadd.s32 1, %s622
                $region113: #{control_transformer_forward.1} parent=106 // loop_footer_branch
                  %621 = sbr.rel target = $region109
                $region114: #{control_transformer_forward.1} parent=106 // loop_exit
                  _
              $region107: #{control_transformer_forward.1} parent=91 // pred_fallthru
                _
              // Predicated region
              $region115: #{control_transformer_forward.1} parent=91 // pred_check
                _
              $region116: #{control_transformer_forward.1} parent=91 // pred_check_branch
                %694 = sbr.rel target = $region118
              $region117: #{control_transformer_forward.1} parent=91 // pred_region
                _
              $region118: #{control_transformer_forward.1} parent=91 // pred_fallthru
                _
            $region92: #{control_transformer_forward.1} parent=87 // pred_fallthru
              _
            // Predicated region
            $region93: #{control_transformer_forward.1} parent=87 // pred_check
              _
            $region94: #{control_transformer_forward.1} parent=87 // pred_check_branch
              %544 = sbr.rel target = $region96
            $region95: #{control_transformer_forward.1} parent=87 // pred_region
              %s546 = ssub.s32 256, 1
              loop: start=0, step=1, limit=1
              $region97: #{control_transformer_forward.1} parent=95 // loop_pre_header
                _
              $region98: #{control_transformer_forward.1} parent=95 // loop_header
                %s548 = sphi 0, %s552
                %p549 = scmp.ge.s32.totalorder %s548, 1
                %s553 = sphi %s538, %s538
                %s554 = sphi %s534, %s534
              $region99: #{control_transformer_forward.1} parent=95 // loop_header_branch
                %551 = sbr.rel (%p549) target = $region103
              $region100: #{control_transformer_forward.1} parent=95 // loop_body
                %v555 = vld [vmem:[%s553] sm:%s546]
                %556 = vst [vmem:[%s554] sm:%s546] %v555
                %v557 = vld [vmem:[%s553 + $0x8] sm:%s546]
                %558 = vst [vmem:[%s554 + $0x8] sm:%s546] %v557
                %v559 = vld [vmem:[%s553 + $0x10] sm:%s546]
                %560 = vst [vmem:[%s554 + $0x10] sm:%s546] %v559
                %v561 = vld [vmem:[%s553 + $0x18] sm:%s546]
                %562 = vst [vmem:[%s554 + $0x18] sm:%s546] %v561
                %v563 = vld [vmem:[%s553 + $0x20] sm:%s546]
                %564 = vst [vmem:[%s554 + $0x20] sm:%s546] %v563
                %v565 = vld [vmem:[%s553 + $0x28] sm:%s546]
                %566 = vst [vmem:[%s554 + $0x28] sm:%s546] %v565
                %v567 = vld [vmem:[%s553 + $0x30] sm:%s546]
                %568 = vst [vmem:[%s554 + $0x30] sm:%s546] %v567
                %v569 = vld [vmem:[%s553 + $0x38] sm:%s546]
                %570 = vst [vmem:[%s554 + $0x38] sm:%s546] %v569
                %v571 = vld [vmem:[%s553 + $0x40] sm:%s546]
                %572 = vst [vmem:[%s554 + $0x40] sm:%s546] %v571
                %v573 = vld [vmem:[%s553 + $0x48] sm:%s546]
                %574 = vst [vmem:[%s554 + $0x48] sm:%s546] %v573
                %v575 = vld [vmem:[%s553 + $0x50] sm:%s546]
                %576 = vst [vmem:[%s554 + $0x50] sm:%s546] %v575
                %v577 = vld [vmem:[%s553 + $0x58] sm:%s546]
                %578 = vst [vmem:[%s554 + $0x58] sm:%s546] %v577
                %v579 = vld [vmem:[%s553 + $0x60] sm:%s546]
                %580 = vst [vmem:[%s554 + $0x60] sm:%s546] %v579
                %v581 = vld [vmem:[%s553 + $0x68] sm:%s546]
                %582 = vst [vmem:[%s554 + $0x68] sm:%s546] %v581
                %v583 = vld [vmem:[%s553 + $0x70] sm:%s546]
                %584 = vst [vmem:[%s554 + $0x70] sm:%s546] %v583
                %v585 = vld [vmem:[%s553 + $0x78] sm:%s546]
                %586 = vst [vmem:[%s554 + $0x78] sm:%s546] %v585
                %v587 = vld [vmem:[%s553 + $0x100] sm:%s546]
                %588 = vst [vmem:[%s554 + $0x80] sm:%s546] %v587
                %v589 = vld [vmem:[%s553 + $0x108] sm:%s546]
                %590 = vst [vmem:[%s554 + $0x88] sm:%s546] %v589
                %v591 = vld [vmem:[%s553 + $0x110] sm:%s546]
                %592 = vst [vmem:[%s554 + $0x90] sm:%s546] %v591
                %v593 = vld [vmem:[%s553 + $0x118] sm:%s546]
                %594 = vst [vmem:[%s554 + $0x98] sm:%s546] %v593
                %v595 = vld [vmem:[%s553 + $0x120] sm:%s546]
                %596 = vst [vmem:[%s554 + $0xa0] sm:%s546] %v595
                %v597 = vld [vmem:[%s553 + $0x128] sm:%s546]
                %598 = vst [vmem:[%s554 + $0xa8] sm:%s546] %v597
                %v599 = vld [vmem:[%s553 + $0x130] sm:%s546]
                %600 = vst [vmem:[%s554 + $0xb0] sm:%s546] %v599
                %v601 = vld [vmem:[%s553 + $0x138] sm:%s546]
                %602 = vst [vmem:[%s554 + $0xb8] sm:%s546] %v601
                %v603 = vld [vmem:[%s553 + $0x140] sm:%s546]
                %604 = vst [vmem:[%s554 + $0xc0] sm:%s546] %v603
                %v605 = vld [vmem:[%s553 + $0x148] sm:%s546]
                %606 = vst [vmem:[%s554 + $0xc8] sm:%s546] %v605
                %v607 = vld [vmem:[%s553 + $0x150] sm:%s546]
                %608 = vst [vmem:[%s554 + $0xd0] sm:%s546] %v607
                %v609 = vld [vmem:[%s553 + $0x158] sm:%s546]
                %610 = vst [vmem:[%s554 + $0xd8] sm:%s546] %v609
                %v611 = vld [vmem:[%s553 + $0x160] sm:%s546]
                %612 = vst [vmem:[%s554 + $0xe0] sm:%s546] %v611
                %v613 = vld [vmem:[%s553 + $0x168] sm:%s546]
                %614 = vst [vmem:[%s554 + $0xe8] sm:%s546] %v613
                %v615 = vld [vmem:[%s553 + $0x170] sm:%s546]
                %616 = vst [vmem:[%s554 + $0xf0] sm:%s546] %v615
                %v617 = vld [vmem:[%s553 + $0x178] sm:%s546]
                %618 = vst [vmem:[%s554 + $0xf8] sm:%s546] %v617
              $region101: #{control_transformer_forward.1} parent=95 // loop_footer
                %s552 = sadd.s32 1, %s548
              $region102: #{control_transformer_forward.1} parent=95 // loop_footer_branch
                %547 = sbr.rel target = $region98
              $region103: #{control_transformer_forward.1} parent=95 // loop_exit
                _
            $region96: #{control_transformer_forward.1} parent=87 // pred_fallthru
              _
          $region88: #{control_transformer_forward.1} parent=83 // pred_fallthru
            _
          %695 = vnop
        $region84: #{control_transformer_forward.1} parent=71 // pred_fallthru
          _
        // Predicated region
        $region119: #{control_transformer_forward.1} parent=71 // pred_check
          %p696 = pneg %p206
        $region120: #{control_transformer_forward.1} parent=71 // pred_check_branch
          %698 = sbr.rel (%p696) target = $region122
        $region121: #{control_transformer_forward.1} parent=71 // pred_region
          %s699 = sand.u32 %s196, 1
          %s700 = sand.u32 %s196, 1
          %s701 = smul.addr %s700, 32
          %s702 = scalar_lea.vmem [#allocation3], %s701
          %s703 = smul.u32 4, %s24
          %s704 = smul.addr %s703, 4
          %s705 = scalar_lea.vmem %s7, %s704
          // Predicated region
          $region123: #{control_transformer_forward.1} parent=121 // pred_check
            _
          $region124: #{control_transformer_forward.1} parent=121 // pred_check_branch
            %707 = sbr.rel (0) target = $region126
          $region125: #{control_transformer_forward.1} parent=121 // pred_region
            // Predicated region
            $region127: #{control_transformer_forward.1} parent=125 // pred_check
              _
            $region128: #{control_transformer_forward.1} parent=125 // pred_check_branch
              %709 = sbr.rel target = $region130
            $region129: #{control_transformer_forward.1} parent=125 // pred_region
              // Predicated region
              $region142: #{control_transformer_forward.1} parent=129 // pred_check
                _
              $region143: #{control_transformer_forward.1} parent=129 // pred_check_branch
                %739 = sbr.rel (0) target = $region145
              $region144: #{control_transformer_forward.1} parent=129 // pred_region
                loop: start=0, step=1, limit=1
                $region146: #{control_transformer_forward.1} parent=144 // loop_pre_header
                  _
                $region147: #{control_transformer_forward.1} parent=144 // loop_header
                  %s741 = sphi 0, %s745
                  %p742 = scmp.ge.s32.totalorder %s741, 1
                  %s746 = sphi %s705, %s705
                  %s747 = sphi %s702, %s702
                $region148: #{control_transformer_forward.1} parent=144 // loop_header_branch
                  %744 = sbr.rel (%p742) target = $region152
                $region149: #{control_transformer_forward.1} parent=144 // loop_body
                  _
                $region150: #{control_transformer_forward.1} parent=144 // loop_footer
                  %s745 = sadd.s32 1, %s741
                $region151: #{control_transformer_forward.1} parent=144 // loop_footer_branch
                  %740 = sbr.rel target = $region147
                $region152: #{control_transformer_forward.1} parent=144 // loop_exit
                  _
                %s749 = ssub.s32 16, 1
                loop: start=0, step=1, limit=1
                $region153: #{control_transformer_forward.1} parent=144 // loop_pre_header
                  _
                $region154: #{control_transformer_forward.1} parent=144 // loop_header
                  %s751 = sphi 0, %s755
                  %p752 = scmp.ge.s32.totalorder %s751, 1
                  %s756 = sphi %s705, %s705
                  %s757 = sphi %s702, %s702
                $region155: #{control_transformer_forward.1} parent=144 // loop_header_branch
                  %754 = sbr.rel (%p752) target = $region159
                $region156: #{control_transformer_forward.1} parent=144 // loop_body
                  %v758 = vld [vmem:[%s756] sm:%s749]
                  %759 = vst [vmem:[%s757] sm:%s749] %v758
                  %v760 = vld [vmem:[%s756 + $0x4] sm:%s749]
                  %761 = vst [vmem:[%s757 + $0x4] sm:%s749] %v760
                  %v762 = vld [vmem:[%s756 + $0x8] sm:%s749]
                  %763 = vst [vmem:[%s757 + $0x8] sm:%s749] %v762
                  %v764 = vld [vmem:[%s756 + $0xc] sm:%s749]
                  %765 = vst [vmem:[%s757 + $0xc] sm:%s749] %v764
                  %v766 = vld [vmem:[%s756 + $0x20] sm:%s749]
                  %767 = vst [vmem:[%s757 + $0x10] sm:%s749] %v766
                  %v768 = vld [vmem:[%s756 + $0x24] sm:%s749]
                  %769 = vst [vmem:[%s757 + $0x14] sm:%s749] %v768
                  %v770 = vld [vmem:[%s756 + $0x28] sm:%s749]
                  %771 = vst [vmem:[%s757 + $0x18] sm:%s749] %v770
                  %v772 = vld [vmem:[%s756 + $0x2c] sm:%s749]
                  %773 = vst [vmem:[%s757 + $0x1c] sm:%s749] %v772
                $region157: #{control_transformer_forward.1} parent=144 // loop_footer
                  %s755 = sadd.s32 1, %s751
                $region158: #{control_transformer_forward.1} parent=144 // loop_footer_branch
                  %750 = sbr.rel target = $region154
                $region159: #{control_transformer_forward.1} parent=144 // loop_exit
                  _
              $region145: #{control_transformer_forward.1} parent=129 // pred_fallthru
                _
            $region130: #{control_transformer_forward.1} parent=125 // pred_fallthru
              _
            // Predicated region
            $region131: #{control_transformer_forward.1} parent=125 // pred_check
              _
            $region132: #{control_transformer_forward.1} parent=125 // pred_check_branch
              %711 = sbr.rel (0) target = $region134
            $region133: #{control_transformer_forward.1} parent=125 // pred_region
              %s713 = ssub.s32 16, 1
              loop: start=0, step=1, limit=1
              $region135: #{control_transformer_forward.1} parent=133 // loop_pre_header
                _
              $region136: #{control_transformer_forward.1} parent=133 // loop_header
                %s715 = sphi 0, %s719
                %p716 = scmp.ge.s32.totalorder %s715, 1
                %s720 = sphi %s705, %s705
                %s721 = sphi %s702, %s702
              $region137: #{control_transformer_forward.1} parent=133 // loop_header_branch
                %718 = sbr.rel (%p716) target = $region141
              $region138: #{control_transformer_forward.1} parent=133 // loop_body
                %v722 = vld [vmem:[%s720] sm:%s713]
                %723 = vst [vmem:[%s721] sm:%s713] %v722
                %v724 = vld [vmem:[%s720 + $0x4] sm:%s713]
                %725 = vst [vmem:[%s721 + $0x4] sm:%s713] %v724
                %v726 = vld [vmem:[%s720 + $0x8] sm:%s713]
                %727 = vst [vmem:[%s721 + $0x8] sm:%s713] %v726
                %v728 = vld [vmem:[%s720 + $0xc] sm:%s713]
                %729 = vst [vmem:[%s721 + $0xc] sm:%s713] %v728
                %v730 = vld [vmem:[%s720 + $0x20] sm:%s713]
                %731 = vst [vmem:[%s721 + $0x10] sm:%s713] %v730
                %v732 = vld [vmem:[%s720 + $0x24] sm:%s713]
                %733 = vst [vmem:[%s721 + $0x14] sm:%s713] %v732
                %v734 = vld [vmem:[%s720 + $0x28] sm:%s713]
                %735 = vst [vmem:[%s721 + $0x18] sm:%s713] %v734
                %v736 = vld [vmem:[%s720 + $0x2c] sm:%s713]
                %737 = vst [vmem:[%s721 + $0x1c] sm:%s713] %v736
              $region139: #{control_transformer_forward.1} parent=133 // loop_footer
                %s719 = sadd.s32 1, %s715
              $region140: #{control_transformer_forward.1} parent=133 // loop_footer_branch
                %714 = sbr.rel target = $region136
              $region141: #{control_transformer_forward.1} parent=133 // loop_exit
                _
            $region134: #{control_transformer_forward.1} parent=125 // pred_fallthru
              _
          $region126: #{control_transformer_forward.1} parent=121 // pred_fallthru
            _
          %774 = vnop
        $region122: #{control_transformer_forward.1} parent=71 // pred_fallthru
          _
      $region72: #{control_transformer_forward.1} parent=5 // pred_fallthru
        _
      %p775 = scmp.le.s32.totalorder 1, %s24
      %p776 = scmp.lt.s32.totalorder %s24, 3
      %p777 = pnand %p775, %p776
      %p778 = pneg %p777
      // Predicated region
      $region160: #{control_transformer_forward.1} parent=5 // pred_check
        _
      $region161: #{control_transformer_forward.1} parent=5 // pred_check_branch
        %780 = sbr.rel (%p777) target = $region163
      $region162: #{control_transformer_forward.1} parent=5 // pred_region
        %s781 = ssub.s32 %s24, 1
        %s782 = sand.u32 %s173, 1
        %s783 = sand.u32 %s173, 1
        %s784 = smul.addr %s783, 256
        %s785 = scalar_lea.vmem [#allocation2], %s784
        // Predicated region
        $region164: #{control_transformer_forward.1} parent=162 // pred_check
          %p786 = pneg %p186
        $region165: #{control_transformer_forward.1} parent=162 // pred_check_branch
          %788 = sbr.rel (%p786) target = $region167
        $region166: #{control_transformer_forward.1} parent=162 // pred_region
          _
        $region167: #{control_transformer_forward.1} parent=162 // pred_fallthru
          _
        %s789 = sand.u32 %s199, 1
        %s790 = sand.u32 %s199, 1
        %s791 = smul.addr %s790, 32
        %s792 = scalar_lea.vmem [#allocation3], %s791
        // Predicated region
        $region168: #{control_transformer_forward.1} parent=162 // pred_check
          %p793 = pneg %p212
        $region169: #{control_transformer_forward.1} parent=162 // pred_check_branch
          %795 = sbr.rel (%p793) target = $region171
        $region170: #{control_transformer_forward.1} parent=162 // pred_region
          _
        $region171: #{control_transformer_forward.1} parent=162 // pred_fallthru
          _
        %s796 = smul.u32 8, %s29
        %p797 = scmp.lt.s32.totalorder %s796, 15
        %s798 = scalar_select %p797, %s796, 15
        %s799 = smul.addr %s798, 8
        %s800 = scalar_lea.vmem %s0, %s799
        %p801 = pneg %p50
        %p802 = pneg %p47
        %s803 = smul.u32 4, %s29
        %p804 = scmp.lt.s32.totalorder %s803, 7
        %s805 = scalar_select %p804, %s803, 7
        %s806 = smul.addr %s805, 2
        %s807 = smul.addr %s806, 8
        %s808 = scalar_lea.vmem %s1, %s807
        %p809 = pneg %p76
        %p810 = pneg %p73
        %p811 = pneg %p97
        %p812 = pneg %p94
        %p813 = pneg %p118
        %p814 = pneg %p115
        %p815 = pneg %p139
        %p816 = pneg %p136
        %p817 = pneg %p160
        %p818 = pneg %p157
        %s819 = sand.u32 %s173, 1
        %s820 = sand.u32 %s173, 1
        %s821 = smul.addr %s820, 256
        %s822 = scalar_lea.vmem [#allocation2], %s821
        %p823 = pneg %p186
        %p824 = pneg %p183
        %s825 = sand.u32 %s199, 1
        %s826 = sand.u32 %s199, 1
        %s827 = smul.addr %s826, 32
        %s828 = scalar_lea.vmem [#allocation3], %s827
        %p829 = pneg %p212
        %p830 = pneg %p209
        %p831 = pneg %p233
        %p832 = pneg %p230
        %p833 = pneg %p254
        %p834 = pneg %p251
        %p835 = pneg %p275
        %p836 = pneg %p272
        %p837 = pneg %p296
        %p838 = pneg %p293
        %p839 = pneg %p317
        %p840 = pneg %p314
        %p841 = pneg %p338
        %p842 = pneg %p335
        %p843 = pneg %p359
        %p844 = pneg %p356
        %p845 = pneg %p380
        %p846 = pneg %p377
        %p847 = pneg %p401
        %p848 = pneg %p398
        %p849 = pneg %p422
        %p850 = pneg %p419
        %p851 = pneg %p448
        %p852 = pneg %p445
        %s853 = smul.u32 8, %s29
        %p854 = scmp.lt.s32.totalorder %s853, 15
        %s855 = scalar_select %p854, %s853, 15
        %s856 = smul.addr %s855, 8
        %s857 = scalar_lea.vmem %s18, %s856
        %s858 = smul.u32 8, %s29
        %p859 = scmp.lt.s32.totalorder %s858, 15
        %s860 = scalar_select %p859, %s858, 15
        %s861 = smul.addr %s860, 8
        %s862 = scalar_lea.vmem %s0, %s861
        %s863 = smul.u32 8, %s29
        %s864 = smul.u32 4, %s29
        %p865 = scmp.lt.s32.totalorder %s864, 7
        %s866 = scalar_select %p865, %s864, 7
        %s867 = smul.addr %s866, 2
        %s868 = smul.addr %s867, 8
        %s869 = scalar_lea.vmem %s1, %s868
        %s870 = smul.u32 4, %s29
        %s871 = smul.u32 4, %s29
        %s872 = smul.u32 4, %s29
        %s873 = smul.u32 8, %s29
        %p874 = scmp.lt.s32.totalorder %s873, 15
        %s875 = scalar_select %p874, %s873, 15
        %s876 = smul.addr %s875, 8
        %s877 = scalar_lea.vmem %s18, %s876
        %s878 = smul.u32 8, %s29
        %v879 = vld [vmem:[%s862] sm:$0xff]
        %v880 = vld [vmem:[%s862 + $0x8] sm:$0xff]
        %v881 = vld [vmem:[%s862 + $0x10] sm:$0xff]
        %v882 = vld [vmem:[%s862 + $0x18] sm:$0xff]
        %v883 = vld [vmem:[%s862 + $0x20] sm:$0xff]
        %v884 = vld [vmem:[%s862 + $0x28] sm:$0xff]
        %v885 = vld [vmem:[%s862 + $0x30] sm:$0xff]
        %v886 = vld [vmem:[%s862 + $0x38] sm:$0xff]
        %v887 = vld [vmem:[%s869] sm:$0xff]
        %v888 = vld [vmem:[%s869 + $0x8] sm:$0xff]
        %v889 = vld [vmem:[%s869 + $0x10] sm:$0xff]
        %v890 = vld [vmem:[%s869 + $0x18] sm:$0xff]
        %v891 = vld [vmem:[%s869 + $0x20] sm:$0xff]
        %v892 = vld [vmem:[%s869 + $0x28] sm:$0xff]
        %v893 = vld [vmem:[%s869 + $0x30] sm:$0xff]
        %v894 = vld [vmem:[%s869 + $0x38] sm:$0xff]
        %v895 = vld [vmem:[%s2] sm:$0x1]
        %v896 = vld [vmem:[%s2 + $0x1] sm:$0x1]
        %v897 = vld [vmem:[%s3] sm:$0x1]
        %v898 = vld [vmem:[%s3 + $0x1] sm:$0x1]
        %v899 = vld [vmem:[%s4] sm:$0xff]
        %v900 = vld [vmem:[%s4 + $0x8] sm:$0xff]
        %v901 = vld [vmem:[%s4 + $0x10] sm:$0xff]
        %v902 = vld [vmem:[%s4 + $0x18] sm:$0xff]
        %v903 = vld [vmem:[%s4 + $0x20] sm:$0xff]
        %v904 = vld [vmem:[%s4 + $0x28] sm:$0xff]
        %v905 = vld [vmem:[%s4 + $0x30] sm:$0xff]
        %v906 = vld [vmem:[%s4 + $0x38] sm:$0xff]
        %v907 = vld [vmem:[%s5] sm:$0x1]
        %v908 = vld [vmem:[%s5 + $0x1] sm:$0x1]
        %v909 = vld [vmem:[%s785] sm:$0xff]
        %v910 = vld [vmem:[%s785 + $0x8] sm:$0xff]
        %v911 = vld [vmem:[%s785 + $0x10] sm:$0xff]
        %v912 = vld [vmem:[%s785 + $0x18] sm:$0xff]
        %v913 = vld [vmem:[%s785 + $0x20] sm:$0xff]
        %v914 = vld [vmem:[%s785 + $0x28] sm:$0xff]
        %v915 = vld [vmem:[%s785 + $0x30] sm:$0xff]
        %v916 = vld [vmem:[%s785 + $0x38] sm:$0xff]
        %v917 = vld [vmem:[%s785 + $0x40] sm:$0xff]
        %v918 = vld [vmem:[%s785 + $0x48] sm:$0xff]
        %v919 = vld [vmem:[%s785 + $0x50] sm:$0xff]
        %v920 = vld [vmem:[%s785 + $0x58] sm:$0xff]
        %v921 = vld [vmem:[%s785 + $0x60] sm:$0xff]
        %v922 = vld [vmem:[%s785 + $0x68] sm:$0xff]
        %v923 = vld [vmem:[%s785 + $0x70] sm:$0xff]
        %v924 = vld [vmem:[%s785 + $0x78] sm:$0xff]
        %v925 = vld [vmem:[%s785 + $0x80] sm:$0xff]
        %v926 = vld [vmem:[%s785 + $0x88] sm:$0xff]
        %v927 = vld [vmem:[%s785 + $0x90] sm:$0xff]
        %v928 = vld [vmem:[%s785 + $0x98] sm:$0xff]
        %v929 = vld [vmem:[%s785 + $0xa0] sm:$0xff]
        %v930 = vld [vmem:[%s785 + $0xa8] sm:$0xff]
        %v931 = vld [vmem:[%s785 + $0xb0] sm:$0xff]
        %v932 = vld [vmem:[%s785 + $0xb8] sm:$0xff]
        %v933 = vld [vmem:[%s785 + $0xc0] sm:$0xff]
        %v934 = vld [vmem:[%s785 + $0xc8] sm:$0xff]
        %v935 = vld [vmem:[%s785 + $0xd0] sm:$0xff]
        %v936 = vld [vmem:[%s785 + $0xd8] sm:$0xff]
        %v937 = vld [vmem:[%s785 + $0xe0] sm:$0xff]
        %v938 = vld [vmem:[%s785 + $0xe8] sm:$0xff]
        %v939 = vld [vmem:[%s785 + $0xf0] sm:$0xff]
        %v940 = vld [vmem:[%s785 + $0xf8] sm:$0xff]
        %v941 = vld [vmem:[%s792] sm:$0xf]
        %v942 = vld [vmem:[%s792 + $0x4] sm:$0xf]
        %v943 = vld [vmem:[%s792 + $0x8] sm:$0xf]
        %v944 = vld [vmem:[%s792 + $0xc] sm:$0xf]
        %v945 = vld [vmem:[%s792 + $0x10] sm:$0xf]
        %v946 = vld [vmem:[%s792 + $0x14] sm:$0xf]
        %v947 = vld [vmem:[%s792 + $0x18] sm:$0xf]
        %v948 = vld [vmem:[%s792 + $0x1c] sm:$0xf]
        %v949 = vld [vmem:[%s8] sm:$0xff]
        %v950 = vld [vmem:[%s8 + $0x8] sm:$0xff]
        %v951 = vld [vmem:[%s8 + $0x10] sm:$0xff]
        %v952 = vld [vmem:[%s8 + $0x18] sm:$0xff]
        %v953 = vld [vmem:[%s8 + $0x20] sm:$0xff]
        %v954 = vld [vmem:[%s8 + $0x28] sm:$0xff]
        %v955 = vld [vmem:[%s8 + $0x30] sm:$0xff]
        %v956 = vld [vmem:[%s8 + $0x38] sm:$0xff]
        %v957 = vld [vmem:[%s9] sm:$0x1]
        %v958 = vld [vmem:[%s9 + $0x1] sm:$0x1]
        %v959 = vld [vmem:[%s10] sm:$0x1]
        %v960 = vld [vmem:[%s10 + $0x1] sm:$0x1]
        %v961 = vld [vmem:[%s11] sm:$0x1]
        %v962 = vld [vmem:[%s11 + $0x1] sm:$0x1]
        %v963 = vld [vmem:[%s12] sm:$0x1]
        %v964 = vld [vmem:[%s12 + $0x1] sm:$0x1]
        %v965 = vld [vmem:[%s13] sm:$0xff]
        %v966 = vld [vmem:[%s13 + $0x8] sm:$0xff]
        %v967 = vld [vmem:[%s13 + $0x10] sm:$0xff]
        %v968 = vld [vmem:[%s13 + $0x18] sm:$0xff]
        %v969 = vld [vmem:[%s13 + $0x20] sm:$0xff]
        %v970 = vld [vmem:[%s13 + $0x28] sm:$0xff]
        %v971 = vld [vmem:[%s13 + $0x30] sm:$0xff]
        %v972 = vld [vmem:[%s13 + $0x38] sm:$0xff]
        %v973 = vld [vmem:[%s14] sm:$0x1]
        %v974 = vld [vmem:[%s14 + $0x1] sm:$0x1]
        %v975 = vld [vmem:[%s15] sm:$0xff]
        %v976 = vld [vmem:[%s15 + $0x8] sm:$0xff]
        %v977 = vld [vmem:[%s15 + $0x10] sm:$0xff]
        %v978 = vld [vmem:[%s15 + $0x18] sm:$0xff]
        %v979 = vld [vmem:[%s15 + $0x20] sm:$0xff]
        %v980 = vld [vmem:[%s15 + $0x28] sm:$0xff]
        %v981 = vld [vmem:[%s15 + $0x30] sm:$0xff]
        %v982 = vld [vmem:[%s15 + $0x38] sm:$0xff]
        %v983 = vld [vmem:[%s15 + $0x40] sm:$0xff]
        %v984 = vld [vmem:[%s15 + $0x48] sm:$0xff]
        %v985 = vld [vmem:[%s15 + $0x50] sm:$0xff]
        %v986 = vld [vmem:[%s15 + $0x58] sm:$0xff]
        %v987 = vld [vmem:[%s15 + $0x60] sm:$0xff]
        %v988 = vld [vmem:[%s15 + $0x68] sm:$0xff]
        %v989 = vld [vmem:[%s15 + $0x70] sm:$0xff]
        %v990 = vld [vmem:[%s15 + $0x78] sm:$0xff]
        %v991 = vld [vmem:[%s15 + $0x80] sm:$0xff]
        %v992 = vld [vmem:[%s15 + $0x88] sm:$0xff]
        %v993 = vld [vmem:[%s15 + $0x90] sm:$0xff]
        %v994 = vld [vmem:[%s15 + $0x98] sm:$0xff]
        %v995 = vld [vmem:[%s15 + $0xa0] sm:$0xff]
        %v996 = vld [vmem:[%s15 + $0xa8] sm:$0xff]
        %v997 = vld [vmem:[%s15 + $0xb0] sm:$0xff]
        %v998 = vld [vmem:[%s15 + $0xb8] sm:$0xff]
        %v999 = vld [vmem:[%s15 + $0xc0] sm:$0xff]
        %v1000 = vld [vmem:[%s15 + $0xc8] sm:$0xff]
        %v1001 = vld [vmem:[%s15 + $0xd0] sm:$0xff]
        %v1002 = vld [vmem:[%s15 + $0xd8] sm:$0xff]
        %v1003 = vld [vmem:[%s15 + $0xe0] sm:$0xff]
        %v1004 = vld [vmem:[%s15 + $0xe8] sm:$0xff]
        %v1005 = vld [vmem:[%s15 + $0xf0] sm:$0xff]
        %v1006 = vld [vmem:[%s15 + $0xf8] sm:$0xff]
        %v1007 = vld [vmem:[%s16] sm:$0x1]
        %v1008 = vld [vmem:[%s16 + $0x1] sm:$0x1]
        %v1009 = vld [vmem:[%s17] sm:$0x1]
        %v1010 = vld [vmem:[%s17 + $0x1] sm:$0x1]
        %vm1011 = vcmask 261120
        %v1012 = vsel %vm1011, %v879, 0.0
        %1013 = vadd.xlane.f32.xlu0 %v1012
        %v1014 = vpop.xlane.xlu0 %1013
        %v1015 = vsel %vm1011, %v880, 0.0
        %1016 = vadd.xlane.f32.xlu0 %v1015
        %v1017 = vpop.xlane.xlu0 %1016
        %v1018 = vsel %vm1011, %v881, 0.0
        %1019 = vadd.xlane.f32.xlu0 %v1018
        %v1020 = vpop.xlane.xlu0 %1019
        %v1021 = vsel %vm1011, %v882, 0.0
        %1022 = vadd.xlane.f32.xlu0 %v1021
        %v1023 = vpop.xlane.xlu0 %1022
        %v1024 = vsel %vm1011, %v883, 0.0
        %1025 = vadd.xlane.f32.xlu0 %v1024
        %v1026 = vpop.xlane.xlu0 %1025
        %v1027 = vsel %vm1011, %v884, 0.0
        %1028 = vadd.xlane.f32.xlu0 %v1027
        %v1029 = vpop.xlane.xlu0 %1028
        %v1030 = vsel %vm1011, %v885, 0.0
        %1031 = vadd.xlane.f32.xlu0 %v1030
        %v1032 = vpop.xlane.xlu0 %1031
        %v1033 = vsel %vm1011, %v886, 0.0
        %1034 = vadd.xlane.f32.xlu0 %v1033
        %v1035 = vpop.xlane.xlu0 %1034
        %v1036 = vrcp.pop 32.0
        %v1037 = vmul.f32 32.0, %v1036
        %v1038 = vsub.f32 1.0, %v1037
        %v1039 = vmul.f32 %v1036, %v1038
        %v1040 = vadd.f32 %v1036, %v1039
        %vm1041 = vweird.f32 %v1036
        %v1042 = vsel %vm1041, %v1036, %v1040
        %v1043 = vmul.f32 %v1014, %v1042
        %v1044 = vmul.f32 %v1017, %v1042
        %v1045 = vmul.f32 %v1020, %v1042
        %v1046 = vmul.f32 %v1023, %v1042
        %v1047 = vmul.f32 %v1026, %v1042
        %v1048 = vmul.f32 %v1029, %v1042
        %v1049 = vmul.f32 %v1032, %v1042
        %v1050 = vmul.f32 %v1035, %v1042
        %v1051 = vsub.f32 %v879, %v1043
        %v1052 = vsub.f32 %v880, %v1044
        %v1053 = vsub.f32 %v881, %v1045
        %v1054 = vsub.f32 %v882, %v1046
        %v1055 = vsub.f32 %v883, %v1047
        %v1056 = vsub.f32 %v884, %v1048
        %v1057 = vsub.f32 %v885, %v1049
        %v1058 = vsub.f32 %v886, %v1050
        %v1059 = vmul.f32 %v1051, %v1051
        %v1060 = vmul.f32 %v1052, %v1052
        %v1061 = vmul.f32 %v1053, %v1053
        %v1062 = vmul.f32 %v1054, %v1054
        %v1063 = vmul.f32 %v1055, %v1055
        %v1064 = vmul.f32 %v1056, %v1056
        %v1065 = vmul.f32 %v1057, %v1057
        %v1066 = vmul.f32 %v1058, %v1058
        %v1067 = vsel %vm1011, %v1059, 0.0
        %1068 = vadd.xlane.f32.xlu0 %v1067
        %v1069 = vpop.xlane.xlu0 %1068
        %v1070 = vsel %vm1011, %v1060, 0.0
        %1071 = vadd.xlane.f32.xlu0 %v1070
        %v1072 = vpop.xlane.xlu0 %1071
        %v1073 = vsel %vm1011, %v1061, 0.0
        %1074 = vadd.xlane.f32.xlu0 %v1073
        %v1075 = vpop.xlane.xlu0 %1074
        %v1076 = vsel %vm1011, %v1062, 0.0
        %1077 = vadd.xlane.f32.xlu0 %v1076
        %v1078 = vpop.xlane.xlu0 %1077
        %v1079 = vsel %vm1011, %v1063, 0.0
        %1080 = vadd.xlane.f32.xlu0 %v1079
        %v1081 = vpop.xlane.xlu0 %1080
        %v1082 = vsel %vm1011, %v1064, 0.0
        %1083 = vadd.xlane.f32.xlu0 %v1082
        %v1084 = vpop.xlane.xlu0 %1083
        %v1085 = vsel %vm1011, %v1065, 0.0
        %1086 = vadd.xlane.f32.xlu0 %v1085
        %v1087 = vpop.xlane.xlu0 %1086
        %v1088 = vsel %vm1011, %v1066, 0.0
        %1089 = vadd.xlane.f32.xlu0 %v1088
        %v1090 = vpop.xlane.xlu0 %1089
        %v1091 = vmul.f32 %v1069, %v1042
        %v1092 = vmul.f32 %v1072, %v1042
        %v1093 = vmul.f32 %v1075, %v1042
        %v1094 = vmul.f32 %v1078, %v1042
        %v1095 = vmul.f32 %v1081, %v1042
        %v1096 = vmul.f32 %v1084, %v1042
        %v1097 = vmul.f32 %v1087, %v1042
        %v1098 = vmul.f32 %v1090, %v1042
        %v1099 = vadd.f32 %v1091, 1e-05
        %v1100 = vadd.f32 %v1092, 1e-05
        %v1101 = vadd.f32 %v1093, 1e-05
        %v1102 = vadd.f32 %v1094, 1e-05
        %v1103 = vadd.f32 %v1095, 1e-05
        %v1104 = vadd.f32 %v1096, 1e-05
        %v1105 = vadd.f32 %v1097, 1e-05
        %v1106 = vadd.f32 %v1098, 1e-05
        %v1107 = vrsqrt.pop %v1099
        %v1108 = vmul.f32 %v1107, %v1099
        %v1109 = vmul.f32 %v1108, %v1107
        %v1110 = vmul.f32 0.5, %v1109
        %v1111 = vsub.f32 1.5, %v1110
        %v1112 = vmul.f32 %v1107, %v1111
        %vm1113 = vweird.f32 %v1099
        %vm1114 = vweird.f32 %v1107
        %vm1115 = vmor %vm1113, %vm1114
        %v1116 = vsel %vm1115, %v1107, %v1112
        %v1117 = vrsqrt.pop %v1100
        %v1118 = vmul.f32 %v1117, %v1100
        %v1119 = vmul.f32 %v1118, %v1117
        %v1120 = vmul.f32 0.5, %v1119
        %v1121 = vsub.f32 1.5, %v1120
        %v1122 = vmul.f32 %v1117, %v1121
        %vm1123 = vweird.f32 %v1100
        %vm1124 = vweird.f32 %v1117
        %vm1125 = vmor %vm1123, %vm1124
        %v1126 = vsel %vm1125, %v1117, %v1122
        %v1127 = vrsqrt.pop %v1101
        %v1128 = vmul.f32 %v1127, %v1101
        %v1129 = vmul.f32 %v1128, %v1127
        %v1130 = vmul.f32 0.5, %v1129
        %v1131 = vsub.f32 1.5, %v1130
        %v1132 = vmul.f32 %v1127, %v1131
        %vm1133 = vweird.f32 %v1101
        %vm1134 = vweird.f32 %v1127
        %vm1135 = vmor %vm1133, %vm1134
        %v1136 = vsel %vm1135, %v1127, %v1132
        %v1137 = vrsqrt.pop %v1102
        %v1138 = vmul.f32 %v1137, %v1102
        %v1139 = vmul.f32 %v1138, %v1137
        %v1140 = vmul.f32 0.5, %v1139
        %v1141 = vsub.f32 1.5, %v1140
        %v1142 = vmul.f32 %v1137, %v1141
        %vm1143 = vweird.f32 %v1102
        %vm1144 = vweird.f32 %v1137
        %vm1145 = vmor %vm1143, %vm1144
        %v1146 = vsel %vm1145, %v1137, %v1142
        %v1147 = vrsqrt.pop %v1103
        %v1148 = vmul.f32 %v1147, %v1103
        %v1149 = vmul.f32 %v1148, %v1147
        %v1150 = vmul.f32 0.5, %v1149
        %v1151 = vsub.f32 1.5, %v1150
        %v1152 = vmul.f32 %v1147, %v1151
        %vm1153 = vweird.f32 %v1103
        %vm1154 = vweird.f32 %v1147
        %vm1155 = vmor %vm1153, %vm1154
        %v1156 = vsel %vm1155, %v1147, %v1152
        %v1157 = vrsqrt.pop %v1104
        %v1158 = vmul.f32 %v1157, %v1104
        %v1159 = vmul.f32 %v1158, %v1157
        %v1160 = vmul.f32 0.5, %v1159
        %v1161 = vsub.f32 1.5, %v1160
        %v1162 = vmul.f32 %v1157, %v1161
        %vm1163 = vweird.f32 %v1104
        %vm1164 = vweird.f32 %v1157
        %vm1165 = vmor %vm1163, %vm1164
        %v1166 = vsel %vm1165, %v1157, %v1162
        %v1167 = vrsqrt.pop %v1105
        %v1168 = vmul.f32 %v1167, %v1105
        %v1169 = vmul.f32 %v1168, %v1167
        %v1170 = vmul.f32 0.5, %v1169
        %v1171 = vsub.f32 1.5, %v1170
        %v1172 = vmul.f32 %v1167, %v1171
        %vm1173 = vweird.f32 %v1105
        %vm1174 = vweird.f32 %v1167
        %vm1175 = vmor %vm1173, %vm1174
        %v1176 = vsel %vm1175, %v1167, %v1172
        %v1177 = vrsqrt.pop %v1106
        %v1178 = vmul.f32 %v1177, %v1106
        %v1179 = vmul.f32 %v1178, %v1177
        %v1180 = vmul.f32 0.5, %v1179
        %v1181 = vsub.f32 1.5, %v1180
        %v1182 = vmul.f32 %v1177, %v1181
        %vm1183 = vweird.f32 %v1106
        %vm1184 = vweird.f32 %v1177
        %vm1185 = vmor %vm1183, %vm1184
        %v1186 = vsel %vm1185, %v1177, %v1182
        %v1187 = vmul.f32 %v1051, %v1116
        %v1188 = vmul.f32 %v1052, %v1126
        %v1189 = vmul.f32 %v1053, %v1136
        %v1190 = vmul.f32 %v1054, %v1146
        %v1191 = vmul.f32 %v1055, %v1156
        %v1192 = vmul.f32 %v1056, %v1166
        %v1193 = vmul.f32 %v1057, %v1176
        %v1194 = vmul.f32 %v1058, %v1186
        %v1196 = vperm.slane %v895, 0
        %v1198 = vmul.f32 %v1187, %v1196
        %v1199 = vmul.f32 %v1188, %v1196
        %v1200 = vmul.f32 %v1189, %v1196
        %v1201 = vmul.f32 %v1190, %v1196
        %v1202 = vmul.f32 %v1191, %v1196
        %v1203 = vmul.f32 %v1192, %v1196
        %v1204 = vmul.f32 %v1193, %v1196
        %v1205 = vmul.f32 %v1194, %v1196
        %v1207 = vperm.slane %v897, 0
        %v1209 = vadd.f32 %v1198, %v1207
        %v1210 = vadd.f32 %v1199, %v1207
        %v1211 = vadd.f32 %v1200, %v1207
        %v1212 = vadd.f32 %v1201, %v1207
        %v1213 = vadd.f32 %v1202, %v1207
        %v1214 = vadd.f32 %v1203, %v1207
        %v1215 = vadd.f32 %v1204, %v1207
        %v1216 = vadd.f32 %v1205, %v1207
        %v1218 = vperm.slane %v907, 0
        %v1221 = vsel %vm1011, %v1209, 0
        %v1224 = vsel %vm1011, %v1210, 0
        %v1227 = vsel %vm1011, %v1211, 0
        %v1230 = vsel %vm1011, %v1212, 0
        %v1233 = vsel %vm1011, %v1213, 0
        %v1236 = vsel %vm1011, %v1214, 0
        %v1239 = vsel %vm1011, %v1215, 0
        %v1242 = vsel %vm1011, %v1216, 0
        %1244 = vmatpush.msra.mxu0 0.0
        %1245 = vmatpush.msra.mxu0 0.0
        %1246 = vmatpush.msra.mxu0 0.0
        %1247 = vmatpush.msra.mxu0 0.0
        %1248 = vmatpush.msra.mxu0 0.0
        %1249 = vmatpush.msra.mxu0 0.0
        %1250 = vmatpush.msra.mxu0 0.0
        %1251 = vmatpush.msra.mxu0 0.0
        %1252 = vmatpush.msra.mxu0 0.0
        %1253 = vmatpush.msra.mxu0 0.0
        %1254 = vmatpush.msra.mxu0 0.0
        %1255 = vmatpush.msra.mxu0 0.0
        %1256 = vmatpush.msra.mxu0 %v902
        %1257 = vmatpush.msra.mxu0 %v901
        %1258 = vmatpush.msra.mxu0 %v900
        %1259 = vmatpush.msra.mxu0 %v899
        %1260 = vmatmul.f32.gmra.mxu0 %v1221
        %v1261 = vpop.f32.mrf.mxu0
        %v1262 = vadd.f32 %v1218, %v1261
        %1263 = vmatmul.f32.gmra.mxu0 %v1224
        %v1264 = vpop.f32.mrf.mxu0
        %v1265 = vadd.f32 %v1218, %v1264
        %1266 = vmatmul.f32.gmra.mxu0 %v1227
        %v1267 = vpop.f32.mrf.mxu0
        %v1268 = vadd.f32 %v1218, %v1267
        %1269 = vmatmul.f32.gmra.mxu0 %v1230
        %v1270 = vpop.f32.mrf.mxu0
        %v1271 = vadd.f32 %v1218, %v1270
        %1272 = vmatmul.f32.gmra.mxu0 %v1233
        %v1273 = vpop.f32.mrf.mxu0
        %v1274 = vadd.f32 %v1218, %v1273
        %1275 = vmatmul.f32.gmra.mxu0 %v1236
        %v1276 = vpop.f32.mrf.mxu0
        %v1277 = vadd.f32 %v1218, %v1276
        %1278 = vmatmul.f32.gmra.mxu0 %v1239
        %v1279 = vpop.f32.mrf.mxu0
        %v1280 = vadd.f32 %v1218, %v1279
        %1281 = vmatmul.f32.gmra.mxu0 %v1242
        %v1282 = vpop.f32.mrf.mxu0
        %v1283 = vadd.f32 %v1218, %v1282
        %1284 = vdwg.mxu0
        %1285 = vmatpush.msra.mxu0 0.0
        %1286 = vmatpush.msra.mxu0 0.0
        %1287 = vmatpush.msra.mxu0 0.0
        %1288 = vmatpush.msra.mxu0 0.0
        %1289 = vmatpush.msra.mxu0 0.0
        %1290 = vmatpush.msra.mxu0 0.0
        %1291 = vmatpush.msra.mxu0 0.0
        %1292 = vmatpush.msra.mxu0 0.0
        %1293 = vmatpush.msra.mxu0 0.0
        %1294 = vmatpush.msra.mxu0 0.0
        %1295 = vmatpush.msra.mxu0 0.0
        %1296 = vmatpush.msra.mxu0 0.0
        %1297 = vmatpush.msra.mxu0 %v912
        %1298 = vmatpush.msra.mxu0 %v911
        %1299 = vmatpush.msra.mxu0 %v910
        %1300 = vmatpush.msra.mxu0 %v909
        %1301 = vmatmul.f32.gmra.mxu0 %v1221
        %v1302 = vpop.f32.mrf.mxu0
        %v1303 = vadd.f32 0.0, %v1302
        %1304 = vmatmul.f32.gmra.mxu0 %v1224
        %v1305 = vpop.f32.mrf.mxu0
        %v1306 = vadd.f32 0.0, %v1305
        %1307 = vdwg.mxu0
        %1308 = vmatpush.msra.mxu0 0.0
        %1309 = vmatpush.msra.mxu0 0.0
        %1310 = vmatpush.msra.mxu0 0.0
        %1311 = vmatpush.msra.mxu0 0.0
        %1312 = vmatpush.msra.mxu0 0.0
        %1313 = vmatpush.msra.mxu0 0.0
        %1314 = vmatpush.msra.mxu0 0.0
        %1315 = vmatpush.msra.mxu0 0.0
        %1316 = vmatpush.msra.mxu0 0.0
        %1317 = vmatpush.msra.mxu0 0.0
        %1318 = vmatpush.msra.mxu0 0.0
        %1319 = vmatpush.msra.mxu0 0.0
        %1320 = vmatpush.msra.mxu0 %v916
        %1321 = vmatpush.msra.mxu0 %v915
        %1322 = vmatpush.msra.mxu0 %v914
        %1323 = vmatpush.msra.mxu0 %v913
        %1324 = vmatmul.f32.gmra.mxu0 %v1227
        %v1325 = vpop.f32.mrf.mxu0
        %v1326 = vadd.f32 0.0, %v1325
        %1327 = vmatmul.f32.gmra.mxu0 %v1230
        %v1328 = vpop.f32.mrf.mxu0
        %v1329 = vadd.f32 0.0, %v1328
        %1330 = vdwg.mxu0
        %1331 = vmatpush.msra.mxu0 0.0
        %1332 = vmatpush.msra.mxu0 0.0
        %1333 = vmatpush.msra.mxu0 0.0
        %1334 = vmatpush.msra.mxu0 0.0
        %1335 = vmatpush.msra.mxu0 0.0
        %1336 = vmatpush.msra.mxu0 0.0
        %1337 = vmatpush.msra.mxu0 0.0
        %1338 = vmatpush.msra.mxu0 0.0
        %1339 = vmatpush.msra.mxu0 0.0
        %1340 = vmatpush.msra.mxu0 0.0
        %1341 = vmatpush.msra.mxu0 0.0
        %1342 = vmatpush.msra.mxu0 0.0
        %1343 = vmatpush.msra.mxu0 %v920
        %1344 = vmatpush.msra.mxu0 %v919
        %1345 = vmatpush.msra.mxu0 %v918
        %1346 = vmatpush.msra.mxu0 %v917
        %1347 = vmatmul.f32.gmra.mxu0 %v1233
        %v1348 = vpop.f32.mrf.mxu0
        %v1349 = vadd.f32 0.0, %v1348
        %1350 = vmatmul.f32.gmra.mxu0 %v1236
        %v1351 = vpop.f32.mrf.mxu0
        %v1352 = vadd.f32 0.0, %v1351
        %1353 = vdwg.mxu0
        %1354 = vmatpush.msra.mxu0 0.0
        %1355 = vmatpush.msra.mxu0 0.0
        %1356 = vmatpush.msra.mxu0 0.0
        %1357 = vmatpush.msra.mxu0 0.0
        %1358 = vmatpush.msra.mxu0 0.0
        %1359 = vmatpush.msra.mxu0 0.0
        %1360 = vmatpush.msra.mxu0 0.0
        %1361 = vmatpush.msra.mxu0 0.0
        %1362 = vmatpush.msra.mxu0 0.0
        %1363 = vmatpush.msra.mxu0 0.0
        %1364 = vmatpush.msra.mxu0 0.0
        %1365 = vmatpush.msra.mxu0 0.0
        %1366 = vmatpush.msra.mxu0 %v924
        %1367 = vmatpush.msra.mxu0 %v923
        %1368 = vmatpush.msra.mxu0 %v922
        %1369 = vmatpush.msra.mxu0 %v921
        %1370 = vmatmul.f32.gmra.mxu0 %v1239
        %v1371 = vpop.f32.mrf.mxu0
        %v1372 = vadd.f32 0.0, %v1371
        %1373 = vmatmul.f32.gmra.mxu0 %v1242
        %v1374 = vpop.f32.mrf.mxu0
        %v1375 = vadd.f32 0.0, %v1374
        %1376 = vdwg.mxu0
        %vm1377 = vcmask 31744
        %v1379 = vsel %vm1377, %v1303, 0
        %v1382 = vsel %vm1377, %v1306, 0
        %vm1384 = vcmask 1043456
        %v1386 = vsel %vm1384, %v941, 0
        %1388 = vmatpush.msra.mxu0 0.0
        %1389 = vmatpush.msra.mxu0 0.0
        %1390 = vmatpush.msra.mxu0 0.0
        %1391 = vmatpush.msra.mxu0 0.0
        %1392 = vmatpush.msra.mxu0 0.0
        %1393 = vmatpush.msra.mxu0 0.0
        %1394 = vmatpush.msra.mxu0 0.0
        %1395 = vmatpush.msra.mxu0 0.0
        %1396 = vmatpush.msra.mxu0 0.0
        %1397 = vmatpush.msra.mxu0 0.0
        %1398 = vmatpush.msra.mxu0 0.0
        %1399 = vmatpush.msra.mxu0 0.0
        %1400 = vmatpush.msra.mxu0 0.0
        %1401 = vmatpush.msra.mxu0 0.0
        %1402 = vmatpush.msra.mxu0 0.0
        %1403 = vmatpush.msra.mxu0 %v1386
        %1404 = vmatmul.f32.gmra.mxu0 %v1379
        %v1405 = vpop.f32.mrf.mxu0
        %v1406 = vadd.f32 0.0, %v1405
        %1407 = vmatmul.f32.gmra.mxu0 %v1382
        %v1408 = vpop.f32.mrf.mxu0
        %v1409 = vadd.f32 0.0, %v1408
        %1410 = vdwg.mxu0
        %v1412 = vsel %vm1377, %v1326, 0
        %v1415 = vsel %vm1377, %v1329, 0
        %v1418 = vsel %vm1384, %v942, 0
        %1420 = vmatpush.msra.mxu0 0.0
        %1421 = vmatpush.msra.mxu0 0.0
        %1422 = vmatpush.msra.mxu0 0.0
        %1423 = vmatpush.msra.mxu0 0.0
        %1424 = vmatpush.msra.mxu0 0.0
        %1425 = vmatpush.msra.mxu0 0.0
        %1426 = vmatpush.msra.mxu0 0.0
        %1427 = vmatpush.msra.mxu0 0.0
        %1428 = vmatpush.msra.mxu0 0.0
        %1429 = vmatpush.msra.mxu0 0.0
        %1430 = vmatpush.msra.mxu0 0.0
        %1431 = vmatpush.msra.mxu0 0.0
        %1432 = vmatpush.msra.mxu0 0.0
        %1433 = vmatpush.msra.mxu0 0.0
        %1434 = vmatpush.msra.mxu0 0.0
        %1435 = vmatpush.msra.mxu0 %v1418
        %1436 = vmatmul.f32.gmra.mxu0 %v1412
        %v1437 = vpop.f32.mrf.mxu0
        %v1438 = vadd.f32 0.0, %v1437
        %1439 = vmatmul.f32.gmra.mxu0 %v1415
        %v1440 = vpop.f32.mrf.mxu0
        %v1441 = vadd.f32 0.0, %v1440
        %1442 = vdwg.mxu0
        %v1444 = vsel %vm1377, %v1349, 0
        %v1447 = vsel %vm1377, %v1352, 0
        %v1450 = vsel %vm1384, %v943, 0
        %1452 = vmatpush.msra.mxu0 0.0
        %1453 = vmatpush.msra.mxu0 0.0
        %1454 = vmatpush.msra.mxu0 0.0
        %1455 = vmatpush.msra.mxu0 0.0
        %1456 = vmatpush.msra.mxu0 0.0
        %1457 = vmatpush.msra.mxu0 0.0
        %1458 = vmatpush.msra.mxu0 0.0
        %1459 = vmatpush.msra.mxu0 0.0
        %1460 = vmatpush.msra.mxu0 0.0
        %1461 = vmatpush.msra.mxu0 0.0
        %1462 = vmatpush.msra.mxu0 0.0
        %1463 = vmatpush.msra.mxu0 0.0
        %1464 = vmatpush.msra.mxu0 0.0
        %1465 = vmatpush.msra.mxu0 0.0
        %1466 = vmatpush.msra.mxu0 0.0
        %1467 = vmatpush.msra.mxu0 %v1450
        %1468 = vmatmul.f32.gmra.mxu0 %v1444
        %v1469 = vpop.f32.mrf.mxu0
        %v1470 = vadd.f32 0.0, %v1469
        %1471 = vmatmul.f32.gmra.mxu0 %v1447
        %v1472 = vpop.f32.mrf.mxu0
        %v1473 = vadd.f32 0.0, %v1472
        %1474 = vdwg.mxu0
        %v1476 = vsel %vm1377, %v1372, 0
        %v1479 = vsel %vm1377, %v1375, 0
        %v1482 = vsel %vm1384, %v944, 0
        %1484 = vmatpush.msra.mxu0 0.0
        %1485 = vmatpush.msra.mxu0 0.0
        %1486 = vmatpush.msra.mxu0 0.0
        %1487 = vmatpush.msra.mxu0 0.0
        %1488 = vmatpush.msra.mxu0 0.0
        %1489 = vmatpush.msra.mxu0 0.0
        %1490 = vmatpush.msra.mxu0 0.0
        %1491 = vmatpush.msra.mxu0 0.0
        %1492 = vmatpush.msra.mxu0 0.0
        %1493 = vmatpush.msra.mxu0 0.0
        %1494 = vmatpush.msra.mxu0 0.0
        %1495 = vmatpush.msra.mxu0 0.0
        %1496 = vmatpush.msra.mxu0 0.0
        %1497 = vmatpush.msra.mxu0 0.0
        %1498 = vmatpush.msra.mxu0 0.0
        %1499 = vmatpush.msra.mxu0 %v1482
        %1500 = vmatmul.f32.gmra.mxu0 %v1476
        %v1501 = vpop.f32.mrf.mxu0
        %v1502 = vadd.f32 0.0, %v1501
        %1503 = vmatmul.f32.gmra.mxu0 %v1479
        %v1504 = vpop.f32.mrf.mxu0
        %v1505 = vadd.f32 0.0, %v1504
        %1506 = vdwg.mxu0
        %v1507 = vadd.f32 %v1262, %v1406
        %v1508 = vadd.f32 %v1265, %v1409
        %v1509 = vadd.f32 %v1268, %v1438
        %v1510 = vadd.f32 %v1271, %v1441
        %v1511 = vadd.f32 %v1274, %v1470
        %v1512 = vadd.f32 %v1277, %v1473
        %v1513 = vadd.f32 %v1280, %v1502
        %v1514 = vadd.f32 %v1283, %v1505
        %v1515 = vmul.f32 %v1507, 0.35355338
        %v1516 = vmul.f32 %v1508, 0.35355338
        %v1517 = vmul.f32 %v1509, 0.35355338
        %v1518 = vmul.f32 %v1510, 0.35355338
        %v1519 = vmul.f32 %v1511, 0.35355338
        %v1520 = vmul.f32 %v1512, 0.35355338
        %v1521 = vmul.f32 %v1513, 0.35355338
        %v1522 = vmul.f32 %v1514, 0.35355338
        %1525 = vrot.lane.b32.xlu0 %v1507, 96
        %v1526 = vpop.permute.xlu0 %1525
        %1527 = vrot.lane.b32.xlu0 %v1508, 96
        %v1528 = vpop.permute.xlu0 %1527
        %vm1529 = vcmask 64512
        %v1531 = vsel %vm1529, %v1515, 0
        %v1534 = vsel %vm1529, %v1516, 0
        %v1536 = vsel %vm1529, %v1526, 0
        %v1538 = vsel %vm1529, %v1528, 0
        %1540 = vmatpush.xpose.msra.mxu0 0.0
        %1541 = vmatpush.xpose.msra.mxu0 0.0
        %1542 = vmatpush.xpose.msra.mxu0 0.0
        %1543 = vmatpush.xpose.msra.mxu0 0.0
        %1544 = vmatpush.xpose.msra.mxu0 0.0
        %1545 = vmatpush.xpose.msra.mxu0 0.0
        %1546 = vmatpush.xpose.msra.mxu0 0.0
        %1547 = vmatpush.xpose.msra.mxu0 0.0
        %1548 = vmatpush.xpose.msra.mxu0 0.0
        %1549 = vmatpush.xpose.msra.mxu0 0.0
        %1550 = vmatpush.xpose.msra.mxu0 0.0
        %1551 = vmatpush.xpose.msra.mxu0 0.0
        %1552 = vmatpush.xpose.msra.mxu0 0.0
        %1553 = vmatpush.xpose.msra.mxu0 0.0
        %1554 = vmatpush.xpose.msra.mxu0 %v1538
        %1555 = vmatpush.xpose.msra.mxu0 %v1536
        %1556 = vmatmul.f32.gmra.mxu0 %v1531
        %v1557 = vpop.f32.mrf.mxu0
        %v1558 = vadd.f32 %v887, %v1557
        %1559 = vmatmul.f32.gmra.mxu0 %v1534
        %v1560 = vpop.f32.mrf.mxu0
        %v1561 = vadd.f32 %v888, %v1560
        %1562 = vdwg.mxu0
        %1565 = vrot.lane.b32.xlu0 %v1509, 96
        %v1566 = vpop.permute.xlu0 %1565
        %1567 = vrot.lane.b32.xlu0 %v1510, 96
        %v1568 = vpop.permute.xlu0 %1567
        %v1570 = vsel %vm1529, %v1517, 0
        %v1573 = vsel %vm1529, %v1518, 0
        %v1575 = vsel %vm1529, %v1566, 0
        %v1577 = vsel %vm1529, %v1568, 0
        %1579 = vmatpush.xpose.msra.mxu0 0.0
        %1580 = vmatpush.xpose.msra.mxu0 0.0
        %1581 = vmatpush.xpose.msra.mxu0 0.0
        %1582 = vmatpush.xpose.msra.mxu0 0.0
        %1583 = vmatpush.xpose.msra.mxu0 0.0
        %1584 = vmatpush.xpose.msra.mxu0 0.0
        %1585 = vmatpush.xpose.msra.mxu0 0.0
        %1586 = vmatpush.xpose.msra.mxu0 0.0
        %1587 = vmatpush.xpose.msra.mxu0 0.0
        %1588 = vmatpush.xpose.msra.mxu0 0.0
        %1589 = vmatpush.xpose.msra.mxu0 0.0
        %1590 = vmatpush.xpose.msra.mxu0 0.0
        %1591 = vmatpush.xpose.msra.mxu0 0.0
        %1592 = vmatpush.xpose.msra.mxu0 0.0
        %1593 = vmatpush.xpose.msra.mxu0 %v1577
        %1594 = vmatpush.xpose.msra.mxu0 %v1575
        %1595 = vmatmul.f32.gmra.mxu0 %v1570
        %v1596 = vpop.f32.mrf.mxu0
        %v1597 = vadd.f32 %v889, %v1596
        %1598 = vmatmul.f32.gmra.mxu0 %v1573
        %v1599 = vpop.f32.mrf.mxu0
        %v1600 = vadd.f32 %v890, %v1599
        %1601 = vdwg.mxu0
        %1604 = vrot.lane.b32.xlu0 %v1511, 96
        %v1605 = vpop.permute.xlu0 %1604
        %1606 = vrot.lane.b32.xlu0 %v1512, 96
        %v1607 = vpop.permute.xlu0 %1606
        %v1609 = vsel %vm1529, %v1519, 0
        %v1612 = vsel %vm1529, %v1520, 0
        %v1614 = vsel %vm1529, %v1605, 0
        %v1616 = vsel %vm1529, %v1607, 0
        %1618 = vmatpush.xpose.msra.mxu0 0.0
        %1619 = vmatpush.xpose.msra.mxu0 0.0
        %1620 = vmatpush.xpose.msra.mxu0 0.0
        %1621 = vmatpush.xpose.msra.mxu0 0.0
        %1622 = vmatpush.xpose.msra.mxu0 0.0
        %1623 = vmatpush.xpose.msra.mxu0 0.0
        %1624 = vmatpush.xpose.msra.mxu0 0.0
        %1625 = vmatpush.xpose.msra.mxu0 0.0
        %1626 = vmatpush.xpose.msra.mxu0 0.0
        %1627 = vmatpush.xpose.msra.mxu0 0.0
        %1628 = vmatpush.xpose.msra.mxu0 0.0
        %1629 = vmatpush.xpose.msra.mxu0 0.0
        %1630 = vmatpush.xpose.msra.mxu0 0.0
        %1631 = vmatpush.xpose.msra.mxu0 0.0
        %1632 = vmatpush.xpose.msra.mxu0 %v1616
        %1633 = vmatpush.xpose.msra.mxu0 %v1614
        %1634 = vmatmul.f32.gmra.mxu0 %v1609
        %v1635 = vpop.f32.mrf.mxu0
        %v1636 = vadd.f32 %v891, %v1635
        %1637 = vmatmul.f32.gmra.mxu0 %v1612
        %v1638 = vpop.f32.mrf.mxu0
        %v1639 = vadd.f32 %v892, %v1638
        %1640 = vdwg.mxu0
        %1643 = vrot.lane.b32.xlu0 %v1513, 96
        %v1644 = vpop.permute.xlu0 %1643
        %1645 = vrot.lane.b32.xlu0 %v1514, 96
        %v1646 = vpop.permute.xlu0 %1645
        %v1648 = vsel %vm1529, %v1521, 0
        %v1651 = vsel %vm1529, %v1522, 0
        %v1653 = vsel %vm1529, %v1644, 0
        %v1655 = vsel %vm1529, %v1646, 0
        %1657 = vmatpush.xpose.msra.mxu0 0.0
        %1658 = vmatpush.xpose.msra.mxu0 0.0
        %1659 = vmatpush.xpose.msra.mxu0 0.0
        %1660 = vmatpush.xpose.msra.mxu0 0.0
        %1661 = vmatpush.xpose.msra.mxu0 0.0
        %1662 = vmatpush.xpose.msra.mxu0 0.0
        %1663 = vmatpush.xpose.msra.mxu0 0.0
        %1664 = vmatpush.xpose.msra.mxu0 0.0
        %1665 = vmatpush.xpose.msra.mxu0 0.0
        %1666 = vmatpush.xpose.msra.mxu0 0.0
        %1667 = vmatpush.xpose.msra.mxu0 0.0
        %1668 = vmatpush.xpose.msra.mxu0 0.0
        %1669 = vmatpush.xpose.msra.mxu0 0.0
        %1670 = vmatpush.xpose.msra.mxu0 0.0
        %1671 = vmatpush.xpose.msra.mxu0 %v1655
        %1672 = vmatpush.xpose.msra.mxu0 %v1653
        %1673 = vmatmul.f32.gmra.mxu0 %v1648
        %v1674 = vpop.f32.mrf.mxu0
        %v1675 = vadd.f32 %v893, %v1674
        %1676 = vmatmul.f32.gmra.mxu0 %v1651
        %v1677 = vpop.f32.mrf.mxu0
        %v1678 = vadd.f32 %v894, %v1677
        %1679 = vdwg.mxu0
        %vm1680 = vcmask 130048
        %v1681 = vsel %vm1680, %v1558, -inf
        %1682 = vmax.xlane.f32.xlu0 %v1681
        %v1683 = vpop.xlane.xlu0 %1682
        %v1684 = vsel %vm1680, %v1561, -inf
        %1685 = vmax.xlane.f32.xlu0 %v1684
        %v1686 = vpop.xlane.xlu0 %1685
        %v1687 = vsel %vm1680, %v1597, -inf
        %1688 = vmax.xlane.f32.xlu0 %v1687
        %v1689 = vpop.xlane.xlu0 %1688
        %v1690 = vsel %vm1680, %v1600, -inf
        %1691 = vmax.xlane.f32.xlu0 %v1690
        %v1692 = vpop.xlane.xlu0 %1691
        %v1693 = vsel %vm1680, %v1636, -inf
        %1694 = vmax.xlane.f32.xlu0 %v1693
        %v1695 = vpop.xlane.xlu0 %1694
        %v1696 = vsel %vm1680, %v1639, -inf
        %1697 = vmax.xlane.f32.xlu0 %v1696
        %v1698 = vpop.xlane.xlu0 %1697
        %v1699 = vsel %vm1680, %v1675, -inf
        %1700 = vmax.xlane.f32.xlu0 %v1699
        %v1701 = vpop.xlane.xlu0 %1700
        %v1702 = vsel %vm1680, %v1678, -inf
        %1703 = vmax.xlane.f32.xlu0 %v1702
        %v1704 = vpop.xlane.xlu0 %1703
        %v1705 = vsub.f32 %v1558, %v1683
        %v1706 = vsub.f32 %v1561, %v1686
        %v1707 = vsub.f32 %v1597, %v1689
        %v1708 = vsub.f32 %v1600, %v1692
        %v1709 = vsub.f32 %v1636, %v1695
        %v1710 = vsub.f32 %v1639, %v1698
        %v1711 = vsub.f32 %v1675, %v1701
        %v1712 = vsub.f32 %v1678, %v1704
        %v1713 = vmul.f32 %v1705, 1.442695
        %v1714 = vpow.pop %v1713
        %v1715 = vmul.f32 %v1706, 1.442695
        %v1716 = vpow.pop %v1715
        %v1717 = vmul.f32 %v1707, 1.442695
        %v1718 = vpow.pop %v1717
        %v1719 = vmul.f32 %v1708, 1.442695
        %v1720 = vpow.pop %v1719
        %v1721 = vmul.f32 %v1709, 1.442695
        %v1722 = vpow.pop %v1721
        %v1723 = vmul.f32 %v1710, 1.442695
        %v1724 = vpow.pop %v1723
        %v1725 = vmul.f32 %v1711, 1.442695
        %v1726 = vpow.pop %v1725
        %v1727 = vmul.f32 %v1712, 1.442695
        %v1728 = vpow.pop %v1727
        %v1729 = vsel %vm1680, %v1714, 0.0
        %1730 = vadd.xlane.f32.xlu0 %v1729
        %v1731 = vpop.xlane.xlu0 %1730
        %v1732 = vsel %vm1680, %v1716, 0.0
        %1733 = vadd.xlane.f32.xlu0 %v1732
        %v1734 = vpop.xlane.xlu0 %1733
        %v1735 = vsel %vm1680, %v1718, 0.0
        %1736 = vadd.xlane.f32.xlu0 %v1735
        %v1737 = vpop.xlane.xlu0 %1736
        %v1738 = vsel %vm1680, %v1720, 0.0
        %1739 = vadd.xlane.f32.xlu0 %v1738
        %v1740 = vpop.xlane.xlu0 %1739
        %v1741 = vsel %vm1680, %v1722, 0.0
        %1742 = vadd.xlane.f32.xlu0 %v1741
        %v1743 = vpop.xlane.xlu0 %1742
        %v1744 = vsel %vm1680, %v1724, 0.0
        %1745 = vadd.xlane.f32.xlu0 %v1744
        %v1746 = vpop.xlane.xlu0 %1745
        %v1747 = vsel %vm1680, %v1726, 0.0
        %1748 = vadd.xlane.f32.xlu0 %v1747
        %v1749 = vpop.xlane.xlu0 %1748
        %v1750 = vsel %vm1680, %v1728, 0.0
        %1751 = vadd.xlane.f32.xlu0 %v1750
        %v1752 = vpop.xlane.xlu0 %1751
        %v1753 = vrcp.pop %v1731
        %v1754 = vrcp.pop %v1734
        %v1755 = vrcp.pop %v1737
        %v1756 = vrcp.pop %v1740
        %v1757 = vrcp.pop %v1743
        %v1758 = vrcp.pop %v1746
        %v1759 = vrcp.pop %v1749
        %v1760 = vrcp.pop %v1752
        %v1761 = vmul.f32 %v1714, %v1753
        %v1762 = vmul.f32 %v1716, %v1754
        %v1763 = vmul.f32 %v1718, %v1755
        %v1764 = vmul.f32 %v1720, %v1756
        %v1765 = vmul.f32 %v1722, %v1757
        %v1766 = vmul.f32 %v1724, %v1758
        %v1767 = vmul.f32 %v1726, %v1759
        %v1768 = vmul.f32 %v1728, %v1760
        %1769 = vrot.lane.b32.xlu0 %v1507, 64
        %v1770 = vpop.permute.xlu0 %1769
        %1771 = vrot.lane.b32.xlu0 %v1508, 64
        %v1772 = vpop.permute.xlu0 %1771
        %v1776 = vsel %vm1680, %v1761, 0
        %v1779 = vsel %vm1680, %v1762, 0
        %1781 = vmatpush.msra.mxu0 0.0
        %1782 = vmatpush.msra.mxu0 0.0
        %1783 = vmatpush.msra.mxu0 0.0
        %1784 = vmatpush.msra.mxu0 0.0
        %1785 = vmatpush.msra.mxu0 0.0
        %1786 = vmatpush.msra.mxu0 0.0
        %1787 = vmatpush.msra.mxu0 0.0
        %1788 = vmatpush.msra.mxu0 0.0
        %1789 = vmatpush.msra.mxu0 0.0
        %1790 = vmatpush.msra.mxu0 0.0
        %1791 = vmatpush.msra.mxu0 0.0
        %1792 = vmatpush.msra.mxu0 0.0
        %1793 = vmatpush.msra.mxu0 0.0
        %1794 = vmatpush.msra.mxu0 0.0
        %1795 = vmatpush.msra.mxu0 %v1772
        %1796 = vmatpush.msra.mxu0 %v1770
        %1797 = vmatmul.f32.gmra.mxu0 %v1776
        %v1798 = vpop.f32.mrf.mxu0
        %v1799 = vadd.f32 0.0, %v1798
        %1800 = vmatmul.f32.gmra.mxu0 %v1779
        %v1801 = vpop.f32.mrf.mxu0
        %v1802 = vadd.f32 0.0, %v1801
        %1803 = vdwg.mxu0
        %1804 = vrot.lane.b32.xlu0 %v1509, 64
        %v1805 = vpop.permute.xlu0 %1804
        %1806 = vrot.lane.b32.xlu0 %v1510, 64
        %v1807 = vpop.permute.xlu0 %1806
        %v1811 = vsel %vm1680, %v1763, 0
        %v1814 = vsel %vm1680, %v1764, 0
        %1816 = vmatpush.msra.mxu0 0.0
        %1817 = vmatpush.msra.mxu0 0.0
        %1818 = vmatpush.msra.mxu0 0.0
        %1819 = vmatpush.msra.mxu0 0.0
        %1820 = vmatpush.msra.mxu0 0.0
        %1821 = vmatpush.msra.mxu0 0.0
        %1822 = vmatpush.msra.mxu0 0.0
        %1823 = vmatpush.msra.mxu0 0.0
        %1824 = vmatpush.msra.mxu0 0.0
        %1825 = vmatpush.msra.mxu0 0.0
        %1826 = vmatpush.msra.mxu0 0.0
        %1827 = vmatpush.msra.mxu0 0.0
        %1828 = vmatpush.msra.mxu0 0.0
        %1829 = vmatpush.msra.mxu0 0.0
        %1830 = vmatpush.msra.mxu0 %v1807
        %1831 = vmatpush.msra.mxu0 %v1805
        %1832 = vmatmul.f32.gmra.mxu0 %v1811
        %v1833 = vpop.f32.mrf.mxu0
        %v1834 = vadd.f32 0.0, %v1833
        %1835 = vmatmul.f32.gmra.mxu0 %v1814
        %v1836 = vpop.f32.mrf.mxu0
        %v1837 = vadd.f32 0.0, %v1836
        %1838 = vdwg.mxu0
        %1839 = vrot.lane.b32.xlu0 %v1511, 64
        %v1840 = vpop.permute.xlu0 %1839
        %1841 = vrot.lane.b32.xlu0 %v1512, 64
        %v1842 = vpop.permute.xlu0 %1841
        %v1846 = vsel %vm1680, %v1765, 0
        %v1849 = vsel %vm1680, %v1766, 0
        %1851 = vmatpush.msra.mxu0 0.0
        %1852 = vmatpush.msra.mxu0 0.0
        %1853 = vmatpush.msra.mxu0 0.0
        %1854 = vmatpush.msra.mxu0 0.0
        %1855 = vmatpush.msra.mxu0 0.0
        %1856 = vmatpush.msra.mxu0 0.0
        %1857 = vmatpush.msra.mxu0 0.0
        %1858 = vmatpush.msra.mxu0 0.0
        %1859 = vmatpush.msra.mxu0 0.0
        %1860 = vmatpush.msra.mxu0 0.0
        %1861 = vmatpush.msra.mxu0 0.0
        %1862 = vmatpush.msra.mxu0 0.0
        %1863 = vmatpush.msra.mxu0 0.0
        %1864 = vmatpush.msra.mxu0 0.0
        %1865 = vmatpush.msra.mxu0 %v1842
        %1866 = vmatpush.msra.mxu0 %v1840
        %1867 = vmatmul.f32.gmra.mxu0 %v1846
        %v1868 = vpop.f32.mrf.mxu0
        %v1869 = vadd.f32 0.0, %v1868
        %1870 = vmatmul.f32.gmra.mxu0 %v1849
        %v1871 = vpop.f32.mrf.mxu0
        %v1872 = vadd.f32 0.0, %v1871
        %1873 = vdwg.mxu0
        %1874 = vrot.lane.b32.xlu0 %v1513, 64
        %v1875 = vpop.permute.xlu0 %1874
        %1876 = vrot.lane.b32.xlu0 %v1514, 64
        %v1877 = vpop.permute.xlu0 %1876
        %v1881 = vsel %vm1680, %v1767, 0
        %v1884 = vsel %vm1680, %v1768, 0
        %1886 = vmatpush.msra.mxu0 0.0
        %1887 = vmatpush.msra.mxu0 0.0
        %1888 = vmatpush.msra.mxu0 0.0
        %1889 = vmatpush.msra.mxu0 0.0
        %1890 = vmatpush.msra.mxu0 0.0
        %1891 = vmatpush.msra.mxu0 0.0
        %1892 = vmatpush.msra.mxu0 0.0
        %1893 = vmatpush.msra.mxu0 0.0
        %1894 = vmatpush.msra.mxu0 0.0
        %1895 = vmatpush.msra.mxu0 0.0
        %1896 = vmatpush.msra.mxu0 0.0
        %1897 = vmatpush.msra.mxu0 0.0
        %1898 = vmatpush.msra.mxu0 0.0
        %1899 = vmatpush.msra.mxu0 0.0
        %1900 = vmatpush.msra.mxu0 %v1877
        %1901 = vmatpush.msra.mxu0 %v1875
        %1902 = vmatmul.f32.gmra.mxu0 %v1881
        %v1903 = vpop.f32.mrf.mxu0
        %v1904 = vadd.f32 0.0, %v1903
        %1905 = vmatmul.f32.gmra.mxu0 %v1884
        %v1906 = vpop.f32.mrf.mxu0
        %v1907 = vadd.f32 0.0, %v1906
        %1908 = vdwg.mxu0
        %1909 = vrot.lane.b32.xlu0 %v1515, 120
        %v1910 = vpop.permute.xlu0 %1909
        %1911 = vrot.lane.b32.xlu0 %v1516, 120
        %v1912 = vpop.permute.xlu0 %1911
        %1913 = vrot.lane.b32.xlu0 %v1507, 88
        %v1914 = vpop.permute.xlu0 %1913
        %1915 = vrot.lane.b32.xlu0 %v1508, 88
        %v1916 = vpop.permute.xlu0 %1915
        %v1917 = vsel %vm1529, %v1910, 0
        %v1919 = vsel %vm1529, %v1912, 0
        %v1921 = vsel %vm1529, %v1914, 0
        %v1923 = vsel %vm1529, %v1916, 0
        %1925 = vmatpush.xpose.msra.mxu0 0.0
        %1926 = vmatpush.xpose.msra.mxu0 0.0
        %1927 = vmatpush.xpose.msra.mxu0 0.0
        %1928 = vmatpush.xpose.msra.mxu0 0.0
        %1929 = vmatpush.xpose.msra.mxu0 0.0
        %1930 = vmatpush.xpose.msra.mxu0 0.0
        %1931 = vmatpush.xpose.msra.mxu0 0.0
        %1932 = vmatpush.xpose.msra.mxu0 0.0
        %1933 = vmatpush.xpose.msra.mxu0 0.0
        %1934 = vmatpush.xpose.msra.mxu0 0.0
        %1935 = vmatpush.xpose.msra.mxu0 0.0
        %1936 = vmatpush.xpose.msra.mxu0 0.0
        %1937 = vmatpush.xpose.msra.mxu0 0.0
        %1938 = vmatpush.xpose.msra.mxu0 0.0
        %1939 = vmatpush.xpose.msra.mxu0 %v1923
        %1940 = vmatpush.xpose.msra.mxu0 %v1921
        %1941 = vmatmul.f32.gmra.mxu0 %v1917
        %v1942 = vpop.f32.mrf.mxu0
        %v1943 = vadd.f32 %v887, %v1942
        %1944 = vmatmul.f32.gmra.mxu0 %v1919
        %v1945 = vpop.f32.mrf.mxu0
        %v1946 = vadd.f32 %v888, %v1945
        %1947 = vdwg.mxu0
        %1948 = vrot.lane.b32.xlu0 %v1517, 120
        %v1949 = vpop.permute.xlu0 %1948
        %1950 = vrot.lane.b32.xlu0 %v1518, 120
        %v1951 = vpop.permute.xlu0 %1950
        %1952 = vrot.lane.b32.xlu0 %v1509, 88
        %v1953 = vpop.permute.xlu0 %1952
        %1954 = vrot.lane.b32.xlu0 %v1510, 88
        %v1955 = vpop.permute.xlu0 %1954
        %v1956 = vsel %vm1529, %v1949, 0
        %v1958 = vsel %vm1529, %v1951, 0
        %v1960 = vsel %vm1529, %v1953, 0
        %v1962 = vsel %vm1529, %v1955, 0
        %1964 = vmatpush.xpose.msra.mxu0 0.0
        %1965 = vmatpush.xpose.msra.mxu0 0.0
        %1966 = vmatpush.xpose.msra.mxu0 0.0
        %1967 = vmatpush.xpose.msra.mxu0 0.0
        %1968 = vmatpush.xpose.msra.mxu0 0.0
        %1969 = vmatpush.xpose.msra.mxu0 0.0
        %1970 = vmatpush.xpose.msra.mxu0 0.0
        %1971 = vmatpush.xpose.msra.mxu0 0.0
        %1972 = vmatpush.xpose.msra.mxu0 0.0
        %1973 = vmatpush.xpose.msra.mxu0 0.0
        %1974 = vmatpush.xpose.msra.mxu0 0.0
        %1975 = vmatpush.xpose.msra.mxu0 0.0
        %1976 = vmatpush.xpose.msra.mxu0 0.0
        %1977 = vmatpush.xpose.msra.mxu0 0.0
        %1978 = vmatpush.xpose.msra.mxu0 %v1962
        %1979 = vmatpush.xpose.msra.mxu0 %v1960
        %1980 = vmatmul.f32.gmra.mxu0 %v1956
        %v1981 = vpop.f32.mrf.mxu0
        %v1982 = vadd.f32 %v889, %v1981
        %1983 = vmatmul.f32.gmra.mxu0 %v1958
        %v1984 = vpop.f32.mrf.mxu0
        %v1985 = vadd.f32 %v890, %v1984
        %1986 = vdwg.mxu0
        %1987 = vrot.lane.b32.xlu0 %v1519, 120
        %v1988 = vpop.permute.xlu0 %1987
        %1989 = vrot.lane.b32.xlu0 %v1520, 120
        %v1990 = vpop.permute.xlu0 %1989
        %1991 = vrot.lane.b32.xlu0 %v1511, 88
        %v1992 = vpop.permute.xlu0 %1991
        %1993 = vrot.lane.b32.xlu0 %v1512, 88
        %v1994 = vpop.permute.xlu0 %1993
        %v1995 = vsel %vm1529, %v1988, 0
        %v1997 = vsel %vm1529, %v1990, 0
        %v1999 = vsel %vm1529, %v1992, 0
        %v2001 = vsel %vm1529, %v1994, 0
        %2003 = vmatpush.xpose.msra.mxu0 0.0
        %2004 = vmatpush.xpose.msra.mxu0 0.0
        %2005 = vmatpush.xpose.msra.mxu0 0.0
        %2006 = vmatpush.xpose.msra.mxu0 0.0
        %2007 = vmatpush.xpose.msra.mxu0 0.0
        %2008 = vmatpush.xpose.msra.mxu0 0.0
        %2009 = vmatpush.xpose.msra.mxu0 0.0
        %2010 = vmatpush.xpose.msra.mxu0 0.0
        %2011 = vmatpush.xpose.msra.mxu0 0.0
        %2012 = vmatpush.xpose.msra.mxu0 0.0
        %2013 = vmatpush.xpose.msra.mxu0 0.0
        %2014 = vmatpush.xpose.msra.mxu0 0.0
        %2015 = vmatpush.xpose.msra.mxu0 0.0
        %2016 = vmatpush.xpose.msra.mxu0 0.0
        %2017 = vmatpush.xpose.msra.mxu0 %v2001
        %2018 = vmatpush.xpose.msra.mxu0 %v1999
        %2019 = vmatmul.f32.gmra.mxu0 %v1995
        %v2020 = vpop.f32.mrf.mxu0
        %v2021 = vadd.f32 %v891, %v2020
        %2022 = vmatmul.f32.gmra.mxu0 %v1997
        %v2023 = vpop.f32.mrf.mxu0
        %v2024 = vadd.f32 %v892, %v2023
        %2025 = vdwg.mxu0
        %2026 = vrot.lane.b32.xlu0 %v1521, 120
        %v2027 = vpop.permute.xlu0 %2026
        %2028 = vrot.lane.b32.xlu0 %v1522, 120
        %v2029 = vpop.permute.xlu0 %2028
        %2030 = vrot.lane.b32.xlu0 %v1513, 88
        %v2031 = vpop.permute.xlu0 %2030
        %2032 = vrot.lane.b32.xlu0 %v1514, 88
        %v2033 = vpop.permute.xlu0 %2032
        %v2034 = vsel %vm1529, %v2027, 0
        %v2036 = vsel %vm1529, %v2029, 0
        %v2038 = vsel %vm1529, %v2031, 0
        %v2040 = vsel %vm1529, %v2033, 0
        %2042 = vmatpush.xpose.msra.mxu0 0.0
        %2043 = vmatpush.xpose.msra.mxu0 0.0
        %2044 = vmatpush.xpose.msra.mxu0 0.0
        %2045 = vmatpush.xpose.msra.mxu0 0.0
        %2046 = vmatpush.xpose.msra.mxu0 0.0
        %2047 = vmatpush.xpose.msra.mxu0 0.0
        %2048 = vmatpush.xpose.msra.mxu0 0.0
        %2049 = vmatpush.xpose.msra.mxu0 0.0
        %2050 = vmatpush.xpose.msra.mxu0 0.0
        %2051 = vmatpush.xpose.msra.mxu0 0.0
        %2052 = vmatpush.xpose.msra.mxu0 0.0
        %2053 = vmatpush.xpose.msra.mxu0 0.0
        %2054 = vmatpush.xpose.msra.mxu0 0.0
        %2055 = vmatpush.xpose.msra.mxu0 0.0
        %2056 = vmatpush.xpose.msra.mxu0 %v2040
        %2057 = vmatpush.xpose.msra.mxu0 %v2038
        %2058 = vmatmul.f32.gmra.mxu0 %v2034
        %v2059 = vpop.f32.mrf.mxu0
        %v2060 = vadd.f32 %v893, %v2059
        %2061 = vmatmul.f32.gmra.mxu0 %v2036
        %v2062 = vpop.f32.mrf.mxu0
        %v2063 = vadd.f32 %v894, %v2062
        %2064 = vdwg.mxu0
        %v2065 = vsel %vm1680, %v1943, -inf
        %2066 = vmax.xlane.f32.xlu0 %v2065
        %v2067 = vpop.xlane.xlu0 %2066
        %v2068 = vsel %vm1680, %v1946, -inf
        %2069 = vmax.xlane.f32.xlu0 %v2068
        %v2070 = vpop.xlane.xlu0 %2069
        %v2071 = vsel %vm1680, %v1982, -inf
        %2072 = vmax.xlane.f32.xlu0 %v2071
        %v2073 = vpop.xlane.xlu0 %2072
        %v2074 = vsel %vm1680, %v1985, -inf
        %2075 = vmax.xlane.f32.xlu0 %v2074
        %v2076 = vpop.xlane.xlu0 %2075
        %v2077 = vsel %vm1680, %v2021, -inf
        %2078 = vmax.xlane.f32.xlu0 %v2077
        %v2079 = vpop.xlane.xlu0 %2078
        %v2080 = vsel %vm1680, %v2024, -inf
        %2081 = vmax.xlane.f32.xlu0 %v2080
        %v2082 = vpop.xlane.xlu0 %2081
        %v2083 = vsel %vm1680, %v2060, -inf
        %2084 = vmax.xlane.f32.xlu0 %v2083
        %v2085 = vpop.xlane.xlu0 %2084
        %v2086 = vsel %vm1680, %v2063, -inf
        %2087 = vmax.xlane.f32.xlu0 %v2086
        %v2088 = vpop.xlane.xlu0 %2087
        %v2089 = vsub.f32 %v1943, %v2067
        %v2090 = vsub.f32 %v1946, %v2070
        %v2091 = vsub.f32 %v1982, %v2073
        %v2092 = vsub.f32 %v1985, %v2076
        %v2093 = vsub.f32 %v2021, %v2079
        %v2094 = vsub.f32 %v2024, %v2082
        %v2095 = vsub.f32 %v2060, %v2085
        %v2096 = vsub.f32 %v2063, %v2088
        %v2097 = vmul.f32 %v2089, 1.442695
        %v2098 = vpow.pop %v2097
        %v2099 = vmul.f32 %v2090, 1.442695
        %v2100 = vpow.pop %v2099
        %v2101 = vmul.f32 %v2091, 1.442695
        %v2102 = vpow.pop %v2101
        %v2103 = vmul.f32 %v2092, 1.442695
        %v2104 = vpow.pop %v2103
        %v2105 = vmul.f32 %v2093, 1.442695
        %v2106 = vpow.pop %v2105
        %v2107 = vmul.f32 %v2094, 1.442695
        %v2108 = vpow.pop %v2107
        %v2109 = vmul.f32 %v2095, 1.442695
        %v2110 = vpow.pop %v2109
        %v2111 = vmul.f32 %v2096, 1.442695
        %v2112 = vpow.pop %v2111
        %v2113 = vsel %vm1680, %v2098, 0.0
        %2114 = vadd.xlane.f32.xlu0 %v2113
        %v2115 = vpop.xlane.xlu0 %2114
        %v2116 = vsel %vm1680, %v2100, 0.0
        %2117 = vadd.xlane.f32.xlu0 %v2116
        %v2118 = vpop.xlane.xlu0 %2117
        %v2119 = vsel %vm1680, %v2102, 0.0
        %2120 = vadd.xlane.f32.xlu0 %v2119
        %v2121 = vpop.xlane.xlu0 %2120
        %v2122 = vsel %vm1680, %v2104, 0.0
        %2123 = vadd.xlane.f32.xlu0 %v2122
        %v2124 = vpop.xlane.xlu0 %2123
        %v2125 = vsel %vm1680, %v2106, 0.0
        %2126 = vadd.xlane.f32.xlu0 %v2125
        %v2127 = vpop.xlane.xlu0 %2126
        %v2128 = vsel %vm1680, %v2108, 0.0
        %2129 = vadd.xlane.f32.xlu0 %v2128
        %v2130 = vpop.xlane.xlu0 %2129
        %v2131 = vsel %vm1680, %v2110, 0.0
        %2132 = vadd.xlane.f32.xlu0 %v2131
        %v2133 = vpop.xlane.xlu0 %2132
        %v2134 = vsel %vm1680, %v2112, 0.0
        %2135 = vadd.xlane.f32.xlu0 %v2134
        %v2136 = vpop.xlane.xlu0 %2135
        %v2137 = vrcp.pop %v2115
        %v2138 = vrcp.pop %v2118
        %v2139 = vrcp.pop %v2121
        %v2140 = vrcp.pop %v2124
        %v2141 = vrcp.pop %v2127
        %v2142 = vrcp.pop %v2130
        %v2143 = vrcp.pop %v2133
        %v2144 = vrcp.pop %v2136
        %v2145 = vmul.f32 %v2098, %v2137
        %v2146 = vmul.f32 %v2100, %v2138
        %v2147 = vmul.f32 %v2102, %v2139
        %v2148 = vmul.f32 %v2104, %v2140
        %v2149 = vmul.f32 %v2106, %v2141
        %v2150 = vmul.f32 %v2108, %v2142
        %v2151 = vmul.f32 %v2110, %v2143
        %v2152 = vmul.f32 %v2112, %v2144
        %2153 = vrot.lane.b32.xlu0 %v1507, 56
        %v2154 = vpop.permute.xlu0 %2153
        %2155 = vrot.lane.b32.xlu0 %v1508, 56
        %v2156 = vpop.permute.xlu0 %2155
        %v2160 = vsel %vm1680, %v2145, 0
        %v2163 = vsel %vm1680, %v2146, 0
        %2165 = vmatpush.msra.mxu0 0.0
        %2166 = vmatpush.msra.mxu0 0.0
        %2167 = vmatpush.msra.mxu0 0.0
        %2168 = vmatpush.msra.mxu0 0.0
        %2169 = vmatpush.msra.mxu0 0.0
        %2170 = vmatpush.msra.mxu0 0.0
        %2171 = vmatpush.msra.mxu0 0.0
        %2172 = vmatpush.msra.mxu0 0.0
        %2173 = vmatpush.msra.mxu0 0.0
        %2174 = vmatpush.msra.mxu0 0.0
        %2175 = vmatpush.msra.mxu0 0.0
        %2176 = vmatpush.msra.mxu0 0.0
        %2177 = vmatpush.msra.mxu0 0.0
        %2178 = vmatpush.msra.mxu0 0.0
        %2179 = vmatpush.msra.mxu0 %v2156
        %2180 = vmatpush.msra.mxu0 %v2154
        %2181 = vmatmul.f32.gmra.mxu0 %v2160
        %v2182 = vpop.f32.mrf.mxu0
        %v2183 = vadd.f32 0.0, %v2182
        %2184 = vmatmul.f32.gmra.mxu0 %v2163
        %v2185 = vpop.f32.mrf.mxu0
        %v2186 = vadd.f32 0.0, %v2185
        %2187 = vdwg.mxu0
        %2188 = vrot.lane.b32.xlu0 %v1509, 56
        %v2189 = vpop.permute.xlu0 %2188
        %2190 = vrot.lane.b32.xlu0 %v1510, 56
        %v2191 = vpop.permute.xlu0 %2190
        %v2195 = vsel %vm1680, %v2147, 0
        %v2198 = vsel %vm1680, %v2148, 0
        %2200 = vmatpush.msra.mxu0 0.0
        %2201 = vmatpush.msra.mxu0 0.0
        %2202 = vmatpush.msra.mxu0 0.0
        %2203 = vmatpush.msra.mxu0 0.0
        %2204 = vmatpush.msra.mxu0 0.0
        %2205 = vmatpush.msra.mxu0 0.0
        %2206 = vmatpush.msra.mxu0 0.0
        %2207 = vmatpush.msra.mxu0 0.0
        %2208 = vmatpush.msra.mxu0 0.0
        %2209 = vmatpush.msra.mxu0 0.0
        %2210 = vmatpush.msra.mxu0 0.0
        %2211 = vmatpush.msra.mxu0 0.0
        %2212 = vmatpush.msra.mxu0 0.0
        %2213 = vmatpush.msra.mxu0 0.0
        %2214 = vmatpush.msra.mxu0 %v2191
        %2215 = vmatpush.msra.mxu0 %v2189
        %2216 = vmatmul.f32.gmra.mxu0 %v2195
        %v2217 = vpop.f32.mrf.mxu0
        %v2218 = vadd.f32 0.0, %v2217
        %2219 = vmatmul.f32.gmra.mxu0 %v2198
        %v2220 = vpop.f32.mrf.mxu0
        %v2221 = vadd.f32 0.0, %v2220
        %2222 = vdwg.mxu0
        %2223 = vrot.lane.b32.xlu0 %v1511, 56
        %v2224 = vpop.permute.xlu0 %2223
        %2225 = vrot.lane.b32.xlu0 %v1512, 56
        %v2226 = vpop.permute.xlu0 %2225
        %v2230 = vsel %vm1680, %v2149, 0
        %v2233 = vsel %vm1680, %v2150, 0
        %2235 = vmatpush.msra.mxu0 0.0
        %2236 = vmatpush.msra.mxu0 0.0
        %2237 = vmatpush.msra.mxu0 0.0
        %2238 = vmatpush.msra.mxu0 0.0
        %2239 = vmatpush.msra.mxu0 0.0
        %2240 = vmatpush.msra.mxu0 0.0
        %2241 = vmatpush.msra.mxu0 0.0
        %2242 = vmatpush.msra.mxu0 0.0
        %2243 = vmatpush.msra.mxu0 0.0
        %2244 = vmatpush.msra.mxu0 0.0
        %2245 = vmatpush.msra.mxu0 0.0
        %2246 = vmatpush.msra.mxu0 0.0
        %2247 = vmatpush.msra.mxu0 0.0
        %2248 = vmatpush.msra.mxu0 0.0
        %2249 = vmatpush.msra.mxu0 %v2226
        %2250 = vmatpush.msra.mxu0 %v2224
        %2251 = vmatmul.f32.gmra.mxu0 %v2230
        %v2252 = vpop.f32.mrf.mxu0
        %v2253 = vadd.f32 0.0, %v2252
        %2254 = vmatmul.f32.gmra.mxu0 %v2233
        %v2255 = vpop.f32.mrf.mxu0
        %v2256 = vadd.f32 0.0, %v2255
        %2257 = vdwg.mxu0
        %2258 = vrot.lane.b32.xlu0 %v1513, 56
        %v2259 = vpop.permute.xlu0 %2258
        %2260 = vrot.lane.b32.xlu0 %v1514, 56
        %v2261 = vpop.permute.xlu0 %2260
        %v2265 = vsel %vm1680, %v2151, 0
        %v2268 = vsel %vm1680, %v2152, 0
        %2270 = vmatpush.msra.mxu0 0.0
        %2271 = vmatpush.msra.mxu0 0.0
        %2272 = vmatpush.msra.mxu0 0.0
        %2273 = vmatpush.msra.mxu0 0.0
        %2274 = vmatpush.msra.mxu0 0.0
        %2275 = vmatpush.msra.mxu0 0.0
        %2276 = vmatpush.msra.mxu0 0.0
        %2277 = vmatpush.msra.mxu0 0.0
        %2278 = vmatpush.msra.mxu0 0.0
        %2279 = vmatpush.msra.mxu0 0.0
        %2280 = vmatpush.msra.mxu0 0.0
        %2281 = vmatpush.msra.mxu0 0.0
        %2282 = vmatpush.msra.mxu0 0.0
        %2283 = vmatpush.msra.mxu0 0.0
        %2284 = vmatpush.msra.mxu0 %v2261
        %2285 = vmatpush.msra.mxu0 %v2259
        %2286 = vmatmul.f32.gmra.mxu0 %v2265
        %v2287 = vpop.f32.mrf.mxu0
        %v2288 = vadd.f32 0.0, %v2287
        %2289 = vmatmul.f32.gmra.mxu0 %v2268
        %v2290 = vpop.f32.mrf.mxu0
        %v2291 = vadd.f32 0.0, %v2290
        %2292 = vdwg.mxu0
        %2293 = vrot.lane.b32.xlu0 %v1515, 112
        %v2294 = vpop.permute.xlu0 %2293
        %2295 = vrot.lane.b32.xlu0 %v1516, 112
        %v2296 = vpop.permute.xlu0 %2295
        %2297 = vrot.lane.b32.xlu0 %v1507, 80
        %v2298 = vpop.permute.xlu0 %2297
        %2299 = vrot.lane.b32.xlu0 %v1508, 80
        %v2300 = vpop.permute.xlu0 %2299
        %v2301 = vsel %vm1529, %v2294, 0
        %v2303 = vsel %vm1529, %v2296, 0
        %v2305 = vsel %vm1529, %v2298, 0
        %v2307 = vsel %vm1529, %v2300, 0
        %2309 = vmatpush.xpose.msra.mxu0 0.0
        %2310 = vmatpush.xpose.msra.mxu0 0.0
        %2311 = vmatpush.xpose.msra.mxu0 0.0
        %2312 = vmatpush.xpose.msra.mxu0 0.0
        %2313 = vmatpush.xpose.msra.mxu0 0.0
        %2314 = vmatpush.xpose.msra.mxu0 0.0
        %2315 = vmatpush.xpose.msra.mxu0 0.0
        %2316 = vmatpush.xpose.msra.mxu0 0.0
        %2317 = vmatpush.xpose.msra.mxu0 0.0
        %2318 = vmatpush.xpose.msra.mxu0 0.0
        %2319 = vmatpush.xpose.msra.mxu0 0.0
        %2320 = vmatpush.xpose.msra.mxu0 0.0
        %2321 = vmatpush.xpose.msra.mxu0 0.0
        %2322 = vmatpush.xpose.msra.mxu0 0.0
        %2323 = vmatpush.xpose.msra.mxu0 %v2307
        %2324 = vmatpush.xpose.msra.mxu0 %v2305
        %2325 = vmatmul.f32.gmra.mxu0 %v2301
        %v2326 = vpop.f32.mrf.mxu0
        %v2327 = vadd.f32 %v887, %v2326
        %2328 = vmatmul.f32.gmra.mxu0 %v2303
        %v2329 = vpop.f32.mrf.mxu0
        %v2330 = vadd.f32 %v888, %v2329
        %2331 = vdwg.mxu0
        %2332 = vrot.lane.b32.xlu0 %v1517, 112
        %v2333 = vpop.permute.xlu0 %2332
        %2334 = vrot.lane.b32.xlu0 %v1518, 112
        %v2335 = vpop.permute.xlu0 %2334
        %2336 = vrot.lane.b32.xlu0 %v1509, 80
        %v2337 = vpop.permute.xlu0 %2336
        %2338 = vrot.lane.b32.xlu0 %v1510, 80
        %v2339 = vpop.permute.xlu0 %2338
        %v2340 = vsel %vm1529, %v2333, 0
        %v2342 = vsel %vm1529, %v2335, 0
        %v2344 = vsel %vm1529, %v2337, 0
        %v2346 = vsel %vm1529, %v2339, 0
        %2348 = vmatpush.xpose.msra.mxu0 0.0
        %2349 = vmatpush.xpose.msra.mxu0 0.0
        %2350 = vmatpush.xpose.msra.mxu0 0.0
        %2351 = vmatpush.xpose.msra.mxu0 0.0
        %2352 = vmatpush.xpose.msra.mxu0 0.0
        %2353 = vmatpush.xpose.msra.mxu0 0.0
        %2354 = vmatpush.xpose.msra.mxu0 0.0
        %2355 = vmatpush.xpose.msra.mxu0 0.0
        %2356 = vmatpush.xpose.msra.mxu0 0.0
        %2357 = vmatpush.xpose.msra.mxu0 0.0
        %2358 = vmatpush.xpose.msra.mxu0 0.0
        %2359 = vmatpush.xpose.msra.mxu0 0.0
        %2360 = vmatpush.xpose.msra.mxu0 0.0
        %2361 = vmatpush.xpose.msra.mxu0 0.0
        %2362 = vmatpush.xpose.msra.mxu0 %v2346
        %2363 = vmatpush.xpose.msra.mxu0 %v2344
        %2364 = vmatmul.f32.gmra.mxu0 %v2340
        %v2365 = vpop.f32.mrf.mxu0
        %v2366 = vadd.f32 %v889, %v2365
        %2367 = vmatmul.f32.gmra.mxu0 %v2342
        %v2368 = vpop.f32.mrf.mxu0
        %v2369 = vadd.f32 %v890, %v2368
        %2370 = vdwg.mxu0
        %2371 = vrot.lane.b32.xlu0 %v1519, 112
        %v2372 = vpop.permute.xlu0 %2371
        %2373 = vrot.lane.b32.xlu0 %v1520, 112
        %v2374 = vpop.permute.xlu0 %2373
        %2375 = vrot.lane.b32.xlu0 %v1511, 80
        %v2376 = vpop.permute.xlu0 %2375
        %2377 = vrot.lane.b32.xlu0 %v1512, 80
        %v2378 = vpop.permute.xlu0 %2377
        %v2379 = vsel %vm1529, %v2372, 0
        %v2381 = vsel %vm1529, %v2374, 0
        %v2383 = vsel %vm1529, %v2376, 0
        %v2385 = vsel %vm1529, %v2378, 0
        %2387 = vmatpush.xpose.msra.mxu0 0.0
        %2388 = vmatpush.xpose.msra.mxu0 0.0
        %2389 = vmatpush.xpose.msra.mxu0 0.0
        %2390 = vmatpush.xpose.msra.mxu0 0.0
        %2391 = vmatpush.xpose.msra.mxu0 0.0
        %2392 = vmatpush.xpose.msra.mxu0 0.0
        %2393 = vmatpush.xpose.msra.mxu0 0.0
        %2394 = vmatpush.xpose.msra.mxu0 0.0
        %2395 = vmatpush.xpose.msra.mxu0 0.0
        %2396 = vmatpush.xpose.msra.mxu0 0.0
        %2397 = vmatpush.xpose.msra.mxu0 0.0
        %2398 = vmatpush.xpose.msra.mxu0 0.0
        %2399 = vmatpush.xpose.msra.mxu0 0.0
        %2400 = vmatpush.xpose.msra.mxu0 0.0
        %2401 = vmatpush.xpose.msra.mxu0 %v2385
        %2402 = vmatpush.xpose.msra.mxu0 %v2383
        %2403 = vmatmul.f32.gmra.mxu0 %v2379
        %v2404 = vpop.f32.mrf.mxu0
        %v2405 = vadd.f32 %v891, %v2404
        %2406 = vmatmul.f32.gmra.mxu0 %v2381
        %v2407 = vpop.f32.mrf.mxu0
        %v2408 = vadd.f32 %v892, %v2407
        %2409 = vdwg.mxu0
        %2410 = vrot.lane.b32.xlu0 %v1521, 112
        %v2411 = vpop.permute.xlu0 %2410
        %2412 = vrot.lane.b32.xlu0 %v1522, 112
        %v2413 = vpop.permute.xlu0 %2412
        %2414 = vrot.lane.b32.xlu0 %v1513, 80
        %v2415 = vpop.permute.xlu0 %2414
        %2416 = vrot.lane.b32.xlu0 %v1514, 80
        %v2417 = vpop.permute.xlu0 %2416
        %v2418 = vsel %vm1529, %v2411, 0
        %v2420 = vsel %vm1529, %v2413, 0
        %v2422 = vsel %vm1529, %v2415, 0
        %v2424 = vsel %vm1529, %v2417, 0
        %2426 = vmatpush.xpose.msra.mxu0 0.0
        %2427 = vmatpush.xpose.msra.mxu0 0.0
        %2428 = vmatpush.xpose.msra.mxu0 0.0
        %2429 = vmatpush.xpose.msra.mxu0 0.0
        %2430 = vmatpush.xpose.msra.mxu0 0.0
        %2431 = vmatpush.xpose.msra.mxu0 0.0
        %2432 = vmatpush.xpose.msra.mxu0 0.0
        %2433 = vmatpush.xpose.msra.mxu0 0.0
        %2434 = vmatpush.xpose.msra.mxu0 0.0
        %2435 = vmatpush.xpose.msra.mxu0 0.0
        %2436 = vmatpush.xpose.msra.mxu0 0.0
        %2437 = vmatpush.xpose.msra.mxu0 0.0
        %2438 = vmatpush.xpose.msra.mxu0 0.0
        %2439 = vmatpush.xpose.msra.mxu0 0.0
        %2440 = vmatpush.xpose.msra.mxu0 %v2424
        %2441 = vmatpush.xpose.msra.mxu0 %v2422
        %2442 = vmatmul.f32.gmra.mxu0 %v2418
        %v2443 = vpop.f32.mrf.mxu0
        %v2444 = vadd.f32 %v893, %v2443
        %2445 = vmatmul.f32.gmra.mxu0 %v2420
        %v2446 = vpop.f32.mrf.mxu0
        %v2447 = vadd.f32 %v894, %v2446
        %2448 = vdwg.mxu0
        %v2449 = vsel %vm1680, %v2327, -inf
        %2450 = vmax.xlane.f32.xlu0 %v2449
        %v2451 = vpop.xlane.xlu0 %2450
        %v2452 = vsel %vm1680, %v2330, -inf
        %2453 = vmax.xlane.f32.xlu0 %v2452
        %v2454 = vpop.xlane.xlu0 %2453
        %v2455 = vsel %vm1680, %v2366, -inf
        %2456 = vmax.xlane.f32.xlu0 %v2455
        %v2457 = vpop.xlane.xlu0 %2456
        %v2458 = vsel %vm1680, %v2369, -inf
        %2459 = vmax.xlane.f32.xlu0 %v2458
        %v2460 = vpop.xlane.xlu0 %2459
        %v2461 = vsel %vm1680, %v2405, -inf
        %2462 = vmax.xlane.f32.xlu0 %v2461
        %v2463 = vpop.xlane.xlu0 %2462
        %v2464 = vsel %vm1680, %v2408, -inf
        %2465 = vmax.xlane.f32.xlu0 %v2464
        %v2466 = vpop.xlane.xlu0 %2465
        %v2467 = vsel %vm1680, %v2444, -inf
        %2468 = vmax.xlane.f32.xlu0 %v2467
        %v2469 = vpop.xlane.xlu0 %2468
        %v2470 = vsel %vm1680, %v2447, -inf
        %2471 = vmax.xlane.f32.xlu0 %v2470
        %v2472 = vpop.xlane.xlu0 %2471
        %v2473 = vsub.f32 %v2327, %v2451
        %v2474 = vsub.f32 %v2330, %v2454
        %v2475 = vsub.f32 %v2366, %v2457
        %v2476 = vsub.f32 %v2369, %v2460
        %v2477 = vsub.f32 %v2405, %v2463
        %v2478 = vsub.f32 %v2408, %v2466
        %v2479 = vsub.f32 %v2444, %v2469
        %v2480 = vsub.f32 %v2447, %v2472
        %v2481 = vmul.f32 %v2473, 1.442695
        %v2482 = vpow.pop %v2481
        %v2483 = vmul.f32 %v2474, 1.442695
        %v2484 = vpow.pop %v2483
        %v2485 = vmul.f32 %v2475, 1.442695
        %v2486 = vpow.pop %v2485
        %v2487 = vmul.f32 %v2476, 1.442695
        %v2488 = vpow.pop %v2487
        %v2489 = vmul.f32 %v2477, 1.442695
        %v2490 = vpow.pop %v2489
        %v2491 = vmul.f32 %v2478, 1.442695
        %v2492 = vpow.pop %v2491
        %v2493 = vmul.f32 %v2479, 1.442695
        %v2494 = vpow.pop %v2493
        %v2495 = vmul.f32 %v2480, 1.442695
        %v2496 = vpow.pop %v2495
        %v2497 = vsel %vm1680, %v2482, 0.0
        %2498 = vadd.xlane.f32.xlu0 %v2497
        %v2499 = vpop.xlane.xlu0 %2498
        %v2500 = vsel %vm1680, %v2484, 0.0
        %2501 = vadd.xlane.f32.xlu0 %v2500
        %v2502 = vpop.xlane.xlu0 %2501
        %v2503 = vsel %vm1680, %v2486, 0.0
        %2504 = vadd.xlane.f32.xlu0 %v2503
        %v2505 = vpop.xlane.xlu0 %2504
        %v2506 = vsel %vm1680, %v2488, 0.0
        %2507 = vadd.xlane.f32.xlu0 %v2506
        %v2508 = vpop.xlane.xlu0 %2507
        %v2509 = vsel %vm1680, %v2490, 0.0
        %2510 = vadd.xlane.f32.xlu0 %v2509
        %v2511 = vpop.xlane.xlu0 %2510
        %v2512 = vsel %vm1680, %v2492, 0.0
        %2513 = vadd.xlane.f32.xlu0 %v2512
        %v2514 = vpop.xlane.xlu0 %2513
        %v2515 = vsel %vm1680, %v2494, 0.0
        %2516 = vadd.xlane.f32.xlu0 %v2515
        %v2517 = vpop.xlane.xlu0 %2516
        %v2518 = vsel %vm1680, %v2496, 0.0
        %2519 = vadd.xlane.f32.xlu0 %v2518
        %v2520 = vpop.xlane.xlu0 %2519
        %v2521 = vrcp.pop %v2499
        %v2522 = vrcp.pop %v2502
        %v2523 = vrcp.pop %v2505
        %v2524 = vrcp.pop %v2508
        %v2525 = vrcp.pop %v2511
        %v2526 = vrcp.pop %v2514
        %v2527 = vrcp.pop %v2517
        %v2528 = vrcp.pop %v2520
        %v2529 = vmul.f32 %v2482, %v2521
        %v2530 = vmul.f32 %v2484, %v2522
        %v2531 = vmul.f32 %v2486, %v2523
        %v2532 = vmul.f32 %v2488, %v2524
        %v2533 = vmul.f32 %v2490, %v2525
        %v2534 = vmul.f32 %v2492, %v2526
        %v2535 = vmul.f32 %v2494, %v2527
        %v2536 = vmul.f32 %v2496, %v2528
        %2537 = vrot.lane.b32.xlu0 %v1507, 48
        %v2538 = vpop.permute.xlu0 %2537
        %2539 = vrot.lane.b32.xlu0 %v1508, 48
        %v2540 = vpop.permute.xlu0 %2539
        %v2544 = vsel %vm1680, %v2529, 0
        %v2547 = vsel %vm1680, %v2530, 0
        %2549 = vmatpush.msra.mxu0 0.0
        %2550 = vmatpush.msra.mxu0 0.0
        %2551 = vmatpush.msra.mxu0 0.0
        %2552 = vmatpush.msra.mxu0 0.0
        %2553 = vmatpush.msra.mxu0 0.0
        %2554 = vmatpush.msra.mxu0 0.0
        %2555 = vmatpush.msra.mxu0 0.0
        %2556 = vmatpush.msra.mxu0 0.0
        %2557 = vmatpush.msra.mxu0 0.0
        %2558 = vmatpush.msra.mxu0 0.0
        %2559 = vmatpush.msra.mxu0 0.0
        %2560 = vmatpush.msra.mxu0 0.0
        %2561 = vmatpush.msra.mxu0 0.0
        %2562 = vmatpush.msra.mxu0 0.0
        %2563 = vmatpush.msra.mxu0 %v2540
        %2564 = vmatpush.msra.mxu0 %v2538
        %2565 = vmatmul.f32.gmra.mxu0 %v2544
        %v2566 = vpop.f32.mrf.mxu0
        %v2567 = vadd.f32 0.0, %v2566
        %2568 = vmatmul.f32.gmra.mxu0 %v2547
        %v2569 = vpop.f32.mrf.mxu0
        %v2570 = vadd.f32 0.0, %v2569
        %2571 = vdwg.mxu0
        %2572 = vrot.lane.b32.xlu0 %v1509, 48
        %v2573 = vpop.permute.xlu0 %2572
        %2574 = vrot.lane.b32.xlu0 %v1510, 48
        %v2575 = vpop.permute.xlu0 %2574
        %v2579 = vsel %vm1680, %v2531, 0
        %v2582 = vsel %vm1680, %v2532, 0
        %2584 = vmatpush.msra.mxu0 0.0
        %2585 = vmatpush.msra.mxu0 0.0
        %2586 = vmatpush.msra.mxu0 0.0
        %2587 = vmatpush.msra.mxu0 0.0
        %2588 = vmatpush.msra.mxu0 0.0
        %2589 = vmatpush.msra.mxu0 0.0
        %2590 = vmatpush.msra.mxu0 0.0
        %2591 = vmatpush.msra.mxu0 0.0
        %2592 = vmatpush.msra.mxu0 0.0
        %2593 = vmatpush.msra.mxu0 0.0
        %2594 = vmatpush.msra.mxu0 0.0
        %2595 = vmatpush.msra.mxu0 0.0
        %2596 = vmatpush.msra.mxu0 0.0
        %2597 = vmatpush.msra.mxu0 0.0
        %2598 = vmatpush.msra.mxu0 %v2575
        %2599 = vmatpush.msra.mxu0 %v2573
        %2600 = vmatmul.f32.gmra.mxu0 %v2579
        %v2601 = vpop.f32.mrf.mxu0
        %v2602 = vadd.f32 0.0, %v2601
        %2603 = vmatmul.f32.gmra.mxu0 %v2582
        %v2604 = vpop.f32.mrf.mxu0
        %v2605 = vadd.f32 0.0, %v2604
        %2606 = vdwg.mxu0
        %2607 = vrot.lane.b32.xlu0 %v1511, 48
        %v2608 = vpop.permute.xlu0 %2607
        %2609 = vrot.lane.b32.xlu0 %v1512, 48
        %v2610 = vpop.permute.xlu0 %2609
        %v2614 = vsel %vm1680, %v2533, 0
        %v2617 = vsel %vm1680, %v2534, 0
        %2619 = vmatpush.msra.mxu0 0.0
        %2620 = vmatpush.msra.mxu0 0.0
        %2621 = vmatpush.msra.mxu0 0.0
        %2622 = vmatpush.msra.mxu0 0.0
        %2623 = vmatpush.msra.mxu0 0.0
        %2624 = vmatpush.msra.mxu0 0.0
        %2625 = vmatpush.msra.mxu0 0.0
        %2626 = vmatpush.msra.mxu0 0.0
        %2627 = vmatpush.msra.mxu0 0.0
        %2628 = vmatpush.msra.mxu0 0.0
        %2629 = vmatpush.msra.mxu0 0.0
        %2630 = vmatpush.msra.mxu0 0.0
        %2631 = vmatpush.msra.mxu0 0.0
        %2632 = vmatpush.msra.mxu0 0.0
        %2633 = vmatpush.msra.mxu0 %v2610
        %2634 = vmatpush.msra.mxu0 %v2608
        %2635 = vmatmul.f32.gmra.mxu0 %v2614
        %v2636 = vpop.f32.mrf.mxu0
        %v2637 = vadd.f32 0.0, %v2636
        %2638 = vmatmul.f32.gmra.mxu0 %v2617
        %v2639 = vpop.f32.mrf.mxu0
        %v2640 = vadd.f32 0.0, %v2639
        %2641 = vdwg.mxu0
        %2642 = vrot.lane.b32.xlu0 %v1513, 48
        %v2643 = vpop.permute.xlu0 %2642
        %2644 = vrot.lane.b32.xlu0 %v1514, 48
        %v2645 = vpop.permute.xlu0 %2644
        %v2649 = vsel %vm1680, %v2535, 0
        %v2652 = vsel %vm1680, %v2536, 0
        %2654 = vmatpush.msra.mxu0 0.0
        %2655 = vmatpush.msra.mxu0 0.0
        %2656 = vmatpush.msra.mxu0 0.0
        %2657 = vmatpush.msra.mxu0 0.0
        %2658 = vmatpush.msra.mxu0 0.0
        %2659 = vmatpush.msra.mxu0 0.0
        %2660 = vmatpush.msra.mxu0 0.0
        %2661 = vmatpush.msra.mxu0 0.0
        %2662 = vmatpush.msra.mxu0 0.0
        %2663 = vmatpush.msra.mxu0 0.0
        %2664 = vmatpush.msra.mxu0 0.0
        %2665 = vmatpush.msra.mxu0 0.0
        %2666 = vmatpush.msra.mxu0 0.0
        %2667 = vmatpush.msra.mxu0 0.0
        %2668 = vmatpush.msra.mxu0 %v2645
        %2669 = vmatpush.msra.mxu0 %v2643
        %2670 = vmatmul.f32.gmra.mxu0 %v2649
        %v2671 = vpop.f32.mrf.mxu0
        %v2672 = vadd.f32 0.0, %v2671
        %2673 = vmatmul.f32.gmra.mxu0 %v2652
        %v2674 = vpop.f32.mrf.mxu0
        %v2675 = vadd.f32 0.0, %v2674
        %2676 = vdwg.mxu0
        %2677 = vrot.lane.b32.xlu0 %v1515, 104
        %v2678 = vpop.permute.xlu0 %2677
        %2679 = vrot.lane.b32.xlu0 %v1516, 104
        %v2680 = vpop.permute.xlu0 %2679
        %2681 = vrot.lane.b32.xlu0 %v1507, 72
        %v2682 = vpop.permute.xlu0 %2681
        %2683 = vrot.lane.b32.xlu0 %v1508, 72
        %v2684 = vpop.permute.xlu0 %2683
        %v2685 = vsel %vm1529, %v2678, 0
        %v2687 = vsel %vm1529, %v2680, 0
        %v2689 = vsel %vm1529, %v2682, 0
        %v2691 = vsel %vm1529, %v2684, 0
        %2693 = vmatpush.xpose.msra.mxu0 0.0
        %2694 = vmatpush.xpose.msra.mxu0 0.0
        %2695 = vmatpush.xpose.msra.mxu0 0.0
        %2696 = vmatpush.xpose.msra.mxu0 0.0
        %2697 = vmatpush.xpose.msra.mxu0 0.0
        %2698 = vmatpush.xpose.msra.mxu0 0.0
        %2699 = vmatpush.xpose.msra.mxu0 0.0
        %2700 = vmatpush.xpose.msra.mxu0 0.0
        %2701 = vmatpush.xpose.msra.mxu0 0.0
        %2702 = vmatpush.xpose.msra.mxu0 0.0
        %2703 = vmatpush.xpose.msra.mxu0 0.0
        %2704 = vmatpush.xpose.msra.mxu0 0.0
        %2705 = vmatpush.xpose.msra.mxu0 0.0
        %2706 = vmatpush.xpose.msra.mxu0 0.0
        %2707 = vmatpush.xpose.msra.mxu0 %v2691
        %2708 = vmatpush.xpose.msra.mxu0 %v2689
        %2709 = vmatmul.f32.gmra.mxu0 %v2685
        %v2710 = vpop.f32.mrf.mxu0
        %v2711 = vadd.f32 %v887, %v2710
        %2712 = vmatmul.f32.gmra.mxu0 %v2687
        %v2713 = vpop.f32.mrf.mxu0
        %v2714 = vadd.f32 %v888, %v2713
        %2715 = vdwg.mxu0
        %2716 = vrot.lane.b32.xlu0 %v1517, 104
        %v2717 = vpop.permute.xlu0 %2716
        %2718 = vrot.lane.b32.xlu0 %v1518, 104
        %v2719 = vpop.permute.xlu0 %2718
        %2720 = vrot.lane.b32.xlu0 %v1509, 72
        %v2721 = vpop.permute.xlu0 %2720
        %2722 = vrot.lane.b32.xlu0 %v1510, 72
        %v2723 = vpop.permute.xlu0 %2722
        %v2724 = vsel %vm1529, %v2717, 0
        %v2726 = vsel %vm1529, %v2719, 0
        %v2728 = vsel %vm1529, %v2721, 0
        %v2730 = vsel %vm1529, %v2723, 0
        %2732 = vmatpush.xpose.msra.mxu0 0.0
        %2733 = vmatpush.xpose.msra.mxu0 0.0
        %2734 = vmatpush.xpose.msra.mxu0 0.0
        %2735 = vmatpush.xpose.msra.mxu0 0.0
        %2736 = vmatpush.xpose.msra.mxu0 0.0
        %2737 = vmatpush.xpose.msra.mxu0 0.0
        %2738 = vmatpush.xpose.msra.mxu0 0.0
        %2739 = vmatpush.xpose.msra.mxu0 0.0
        %2740 = vmatpush.xpose.msra.mxu0 0.0
        %2741 = vmatpush.xpose.msra.mxu0 0.0
        %2742 = vmatpush.xpose.msra.mxu0 0.0
        %2743 = vmatpush.xpose.msra.mxu0 0.0
        %2744 = vmatpush.xpose.msra.mxu0 0.0
        %2745 = vmatpush.xpose.msra.mxu0 0.0
        %2746 = vmatpush.xpose.msra.mxu0 %v2730
        %2747 = vmatpush.xpose.msra.mxu0 %v2728
        %2748 = vmatmul.f32.gmra.mxu0 %v2724
        %v2749 = vpop.f32.mrf.mxu0
        %v2750 = vadd.f32 %v889, %v2749
        %2751 = vmatmul.f32.gmra.mxu0 %v2726
        %v2752 = vpop.f32.mrf.mxu0
        %v2753 = vadd.f32 %v890, %v2752
        %2754 = vdwg.mxu0
        %2755 = vrot.lane.b32.xlu0 %v1519, 104
        %v2756 = vpop.permute.xlu0 %2755
        %2757 = vrot.lane.b32.xlu0 %v1520, 104
        %v2758 = vpop.permute.xlu0 %2757
        %2759 = vrot.lane.b32.xlu0 %v1511, 72
        %v2760 = vpop.permute.xlu0 %2759
        %2761 = vrot.lane.b32.xlu0 %v1512, 72
        %v2762 = vpop.permute.xlu0 %2761
        %v2763 = vsel %vm1529, %v2756, 0
        %v2765 = vsel %vm1529, %v2758, 0
        %v2767 = vsel %vm1529, %v2760, 0
        %v2769 = vsel %vm1529, %v2762, 0
        %2771 = vmatpush.xpose.msra.mxu0 0.0
        %2772 = vmatpush.xpose.msra.mxu0 0.0
        %2773 = vmatpush.xpose.msra.mxu0 0.0
        %2774 = vmatpush.xpose.msra.mxu0 0.0
        %2775 = vmatpush.xpose.msra.mxu0 0.0
        %2776 = vmatpush.xpose.msra.mxu0 0.0
        %2777 = vmatpush.xpose.msra.mxu0 0.0
        %2778 = vmatpush.xpose.msra.mxu0 0.0
        %2779 = vmatpush.xpose.msra.mxu0 0.0
        %2780 = vmatpush.xpose.msra.mxu0 0.0
        %2781 = vmatpush.xpose.msra.mxu0 0.0
        %2782 = vmatpush.xpose.msra.mxu0 0.0
        %2783 = vmatpush.xpose.msra.mxu0 0.0
        %2784 = vmatpush.xpose.msra.mxu0 0.0
        %2785 = vmatpush.xpose.msra.mxu0 %v2769
        %2786 = vmatpush.xpose.msra.mxu0 %v2767
        %2787 = vmatmul.f32.gmra.mxu0 %v2763
        %v2788 = vpop.f32.mrf.mxu0
        %v2789 = vadd.f32 %v891, %v2788
        %2790 = vmatmul.f32.gmra.mxu0 %v2765
        %v2791 = vpop.f32.mrf.mxu0
        %v2792 = vadd.f32 %v892, %v2791
        %2793 = vdwg.mxu0
        %2794 = vrot.lane.b32.xlu0 %v1521, 104
        %v2795 = vpop.permute.xlu0 %2794
        %2796 = vrot.lane.b32.xlu0 %v1522, 104
        %v2797 = vpop.permute.xlu0 %2796
        %2798 = vrot.lane.b32.xlu0 %v1513, 72
        %v2799 = vpop.permute.xlu0 %2798
        %2800 = vrot.lane.b32.xlu0 %v1514, 72
        %v2801 = vpop.permute.xlu0 %2800
        %v2802 = vsel %vm1529, %v2795, 0
        %v2804 = vsel %vm1529, %v2797, 0
        %v2806 = vsel %vm1529, %v2799, 0
        %v2808 = vsel %vm1529, %v2801, 0
        %2810 = vmatpush.xpose.msra.mxu0 0.0
        %2811 = vmatpush.xpose.msra.mxu0 0.0
        %2812 = vmatpush.xpose.msra.mxu0 0.0
        %2813 = vmatpush.xpose.msra.mxu0 0.0
        %2814 = vmatpush.xpose.msra.mxu0 0.0
        %2815 = vmatpush.xpose.msra.mxu0 0.0
        %2816 = vmatpush.xpose.msra.mxu0 0.0
        %2817 = vmatpush.xpose.msra.mxu0 0.0
        %2818 = vmatpush.xpose.msra.mxu0 0.0
        %2819 = vmatpush.xpose.msra.mxu0 0.0
        %2820 = vmatpush.xpose.msra.mxu0 0.0
        %2821 = vmatpush.xpose.msra.mxu0 0.0
        %2822 = vmatpush.xpose.msra.mxu0 0.0
        %2823 = vmatpush.xpose.msra.mxu0 0.0
        %2824 = vmatpush.xpose.msra.mxu0 %v2808
        %2825 = vmatpush.xpose.msra.mxu0 %v2806
        %2826 = vmatmul.f32.gmra.mxu0 %v2802
        %v2827 = vpop.f32.mrf.mxu0
        %v2828 = vadd.f32 %v893, %v2827
        %2829 = vmatmul.f32.gmra.mxu0 %v2804
        %v2830 = vpop.f32.mrf.mxu0
        %v2831 = vadd.f32 %v894, %v2830
        %2832 = vdwg.mxu0
        %v2833 = vsel %vm1680, %v2711, -inf
        %2834 = vmax.xlane.f32.xlu0 %v2833
        %v2835 = vpop.xlane.xlu0 %2834
        %v2836 = vsel %vm1680, %v2714, -inf
        %2837 = vmax.xlane.f32.xlu0 %v2836
        %v2838 = vpop.xlane.xlu0 %2837
        %v2839 = vsel %vm1680, %v2750, -inf
        %2840 = vmax.xlane.f32.xlu0 %v2839
        %v2841 = vpop.xlane.xlu0 %2840
        %v2842 = vsel %vm1680, %v2753, -inf
        %2843 = vmax.xlane.f32.xlu0 %v2842
        %v2844 = vpop.xlane.xlu0 %2843
        %v2845 = vsel %vm1680, %v2789, -inf
        %2846 = vmax.xlane.f32.xlu0 %v2845
        %v2847 = vpop.xlane.xlu0 %2846
        %v2848 = vsel %vm1680, %v2792, -inf
        %2849 = vmax.xlane.f32.xlu0 %v2848
        %v2850 = vpop.xlane.xlu0 %2849
        %v2851 = vsel %vm1680, %v2828, -inf
        %2852 = vmax.xlane.f32.xlu0 %v2851
        %v2853 = vpop.xlane.xlu0 %2852
        %v2854 = vsel %vm1680, %v2831, -inf
        %2855 = vmax.xlane.f32.xlu0 %v2854
        %v2856 = vpop.xlane.xlu0 %2855
        %v2857 = vsub.f32 %v2711, %v2835
        %v2858 = vsub.f32 %v2714, %v2838
        %v2859 = vsub.f32 %v2750, %v2841
        %v2860 = vsub.f32 %v2753, %v2844
        %v2861 = vsub.f32 %v2789, %v2847
        %v2862 = vsub.f32 %v2792, %v2850
        %v2863 = vsub.f32 %v2828, %v2853
        %v2864 = vsub.f32 %v2831, %v2856
        %v2865 = vmul.f32 %v2857, 1.442695
        %v2866 = vpow.pop %v2865
        %v2867 = vmul.f32 %v2858, 1.442695
        %v2868 = vpow.pop %v2867
        %v2869 = vmul.f32 %v2859, 1.442695
        %v2870 = vpow.pop %v2869
        %v2871 = vmul.f32 %v2860, 1.442695
        %v2872 = vpow.pop %v2871
        %v2873 = vmul.f32 %v2861, 1.442695
        %v2874 = vpow.pop %v2873
        %v2875 = vmul.f32 %v2862, 1.442695
        %v2876 = vpow.pop %v2875
        %v2877 = vmul.f32 %v2863, 1.442695
        %v2878 = vpow.pop %v2877
        %v2879 = vmul.f32 %v2864, 1.442695
        %v2880 = vpow.pop %v2879
        %v2881 = vsel %vm1680, %v2866, 0.0
        %2882 = vadd.xlane.f32.xlu0 %v2881
        %v2883 = vpop.xlane.xlu0 %2882
        %v2884 = vsel %vm1680, %v2868, 0.0
        %2885 = vadd.xlane.f32.xlu0 %v2884
        %v2886 = vpop.xlane.xlu0 %2885
        %v2887 = vsel %vm1680, %v2870, 0.0
        %2888 = vadd.xlane.f32.xlu0 %v2887
        %v2889 = vpop.xlane.xlu0 %2888
        %v2890 = vsel %vm1680, %v2872, 0.0
        %2891 = vadd.xlane.f32.xlu0 %v2890
        %v2892 = vpop.xlane.xlu0 %2891
        %v2893 = vsel %vm1680, %v2874, 0.0
        %2894 = vadd.xlane.f32.xlu0 %v2893
        %v2895 = vpop.xlane.xlu0 %2894
        %v2896 = vsel %vm1680, %v2876, 0.0
        %2897 = vadd.xlane.f32.xlu0 %v2896
        %v2898 = vpop.xlane.xlu0 %2897
        %v2899 = vsel %vm1680, %v2878, 0.0
        %2900 = vadd.xlane.f32.xlu0 %v2899
        %v2901 = vpop.xlane.xlu0 %2900
        %v2902 = vsel %vm1680, %v2880, 0.0
        %2903 = vadd.xlane.f32.xlu0 %v2902
        %v2904 = vpop.xlane.xlu0 %2903
        %v2905 = vrcp.pop %v2883
        %v2906 = vrcp.pop %v2886
        %v2907 = vrcp.pop %v2889
        %v2908 = vrcp.pop %v2892
        %v2909 = vrcp.pop %v2895
        %v2910 = vrcp.pop %v2898
        %v2911 = vrcp.pop %v2901
        %v2912 = vrcp.pop %v2904
        %v2913 = vmul.f32 %v2866, %v2905
        %v2914 = vmul.f32 %v2868, %v2906
        %v2915 = vmul.f32 %v2870, %v2907
        %v2916 = vmul.f32 %v2872, %v2908
        %v2917 = vmul.f32 %v2874, %v2909
        %v2918 = vmul.f32 %v2876, %v2910
        %v2919 = vmul.f32 %v2878, %v2911
        %v2920 = vmul.f32 %v2880, %v2912
        %2921 = vrot.lane.b32.xlu0 %v1507, 40
        %v2922 = vpop.permute.xlu0 %2921
        %2923 = vrot.lane.b32.xlu0 %v1508, 40
        %v2924 = vpop.permute.xlu0 %2923
        %v2928 = vsel %vm1680, %v2913, 0
        %v2931 = vsel %vm1680, %v2914, 0
        %2933 = vmatpush.msra.mxu0 0.0
        %2934 = vmatpush.msra.mxu0 0.0
        %2935 = vmatpush.msra.mxu0 0.0
        %2936 = vmatpush.msra.mxu0 0.0
        %2937 = vmatpush.msra.mxu0 0.0
        %2938 = vmatpush.msra.mxu0 0.0
        %2939 = vmatpush.msra.mxu0 0.0
        %2940 = vmatpush.msra.mxu0 0.0
        %2941 = vmatpush.msra.mxu0 0.0
        %2942 = vmatpush.msra.mxu0 0.0
        %2943 = vmatpush.msra.mxu0 0.0
        %2944 = vmatpush.msra.mxu0 0.0
        %2945 = vmatpush.msra.mxu0 0.0
        %2946 = vmatpush.msra.mxu0 0.0
        %2947 = vmatpush.msra.mxu0 %v2924
        %2948 = vmatpush.msra.mxu0 %v2922
        %2949 = vmatmul.f32.gmra.mxu0 %v2928
        %v2950 = vpop.f32.mrf.mxu0
        %v2951 = vadd.f32 0.0, %v2950
        %2952 = vmatmul.f32.gmra.mxu0 %v2931
        %v2953 = vpop.f32.mrf.mxu0
        %v2954 = vadd.f32 0.0, %v2953
        %2955 = vdwg.mxu0
        %2956 = vrot.lane.b32.xlu0 %v1509, 40
        %v2957 = vpop.permute.xlu0 %2956
        %2958 = vrot.lane.b32.xlu0 %v1510, 40
        %v2959 = vpop.permute.xlu0 %2958
        %v2963 = vsel %vm1680, %v2915, 0
        %v2966 = vsel %vm1680, %v2916, 0
        %2968 = vmatpush.msra.mxu0 0.0
        %2969 = vmatpush.msra.mxu0 0.0
        %2970 = vmatpush.msra.mxu0 0.0
        %2971 = vmatpush.msra.mxu0 0.0
        %2972 = vmatpush.msra.mxu0 0.0
        %2973 = vmatpush.msra.mxu0 0.0
        %2974 = vmatpush.msra.mxu0 0.0
        %2975 = vmatpush.msra.mxu0 0.0
        %2976 = vmatpush.msra.mxu0 0.0
        %2977 = vmatpush.msra.mxu0 0.0
        %2978 = vmatpush.msra.mxu0 0.0
        %2979 = vmatpush.msra.mxu0 0.0
        %2980 = vmatpush.msra.mxu0 0.0
        %2981 = vmatpush.msra.mxu0 0.0
        %2982 = vmatpush.msra.mxu0 %v2959
        %2983 = vmatpush.msra.mxu0 %v2957
        %2984 = vmatmul.f32.gmra.mxu0 %v2963
        %v2985 = vpop.f32.mrf.mxu0
        %v2986 = vadd.f32 0.0, %v2985
        %2987 = vmatmul.f32.gmra.mxu0 %v2966
        %v2988 = vpop.f32.mrf.mxu0
        %v2989 = vadd.f32 0.0, %v2988
        %2990 = vdwg.mxu0
        %2991 = vrot.lane.b32.xlu0 %v1511, 40
        %v2992 = vpop.permute.xlu0 %2991
        %2993 = vrot.lane.b32.xlu0 %v1512, 40
        %v2994 = vpop.permute.xlu0 %2993
        %v2998 = vsel %vm1680, %v2917, 0
        %v3001 = vsel %vm1680, %v2918, 0
        %3003 = vmatpush.msra.mxu0 0.0
        %3004 = vmatpush.msra.mxu0 0.0
        %3005 = vmatpush.msra.mxu0 0.0
        %3006 = vmatpush.msra.mxu0 0.0
        %3007 = vmatpush.msra.mxu0 0.0
        %3008 = vmatpush.msra.mxu0 0.0
        %3009 = vmatpush.msra.mxu0 0.0
        %3010 = vmatpush.msra.mxu0 0.0
        %3011 = vmatpush.msra.mxu0 0.0
        %3012 = vmatpush.msra.mxu0 0.0
        %3013 = vmatpush.msra.mxu0 0.0
        %3014 = vmatpush.msra.mxu0 0.0
        %3015 = vmatpush.msra.mxu0 0.0
        %3016 = vmatpush.msra.mxu0 0.0
        %3017 = vmatpush.msra.mxu0 %v2994
        %3018 = vmatpush.msra.mxu0 %v2992
        %3019 = vmatmul.f32.gmra.mxu0 %v2998
        %v3020 = vpop.f32.mrf.mxu0
        %v3021 = vadd.f32 0.0, %v3020
        %3022 = vmatmul.f32.gmra.mxu0 %v3001
        %v3023 = vpop.f32.mrf.mxu0
        %v3024 = vadd.f32 0.0, %v3023
        %3025 = vdwg.mxu0
        %3026 = vrot.lane.b32.xlu0 %v1513, 40
        %v3027 = vpop.permute.xlu0 %3026
        %3028 = vrot.lane.b32.xlu0 %v1514, 40
        %v3029 = vpop.permute.xlu0 %3028
        %v3033 = vsel %vm1680, %v2919, 0
        %v3036 = vsel %vm1680, %v2920, 0
        %3038 = vmatpush.msra.mxu0 0.0
        %3039 = vmatpush.msra.mxu0 0.0
        %3040 = vmatpush.msra.mxu0 0.0
        %3041 = vmatpush.msra.mxu0 0.0
        %3042 = vmatpush.msra.mxu0 0.0
        %3043 = vmatpush.msra.mxu0 0.0
        %3044 = vmatpush.msra.mxu0 0.0
        %3045 = vmatpush.msra.mxu0 0.0
        %3046 = vmatpush.msra.mxu0 0.0
        %3047 = vmatpush.msra.mxu0 0.0
        %3048 = vmatpush.msra.mxu0 0.0
        %3049 = vmatpush.msra.mxu0 0.0
        %3050 = vmatpush.msra.mxu0 0.0
        %3051 = vmatpush.msra.mxu0 0.0
        %3052 = vmatpush.msra.mxu0 %v3029
        %3053 = vmatpush.msra.mxu0 %v3027
        %3054 = vmatmul.f32.gmra.mxu0 %v3033
        %v3055 = vpop.f32.mrf.mxu0
        %v3056 = vadd.f32 0.0, %v3055
        %3057 = vmatmul.f32.gmra.mxu0 %v3036
        %v3058 = vpop.f32.mrf.mxu0
        %v3059 = vadd.f32 0.0, %v3058
        %3060 = vdwg.mxu0
        %3069 = vrot.lane.b32.xlu0 %v2183, 8
        %v3070 = vpop.permute.xlu0 %3069
        %3071 = vrot.lane.b32.xlu0 %v2186, 8
        %v3072 = vpop.permute.xlu0 %3071
        %3073 = vrot.lane.b32.xlu0 %v2218, 8
        %v3074 = vpop.permute.xlu0 %3073
        %3075 = vrot.lane.b32.xlu0 %v2221, 8
        %v3076 = vpop.permute.xlu0 %3075
        %3077 = vrot.lane.b32.xlu0 %v2253, 8
        %v3078 = vpop.permute.xlu0 %3077
        %3079 = vrot.lane.b32.xlu0 %v2256, 8
        %v3080 = vpop.permute.xlu0 %3079
        %3081 = vrot.lane.b32.xlu0 %v2288, 8
        %v3082 = vpop.permute.xlu0 %3081
        %3083 = vrot.lane.b32.xlu0 %v2291, 8
        %v3084 = vpop.permute.xlu0 %3083
        %3101 = vrot.lane.b32.xlu0 %v2567, 16
        %v3102 = vpop.permute.xlu0 %3101
        %3103 = vrot.lane.b32.xlu0 %v2570, 16
        %v3104 = vpop.permute.xlu0 %3103
        %3105 = vrot.lane.b32.xlu0 %v2602, 16
        %v3106 = vpop.permute.xlu0 %3105
        %3107 = vrot.lane.b32.xlu0 %v2605, 16
        %v3108 = vpop.permute.xlu0 %3107
        %3109 = vrot.lane.b32.xlu0 %v2637, 16
        %v3110 = vpop.permute.xlu0 %3109
        %3111 = vrot.lane.b32.xlu0 %v2640, 16
        %v3112 = vpop.permute.xlu0 %3111
        %3113 = vrot.lane.b32.xlu0 %v2672, 16
        %v3114 = vpop.permute.xlu0 %3113
        %3115 = vrot.lane.b32.xlu0 %v2675, 16
        %v3116 = vpop.permute.xlu0 %3115
        %3133 = vrot.lane.b32.xlu0 %v2951, 24
        %v3134 = vpop.permute.xlu0 %3133
        %3135 = vrot.lane.b32.xlu0 %v2954, 24
        %v3136 = vpop.permute.xlu0 %3135
        %3137 = vrot.lane.b32.xlu0 %v2986, 24
        %v3138 = vpop.permute.xlu0 %3137
        %3139 = vrot.lane.b32.xlu0 %v2989, 24
        %v3140 = vpop.permute.xlu0 %3139
        %3141 = vrot.lane.b32.xlu0 %v3021, 24
        %v3142 = vpop.permute.xlu0 %3141
        %3143 = vrot.lane.b32.xlu0 %v3024, 24
        %v3144 = vpop.permute.xlu0 %3143
        %3145 = vrot.lane.b32.xlu0 %v3056, 24
        %v3146 = vpop.permute.xlu0 %3145
        %3147 = vrot.lane.b32.xlu0 %v3059, 24
        %v3148 = vpop.permute.xlu0 %3147
        %v3157 = vsel %vm1529, %v1799, %v3070
        %v3158 = vsel %vm1529, %v1802, %v3072
        %v3159 = vsel %vm1529, %v1834, %v3074
        %v3160 = vsel %vm1529, %v1837, %v3076
        %v3161 = vsel %vm1529, %v1869, %v3078
        %v3162 = vsel %vm1529, %v1872, %v3080
        %v3163 = vsel %vm1529, %v1904, %v3082
        %v3164 = vsel %vm1529, %v1907, %v3084
        %v3165 = vsel %vm1680, %v3157, %v3102
        %v3166 = vsel %vm1680, %v3158, %v3104
        %v3167 = vsel %vm1680, %v3159, %v3106
        %v3168 = vsel %vm1680, %v3160, %v3108
        %v3169 = vsel %vm1680, %v3161, %v3110
        %v3170 = vsel %vm1680, %v3162, %v3112
        %v3171 = vsel %vm1680, %v3163, %v3114
        %v3172 = vsel %vm1680, %v3164, %v3116
        %vm3173 = vcmask 195584
        %v3174 = vsel %vm3173, %v3165, %v3134
        %v3175 = vsel %vm3173, %v3166, %v3136
        %v3176 = vsel %vm3173, %v3167, %v3138
        %v3177 = vsel %vm3173, %v3168, %v3140
        %v3178 = vsel %vm3173, %v3169, %v3142
        %v3179 = vsel %vm3173, %v3170, %v3144
        %v3180 = vsel %vm3173, %v3171, %v3146
        %v3181 = vsel %vm3173, %v3172, %v3148
        %v3183 = vperm.slane %v957, 0
        %v3186 = vsel %vm1011, %v3174, 0
        %v3189 = vsel %vm1011, %v3175, 0
        %v3192 = vsel %vm1011, %v3176, 0
        %v3195 = vsel %vm1011, %v3177, 0
        %v3198 = vsel %vm1011, %v3178, 0
        %v3201 = vsel %vm1011, %v3179, 0
        %v3204 = vsel %vm1011, %v3180, 0
        %v3207 = vsel %vm1011, %v3181, 0
        %3209 = vmatpush.msra.mxu0 0.0
        %3210 = vmatpush.msra.mxu0 0.0
        %3211 = vmatpush.msra.mxu0 0.0
        %3212 = vmatpush.msra.mxu0 0.0
        %3213 = vmatpush.msra.mxu0 0.0
        %3214 = vmatpush.msra.mxu0 0.0
        %3215 = vmatpush.msra.mxu0 0.0
        %3216 = vmatpush.msra.mxu0 0.0
        %3217 = vmatpush.msra.mxu0 0.0
        %3218 = vmatpush.msra.mxu0 0.0
        %3219 = vmatpush.msra.mxu0 0.0
        %3220 = vmatpush.msra.mxu0 0.0
        %3221 = vmatpush.msra.mxu0 %v952
        %3222 = vmatpush.msra.mxu0 %v951
        %3223 = vmatpush.msra.mxu0 %v950
        %3224 = vmatpush.msra.mxu0 %v949
        %3225 = vmatmul.f32.gmra.mxu0 %v3186
        %v3226 = vpop.f32.mrf.mxu0
        %v3227 = vadd.f32 %v3183, %v3226
        %3228 = vmatmul.f32.gmra.mxu0 %v3189
        %v3229 = vpop.f32.mrf.mxu0
        %v3230 = vadd.f32 %v3183, %v3229
        %3231 = vmatmul.f32.gmra.mxu0 %v3192
        %v3232 = vpop.f32.mrf.mxu0
        %v3233 = vadd.f32 %v3183, %v3232
        %3234 = vmatmul.f32.gmra.mxu0 %v3195
        %v3235 = vpop.f32.mrf.mxu0
        %v3236 = vadd.f32 %v3183, %v3235
        %3237 = vmatmul.f32.gmra.mxu0 %v3198
        %v3238 = vpop.f32.mrf.mxu0
        %v3239 = vadd.f32 %v3183, %v3238
        %3240 = vmatmul.f32.gmra.mxu0 %v3201
        %v3241 = vpop.f32.mrf.mxu0
        %v3242 = vadd.f32 %v3183, %v3241
        %3243 = vmatmul.f32.gmra.mxu0 %v3204
        %v3244 = vpop.f32.mrf.mxu0
        %v3245 = vadd.f32 %v3183, %v3244
        %3246 = vmatmul.f32.gmra.mxu0 %v3207
        %v3247 = vpop.f32.mrf.mxu0
        %v3248 = vadd.f32 %v3183, %v3247
        %3249 = vdwg.mxu0
        %v3251 = vperm.slane %v959, 0
        %v3253 = vmul.f32 %v3251, %v3227
        %v3254 = vmul.f32 %v3251, %v3230
        %v3255 = vmul.f32 %v3251, %v3233
        %v3256 = vmul.f32 %v3251, %v3236
        %v3257 = vmul.f32 %v3251, %v3239
        %v3258 = vmul.f32 %v3251, %v3242
        %v3259 = vmul.f32 %v3251, %v3245
        %v3260 = vmul.f32 %v3251, %v3248
        %v3261 = vadd.f32 %v879, %v3253
        %v3262 = vadd.f32 %v880, %v3254
        %v3263 = vadd.f32 %v881, %v3255
        %v3264 = vadd.f32 %v882, %v3256
        %v3265 = vadd.f32 %v883, %v3257
        %v3266 = vadd.f32 %v884, %v3258
        %v3267 = vadd.f32 %v885, %v3259
        %v3268 = vadd.f32 %v886, %v3260
        %v3269 = vsel %vm1011, %v3261, 0.0
        %3270 = vadd.xlane.f32.xlu0 %v3269
        %v3271 = vpop.xlane.xlu0 %3270
        %v3272 = vsel %vm1011, %v3262, 0.0
        %3273 = vadd.xlane.f32.xlu0 %v3272
        %v3274 = vpop.xlane.xlu0 %3273
        %v3275 = vsel %vm1011, %v3263, 0.0
        %3276 = vadd.xlane.f32.xlu0 %v3275
        %v3277 = vpop.xlane.xlu0 %3276
        %v3278 = vsel %vm1011, %v3264, 0.0
        %3279 = vadd.xlane.f32.xlu0 %v3278
        %v3280 = vpop.xlane.xlu0 %3279
        %v3281 = vsel %vm1011, %v3265, 0.0
        %3282 = vadd.xlane.f32.xlu0 %v3281
        %v3283 = vpop.xlane.xlu0 %3282
        %v3284 = vsel %vm1011, %v3266, 0.0
        %3285 = vadd.xlane.f32.xlu0 %v3284
        %v3286 = vpop.xlane.xlu0 %3285
        %v3287 = vsel %vm1011, %v3267, 0.0
        %3288 = vadd.xlane.f32.xlu0 %v3287
        %v3289 = vpop.xlane.xlu0 %3288
        %v3290 = vsel %vm1011, %v3268, 0.0
        %3291 = vadd.xlane.f32.xlu0 %v3290
        %v3292 = vpop.xlane.xlu0 %3291
        %v3293 = vmul.f32 %v3271, %v1042
        %v3294 = vmul.f32 %v3274, %v1042
        %v3295 = vmul.f32 %v3277, %v1042
        %v3296 = vmul.f32 %v3280, %v1042
        %v3297 = vmul.f32 %v3283, %v1042
        %v3298 = vmul.f32 %v3286, %v1042
        %v3299 = vmul.f32 %v3289, %v1042
        %v3300 = vmul.f32 %v3292, %v1042
        %v3301 = vsub.f32 %v3261, %v3293
        %v3302 = vsub.f32 %v3262, %v3294
        %v3303 = vsub.f32 %v3263, %v3295
        %v3304 = vsub.f32 %v3264, %v3296
        %v3305 = vsub.f32 %v3265, %v3297
        %v3306 = vsub.f32 %v3266, %v3298
        %v3307 = vsub.f32 %v3267, %v3299
        %v3308 = vsub.f32 %v3268, %v3300
        %v3309 = vmul.f32 %v3301, %v3301
        %v3310 = vmul.f32 %v3302, %v3302
        %v3311 = vmul.f32 %v3303, %v3303
        %v3312 = vmul.f32 %v3304, %v3304
        %v3313 = vmul.f32 %v3305, %v3305
        %v3314 = vmul.f32 %v3306, %v3306
        %v3315 = vmul.f32 %v3307, %v3307
        %v3316 = vmul.f32 %v3308, %v3308
        %v3317 = vsel %vm1011, %v3309, 0.0
        %3318 = vadd.xlane.f32.xlu0 %v3317
        %v3319 = vpop.xlane.xlu0 %3318
        %v3320 = vsel %vm1011, %v3310, 0.0
        %3321 = vadd.xlane.f32.xlu0 %v3320
        %v3322 = vpop.xlane.xlu0 %3321
        %v3323 = vsel %vm1011, %v3311, 0.0
        %3324 = vadd.xlane.f32.xlu0 %v3323
        %v3325 = vpop.xlane.xlu0 %3324
        %v3326 = vsel %vm1011, %v3312, 0.0
        %3327 = vadd.xlane.f32.xlu0 %v3326
        %v3328 = vpop.xlane.xlu0 %3327
        %v3329 = vsel %vm1011, %v3313, 0.0
        %3330 = vadd.xlane.f32.xlu0 %v3329
        %v3331 = vpop.xlane.xlu0 %3330
        %v3332 = vsel %vm1011, %v3314, 0.0
        %3333 = vadd.xlane.f32.xlu0 %v3332
        %v3334 = vpop.xlane.xlu0 %3333
        %v3335 = vsel %vm1011, %v3315, 0.0
        %3336 = vadd.xlane.f32.xlu0 %v3335
        %v3337 = vpop.xlane.xlu0 %3336
        %v3338 = vsel %vm1011, %v3316, 0.0
        %3339 = vadd.xlane.f32.xlu0 %v3338
        %v3340 = vpop.xlane.xlu0 %3339
        %v3341 = vmul.f32 %v3319, %v1042
        %v3342 = vmul.f32 %v3322, %v1042
        %v3343 = vmul.f32 %v3325, %v1042
        %v3344 = vmul.f32 %v3328, %v1042
        %v3345 = vmul.f32 %v3331, %v1042
        %v3346 = vmul.f32 %v3334, %v1042
        %v3347 = vmul.f32 %v3337, %v1042
        %v3348 = vmul.f32 %v3340, %v1042
        %v3349 = vadd.f32 %v3341, 1e-05
        %v3350 = vadd.f32 %v3342, 1e-05
        %v3351 = vadd.f32 %v3343, 1e-05
        %v3352 = vadd.f32 %v3344, 1e-05
        %v3353 = vadd.f32 %v3345, 1e-05
        %v3354 = vadd.f32 %v3346, 1e-05
        %v3355 = vadd.f32 %v3347, 1e-05
        %v3356 = vadd.f32 %v3348, 1e-05
        %v3357 = vrsqrt.pop %v3349
        %v3358 = vmul.f32 %v3357, %v3349
        %v3359 = vmul.f32 %v3358, %v3357
        %v3360 = vmul.f32 0.5, %v3359
        %v3361 = vsub.f32 1.5, %v3360
        %v3362 = vmul.f32 %v3357, %v3361
        %vm3363 = vweird.f32 %v3349
        %vm3364 = vweird.f32 %v3357
        %vm3365 = vmor %vm3363, %vm3364
        %v3366 = vsel %vm3365, %v3357, %v3362
        %v3367 = vrsqrt.pop %v3350
        %v3368 = vmul.f32 %v3367, %v3350
        %v3369 = vmul.f32 %v3368, %v3367
        %v3370 = vmul.f32 0.5, %v3369
        %v3371 = vsub.f32 1.5, %v3370
        %v3372 = vmul.f32 %v3367, %v3371
        %vm3373 = vweird.f32 %v3350
        %vm3374 = vweird.f32 %v3367
        %vm3375 = vmor %vm3373, %vm3374
        %v3376 = vsel %vm3375, %v3367, %v3372
        %v3377 = vrsqrt.pop %v3351
        %v3378 = vmul.f32 %v3377, %v3351
        %v3379 = vmul.f32 %v3378, %v3377
        %v3380 = vmul.f32 0.5, %v3379
        %v3381 = vsub.f32 1.5, %v3380
        %v3382 = vmul.f32 %v3377, %v3381
        %vm3383 = vweird.f32 %v3351
        %vm3384 = vweird.f32 %v3377
        %vm3385 = vmor %vm3383, %vm3384
        %v3386 = vsel %vm3385, %v3377, %v3382
        %v3387 = vrsqrt.pop %v3352
        %v3388 = vmul.f32 %v3387, %v3352
        %v3389 = vmul.f32 %v3388, %v3387
        %v3390 = vmul.f32 0.5, %v3389
        %v3391 = vsub.f32 1.5, %v3390
        %v3392 = vmul.f32 %v3387, %v3391
        %vm3393 = vweird.f32 %v3352
        %vm3394 = vweird.f32 %v3387
        %vm3395 = vmor %vm3393, %vm3394
        %v3396 = vsel %vm3395, %v3387, %v3392
        %v3397 = vrsqrt.pop %v3353
        %v3398 = vmul.f32 %v3397, %v3353
        %v3399 = vmul.f32 %v3398, %v3397
        %v3400 = vmul.f32 0.5, %v3399
        %v3401 = vsub.f32 1.5, %v3400
        %v3402 = vmul.f32 %v3397, %v3401
        %vm3403 = vweird.f32 %v3353
        %vm3404 = vweird.f32 %v3397
        %vm3405 = vmor %vm3403, %vm3404
        %v3406 = vsel %vm3405, %v3397, %v3402
        %v3407 = vrsqrt.pop %v3354
        %v3408 = vmul.f32 %v3407, %v3354
        %v3409 = vmul.f32 %v3408, %v3407
        %v3410 = vmul.f32 0.5, %v3409
        %v3411 = vsub.f32 1.5, %v3410
        %v3412 = vmul.f32 %v3407, %v3411
        %vm3413 = vweird.f32 %v3354
        %vm3414 = vweird.f32 %v3407
        %vm3415 = vmor %vm3413, %vm3414
        %v3416 = vsel %vm3415, %v3407, %v3412
        %v3417 = vrsqrt.pop %v3355
        %v3418 = vmul.f32 %v3417, %v3355
        %v3419 = vmul.f32 %v3418, %v3417
        %v3420 = vmul.f32 0.5, %v3419
        %v3421 = vsub.f32 1.5, %v3420
        %v3422 = vmul.f32 %v3417, %v3421
        %vm3423 = vweird.f32 %v3355
        %vm3424 = vweird.f32 %v3417
        %vm3425 = vmor %vm3423, %vm3424
        %v3426 = vsel %vm3425, %v3417, %v3422
        %v3427 = vrsqrt.pop %v3356
        %v3428 = vmul.f32 %v3427, %v3356
        %v3429 = vmul.f32 %v3428, %v3427
        %v3430 = vmul.f32 0.5, %v3429
        %v3431 = vsub.f32 1.5, %v3430
        %v3432 = vmul.f32 %v3427, %v3431
        %vm3433 = vweird.f32 %v3356
        %vm3434 = vweird.f32 %v3427
        %vm3435 = vmor %vm3433, %vm3434
        %v3436 = vsel %vm3435, %v3427, %v3432
        %v3437 = vmul.f32 %v3301, %v3366
        %v3438 = vmul.f32 %v3302, %v3376
        %v3439 = vmul.f32 %v3303, %v3386
        %v3440 = vmul.f32 %v3304, %v3396
        %v3441 = vmul.f32 %v3305, %v3406
        %v3442 = vmul.f32 %v3306, %v3416
        %v3443 = vmul.f32 %v3307, %v3426
        %v3444 = vmul.f32 %v3308, %v3436
        %v3446 = vperm.slane %v961, 0
        %v3448 = vmul.f32 %v3437, %v3446
        %v3449 = vmul.f32 %v3438, %v3446
        %v3450 = vmul.f32 %v3439, %v3446
        %v3451 = vmul.f32 %v3440, %v3446
        %v3452 = vmul.f32 %v3441, %v3446
        %v3453 = vmul.f32 %v3442, %v3446
        %v3454 = vmul.f32 %v3443, %v3446
        %v3455 = vmul.f32 %v3444, %v3446
        %v3457 = vperm.slane %v963, 0
        %v3459 = vadd.f32 %v3448, %v3457
        %v3460 = vadd.f32 %v3449, %v3457
        %v3461 = vadd.f32 %v3450, %v3457
        %v3462 = vadd.f32 %v3451, %v3457
        %v3463 = vadd.f32 %v3452, %v3457
        %v3464 = vadd.f32 %v3453, %v3457
        %v3465 = vadd.f32 %v3454, %v3457
        %v3466 = vadd.f32 %v3455, %v3457
        %v3468 = vperm.slane %v973, 0
        %v3471 = vsel %vm1011, %v3459, 0
        %v3474 = vsel %vm1011, %v3460, 0
        %v3477 = vsel %vm1011, %v3461, 0
        %v3480 = vsel %vm1011, %v3462, 0
        %v3483 = vsel %vm1011, %v3463, 0
        %v3486 = vsel %vm1011, %v3464, 0
        %v3489 = vsel %vm1011, %v3465, 0
        %v3492 = vsel %vm1011, %v3466, 0
        %3494 = vmatpush.msra.mxu0 0.0
        %3495 = vmatpush.msra.mxu0 0.0
        %3496 = vmatpush.msra.mxu0 0.0
        %3497 = vmatpush.msra.mxu0 0.0
        %3498 = vmatpush.msra.mxu0 0.0
        %3499 = vmatpush.msra.mxu0 0.0
        %3500 = vmatpush.msra.mxu0 0.0
        %3501 = vmatpush.msra.mxu0 0.0
        %3502 = vmatpush.msra.mxu0 0.0
        %3503 = vmatpush.msra.mxu0 0.0
        %3504 = vmatpush.msra.mxu0 0.0
        %3505 = vmatpush.msra.mxu0 0.0
        %3506 = vmatpush.msra.mxu0 %v968
        %3507 = vmatpush.msra.mxu0 %v967
        %3508 = vmatpush.msra.mxu0 %v966
        %3509 = vmatpush.msra.mxu0 %v965
        %3510 = vmatmul.f32.gmra.mxu0 %v3471
        %v3511 = vpop.f32.mrf.mxu0
        %v3512 = vadd.f32 %v3468, %v3511
        %3513 = vmatmul.f32.gmra.mxu0 %v3474
        %v3514 = vpop.f32.mrf.mxu0
        %v3515 = vadd.f32 %v3468, %v3514
        %3516 = vmatmul.f32.gmra.mxu0 %v3477
        %v3517 = vpop.f32.mrf.mxu0
        %v3518 = vadd.f32 %v3468, %v3517
        %3519 = vmatmul.f32.gmra.mxu0 %v3480
        %v3520 = vpop.f32.mrf.mxu0
        %v3521 = vadd.f32 %v3468, %v3520
        %3522 = vmatmul.f32.gmra.mxu0 %v3483
        %v3523 = vpop.f32.mrf.mxu0
        %v3524 = vadd.f32 %v3468, %v3523
        %3525 = vmatmul.f32.gmra.mxu0 %v3486
        %v3526 = vpop.f32.mrf.mxu0
        %v3527 = vadd.f32 %v3468, %v3526
        %3528 = vmatmul.f32.gmra.mxu0 %v3489
        %v3529 = vpop.f32.mrf.mxu0
        %v3530 = vadd.f32 %v3468, %v3529
        %3531 = vmatmul.f32.gmra.mxu0 %v3492
        %v3532 = vpop.f32.mrf.mxu0
        %v3533 = vadd.f32 %v3468, %v3532
        %3534 = vdwg.mxu0
        %v3535 = vmul.f32 %v3512, %v3512
        %v3536 = vmul.f32 %v3515, %v3515
        %v3537 = vmul.f32 %v3518, %v3518
        %v3538 = vmul.f32 %v3521, %v3521
        %v3539 = vmul.f32 %v3524, %v3524
        %v3540 = vmul.f32 %v3527, %v3527
        %v3541 = vmul.f32 %v3530, %v3530
        %v3542 = vmul.f32 %v3533, %v3533
        %v3543 = vmul.f32 %v3512, %v3535
        %v3544 = vmul.f32 %v3515, %v3536
        %v3545 = vmul.f32 %v3518, %v3537
        %v3546 = vmul.f32 %v3521, %v3538
        %v3547 = vmul.f32 %v3524, %v3539
        %v3548 = vmul.f32 %v3527, %v3540
        %v3549 = vmul.f32 %v3530, %v3541
        %v3550 = vmul.f32 %v3533, %v3542
        %v3551 = vmul.f32 %v3543, 0.044715
        %v3552 = vmul.f32 %v3544, 0.044715
        %v3553 = vmul.f32 %v3545, 0.044715
        %v3554 = vmul.f32 %v3546, 0.044715
        %v3555 = vmul.f32 %v3547, 0.044715
        %v3556 = vmul.f32 %v3548, 0.044715
        %v3557 = vmul.f32 %v3549, 0.044715
        %v3558 = vmul.f32 %v3550, 0.044715
        %v3559 = vadd.f32 %v3512, %v3551
        %v3560 = vadd.f32 %v3515, %v3552
        %v3561 = vadd.f32 %v3518, %v3553
        %v3562 = vadd.f32 %v3521, %v3554
        %v3563 = vadd.f32 %v3524, %v3555
        %v3564 = vadd.f32 %v3527, %v3556
        %v3565 = vadd.f32 %v3530, %v3557
        %v3566 = vadd.f32 %v3533, %v3558
        %v3567 = vmul.f32 %v3559, 0.7978846
        %v3568 = vmul.f32 %v3560, 0.7978846
        %v3569 = vmul.f32 %v3561, 0.7978846
        %v3570 = vmul.f32 %v3562, 0.7978846
        %v3571 = vmul.f32 %v3563, 0.7978846
        %v3572 = vmul.f32 %v3564, 0.7978846
        %v3573 = vmul.f32 %v3565, 0.7978846
        %v3574 = vmul.f32 %v3566, 0.7978846
        %v3575 = vtanh.pop %v3567
        %v3576 = vtanh.pop %v3568
        %v3577 = vtanh.pop %v3569
        %v3578 = vtanh.pop %v3570
        %v3579 = vtanh.pop %v3571
        %v3580 = vtanh.pop %v3572
        %v3581 = vtanh.pop %v3573
        %v3582 = vtanh.pop %v3574
        %v3583 = vadd.f32 %v3575, 1.0
        %v3584 = vadd.f32 %v3576, 1.0
        %v3585 = vadd.f32 %v3577, 1.0
        %v3586 = vadd.f32 %v3578, 1.0
        %v3587 = vadd.f32 %v3579, 1.0
        %v3588 = vadd.f32 %v3580, 1.0
        %v3589 = vadd.f32 %v3581, 1.0
        %v3590 = vadd.f32 %v3582, 1.0
        %v3591 = vmul.f32 %v3583, 0.5
        %v3592 = vmul.f32 %v3584, 0.5
        %v3593 = vmul.f32 %v3585, 0.5
        %v3594 = vmul.f32 %v3586, 0.5
        %v3595 = vmul.f32 %v3587, 0.5
        %v3596 = vmul.f32 %v3588, 0.5
        %v3597 = vmul.f32 %v3589, 0.5
        %v3598 = vmul.f32 %v3590, 0.5
        %v3599 = vmul.f32 %v3512, %v3591
        %v3600 = vmul.f32 %v3515, %v3592
        %v3601 = vmul.f32 %v3518, %v3593
        %v3602 = vmul.f32 %v3521, %v3594
        %v3603 = vmul.f32 %v3524, %v3595
        %v3604 = vmul.f32 %v3527, %v3596
        %v3605 = vmul.f32 %v3530, %v3597
        %v3606 = vmul.f32 %v3533, %v3598
        %v3608 = vperm.slane %v1007, 0
        %3610 = vmatpush.msra.mxu0 %v990
        %3611 = vmatpush.msra.mxu0 %v989
        %3612 = vmatpush.msra.mxu0 %v988
        %3613 = vmatpush.msra.mxu0 %v987
        %3614 = vmatpush.msra.mxu0 %v986
        %3615 = vmatpush.msra.mxu0 %v985
        %3616 = vmatpush.msra.mxu0 %v984
        %3617 = vmatpush.msra.mxu0 %v983
        %3618 = vmatpush.msra.mxu0 %v982
        %3619 = vmatpush.msra.mxu0 %v981
        %3620 = vmatpush.msra.mxu0 %v980
        %3621 = vmatpush.msra.mxu0 %v979
        %3622 = vmatpush.msra.mxu0 %v978
        %3623 = vmatpush.msra.mxu0 %v977
        %3624 = vmatpush.msra.mxu0 %v976
        %3625 = vmatpush.msra.mxu0 %v975
        %3626 = vmatmul.f32.gmra.mxu0 %v3599
        %v3627 = vpop.f32.mrf.mxu0
        %v3628 = vadd.f32 %v3608, %v3627
        %3629 = vmatmul.f32.gmra.mxu0 %v3600
        %v3630 = vpop.f32.mrf.mxu0
        %v3631 = vadd.f32 %v3608, %v3630
        %3632 = vmatmul.f32.gmra.mxu0 %v3601
        %v3633 = vpop.f32.mrf.mxu0
        %v3634 = vadd.f32 %v3608, %v3633
        %3635 = vmatmul.f32.gmra.mxu0 %v3602
        %v3636 = vpop.f32.mrf.mxu0
        %v3637 = vadd.f32 %v3608, %v3636
        %3638 = vmatmul.f32.gmra.mxu0 %v3603
        %v3639 = vpop.f32.mrf.mxu0
        %v3640 = vadd.f32 %v3608, %v3639
        %3641 = vmatmul.f32.gmra.mxu0 %v3604
        %v3642 = vpop.f32.mrf.mxu0
        %v3643 = vadd.f32 %v3608, %v3642
        %3644 = vmatmul.f32.gmra.mxu0 %v3605
        %v3645 = vpop.f32.mrf.mxu0
        %v3646 = vadd.f32 %v3608, %v3645
        %3647 = vmatmul.f32.gmra.mxu0 %v3606
        %v3648 = vpop.f32.mrf.mxu0
        %v3649 = vadd.f32 %v3608, %v3648
        %3650 = vdwg.mxu0
        %v3652 = vperm.slane %v1009, 0
        %v3654 = vmul.f32 %v3652, %v3628
        %v3655 = vmul.f32 %v3652, %v3631
        %v3656 = vmul.f32 %v3652, %v3634
        %v3657 = vmul.f32 %v3652, %v3637
        %v3658 = vmul.f32 %v3652, %v3640
        %v3659 = vmul.f32 %v3652, %v3643
        %v3660 = vmul.f32 %v3652, %v3646
        %v3661 = vmul.f32 %v3652, %v3649
        %v3662 = vadd.f32 %v3261, %v3654
        %v3663 = vadd.f32 %v3262, %v3655
        %v3664 = vadd.f32 %v3263, %v3656
        %v3665 = vadd.f32 %v3264, %v3657
        %v3666 = vadd.f32 %v3265, %v3658
        %v3667 = vadd.f32 %v3266, %v3659
        %v3668 = vadd.f32 %v3267, %v3660
        %v3669 = vadd.f32 %v3268, %v3661
        %v3670 = vsel %vm1011, %v3662, 0.0
        %3671 = vadd.xlane.f32.xlu0 %v3670
        %v3672 = vpop.xlane.xlu0 %3671
        %v3673 = vsel %vm1011, %v3663, 0.0
        %3674 = vadd.xlane.f32.xlu0 %v3673
        %v3675 = vpop.xlane.xlu0 %3674
        %v3676 = vsel %vm1011, %v3664, 0.0
        %3677 = vadd.xlane.f32.xlu0 %v3676
        %v3678 = vpop.xlane.xlu0 %3677
        %v3679 = vsel %vm1011, %v3665, 0.0
        %3680 = vadd.xlane.f32.xlu0 %v3679
        %v3681 = vpop.xlane.xlu0 %3680
        %v3682 = vsel %vm1011, %v3666, 0.0
        %3683 = vadd.xlane.f32.xlu0 %v3682
        %v3684 = vpop.xlane.xlu0 %3683
        %v3685 = vsel %vm1011, %v3667, 0.0
        %3686 = vadd.xlane.f32.xlu0 %v3685
        %v3687 = vpop.xlane.xlu0 %3686
        %v3688 = vsel %vm1011, %v3668, 0.0
        %3689 = vadd.xlane.f32.xlu0 %v3688
        %v3690 = vpop.xlane.xlu0 %3689
        %v3691 = vsel %vm1011, %v3669, 0.0
        %3692 = vadd.xlane.f32.xlu0 %v3691
        %v3693 = vpop.xlane.xlu0 %3692
        %v3694 = vmul.f32 %v3672, %v1042
        %v3695 = vmul.f32 %v3675, %v1042
        %v3696 = vmul.f32 %v3678, %v1042
        %v3697 = vmul.f32 %v3681, %v1042
        %v3698 = vmul.f32 %v3684, %v1042
        %v3699 = vmul.f32 %v3687, %v1042
        %v3700 = vmul.f32 %v3690, %v1042
        %v3701 = vmul.f32 %v3693, %v1042
        %v3702 = vsub.f32 %v3662, %v3694
        %v3703 = vsub.f32 %v3663, %v3695
        %v3704 = vsub.f32 %v3664, %v3696
        %v3705 = vsub.f32 %v3665, %v3697
        %v3706 = vsub.f32 %v3666, %v3698
        %v3707 = vsub.f32 %v3667, %v3699
        %v3708 = vsub.f32 %v3668, %v3700
        %v3709 = vsub.f32 %v3669, %v3701
        %v3710 = vmul.f32 %v3702, %v3702
        %v3711 = vmul.f32 %v3703, %v3703
        %v3712 = vmul.f32 %v3704, %v3704
        %v3713 = vmul.f32 %v3705, %v3705
        %v3714 = vmul.f32 %v3706, %v3706
        %v3715 = vmul.f32 %v3707, %v3707
        %v3716 = vmul.f32 %v3708, %v3708
        %v3717 = vmul.f32 %v3709, %v3709
        %v3718 = vsel %vm1011, %v3710, 0.0
        %3719 = vadd.xlane.f32.xlu0 %v3718
        %v3720 = vpop.xlane.xlu0 %3719
        %v3721 = vsel %vm1011, %v3711, 0.0
        %3722 = vadd.xlane.f32.xlu0 %v3721
        %v3723 = vpop.xlane.xlu0 %3722
        %v3724 = vsel %vm1011, %v3712, 0.0
        %3725 = vadd.xlane.f32.xlu0 %v3724
        %v3726 = vpop.xlane.xlu0 %3725
        %v3727 = vsel %vm1011, %v3713, 0.0
        %3728 = vadd.xlane.f32.xlu0 %v3727
        %v3729 = vpop.xlane.xlu0 %3728
        %v3730 = vsel %vm1011, %v3714, 0.0
        %3731 = vadd.xlane.f32.xlu0 %v3730
        %v3732 = vpop.xlane.xlu0 %3731
        %v3733 = vsel %vm1011, %v3715, 0.0
        %3734 = vadd.xlane.f32.xlu0 %v3733
        %v3735 = vpop.xlane.xlu0 %3734
        %v3736 = vsel %vm1011, %v3716, 0.0
        %3737 = vadd.xlane.f32.xlu0 %v3736
        %v3738 = vpop.xlane.xlu0 %3737
        %v3739 = vsel %vm1011, %v3717, 0.0
        %3740 = vadd.xlane.f32.xlu0 %v3739
        %v3741 = vpop.xlane.xlu0 %3740
        %v3742 = vmul.f32 %v3720, %v1042
        %v3743 = vmul.f32 %v3723, %v1042
        %v3744 = vmul.f32 %v3726, %v1042
        %v3745 = vmul.f32 %v3729, %v1042
        %v3746 = vmul.f32 %v3732, %v1042
        %v3747 = vmul.f32 %v3735, %v1042
        %v3748 = vmul.f32 %v3738, %v1042
        %v3749 = vmul.f32 %v3741, %v1042
        %v3750 = vadd.f32 %v3742, 1e-05
        %v3751 = vadd.f32 %v3743, 1e-05
        %v3752 = vadd.f32 %v3744, 1e-05
        %v3753 = vadd.f32 %v3745, 1e-05
        %v3754 = vadd.f32 %v3746, 1e-05
        %v3755 = vadd.f32 %v3747, 1e-05
        %v3756 = vadd.f32 %v3748, 1e-05
        %v3757 = vadd.f32 %v3749, 1e-05
        %v3758 = vrsqrt.pop %v3750
        %v3759 = vmul.f32 %v3758, %v3750
        %v3760 = vmul.f32 %v3759, %v3758
        %v3761 = vmul.f32 0.5, %v3760
        %v3762 = vsub.f32 1.5, %v3761
        %v3763 = vmul.f32 %v3758, %v3762
        %vm3764 = vweird.f32 %v3750
        %vm3765 = vweird.f32 %v3758
        %vm3766 = vmor %vm3764, %vm3765
        %v3767 = vsel %vm3766, %v3758, %v3763
        %v3768 = vrsqrt.pop %v3751
        %v3769 = vmul.f32 %v3768, %v3751
        %v3770 = vmul.f32 %v3769, %v3768
        %v3771 = vmul.f32 0.5, %v3770
        %v3772 = vsub.f32 1.5, %v3771
        %v3773 = vmul.f32 %v3768, %v3772
        %vm3774 = vweird.f32 %v3751
        %vm3775 = vweird.f32 %v3768
        %vm3776 = vmor %vm3774, %vm3775
        %v3777 = vsel %vm3776, %v3768, %v3773
        %v3778 = vrsqrt.pop %v3752
        %v3779 = vmul.f32 %v3778, %v3752
        %v3780 = vmul.f32 %v3779, %v3778
        %v3781 = vmul.f32 0.5, %v3780
        %v3782 = vsub.f32 1.5, %v3781
        %v3783 = vmul.f32 %v3778, %v3782
        %vm3784 = vweird.f32 %v3752
        %vm3785 = vweird.f32 %v3778
        %vm3786 = vmor %vm3784, %vm3785
        %v3787 = vsel %vm3786, %v3778, %v3783
        %v3788 = vrsqrt.pop %v3753
        %v3789 = vmul.f32 %v3788, %v3753
        %v3790 = vmul.f32 %v3789, %v3788
        %v3791 = vmul.f32 0.5, %v3790
        %v3792 = vsub.f32 1.5, %v3791
        %v3793 = vmul.f32 %v3788, %v3792
        %vm3794 = vweird.f32 %v3753
        %vm3795 = vweird.f32 %v3788
        %vm3796 = vmor %vm3794, %vm3795
        %v3797 = vsel %vm3796, %v3788, %v3793
        %v3798 = vrsqrt.pop %v3754
        %v3799 = vmul.f32 %v3798, %v3754
        %v3800 = vmul.f32 %v3799, %v3798
        %v3801 = vmul.f32 0.5, %v3800
        %v3802 = vsub.f32 1.5, %v3801
        %v3803 = vmul.f32 %v3798, %v3802
        %vm3804 = vweird.f32 %v3754
        %vm3805 = vweird.f32 %v3798
        %vm3806 = vmor %vm3804, %vm3805
        %v3807 = vsel %vm3806, %v3798, %v3803
        %v3808 = vrsqrt.pop %v3755
        %v3809 = vmul.f32 %v3808, %v3755
        %v3810 = vmul.f32 %v3809, %v3808
        %v3811 = vmul.f32 0.5, %v3810
        %v3812 = vsub.f32 1.5, %v3811
        %v3813 = vmul.f32 %v3808, %v3812
        %vm3814 = vweird.f32 %v3755
        %vm3815 = vweird.f32 %v3808
        %vm3816 = vmor %vm3814, %vm3815
        %v3817 = vsel %vm3816, %v3808, %v3813
        %v3818 = vrsqrt.pop %v3756
        %v3819 = vmul.f32 %v3818, %v3756
        %v3820 = vmul.f32 %v3819, %v3818
        %v3821 = vmul.f32 0.5, %v3820
        %v3822 = vsub.f32 1.5, %v3821
        %v3823 = vmul.f32 %v3818, %v3822
        %vm3824 = vweird.f32 %v3756
        %vm3825 = vweird.f32 %v3818
        %vm3826 = vmor %vm3824, %vm3825
        %v3827 = vsel %vm3826, %v3818, %v3823
        %v3828 = vrsqrt.pop %v3757
        %v3829 = vmul.f32 %v3828, %v3757
        %v3830 = vmul.f32 %v3829, %v3828
        %v3831 = vmul.f32 0.5, %v3830
        %v3832 = vsub.f32 1.5, %v3831
        %v3833 = vmul.f32 %v3828, %v3832
        %vm3834 = vweird.f32 %v3757
        %vm3835 = vweird.f32 %v3828
        %vm3836 = vmor %vm3834, %vm3835
        %v3837 = vsel %vm3836, %v3828, %v3833
        %v3838 = vmul.f32 %v3702, %v3767
        %v3839 = vmul.f32 %v3703, %v3777
        %v3840 = vmul.f32 %v3704, %v3787
        %v3841 = vmul.f32 %v3705, %v3797
        %v3842 = vmul.f32 %v3706, %v3807
        %v3843 = vmul.f32 %v3707, %v3817
        %v3844 = vmul.f32 %v3708, %v3827
        %v3845 = vmul.f32 %v3709, %v3837
        %v3847 = vperm.slane %v896, 0
        %v3849 = vmul.f32 %v3838, %v3847
        %v3850 = vmul.f32 %v3839, %v3847
        %v3851 = vmul.f32 %v3840, %v3847
        %v3852 = vmul.f32 %v3841, %v3847
        %v3853 = vmul.f32 %v3842, %v3847
        %v3854 = vmul.f32 %v3843, %v3847
        %v3855 = vmul.f32 %v3844, %v3847
        %v3856 = vmul.f32 %v3845, %v3847
        %v3858 = vperm.slane %v898, 0
        %v3860 = vadd.f32 %v3849, %v3858
        %v3861 = vadd.f32 %v3850, %v3858
        %v3862 = vadd.f32 %v3851, %v3858
        %v3863 = vadd.f32 %v3852, %v3858
        %v3864 = vadd.f32 %v3853, %v3858
        %v3865 = vadd.f32 %v3854, %v3858
        %v3866 = vadd.f32 %v3855, %v3858
        %v3867 = vadd.f32 %v3856, %v3858
        %v3869 = vperm.slane %v908, 0
        %v3872 = vsel %vm1011, %v3860, 0
        %v3875 = vsel %vm1011, %v3861, 0
        %v3878 = vsel %vm1011, %v3862, 0
        %v3881 = vsel %vm1011, %v3863, 0
        %v3884 = vsel %vm1011, %v3864, 0
        %v3887 = vsel %vm1011, %v3865, 0
        %v3890 = vsel %vm1011, %v3866, 0
        %v3893 = vsel %vm1011, %v3867, 0
        %3895 = vmatpush.msra.mxu0 0.0
        %3896 = vmatpush.msra.mxu0 0.0
        %3897 = vmatpush.msra.mxu0 0.0
        %3898 = vmatpush.msra.mxu0 0.0
        %3899 = vmatpush.msra.mxu0 0.0
        %3900 = vmatpush.msra.mxu0 0.0
        %3901 = vmatpush.msra.mxu0 0.0
        %3902 = vmatpush.msra.mxu0 0.0
        %3903 = vmatpush.msra.mxu0 0.0
        %3904 = vmatpush.msra.mxu0 0.0
        %3905 = vmatpush.msra.mxu0 0.0
        %3906 = vmatpush.msra.mxu0 0.0
        %3907 = vmatpush.msra.mxu0 %v906
        %3908 = vmatpush.msra.mxu0 %v905
        %3909 = vmatpush.msra.mxu0 %v904
        %3910 = vmatpush.msra.mxu0 %v903
        %3911 = vmatmul.f32.gmra.mxu0 %v3872
        %v3912 = vpop.f32.mrf.mxu0
        %v3913 = vadd.f32 %v3869, %v3912
        %3914 = vmatmul.f32.gmra.mxu0 %v3875
        %v3915 = vpop.f32.mrf.mxu0
        %v3916 = vadd.f32 %v3869, %v3915
        %3917 = vmatmul.f32.gmra.mxu0 %v3878
        %v3918 = vpop.f32.mrf.mxu0
        %v3919 = vadd.f32 %v3869, %v3918
        %3920 = vmatmul.f32.gmra.mxu0 %v3881
        %v3921 = vpop.f32.mrf.mxu0
        %v3922 = vadd.f32 %v3869, %v3921
        %3923 = vmatmul.f32.gmra.mxu0 %v3884
        %v3924 = vpop.f32.mrf.mxu0
        %v3925 = vadd.f32 %v3869, %v3924
        %3926 = vmatmul.f32.gmra.mxu0 %v3887
        %v3927 = vpop.f32.mrf.mxu0
        %v3928 = vadd.f32 %v3869, %v3927
        %3929 = vmatmul.f32.gmra.mxu0 %v3890
        %v3930 = vpop.f32.mrf.mxu0
        %v3931 = vadd.f32 %v3869, %v3930
        %3932 = vmatmul.f32.gmra.mxu0 %v3893
        %v3933 = vpop.f32.mrf.mxu0
        %v3934 = vadd.f32 %v3869, %v3933
        %3935 = vdwg.mxu0
        %3936 = vmatpush.msra.mxu0 0.0
        %3937 = vmatpush.msra.mxu0 0.0
        %3938 = vmatpush.msra.mxu0 0.0
        %3939 = vmatpush.msra.mxu0 0.0
        %3940 = vmatpush.msra.mxu0 0.0
        %3941 = vmatpush.msra.mxu0 0.0
        %3942 = vmatpush.msra.mxu0 0.0
        %3943 = vmatpush.msra.mxu0 0.0
        %3944 = vmatpush.msra.mxu0 0.0
        %3945 = vmatpush.msra.mxu0 0.0
        %3946 = vmatpush.msra.mxu0 0.0
        %3947 = vmatpush.msra.mxu0 0.0
        %3948 = vmatpush.msra.mxu0 %v928
        %3949 = vmatpush.msra.mxu0 %v927
        %3950 = vmatpush.msra.mxu0 %v926
        %3951 = vmatpush.msra.mxu0 %v925
        %3952 = vmatmul.f32.gmra.mxu0 %v3872
        %v3953 = vpop.f32.mrf.mxu0
        %v3954 = vadd.f32 0.0, %v3953
        %3955 = vmatmul.f32.gmra.mxu0 %v3875
        %v3956 = vpop.f32.mrf.mxu0
        %v3957 = vadd.f32 0.0, %v3956
        %3958 = vdwg.mxu0
        %3959 = vmatpush.msra.mxu0 0.0
        %3960 = vmatpush.msra.mxu0 0.0
        %3961 = vmatpush.msra.mxu0 0.0
        %3962 = vmatpush.msra.mxu0 0.0
        %3963 = vmatpush.msra.mxu0 0.0
        %3964 = vmatpush.msra.mxu0 0.0
        %3965 = vmatpush.msra.mxu0 0.0
        %3966 = vmatpush.msra.mxu0 0.0
        %3967 = vmatpush.msra.mxu0 0.0
        %3968 = vmatpush.msra.mxu0 0.0
        %3969 = vmatpush.msra.mxu0 0.0
        %3970 = vmatpush.msra.mxu0 0.0
        %3971 = vmatpush.msra.mxu0 %v932
        %3972 = vmatpush.msra.mxu0 %v931
        %3973 = vmatpush.msra.mxu0 %v930
        %3974 = vmatpush.msra.mxu0 %v929
        %3975 = vmatmul.f32.gmra.mxu0 %v3878
        %v3976 = vpop.f32.mrf.mxu0
        %v3977 = vadd.f32 0.0, %v3976
        %3978 = vmatmul.f32.gmra.mxu0 %v3881
        %v3979 = vpop.f32.mrf.mxu0
        %v3980 = vadd.f32 0.0, %v3979
        %3981 = vdwg.mxu0
        %3982 = vmatpush.msra.mxu0 0.0
        %3983 = vmatpush.msra.mxu0 0.0
        %3984 = vmatpush.msra.mxu0 0.0
        %3985 = vmatpush.msra.mxu0 0.0
        %3986 = vmatpush.msra.mxu0 0.0
        %3987 = vmatpush.msra.mxu0 0.0
        %3988 = vmatpush.msra.mxu0 0.0
        %3989 = vmatpush.msra.mxu0 0.0
        %3990 = vmatpush.msra.mxu0 0.0
        %3991 = vmatpush.msra.mxu0 0.0
        %3992 = vmatpush.msra.mxu0 0.0
        %3993 = vmatpush.msra.mxu0 0.0
        %3994 = vmatpush.msra.mxu0 %v936
        %3995 = vmatpush.msra.mxu0 %v935
        %3996 = vmatpush.msra.mxu0 %v934
        %3997 = vmatpush.msra.mxu0 %v933
        %3998 = vmatmul.f32.gmra.mxu0 %v3884
        %v3999 = vpop.f32.mrf.mxu0
        %v4000 = vadd.f32 0.0, %v3999
        %4001 = vmatmul.f32.gmra.mxu0 %v3887
        %v4002 = vpop.f32.mrf.mxu0
        %v4003 = vadd.f32 0.0, %v4002
        %4004 = vdwg.mxu0
        %4005 = vmatpush.msra.mxu0 0.0
        %4006 = vmatpush.msra.mxu0 0.0
        %4007 = vmatpush.msra.mxu0 0.0
        %4008 = vmatpush.msra.mxu0 0.0
        %4009 = vmatpush.msra.mxu0 0.0
        %4010 = vmatpush.msra.mxu0 0.0
        %4011 = vmatpush.msra.mxu0 0.0
        %4012 = vmatpush.msra.mxu0 0.0
        %4013 = vmatpush.msra.mxu0 0.0
        %4014 = vmatpush.msra.mxu0 0.0
        %4015 = vmatpush.msra.mxu0 0.0
        %4016 = vmatpush.msra.mxu0 0.0
        %4017 = vmatpush.msra.mxu0 %v940
        %4018 = vmatpush.msra.mxu0 %v939
        %4019 = vmatpush.msra.mxu0 %v938
        %4020 = vmatpush.msra.mxu0 %v937
        %4021 = vmatmul.f32.gmra.mxu0 %v3890
        %v4022 = vpop.f32.mrf.mxu0
        %v4023 = vadd.f32 0.0, %v4022
        %4024 = vmatmul.f32.gmra.mxu0 %v3893
        %v4025 = vpop.f32.mrf.mxu0
        %v4026 = vadd.f32 0.0, %v4025
        %4027 = vdwg.mxu0
        %v4029 = vsel %vm1377, %v3954, 0
        %v4032 = vsel %vm1377, %v3957, 0
        %v4035 = vsel %vm1384, %v945, 0
        %4037 = vmatpush.msra.mxu0 0.0
        %4038 = vmatpush.msra.mxu0 0.0
        %4039 = vmatpush.msra.mxu0 0.0
        %4040 = vmatpush.msra.mxu0 0.0
        %4041 = vmatpush.msra.mxu0 0.0
        %4042 = vmatpush.msra.mxu0 0.0
        %4043 = vmatpush.msra.mxu0 0.0
        %4044 = vmatpush.msra.mxu0 0.0
        %4045 = vmatpush.msra.mxu0 0.0
        %4046 = vmatpush.msra.mxu0 0.0
        %4047 = vmatpush.msra.mxu0 0.0
        %4048 = vmatpush.msra.mxu0 0.0
        %4049 = vmatpush.msra.mxu0 0.0
        %4050 = vmatpush.msra.mxu0 0.0
        %4051 = vmatpush.msra.mxu0 0.0
        %4052 = vmatpush.msra.mxu0 %v4035
        %4053 = vmatmul.f32.gmra.mxu0 %v4029
        %v4054 = vpop.f32.mrf.mxu0
        %v4055 = vadd.f32 0.0, %v4054
        %4056 = vmatmul.f32.gmra.mxu0 %v4032
        %v4057 = vpop.f32.mrf.mxu0
        %v4058 = vadd.f32 0.0, %v4057
        %4059 = vdwg.mxu0
        %v4061 = vsel %vm1377, %v3977, 0
        %v4064 = vsel %vm1377, %v3980, 0
        %v4067 = vsel %vm1384, %v946, 0
        %4069 = vmatpush.msra.mxu0 0.0
        %4070 = vmatpush.msra.mxu0 0.0
        %4071 = vmatpush.msra.mxu0 0.0
        %4072 = vmatpush.msra.mxu0 0.0
        %4073 = vmatpush.msra.mxu0 0.0
        %4074 = vmatpush.msra.mxu0 0.0
        %4075 = vmatpush.msra.mxu0 0.0
        %4076 = vmatpush.msra.mxu0 0.0
        %4077 = vmatpush.msra.mxu0 0.0
        %4078 = vmatpush.msra.mxu0 0.0
        %4079 = vmatpush.msra.mxu0 0.0
        %4080 = vmatpush.msra.mxu0 0.0
        %4081 = vmatpush.msra.mxu0 0.0
        %4082 = vmatpush.msra.mxu0 0.0
        %4083 = vmatpush.msra.mxu0 0.0
        %4084 = vmatpush.msra.mxu0 %v4067
        %4085 = vmatmul.f32.gmra.mxu0 %v4061
        %v4086 = vpop.f32.mrf.mxu0
        %v4087 = vadd.f32 0.0, %v4086
        %4088 = vmatmul.f32.gmra.mxu0 %v4064
        %v4089 = vpop.f32.mrf.mxu0
        %v4090 = vadd.f32 0.0, %v4089
        %4091 = vdwg.mxu0
        %v4093 = vsel %vm1377, %v4000, 0
        %v4096 = vsel %vm1377, %v4003, 0
        %v4099 = vsel %vm1384, %v947, 0
        %4101 = vmatpush.msra.mxu0 0.0
        %4102 = vmatpush.msra.mxu0 0.0
        %4103 = vmatpush.msra.mxu0 0.0
        %4104 = vmatpush.msra.mxu0 0.0
        %4105 = vmatpush.msra.mxu0 0.0
        %4106 = vmatpush.msra.mxu0 0.0
        %4107 = vmatpush.msra.mxu0 0.0
        %4108 = vmatpush.msra.mxu0 0.0
        %4109 = vmatpush.msra.mxu0 0.0
        %4110 = vmatpush.msra.mxu0 0.0
        %4111 = vmatpush.msra.mxu0 0.0
        %4112 = vmatpush.msra.mxu0 0.0
        %4113 = vmatpush.msra.mxu0 0.0
        %4114 = vmatpush.msra.mxu0 0.0
        %4115 = vmatpush.msra.mxu0 0.0
        %4116 = vmatpush.msra.mxu0 %v4099
        %4117 = vmatmul.f32.gmra.mxu0 %v4093
        %v4118 = vpop.f32.mrf.mxu0
        %v4119 = vadd.f32 0.0, %v4118
        %4120 = vmatmul.f32.gmra.mxu0 %v4096
        %v4121 = vpop.f32.mrf.mxu0
        %v4122 = vadd.f32 0.0, %v4121
        %4123 = vdwg.mxu0
        %v4125 = vsel %vm1377, %v4023, 0
        %v4128 = vsel %vm1377, %v4026, 0
        %v4131 = vsel %vm1384, %v948, 0
        %4133 = vmatpush.msra.mxu0 0.0
        %4134 = vmatpush.msra.mxu0 0.0
        %4135 = vmatpush.msra.mxu0 0.0
        %4136 = vmatpush.msra.mxu0 0.0
        %4137 = vmatpush.msra.mxu0 0.0
        %4138 = vmatpush.msra.mxu0 0.0
        %4139 = vmatpush.msra.mxu0 0.0
        %4140 = vmatpush.msra.mxu0 0.0
        %4141 = vmatpush.msra.mxu0 0.0
        %4142 = vmatpush.msra.mxu0 0.0
        %4143 = vmatpush.msra.mxu0 0.0
        %4144 = vmatpush.msra.mxu0 0.0
        %4145 = vmatpush.msra.mxu0 0.0
        %4146 = vmatpush.msra.mxu0 0.0
        %4147 = vmatpush.msra.mxu0 0.0
        %4148 = vmatpush.msra.mxu0 %v4131
        %4149 = vmatmul.f32.gmra.mxu0 %v4125
        %v4150 = vpop.f32.mrf.mxu0
        %v4151 = vadd.f32 0.0, %v4150
        %4152 = vmatmul.f32.gmra.mxu0 %v4128
        %v4153 = vpop.f32.mrf.mxu0
        %v4154 = vadd.f32 0.0, %v4153
        %4155 = vdwg.mxu0
        %v4156 = vadd.f32 %v3913, %v4055
        %v4157 = vadd.f32 %v3916, %v4058
        %v4158 = vadd.f32 %v3919, %v4087
        %v4159 = vadd.f32 %v3922, %v4090
        %v4160 = vadd.f32 %v3925, %v4119
        %v4161 = vadd.f32 %v3928, %v4122
        %v4162 = vadd.f32 %v3931, %v4151
        %v4163 = vadd.f32 %v3934, %v4154
        %v4164 = vmul.f32 %v4156, 0.35355338
        %v4165 = vmul.f32 %v4157, 0.35355338
        %v4166 = vmul.f32 %v4158, 0.35355338
        %v4167 = vmul.f32 %v4159, 0.35355338
        %v4168 = vmul.f32 %v4160, 0.35355338
        %v4169 = vmul.f32 %v4161, 0.35355338
        %v4170 = vmul.f32 %v4162, 0.35355338
        %v4171 = vmul.f32 %v4163, 0.35355338
        %4174 = vrot.lane.b32.xlu0 %v4156, 96
        %v4175 = vpop.permute.xlu0 %4174
        %4176 = vrot.lane.b32.xlu0 %v4157, 96
        %v4177 = vpop.permute.xlu0 %4176
        %v4179 = vsel %vm1529, %v4164, 0
        %v4182 = vsel %vm1529, %v4165, 0
        %v4184 = vsel %vm1529, %v4175, 0
        %v4186 = vsel %vm1529, %v4177, 0
        %4188 = vmatpush.xpose.msra.mxu0 0.0
        %4189 = vmatpush.xpose.msra.mxu0 0.0
        %4190 = vmatpush.xpose.msra.mxu0 0.0
        %4191 = vmatpush.xpose.msra.mxu0 0.0
        %4192 = vmatpush.xpose.msra.mxu0 0.0
        %4193 = vmatpush.xpose.msra.mxu0 0.0
        %4194 = vmatpush.xpose.msra.mxu0 0.0
        %4195 = vmatpush.xpose.msra.mxu0 0.0
        %4196 = vmatpush.xpose.msra.mxu0 0.0
        %4197 = vmatpush.xpose.msra.mxu0 0.0
        %4198 = vmatpush.xpose.msra.mxu0 0.0
        %4199 = vmatpush.xpose.msra.mxu0 0.0
        %4200 = vmatpush.xpose.msra.mxu0 0.0
        %4201 = vmatpush.xpose.msra.mxu0 0.0
        %4202 = vmatpush.xpose.msra.mxu0 %v4186
        %4203 = vmatpush.xpose.msra.mxu0 %v4184
        %4204 = vmatmul.f32.gmra.mxu0 %v4179
        %v4205 = vpop.f32.mrf.mxu0
        %v4206 = vadd.f32 %v887, %v4205
        %4207 = vmatmul.f32.gmra.mxu0 %v4182
        %v4208 = vpop.f32.mrf.mxu0
        %v4209 = vadd.f32 %v888, %v4208
        %4210 = vdwg.mxu0
        %4213 = vrot.lane.b32.xlu0 %v4158, 96
        %v4214 = vpop.permute.xlu0 %4213
        %4215 = vrot.lane.b32.xlu0 %v4159, 96
        %v4216 = vpop.permute.xlu0 %4215
        %v4218 = vsel %vm1529, %v4166, 0
        %v4221 = vsel %vm1529, %v4167, 0
        %v4223 = vsel %vm1529, %v4214, 0
        %v4225 = vsel %vm1529, %v4216, 0
        %4227 = vmatpush.xpose.msra.mxu0 0.0
        %4228 = vmatpush.xpose.msra.mxu0 0.0
        %4229 = vmatpush.xpose.msra.mxu0 0.0
        %4230 = vmatpush.xpose.msra.mxu0 0.0
        %4231 = vmatpush.xpose.msra.mxu0 0.0
        %4232 = vmatpush.xpose.msra.mxu0 0.0
        %4233 = vmatpush.xpose.msra.mxu0 0.0
        %4234 = vmatpush.xpose.msra.mxu0 0.0
        %4235 = vmatpush.xpose.msra.mxu0 0.0
        %4236 = vmatpush.xpose.msra.mxu0 0.0
        %4237 = vmatpush.xpose.msra.mxu0 0.0
        %4238 = vmatpush.xpose.msra.mxu0 0.0
        %4239 = vmatpush.xpose.msra.mxu0 0.0
        %4240 = vmatpush.xpose.msra.mxu0 0.0
        %4241 = vmatpush.xpose.msra.mxu0 %v4225
        %4242 = vmatpush.xpose.msra.mxu0 %v4223
        %4243 = vmatmul.f32.gmra.mxu0 %v4218
        %v4244 = vpop.f32.mrf.mxu0
        %v4245 = vadd.f32 %v889, %v4244
        %4246 = vmatmul.f32.gmra.mxu0 %v4221
        %v4247 = vpop.f32.mrf.mxu0
        %v4248 = vadd.f32 %v890, %v4247
        %4249 = vdwg.mxu0
        %4252 = vrot.lane.b32.xlu0 %v4160, 96
        %v4253 = vpop.permute.xlu0 %4252
        %4254 = vrot.lane.b32.xlu0 %v4161, 96
        %v4255 = vpop.permute.xlu0 %4254
        %v4257 = vsel %vm1529, %v4168, 0
        %v4260 = vsel %vm1529, %v4169, 0
        %v4262 = vsel %vm1529, %v4253, 0
        %v4264 = vsel %vm1529, %v4255, 0
        %4266 = vmatpush.xpose.msra.mxu0 0.0
        %4267 = vmatpush.xpose.msra.mxu0 0.0
        %4268 = vmatpush.xpose.msra.mxu0 0.0
        %4269 = vmatpush.xpose.msra.mxu0 0.0
        %4270 = vmatpush.xpose.msra.mxu0 0.0
        %4271 = vmatpush.xpose.msra.mxu0 0.0
        %4272 = vmatpush.xpose.msra.mxu0 0.0
        %4273 = vmatpush.xpose.msra.mxu0 0.0
        %4274 = vmatpush.xpose.msra.mxu0 0.0
        %4275 = vmatpush.xpose.msra.mxu0 0.0
        %4276 = vmatpush.xpose.msra.mxu0 0.0
        %4277 = vmatpush.xpose.msra.mxu0 0.0
        %4278 = vmatpush.xpose.msra.mxu0 0.0
        %4279 = vmatpush.xpose.msra.mxu0 0.0
        %4280 = vmatpush.xpose.msra.mxu0 %v4264
        %4281 = vmatpush.xpose.msra.mxu0 %v4262
        %4282 = vmatmul.f32.gmra.mxu0 %v4257
        %v4283 = vpop.f32.mrf.mxu0
        %v4284 = vadd.f32 %v891, %v4283
        %4285 = vmatmul.f32.gmra.mxu0 %v4260
        %v4286 = vpop.f32.mrf.mxu0
        %v4287 = vadd.f32 %v892, %v4286
        %4288 = vdwg.mxu0
        %4291 = vrot.lane.b32.xlu0 %v4162, 96
        %v4292 = vpop.permute.xlu0 %4291
        %4293 = vrot.lane.b32.xlu0 %v4163, 96
        %v4294 = vpop.permute.xlu0 %4293
        %v4296 = vsel %vm1529, %v4170, 0
        %v4299 = vsel %vm1529, %v4171, 0
        %v4301 = vsel %vm1529, %v4292, 0
        %v4303 = vsel %vm1529, %v4294, 0
        %4305 = vmatpush.xpose.msra.mxu0 0.0
        %4306 = vmatpush.xpose.msra.mxu0 0.0
        %4307 = vmatpush.xpose.msra.mxu0 0.0
        %4308 = vmatpush.xpose.msra.mxu0 0.0
        %4309 = vmatpush.xpose.msra.mxu0 0.0
        %4310 = vmatpush.xpose.msra.mxu0 0.0
        %4311 = vmatpush.xpose.msra.mxu0 0.0
        %4312 = vmatpush.xpose.msra.mxu0 0.0
        %4313 = vmatpush.xpose.msra.mxu0 0.0
        %4314 = vmatpush.xpose.msra.mxu0 0.0
        %4315 = vmatpush.xpose.msra.mxu0 0.0
        %4316 = vmatpush.xpose.msra.mxu0 0.0
        %4317 = vmatpush.xpose.msra.mxu0 0.0
        %4318 = vmatpush.xpose.msra.mxu0 0.0
        %4319 = vmatpush.xpose.msra.mxu0 %v4303
        %4320 = vmatpush.xpose.msra.mxu0 %v4301
        %4321 = vmatmul.f32.gmra.mxu0 %v4296
        %v4322 = vpop.f32.mrf.mxu0
        %v4323 = vadd.f32 %v893, %v4322
        %4324 = vmatmul.f32.gmra.mxu0 %v4299
        %v4325 = vpop.f32.mrf.mxu0
        %v4326 = vadd.f32 %v894, %v4325
        %4327 = vdwg.mxu0
        %v4328 = vsel %vm1680, %v4206, -inf
        %4329 = vmax.xlane.f32.xlu0 %v4328
        %v4330 = vpop.xlane.xlu0 %4329
        %v4331 = vsel %vm1680, %v4209, -inf
        %4332 = vmax.xlane.f32.xlu0 %v4331
        %v4333 = vpop.xlane.xlu0 %4332
        %v4334 = vsel %vm1680, %v4245, -inf
        %4335 = vmax.xlane.f32.xlu0 %v4334
        %v4336 = vpop.xlane.xlu0 %4335
        %v4337 = vsel %vm1680, %v4248, -inf
        %4338 = vmax.xlane.f32.xlu0 %v4337
        %v4339 = vpop.xlane.xlu0 %4338
        %v4340 = vsel %vm1680, %v4284, -inf
        %4341 = vmax.xlane.f32.xlu0 %v4340
        %v4342 = vpop.xlane.xlu0 %4341
        %v4343 = vsel %vm1680, %v4287, -inf
        %4344 = vmax.xlane.f32.xlu0 %v4343
        %v4345 = vpop.xlane.xlu0 %4344
        %v4346 = vsel %vm1680, %v4323, -inf
        %4347 = vmax.xlane.f32.xlu0 %v4346
        %v4348 = vpop.xlane.xlu0 %4347
        %v4349 = vsel %vm1680, %v4326, -inf
        %4350 = vmax.xlane.f32.xlu0 %v4349
        %v4351 = vpop.xlane.xlu0 %4350
        %v4352 = vsub.f32 %v4206, %v4330
        %v4353 = vsub.f32 %v4209, %v4333
        %v4354 = vsub.f32 %v4245, %v4336
        %v4355 = vsub.f32 %v4248, %v4339
        %v4356 = vsub.f32 %v4284, %v4342
        %v4357 = vsub.f32 %v4287, %v4345
        %v4358 = vsub.f32 %v4323, %v4348
        %v4359 = vsub.f32 %v4326, %v4351
        %v4360 = vmul.f32 %v4352, 1.442695
        %v4361 = vpow.pop %v4360
        %v4362 = vmul.f32 %v4353, 1.442695
        %v4363 = vpow.pop %v4362
        %v4364 = vmul.f32 %v4354, 1.442695
        %v4365 = vpow.pop %v4364
        %v4366 = vmul.f32 %v4355, 1.442695
        %v4367 = vpow.pop %v4366
        %v4368 = vmul.f32 %v4356, 1.442695
        %v4369 = vpow.pop %v4368
        %v4370 = vmul.f32 %v4357, 1.442695
        %v4371 = vpow.pop %v4370
        %v4372 = vmul.f32 %v4358, 1.442695
        %v4373 = vpow.pop %v4372
        %v4374 = vmul.f32 %v4359, 1.442695
        %v4375 = vpow.pop %v4374
        %v4376 = vsel %vm1680, %v4361, 0.0
        %4377 = vadd.xlane.f32.xlu0 %v4376
        %v4378 = vpop.xlane.xlu0 %4377
        %v4379 = vsel %vm1680, %v4363, 0.0
        %4380 = vadd.xlane.f32.xlu0 %v4379
        %v4381 = vpop.xlane.xlu0 %4380
        %v4382 = vsel %vm1680, %v4365, 0.0
        %4383 = vadd.xlane.f32.xlu0 %v4382
        %v4384 = vpop.xlane.xlu0 %4383
        %v4385 = vsel %vm1680, %v4367, 0.0
        %4386 = vadd.xlane.f32.xlu0 %v4385
        %v4387 = vpop.xlane.xlu0 %4386
        %v4388 = vsel %vm1680, %v4369, 0.0
        %4389 = vadd.xlane.f32.xlu0 %v4388
        %v4390 = vpop.xlane.xlu0 %4389
        %v4391 = vsel %vm1680, %v4371, 0.0
        %4392 = vadd.xlane.f32.xlu0 %v4391
        %v4393 = vpop.xlane.xlu0 %4392
        %v4394 = vsel %vm1680, %v4373, 0.0
        %4395 = vadd.xlane.f32.xlu0 %v4394
        %v4396 = vpop.xlane.xlu0 %4395
        %v4397 = vsel %vm1680, %v4375, 0.0
        %4398 = vadd.xlane.f32.xlu0 %v4397
        %v4399 = vpop.xlane.xlu0 %4398
        %v4400 = vrcp.pop %v4378
        %v4401 = vrcp.pop %v4381
        %v4402 = vrcp.pop %v4384
        %v4403 = vrcp.pop %v4387
        %v4404 = vrcp.pop %v4390
        %v4405 = vrcp.pop %v4393
        %v4406 = vrcp.pop %v4396
        %v4407 = vrcp.pop %v4399
        %v4408 = vmul.f32 %v4361, %v4400
        %v4409 = vmul.f32 %v4363, %v4401
        %v4410 = vmul.f32 %v4365, %v4402
        %v4411 = vmul.f32 %v4367, %v4403
        %v4412 = vmul.f32 %v4369, %v4404
        %v4413 = vmul.f32 %v4371, %v4405
        %v4414 = vmul.f32 %v4373, %v4406
        %v4415 = vmul.f32 %v4375, %v4407
        %4416 = vrot.lane.b32.xlu0 %v4156, 64
        %v4417 = vpop.permute.xlu0 %4416
        %4418 = vrot.lane.b32.xlu0 %v4157, 64
        %v4419 = vpop.permute.xlu0 %4418
        %v4423 = vsel %vm1680, %v4408, 0
        %v4426 = vsel %vm1680, %v4409, 0
        %4428 = vmatpush.msra.mxu0 0.0
        %4429 = vmatpush.msra.mxu0 0.0
        %4430 = vmatpush.msra.mxu0 0.0
        %4431 = vmatpush.msra.mxu0 0.0
        %4432 = vmatpush.msra.mxu0 0.0
        %4433 = vmatpush.msra.mxu0 0.0
        %4434 = vmatpush.msra.mxu0 0.0
        %4435 = vmatpush.msra.mxu0 0.0
        %4436 = vmatpush.msra.mxu0 0.0
        %4437 = vmatpush.msra.mxu0 0.0
        %4438 = vmatpush.msra.mxu0 0.0
        %4439 = vmatpush.msra.mxu0 0.0
        %4440 = vmatpush.msra.mxu0 0.0
        %4441 = vmatpush.msra.mxu0 0.0
        %4442 = vmatpush.msra.mxu0 %v4419
        %4443 = vmatpush.msra.mxu0 %v4417
        %4444 = vmatmul.f32.gmra.mxu0 %v4423
        %v4445 = vpop.f32.mrf.mxu0
        %v4446 = vadd.f32 0.0, %v4445
        %4447 = vmatmul.f32.gmra.mxu0 %v4426
        %v4448 = vpop.f32.mrf.mxu0
        %v4449 = vadd.f32 0.0, %v4448
        %4450 = vdwg.mxu0
        %4451 = vrot.lane.b32.xlu0 %v4158, 64
        %v4452 = vpop.permute.xlu0 %4451
        %4453 = vrot.lane.b32.xlu0 %v4159, 64
        %v4454 = vpop.permute.xlu0 %4453
        %v4458 = vsel %vm1680, %v4410, 0
        %v4461 = vsel %vm1680, %v4411, 0
        %4463 = vmatpush.msra.mxu0 0.0
        %4464 = vmatpush.msra.mxu0 0.0
        %4465 = vmatpush.msra.mxu0 0.0
        %4466 = vmatpush.msra.mxu0 0.0
        %4467 = vmatpush.msra.mxu0 0.0
        %4468 = vmatpush.msra.mxu0 0.0
        %4469 = vmatpush.msra.mxu0 0.0
        %4470 = vmatpush.msra.mxu0 0.0
        %4471 = vmatpush.msra.mxu0 0.0
        %4472 = vmatpush.msra.mxu0 0.0
        %4473 = vmatpush.msra.mxu0 0.0
        %4474 = vmatpush.msra.mxu0 0.0
        %4475 = vmatpush.msra.mxu0 0.0
        %4476 = vmatpush.msra.mxu0 0.0
        %4477 = vmatpush.msra.mxu0 %v4454
        %4478 = vmatpush.msra.mxu0 %v4452
        %4479 = vmatmul.f32.gmra.mxu0 %v4458
        %v4480 = vpop.f32.mrf.mxu0
        %v4481 = vadd.f32 0.0, %v4480
        %4482 = vmatmul.f32.gmra.mxu0 %v4461
        %v4483 = vpop.f32.mrf.mxu0
        %v4484 = vadd.f32 0.0, %v4483
        %4485 = vdwg.mxu0
        %4486 = vrot.lane.b32.xlu0 %v4160, 64
        %v4487 = vpop.permute.xlu0 %4486
        %4488 = vrot.lane.b32.xlu0 %v4161, 64
        %v4489 = vpop.permute.xlu0 %4488
        %v4493 = vsel %vm1680, %v4412, 0
        %v4496 = vsel %vm1680, %v4413, 0
        %4498 = vmatpush.msra.mxu0 0.0
        %4499 = vmatpush.msra.mxu0 0.0
        %4500 = vmatpush.msra.mxu0 0.0
        %4501 = vmatpush.msra.mxu0 0.0
        %4502 = vmatpush.msra.mxu0 0.0
        %4503 = vmatpush.msra.mxu0 0.0
        %4504 = vmatpush.msra.mxu0 0.0
        %4505 = vmatpush.msra.mxu0 0.0
        %4506 = vmatpush.msra.mxu0 0.0
        %4507 = vmatpush.msra.mxu0 0.0
        %4508 = vmatpush.msra.mxu0 0.0
        %4509 = vmatpush.msra.mxu0 0.0
        %4510 = vmatpush.msra.mxu0 0.0
        %4511 = vmatpush.msra.mxu0 0.0
        %4512 = vmatpush.msra.mxu0 %v4489
        %4513 = vmatpush.msra.mxu0 %v4487
        %4514 = vmatmul.f32.gmra.mxu0 %v4493
        %v4515 = vpop.f32.mrf.mxu0
        %v4516 = vadd.f32 0.0, %v4515
        %4517 = vmatmul.f32.gmra.mxu0 %v4496
        %v4518 = vpop.f32.mrf.mxu0
        %v4519 = vadd.f32 0.0, %v4518
        %4520 = vdwg.mxu0
        %4521 = vrot.lane.b32.xlu0 %v4162, 64
        %v4522 = vpop.permute.xlu0 %4521
        %4523 = vrot.lane.b32.xlu0 %v4163, 64
        %v4524 = vpop.permute.xlu0 %4523
        %v4528 = vsel %vm1680, %v4414, 0
        %v4531 = vsel %vm1680, %v4415, 0
        %4533 = vmatpush.msra.mxu0 0.0
        %4534 = vmatpush.msra.mxu0 0.0
        %4535 = vmatpush.msra.mxu0 0.0
        %4536 = vmatpush.msra.mxu0 0.0
        %4537 = vmatpush.msra.mxu0 0.0
        %4538 = vmatpush.msra.mxu0 0.0
        %4539 = vmatpush.msra.mxu0 0.0
        %4540 = vmatpush.msra.mxu0 0.0
        %4541 = vmatpush.msra.mxu0 0.0
        %4542 = vmatpush.msra.mxu0 0.0
        %4543 = vmatpush.msra.mxu0 0.0
        %4544 = vmatpush.msra.mxu0 0.0
        %4545 = vmatpush.msra.mxu0 0.0
        %4546 = vmatpush.msra.mxu0 0.0
        %4547 = vmatpush.msra.mxu0 %v4524
        %4548 = vmatpush.msra.mxu0 %v4522
        %4549 = vmatmul.f32.gmra.mxu0 %v4528
        %v4550 = vpop.f32.mrf.mxu0
        %v4551 = vadd.f32 0.0, %v4550
        %4552 = vmatmul.f32.gmra.mxu0 %v4531
        %v4553 = vpop.f32.mrf.mxu0
        %v4554 = vadd.f32 0.0, %v4553
        %4555 = vdwg.mxu0
        %4556 = vrot.lane.b32.xlu0 %v4164, 120
        %v4557 = vpop.permute.xlu0 %4556
        %4558 = vrot.lane.b32.xlu0 %v4165, 120
        %v4559 = vpop.permute.xlu0 %4558
        %4560 = vrot.lane.b32.xlu0 %v4156, 88
        %v4561 = vpop.permute.xlu0 %4560
        %4562 = vrot.lane.b32.xlu0 %v4157, 88
        %v4563 = vpop.permute.xlu0 %4562
        %v4564 = vsel %vm1529, %v4557, 0
        %v4566 = vsel %vm1529, %v4559, 0
        %v4568 = vsel %vm1529, %v4561, 0
        %v4570 = vsel %vm1529, %v4563, 0
        %4572 = vmatpush.xpose.msra.mxu0 0.0
        %4573 = vmatpush.xpose.msra.mxu0 0.0
        %4574 = vmatpush.xpose.msra.mxu0 0.0
        %4575 = vmatpush.xpose.msra.mxu0 0.0
        %4576 = vmatpush.xpose.msra.mxu0 0.0
        %4577 = vmatpush.xpose.msra.mxu0 0.0
        %4578 = vmatpush.xpose.msra.mxu0 0.0
        %4579 = vmatpush.xpose.msra.mxu0 0.0
        %4580 = vmatpush.xpose.msra.mxu0 0.0
        %4581 = vmatpush.xpose.msra.mxu0 0.0
        %4582 = vmatpush.xpose.msra.mxu0 0.0
        %4583 = vmatpush.xpose.msra.mxu0 0.0
        %4584 = vmatpush.xpose.msra.mxu0 0.0
        %4585 = vmatpush.xpose.msra.mxu0 0.0
        %4586 = vmatpush.xpose.msra.mxu0 %v4570
        %4587 = vmatpush.xpose.msra.mxu0 %v4568
        %4588 = vmatmul.f32.gmra.mxu0 %v4564
        %v4589 = vpop.f32.mrf.mxu0
        %v4590 = vadd.f32 %v887, %v4589
        %4591 = vmatmul.f32.gmra.mxu0 %v4566
        %v4592 = vpop.f32.mrf.mxu0
        %v4593 = vadd.f32 %v888, %v4592
        %4594 = vdwg.mxu0
        %4595 = vrot.lane.b32.xlu0 %v4166, 120
        %v4596 = vpop.permute.xlu0 %4595
        %4597 = vrot.lane.b32.xlu0 %v4167, 120
        %v4598 = vpop.permute.xlu0 %4597
        %4599 = vrot.lane.b32.xlu0 %v4158, 88
        %v4600 = vpop.permute.xlu0 %4599
        %4601 = vrot.lane.b32.xlu0 %v4159, 88
        %v4602 = vpop.permute.xlu0 %4601
        %v4603 = vsel %vm1529, %v4596, 0
        %v4605 = vsel %vm1529, %v4598, 0
        %v4607 = vsel %vm1529, %v4600, 0
        %v4609 = vsel %vm1529, %v4602, 0
        %4611 = vmatpush.xpose.msra.mxu0 0.0
        %4612 = vmatpush.xpose.msra.mxu0 0.0
        %4613 = vmatpush.xpose.msra.mxu0 0.0
        %4614 = vmatpush.xpose.msra.mxu0 0.0
        %4615 = vmatpush.xpose.msra.mxu0 0.0
        %4616 = vmatpush.xpose.msra.mxu0 0.0
        %4617 = vmatpush.xpose.msra.mxu0 0.0
        %4618 = vmatpush.xpose.msra.mxu0 0.0
        %4619 = vmatpush.xpose.msra.mxu0 0.0
        %4620 = vmatpush.xpose.msra.mxu0 0.0
        %4621 = vmatpush.xpose.msra.mxu0 0.0
        %4622 = vmatpush.xpose.msra.mxu0 0.0
        %4623 = vmatpush.xpose.msra.mxu0 0.0
        %4624 = vmatpush.xpose.msra.mxu0 0.0
        %4625 = vmatpush.xpose.msra.mxu0 %v4609
        %4626 = vmatpush.xpose.msra.mxu0 %v4607
        %4627 = vmatmul.f32.gmra.mxu0 %v4603
        %v4628 = vpop.f32.mrf.mxu0
        %v4629 = vadd.f32 %v889, %v4628
        %4630 = vmatmul.f32.gmra.mxu0 %v4605
        %v4631 = vpop.f32.mrf.mxu0
        %v4632 = vadd.f32 %v890, %v4631
        %4633 = vdwg.mxu0
        %4634 = vrot.lane.b32.xlu0 %v4168, 120
        %v4635 = vpop.permute.xlu0 %4634
        %4636 = vrot.lane.b32.xlu0 %v4169, 120
        %v4637 = vpop.permute.xlu0 %4636
        %4638 = vrot.lane.b32.xlu0 %v4160, 88
        %v4639 = vpop.permute.xlu0 %4638
        %4640 = vrot.lane.b32.xlu0 %v4161, 88
        %v4641 = vpop.permute.xlu0 %4640
        %v4642 = vsel %vm1529, %v4635, 0
        %v4644 = vsel %vm1529, %v4637, 0
        %v4646 = vsel %vm1529, %v4639, 0
        %v4648 = vsel %vm1529, %v4641, 0
        %4650 = vmatpush.xpose.msra.mxu0 0.0
        %4651 = vmatpush.xpose.msra.mxu0 0.0
        %4652 = vmatpush.xpose.msra.mxu0 0.0
        %4653 = vmatpush.xpose.msra.mxu0 0.0
        %4654 = vmatpush.xpose.msra.mxu0 0.0
        %4655 = vmatpush.xpose.msra.mxu0 0.0
        %4656 = vmatpush.xpose.msra.mxu0 0.0
        %4657 = vmatpush.xpose.msra.mxu0 0.0
        %4658 = vmatpush.xpose.msra.mxu0 0.0
        %4659 = vmatpush.xpose.msra.mxu0 0.0
        %4660 = vmatpush.xpose.msra.mxu0 0.0
        %4661 = vmatpush.xpose.msra.mxu0 0.0
        %4662 = vmatpush.xpose.msra.mxu0 0.0
        %4663 = vmatpush.xpose.msra.mxu0 0.0
        %4664 = vmatpush.xpose.msra.mxu0 %v4648
        %4665 = vmatpush.xpose.msra.mxu0 %v4646
        %4666 = vmatmul.f32.gmra.mxu0 %v4642
        %v4667 = vpop.f32.mrf.mxu0
        %v4668 = vadd.f32 %v891, %v4667
        %4669 = vmatmul.f32.gmra.mxu0 %v4644
        %v4670 = vpop.f32.mrf.mxu0
        %v4671 = vadd.f32 %v892, %v4670
        %4672 = vdwg.mxu0
        %4673 = vrot.lane.b32.xlu0 %v4170, 120
        %v4674 = vpop.permute.xlu0 %4673
        %4675 = vrot.lane.b32.xlu0 %v4171, 120
        %v4676 = vpop.permute.xlu0 %4675
        %4677 = vrot.lane.b32.xlu0 %v4162, 88
        %v4678 = vpop.permute.xlu0 %4677
        %4679 = vrot.lane.b32.xlu0 %v4163, 88
        %v4680 = vpop.permute.xlu0 %4679
        %v4681 = vsel %vm1529, %v4674, 0
        %v4683 = vsel %vm1529, %v4676, 0
        %v4685 = vsel %vm1529, %v4678, 0
        %v4687 = vsel %vm1529, %v4680, 0
        %4689 = vmatpush.xpose.msra.mxu0 0.0
        %4690 = vmatpush.xpose.msra.mxu0 0.0
        %4691 = vmatpush.xpose.msra.mxu0 0.0
        %4692 = vmatpush.xpose.msra.mxu0 0.0
        %4693 = vmatpush.xpose.msra.mxu0 0.0
        %4694 = vmatpush.xpose.msra.mxu0 0.0
        %4695 = vmatpush.xpose.msra.mxu0 0.0
        %4696 = vmatpush.xpose.msra.mxu0 0.0
        %4697 = vmatpush.xpose.msra.mxu0 0.0
        %4698 = vmatpush.xpose.msra.mxu0 0.0
        %4699 = vmatpush.xpose.msra.mxu0 0.0
        %4700 = vmatpush.xpose.msra.mxu0 0.0
        %4701 = vmatpush.xpose.msra.mxu0 0.0
        %4702 = vmatpush.xpose.msra.mxu0 0.0
        %4703 = vmatpush.xpose.msra.mxu0 %v4687
        %4704 = vmatpush.xpose.msra.mxu0 %v4685
        %4705 = vmatmul.f32.gmra.mxu0 %v4681
        %v4706 = vpop.f32.mrf.mxu0
        %v4707 = vadd.f32 %v893, %v4706
        %4708 = vmatmul.f32.gmra.mxu0 %v4683
        %v4709 = vpop.f32.mrf.mxu0
        %v4710 = vadd.f32 %v894, %v4709
        %4711 = vdwg.mxu0
        %v4712 = vsel %vm1680, %v4590, -inf
        %4713 = vmax.xlane.f32.xlu0 %v4712
        %v4714 = vpop.xlane.xlu0 %4713
        %v4715 = vsel %vm1680, %v4593, -inf
        %4716 = vmax.xlane.f32.xlu0 %v4715
        %v4717 = vpop.xlane.xlu0 %4716
        %v4718 = vsel %vm1680, %v4629, -inf
        %4719 = vmax.xlane.f32.xlu0 %v4718
        %v4720 = vpop.xlane.xlu0 %4719
        %v4721 = vsel %vm1680, %v4632, -inf
        %4722 = vmax.xlane.f32.xlu0 %v4721
        %v4723 = vpop.xlane.xlu0 %4722
        %v4724 = vsel %vm1680, %v4668, -inf
        %4725 = vmax.xlane.f32.xlu0 %v4724
        %v4726 = vpop.xlane.xlu0 %4725
        %v4727 = vsel %vm1680, %v4671, -inf
        %4728 = vmax.xlane.f32.xlu0 %v4727
        %v4729 = vpop.xlane.xlu0 %4728
        %v4730 = vsel %vm1680, %v4707, -inf
        %4731 = vmax.xlane.f32.xlu0 %v4730
        %v4732 = vpop.xlane.xlu0 %4731
        %v4733 = vsel %vm1680, %v4710, -inf
        %4734 = vmax.xlane.f32.xlu0 %v4733
        %v4735 = vpop.xlane.xlu0 %4734
        %v4736 = vsub.f32 %v4590, %v4714
        %v4737 = vsub.f32 %v4593, %v4717
        %v4738 = vsub.f32 %v4629, %v4720
        %v4739 = vsub.f32 %v4632, %v4723
        %v4740 = vsub.f32 %v4668, %v4726
        %v4741 = vsub.f32 %v4671, %v4729
        %v4742 = vsub.f32 %v4707, %v4732
        %v4743 = vsub.f32 %v4710, %v4735
        %v4744 = vmul.f32 %v4736, 1.442695
        %v4745 = vpow.pop %v4744
        %v4746 = vmul.f32 %v4737, 1.442695
        %v4747 = vpow.pop %v4746
        %v4748 = vmul.f32 %v4738, 1.442695
        %v4749 = vpow.pop %v4748
        %v4750 = vmul.f32 %v4739, 1.442695
        %v4751 = vpow.pop %v4750
        %v4752 = vmul.f32 %v4740, 1.442695
        %v4753 = vpow.pop %v4752
        %v4754 = vmul.f32 %v4741, 1.442695
        %v4755 = vpow.pop %v4754
        %v4756 = vmul.f32 %v4742, 1.442695
        %v4757 = vpow.pop %v4756
        %v4758 = vmul.f32 %v4743, 1.442695
        %v4759 = vpow.pop %v4758
        %v4760 = vsel %vm1680, %v4745, 0.0
        %4761 = vadd.xlane.f32.xlu0 %v4760
        %v4762 = vpop.xlane.xlu0 %4761
        %v4763 = vsel %vm1680, %v4747, 0.0
        %4764 = vadd.xlane.f32.xlu0 %v4763
        %v4765 = vpop.xlane.xlu0 %4764
        %v4766 = vsel %vm1680, %v4749, 0.0
        %4767 = vadd.xlane.f32.xlu0 %v4766
        %v4768 = vpop.xlane.xlu0 %4767
        %v4769 = vsel %vm1680, %v4751, 0.0
        %4770 = vadd.xlane.f32.xlu0 %v4769
        %v4771 = vpop.xlane.xlu0 %4770
        %v4772 = vsel %vm1680, %v4753, 0.0
        %4773 = vadd.xlane.f32.xlu0 %v4772
        %v4774 = vpop.xlane.xlu0 %4773
        %v4775 = vsel %vm1680, %v4755, 0.0
        %4776 = vadd.xlane.f32.xlu0 %v4775
        %v4777 = vpop.xlane.xlu0 %4776
        %v4778 = vsel %vm1680, %v4757, 0.0
        %4779 = vadd.xlane.f32.xlu0 %v4778
        %v4780 = vpop.xlane.xlu0 %4779
        %v4781 = vsel %vm1680, %v4759, 0.0
        %4782 = vadd.xlane.f32.xlu0 %v4781
        %v4783 = vpop.xlane.xlu0 %4782
        %v4784 = vrcp.pop %v4762
        %v4785 = vrcp.pop %v4765
        %v4786 = vrcp.pop %v4768
        %v4787 = vrcp.pop %v4771
        %v4788 = vrcp.pop %v4774
        %v4789 = vrcp.pop %v4777
        %v4790 = vrcp.pop %v4780
        %v4791 = vrcp.pop %v4783
        %v4792 = vmul.f32 %v4745, %v4784
        %v4793 = vmul.f32 %v4747, %v4785
        %v4794 = vmul.f32 %v4749, %v4786
        %v4795 = vmul.f32 %v4751, %v4787
        %v4796 = vmul.f32 %v4753, %v4788
        %v4797 = vmul.f32 %v4755, %v4789
        %v4798 = vmul.f32 %v4757, %v4790
        %v4799 = vmul.f32 %v4759, %v4791
        %4800 = vrot.lane.b32.xlu0 %v4156, 56
        %v4801 = vpop.permute.xlu0 %4800
        %4802 = vrot.lane.b32.xlu0 %v4157, 56
        %v4803 = vpop.permute.xlu0 %4802
        %v4807 = vsel %vm1680, %v4792, 0
        %v4810 = vsel %vm1680, %v4793, 0
        %4812 = vmatpush.msra.mxu0 0.0
        %4813 = vmatpush.msra.mxu0 0.0
        %4814 = vmatpush.msra.mxu0 0.0
        %4815 = vmatpush.msra.mxu0 0.0
        %4816 = vmatpush.msra.mxu0 0.0
        %4817 = vmatpush.msra.mxu0 0.0
        %4818 = vmatpush.msra.mxu0 0.0
        %4819 = vmatpush.msra.mxu0 0.0
        %4820 = vmatpush.msra.mxu0 0.0
        %4821 = vmatpush.msra.mxu0 0.0
        %4822 = vmatpush.msra.mxu0 0.0
        %4823 = vmatpush.msra.mxu0 0.0
        %4824 = vmatpush.msra.mxu0 0.0
        %4825 = vmatpush.msra.mxu0 0.0
        %4826 = vmatpush.msra.mxu0 %v4803
        %4827 = vmatpush.msra.mxu0 %v4801
        %4828 = vmatmul.f32.gmra.mxu0 %v4807
        %v4829 = vpop.f32.mrf.mxu0
        %v4830 = vadd.f32 0.0, %v4829
        %4831 = vmatmul.f32.gmra.mxu0 %v4810
        %v4832 = vpop.f32.mrf.mxu0
        %v4833 = vadd.f32 0.0, %v4832
        %4834 = vdwg.mxu0
        %4835 = vrot.lane.b32.xlu0 %v4158, 56
        %v4836 = vpop.permute.xlu0 %4835
        %4837 = vrot.lane.b32.xlu0 %v4159, 56
        %v4838 = vpop.permute.xlu0 %4837
        %v4842 = vsel %vm1680, %v4794, 0
        %v4845 = vsel %vm1680, %v4795, 0
        %4847 = vmatpush.msra.mxu0 0.0
        %4848 = vmatpush.msra.mxu0 0.0
        %4849 = vmatpush.msra.mxu0 0.0
        %4850 = vmatpush.msra.mxu0 0.0
        %4851 = vmatpush.msra.mxu0 0.0
        %4852 = vmatpush.msra.mxu0 0.0
        %4853 = vmatpush.msra.mxu0 0.0
        %4854 = vmatpush.msra.mxu0 0.0
        %4855 = vmatpush.msra.mxu0 0.0
        %4856 = vmatpush.msra.mxu0 0.0
        %4857 = vmatpush.msra.mxu0 0.0
        %4858 = vmatpush.msra.mxu0 0.0
        %4859 = vmatpush.msra.mxu0 0.0
        %4860 = vmatpush.msra.mxu0 0.0
        %4861 = vmatpush.msra.mxu0 %v4838
        %4862 = vmatpush.msra.mxu0 %v4836
        %4863 = vmatmul.f32.gmra.mxu0 %v4842
        %v4864 = vpop.f32.mrf.mxu0
        %v4865 = vadd.f32 0.0, %v4864
        %4866 = vmatmul.f32.gmra.mxu0 %v4845
        %v4867 = vpop.f32.mrf.mxu0
        %v4868 = vadd.f32 0.0, %v4867
        %4869 = vdwg.mxu0
        %4870 = vrot.lane.b32.xlu0 %v4160, 56
        %v4871 = vpop.permute.xlu0 %4870
        %4872 = vrot.lane.b32.xlu0 %v4161, 56
        %v4873 = vpop.permute.xlu0 %4872
        %v4877 = vsel %vm1680, %v4796, 0
        %v4880 = vsel %vm1680, %v4797, 0
        %4882 = vmatpush.msra.mxu0 0.0
        %4883 = vmatpush.msra.mxu0 0.0
        %4884 = vmatpush.msra.mxu0 0.0
        %4885 = vmatpush.msra.mxu0 0.0
        %4886 = vmatpush.msra.mxu0 0.0
        %4887 = vmatpush.msra.mxu0 0.0
        %4888 = vmatpush.msra.mxu0 0.0
        %4889 = vmatpush.msra.mxu0 0.0
        %4890 = vmatpush.msra.mxu0 0.0
        %4891 = vmatpush.msra.mxu0 0.0
        %4892 = vmatpush.msra.mxu0 0.0
        %4893 = vmatpush.msra.mxu0 0.0
        %4894 = vmatpush.msra.mxu0 0.0
        %4895 = vmatpush.msra.mxu0 0.0
        %4896 = vmatpush.msra.mxu0 %v4873
        %4897 = vmatpush.msra.mxu0 %v4871
        %4898 = vmatmul.f32.gmra.mxu0 %v4877
        %v4899 = vpop.f32.mrf.mxu0
        %v4900 = vadd.f32 0.0, %v4899
        %4901 = vmatmul.f32.gmra.mxu0 %v4880
        %v4902 = vpop.f32.mrf.mxu0
        %v4903 = vadd.f32 0.0, %v4902
        %4904 = vdwg.mxu0
        %4905 = vrot.lane.b32.xlu0 %v4162, 56
        %v4906 = vpop.permute.xlu0 %4905
        %4907 = vrot.lane.b32.xlu0 %v4163, 56
        %v4908 = vpop.permute.xlu0 %4907
        %v4912 = vsel %vm1680, %v4798, 0
        %v4915 = vsel %vm1680, %v4799, 0
        %4917 = vmatpush.msra.mxu0 0.0
        %4918 = vmatpush.msra.mxu0 0.0
        %4919 = vmatpush.msra.mxu0 0.0
        %4920 = vmatpush.msra.mxu0 0.0
        %4921 = vmatpush.msra.mxu0 0.0
        %4922 = vmatpush.msra.mxu0 0.0
        %4923 = vmatpush.msra.mxu0 0.0
        %4924 = vmatpush.msra.mxu0 0.0
        %4925 = vmatpush.msra.mxu0 0.0
        %4926 = vmatpush.msra.mxu0 0.0
        %4927 = vmatpush.msra.mxu0 0.0
        %4928 = vmatpush.msra.mxu0 0.0
        %4929 = vmatpush.msra.mxu0 0.0
        %4930 = vmatpush.msra.mxu0 0.0
        %4931 = vmatpush.msra.mxu0 %v4908
        %4932 = vmatpush.msra.mxu0 %v4906
        %4933 = vmatmul.f32.gmra.mxu0 %v4912
        %v4934 = vpop.f32.mrf.mxu0
        %v4935 = vadd.f32 0.0, %v4934
        %4936 = vmatmul.f32.gmra.mxu0 %v4915
        %v4937 = vpop.f32.mrf.mxu0
        %v4938 = vadd.f32 0.0, %v4937
        %4939 = vdwg.mxu0
        %4940 = vrot.lane.b32.xlu0 %v4164, 112
        %v4941 = vpop.permute.xlu0 %4940
        %4942 = vrot.lane.b32.xlu0 %v4165, 112
        %v4943 = vpop.permute.xlu0 %4942
        %4944 = vrot.lane.b32.xlu0 %v4156, 80
        %v4945 = vpop.permute.xlu0 %4944
        %4946 = vrot.lane.b32.xlu0 %v4157, 80
        %v4947 = vpop.permute.xlu0 %4946
        %v4948 = vsel %vm1529, %v4941, 0
        %v4950 = vsel %vm1529, %v4943, 0
        %v4952 = vsel %vm1529, %v4945, 0
        %v4954 = vsel %vm1529, %v4947, 0
        %4956 = vmatpush.xpose.msra.mxu0 0.0
        %4957 = vmatpush.xpose.msra.mxu0 0.0
        %4958 = vmatpush.xpose.msra.mxu0 0.0
        %4959 = vmatpush.xpose.msra.mxu0 0.0
        %4960 = vmatpush.xpose.msra.mxu0 0.0
        %4961 = vmatpush.xpose.msra.mxu0 0.0
        %4962 = vmatpush.xpose.msra.mxu0 0.0
        %4963 = vmatpush.xpose.msra.mxu0 0.0
        %4964 = vmatpush.xpose.msra.mxu0 0.0
        %4965 = vmatpush.xpose.msra.mxu0 0.0
        %4966 = vmatpush.xpose.msra.mxu0 0.0
        %4967 = vmatpush.xpose.msra.mxu0 0.0
        %4968 = vmatpush.xpose.msra.mxu0 0.0
        %4969 = vmatpush.xpose.msra.mxu0 0.0
        %4970 = vmatpush.xpose.msra.mxu0 %v4954
        %4971 = vmatpush.xpose.msra.mxu0 %v4952
        %4972 = vmatmul.f32.gmra.mxu0 %v4948
        %v4973 = vpop.f32.mrf.mxu0
        %v4974 = vadd.f32 %v887, %v4973
        %4975 = vmatmul.f32.gmra.mxu0 %v4950
        %v4976 = vpop.f32.mrf.mxu0
        %v4977 = vadd.f32 %v888, %v4976
        %4978 = vdwg.mxu0
        %4979 = vrot.lane.b32.xlu0 %v4166, 112
        %v4980 = vpop.permute.xlu0 %4979
        %4981 = vrot.lane.b32.xlu0 %v4167, 112
        %v4982 = vpop.permute.xlu0 %4981
        %4983 = vrot.lane.b32.xlu0 %v4158, 80
        %v4984 = vpop.permute.xlu0 %4983
        %4985 = vrot.lane.b32.xlu0 %v4159, 80
        %v4986 = vpop.permute.xlu0 %4985
        %v4987 = vsel %vm1529, %v4980, 0
        %v4989 = vsel %vm1529, %v4982, 0
        %v4991 = vsel %vm1529, %v4984, 0
        %v4993 = vsel %vm1529, %v4986, 0
        %4995 = vmatpush.xpose.msra.mxu0 0.0
        %4996 = vmatpush.xpose.msra.mxu0 0.0
        %4997 = vmatpush.xpose.msra.mxu0 0.0
        %4998 = vmatpush.xpose.msra.mxu0 0.0
        %4999 = vmatpush.xpose.msra.mxu0 0.0
        %5000 = vmatpush.xpose.msra.mxu0 0.0
        %5001 = vmatpush.xpose.msra.mxu0 0.0
        %5002 = vmatpush.xpose.msra.mxu0 0.0
        %5003 = vmatpush.xpose.msra.mxu0 0.0
        %5004 = vmatpush.xpose.msra.mxu0 0.0
        %5005 = vmatpush.xpose.msra.mxu0 0.0
        %5006 = vmatpush.xpose.msra.mxu0 0.0
        %5007 = vmatpush.xpose.msra.mxu0 0.0
        %5008 = vmatpush.xpose.msra.mxu0 0.0
        %5009 = vmatpush.xpose.msra.mxu0 %v4993
        %5010 = vmatpush.xpose.msra.mxu0 %v4991
        %5011 = vmatmul.f32.gmra.mxu0 %v4987
        %v5012 = vpop.f32.mrf.mxu0
        %v5013 = vadd.f32 %v889, %v5012
        %5014 = vmatmul.f32.gmra.mxu0 %v4989
        %v5015 = vpop.f32.mrf.mxu0
        %v5016 = vadd.f32 %v890, %v5015
        %5017 = vdwg.mxu0
        %5018 = vrot.lane.b32.xlu0 %v4168, 112
        %v5019 = vpop.permute.xlu0 %5018
        %5020 = vrot.lane.b32.xlu0 %v4169, 112
        %v5021 = vpop.permute.xlu0 %5020
        %5022 = vrot.lane.b32.xlu0 %v4160, 80
        %v5023 = vpop.permute.xlu0 %5022
        %5024 = vrot.lane.b32.xlu0 %v4161, 80
        %v5025 = vpop.permute.xlu0 %5024
        %v5026 = vsel %vm1529, %v5019, 0
        %v5028 = vsel %vm1529, %v5021, 0
        %v5030 = vsel %vm1529, %v5023, 0
        %v5032 = vsel %vm1529, %v5025, 0
        %5034 = vmatpush.xpose.msra.mxu0 0.0
        %5035 = vmatpush.xpose.msra.mxu0 0.0
        %5036 = vmatpush.xpose.msra.mxu0 0.0
        %5037 = vmatpush.xpose.msra.mxu0 0.0
        %5038 = vmatpush.xpose.msra.mxu0 0.0
        %5039 = vmatpush.xpose.msra.mxu0 0.0
        %5040 = vmatpush.xpose.msra.mxu0 0.0
        %5041 = vmatpush.xpose.msra.mxu0 0.0
        %5042 = vmatpush.xpose.msra.mxu0 0.0
        %5043 = vmatpush.xpose.msra.mxu0 0.0
        %5044 = vmatpush.xpose.msra.mxu0 0.0
        %5045 = vmatpush.xpose.msra.mxu0 0.0
        %5046 = vmatpush.xpose.msra.mxu0 0.0
        %5047 = vmatpush.xpose.msra.mxu0 0.0
        %5048 = vmatpush.xpose.msra.mxu0 %v5032
        %5049 = vmatpush.xpose.msra.mxu0 %v5030
        %5050 = vmatmul.f32.gmra.mxu0 %v5026
        %v5051 = vpop.f32.mrf.mxu0
        %v5052 = vadd.f32 %v891, %v5051
        %5053 = vmatmul.f32.gmra.mxu0 %v5028
        %v5054 = vpop.f32.mrf.mxu0
        %v5055 = vadd.f32 %v892, %v5054
        %5056 = vdwg.mxu0
        %5057 = vrot.lane.b32.xlu0 %v4170, 112
        %v5058 = vpop.permute.xlu0 %5057
        %5059 = vrot.lane.b32.xlu0 %v4171, 112
        %v5060 = vpop.permute.xlu0 %5059
        %5061 = vrot.lane.b32.xlu0 %v4162, 80
        %v5062 = vpop.permute.xlu0 %5061
        %5063 = vrot.lane.b32.xlu0 %v4163, 80
        %v5064 = vpop.permute.xlu0 %5063
        %v5065 = vsel %vm1529, %v5058, 0
        %v5067 = vsel %vm1529, %v5060, 0
        %v5069 = vsel %vm1529, %v5062, 0
        %v5071 = vsel %vm1529, %v5064, 0
        %5073 = vmatpush.xpose.msra.mxu0 0.0
        %5074 = vmatpush.xpose.msra.mxu0 0.0
        %5075 = vmatpush.xpose.msra.mxu0 0.0
        %5076 = vmatpush.xpose.msra.mxu0 0.0
        %5077 = vmatpush.xpose.msra.mxu0 0.0
        %5078 = vmatpush.xpose.msra.mxu0 0.0
        %5079 = vmatpush.xpose.msra.mxu0 0.0
        %5080 = vmatpush.xpose.msra.mxu0 0.0
        %5081 = vmatpush.xpose.msra.mxu0 0.0
        %5082 = vmatpush.xpose.msra.mxu0 0.0
        %5083 = vmatpush.xpose.msra.mxu0 0.0
        %5084 = vmatpush.xpose.msra.mxu0 0.0
        %5085 = vmatpush.xpose.msra.mxu0 0.0
        %5086 = vmatpush.xpose.msra.mxu0 0.0
        %5087 = vmatpush.xpose.msra.mxu0 %v5071
        %5088 = vmatpush.xpose.msra.mxu0 %v5069
        %5089 = vmatmul.f32.gmra.mxu0 %v5065
        %v5090 = vpop.f32.mrf.mxu0
        %v5091 = vadd.f32 %v893, %v5090
        %5092 = vmatmul.f32.gmra.mxu0 %v5067
        %v5093 = vpop.f32.mrf.mxu0
        %v5094 = vadd.f32 %v894, %v5093
        %5095 = vdwg.mxu0
        %v5096 = vsel %vm1680, %v4974, -inf
        %5097 = vmax.xlane.f32.xlu0 %v5096
        %v5098 = vpop.xlane.xlu0 %5097
        %v5099 = vsel %vm1680, %v4977, -inf
        %5100 = vmax.xlane.f32.xlu0 %v5099
        %v5101 = vpop.xlane.xlu0 %5100
        %v5102 = vsel %vm1680, %v5013, -inf
        %5103 = vmax.xlane.f32.xlu0 %v5102
        %v5104 = vpop.xlane.xlu0 %5103
        %v5105 = vsel %vm1680, %v5016, -inf
        %5106 = vmax.xlane.f32.xlu0 %v5105
        %v5107 = vpop.xlane.xlu0 %5106
        %v5108 = vsel %vm1680, %v5052, -inf
        %5109 = vmax.xlane.f32.xlu0 %v5108
        %v5110 = vpop.xlane.xlu0 %5109
        %v5111 = vsel %vm1680, %v5055, -inf
        %5112 = vmax.xlane.f32.xlu0 %v5111
        %v5113 = vpop.xlane.xlu0 %5112
        %v5114 = vsel %vm1680, %v5091, -inf
        %5115 = vmax.xlane.f32.xlu0 %v5114
        %v5116 = vpop.xlane.xlu0 %5115
        %v5117 = vsel %vm1680, %v5094, -inf
        %5118 = vmax.xlane.f32.xlu0 %v5117
        %v5119 = vpop.xlane.xlu0 %5118
        %v5120 = vsub.f32 %v4974, %v5098
        %v5121 = vsub.f32 %v4977, %v5101
        %v5122 = vsub.f32 %v5013, %v5104
        %v5123 = vsub.f32 %v5016, %v5107
        %v5124 = vsub.f32 %v5052, %v5110
        %v5125 = vsub.f32 %v5055, %v5113
        %v5126 = vsub.f32 %v5091, %v5116
        %v5127 = vsub.f32 %v5094, %v5119
        %v5128 = vmul.f32 %v5120, 1.442695
        %v5129 = vpow.pop %v5128
        %v5130 = vmul.f32 %v5121, 1.442695
        %v5131 = vpow.pop %v5130
        %v5132 = vmul.f32 %v5122, 1.442695
        %v5133 = vpow.pop %v5132
        %v5134 = vmul.f32 %v5123, 1.442695
        %v5135 = vpow.pop %v5134
        %v5136 = vmul.f32 %v5124, 1.442695
        %v5137 = vpow.pop %v5136
        %v5138 = vmul.f32 %v5125, 1.442695
        %v5139 = vpow.pop %v5138
        %v5140 = vmul.f32 %v5126, 1.442695
        %v5141 = vpow.pop %v5140
        %v5142 = vmul.f32 %v5127, 1.442695
        %v5143 = vpow.pop %v5142
        %v5144 = vsel %vm1680, %v5129, 0.0
        %5145 = vadd.xlane.f32.xlu0 %v5144
        %v5146 = vpop.xlane.xlu0 %5145
        %v5147 = vsel %vm1680, %v5131, 0.0
        %5148 = vadd.xlane.f32.xlu0 %v5147
        %v5149 = vpop.xlane.xlu0 %5148
        %v5150 = vsel %vm1680, %v5133, 0.0
        %5151 = vadd.xlane.f32.xlu0 %v5150
        %v5152 = vpop.xlane.xlu0 %5151
        %v5153 = vsel %vm1680, %v5135, 0.0
        %5154 = vadd.xlane.f32.xlu0 %v5153
        %v5155 = vpop.xlane.xlu0 %5154
        %v5156 = vsel %vm1680, %v5137, 0.0
        %5157 = vadd.xlane.f32.xlu0 %v5156
        %v5158 = vpop.xlane.xlu0 %5157
        %v5159 = vsel %vm1680, %v5139, 0.0
        %5160 = vadd.xlane.f32.xlu0 %v5159
        %v5161 = vpop.xlane.xlu0 %5160
        %v5162 = vsel %vm1680, %v5141, 0.0
        %5163 = vadd.xlane.f32.xlu0 %v5162
        %v5164 = vpop.xlane.xlu0 %5163
        %v5165 = vsel %vm1680, %v5143, 0.0
        %5166 = vadd.xlane.f32.xlu0 %v5165
        %v5167 = vpop.xlane.xlu0 %5166
        %v5168 = vrcp.pop %v5146
        %v5169 = vrcp.pop %v5149
        %v5170 = vrcp.pop %v5152
        %v5171 = vrcp.pop %v5155
        %v5172 = vrcp.pop %v5158
        %v5173 = vrcp.pop %v5161
        %v5174 = vrcp.pop %v5164
        %v5175 = vrcp.pop %v5167
        %v5176 = vmul.f32 %v5129, %v5168
        %v5177 = vmul.f32 %v5131, %v5169
        %v5178 = vmul.f32 %v5133, %v5170
        %v5179 = vmul.f32 %v5135, %v5171
        %v5180 = vmul.f32 %v5137, %v5172
        %v5181 = vmul.f32 %v5139, %v5173
        %v5182 = vmul.f32 %v5141, %v5174
        %v5183 = vmul.f32 %v5143, %v5175
        %5184 = vrot.lane.b32.xlu0 %v4156, 48
        %v5185 = vpop.permute.xlu0 %5184
        %5186 = vrot.lane.b32.xlu0 %v4157, 48
        %v5187 = vpop.permute.xlu0 %5186
        %v5191 = vsel %vm1680, %v5176, 0
        %v5194 = vsel %vm1680, %v5177, 0
        %5196 = vmatpush.msra.mxu0 0.0
        %5197 = vmatpush.msra.mxu0 0.0
        %5198 = vmatpush.msra.mxu0 0.0
        %5199 = vmatpush.msra.mxu0 0.0
        %5200 = vmatpush.msra.mxu0 0.0
        %5201 = vmatpush.msra.mxu0 0.0
        %5202 = vmatpush.msra.mxu0 0.0
        %5203 = vmatpush.msra.mxu0 0.0
        %5204 = vmatpush.msra.mxu0 0.0
        %5205 = vmatpush.msra.mxu0 0.0
        %5206 = vmatpush.msra.mxu0 0.0
        %5207 = vmatpush.msra.mxu0 0.0
        %5208 = vmatpush.msra.mxu0 0.0
        %5209 = vmatpush.msra.mxu0 0.0
        %5210 = vmatpush.msra.mxu0 %v5187
        %5211 = vmatpush.msra.mxu0 %v5185
        %5212 = vmatmul.f32.gmra.mxu0 %v5191
        %v5213 = vpop.f32.mrf.mxu0
        %v5214 = vadd.f32 0.0, %v5213
        %5215 = vmatmul.f32.gmra.mxu0 %v5194
        %v5216 = vpop.f32.mrf.mxu0
        %v5217 = vadd.f32 0.0, %v5216
        %5218 = vdwg.mxu0
        %5219 = vrot.lane.b32.xlu0 %v4158, 48
        %v5220 = vpop.permute.xlu0 %5219
        %5221 = vrot.lane.b32.xlu0 %v4159, 48
        %v5222 = vpop.permute.xlu0 %5221
        %v5226 = vsel %vm1680, %v5178, 0
        %v5229 = vsel %vm1680, %v5179, 0
        %5231 = vmatpush.msra.mxu0 0.0
        %5232 = vmatpush.msra.mxu0 0.0
        %5233 = vmatpush.msra.mxu0 0.0
        %5234 = vmatpush.msra.mxu0 0.0
        %5235 = vmatpush.msra.mxu0 0.0
        %5236 = vmatpush.msra.mxu0 0.0
        %5237 = vmatpush.msra.mxu0 0.0
        %5238 = vmatpush.msra.mxu0 0.0
        %5239 = vmatpush.msra.mxu0 0.0
        %5240 = vmatpush.msra.mxu0 0.0
        %5241 = vmatpush.msra.mxu0 0.0
        %5242 = vmatpush.msra.mxu0 0.0
        %5243 = vmatpush.msra.mxu0 0.0
        %5244 = vmatpush.msra.mxu0 0.0
        %5245 = vmatpush.msra.mxu0 %v5222
        %5246 = vmatpush.msra.mxu0 %v5220
        %5247 = vmatmul.f32.gmra.mxu0 %v5226
        %v5248 = vpop.f32.mrf.mxu0
        %v5249 = vadd.f32 0.0, %v5248
        %5250 = vmatmul.f32.gmra.mxu0 %v5229
        %v5251 = vpop.f32.mrf.mxu0
        %v5252 = vadd.f32 0.0, %v5251
        %5253 = vdwg.mxu0
        %5254 = vrot.lane.b32.xlu0 %v4160, 48
        %v5255 = vpop.permute.xlu0 %5254
        %5256 = vrot.lane.b32.xlu0 %v4161, 48
        %v5257 = vpop.permute.xlu0 %5256
        %v5261 = vsel %vm1680, %v5180, 0
        %v5264 = vsel %vm1680, %v5181, 0
        %5266 = vmatpush.msra.mxu0 0.0
        %5267 = vmatpush.msra.mxu0 0.0
        %5268 = vmatpush.msra.mxu0 0.0
        %5269 = vmatpush.msra.mxu0 0.0
        %5270 = vmatpush.msra.mxu0 0.0
        %5271 = vmatpush.msra.mxu0 0.0
        %5272 = vmatpush.msra.mxu0 0.0
        %5273 = vmatpush.msra.mxu0 0.0
        %5274 = vmatpush.msra.mxu0 0.0
        %5275 = vmatpush.msra.mxu0 0.0
        %5276 = vmatpush.msra.mxu0 0.0
        %5277 = vmatpush.msra.mxu0 0.0
        %5278 = vmatpush.msra.mxu0 0.0
        %5279 = vmatpush.msra.mxu0 0.0
        %5280 = vmatpush.msra.mxu0 %v5257
        %5281 = vmatpush.msra.mxu0 %v5255
        %5282 = vmatmul.f32.gmra.mxu0 %v5261
        %v5283 = vpop.f32.mrf.mxu0
        %v5284 = vadd.f32 0.0, %v5283
        %5285 = vmatmul.f32.gmra.mxu0 %v5264
        %v5286 = vpop.f32.mrf.mxu0
        %v5287 = vadd.f32 0.0, %v5286
        %5288 = vdwg.mxu0
        %5289 = vrot.lane.b32.xlu0 %v4162, 48
        %v5290 = vpop.permute.xlu0 %5289
        %5291 = vrot.lane.b32.xlu0 %v4163, 48
        %v5292 = vpop.permute.xlu0 %5291
        %v5296 = vsel %vm1680, %v5182, 0
        %v5299 = vsel %vm1680, %v5183, 0
        %5301 = vmatpush.msra.mxu0 0.0
        %5302 = vmatpush.msra.mxu0 0.0
        %5303 = vmatpush.msra.mxu0 0.0
        %5304 = vmatpush.msra.mxu0 0.0
        %5305 = vmatpush.msra.mxu0 0.0
        %5306 = vmatpush.msra.mxu0 0.0
        %5307 = vmatpush.msra.mxu0 0.0
        %5308 = vmatpush.msra.mxu0 0.0
        %5309 = vmatpush.msra.mxu0 0.0
        %5310 = vmatpush.msra.mxu0 0.0
        %5311 = vmatpush.msra.mxu0 0.0
        %5312 = vmatpush.msra.mxu0 0.0
        %5313 = vmatpush.msra.mxu0 0.0
        %5314 = vmatpush.msra.mxu0 0.0
        %5315 = vmatpush.msra.mxu0 %v5292
        %5316 = vmatpush.msra.mxu0 %v5290
        %5317 = vmatmul.f32.gmra.mxu0 %v5296
        %v5318 = vpop.f32.mrf.mxu0
        %v5319 = vadd.f32 0.0, %v5318
        %5320 = vmatmul.f32.gmra.mxu0 %v5299
        %v5321 = vpop.f32.mrf.mxu0
        %v5322 = vadd.f32 0.0, %v5321
        %5323 = vdwg.mxu0
        %5324 = vrot.lane.b32.xlu0 %v4164, 104
        %v5325 = vpop.permute.xlu0 %5324
        %5326 = vrot.lane.b32.xlu0 %v4165, 104
        %v5327 = vpop.permute.xlu0 %5326
        %5328 = vrot.lane.b32.xlu0 %v4156, 72
        %v5329 = vpop.permute.xlu0 %5328
        %5330 = vrot.lane.b32.xlu0 %v4157, 72
        %v5331 = vpop.permute.xlu0 %5330
        %v5332 = vsel %vm1529, %v5325, 0
        %v5334 = vsel %vm1529, %v5327, 0
        %v5336 = vsel %vm1529, %v5329, 0
        %v5338 = vsel %vm1529, %v5331, 0
        %5340 = vmatpush.xpose.msra.mxu0 0.0
        %5341 = vmatpush.xpose.msra.mxu0 0.0
        %5342 = vmatpush.xpose.msra.mxu0 0.0
        %5343 = vmatpush.xpose.msra.mxu0 0.0
        %5344 = vmatpush.xpose.msra.mxu0 0.0
        %5345 = vmatpush.xpose.msra.mxu0 0.0
        %5346 = vmatpush.xpose.msra.mxu0 0.0
        %5347 = vmatpush.xpose.msra.mxu0 0.0
        %5348 = vmatpush.xpose.msra.mxu0 0.0
        %5349 = vmatpush.xpose.msra.mxu0 0.0
        %5350 = vmatpush.xpose.msra.mxu0 0.0
        %5351 = vmatpush.xpose.msra.mxu0 0.0
        %5352 = vmatpush.xpose.msra.mxu0 0.0
        %5353 = vmatpush.xpose.msra.mxu0 0.0
        %5354 = vmatpush.xpose.msra.mxu0 %v5338
        %5355 = vmatpush.xpose.msra.mxu0 %v5336
        %5356 = vmatmul.f32.gmra.mxu0 %v5332
        %v5357 = vpop.f32.mrf.mxu0
        %v5358 = vadd.f32 %v887, %v5357
        %5359 = vmatmul.f32.gmra.mxu0 %v5334
        %v5360 = vpop.f32.mrf.mxu0
        %v5361 = vadd.f32 %v888, %v5360
        %5362 = vdwg.mxu0
        %5363 = vrot.lane.b32.xlu0 %v4166, 104
        %v5364 = vpop.permute.xlu0 %5363
        %5365 = vrot.lane.b32.xlu0 %v4167, 104
        %v5366 = vpop.permute.xlu0 %5365
        %5367 = vrot.lane.b32.xlu0 %v4158, 72
        %v5368 = vpop.permute.xlu0 %5367
        %5369 = vrot.lane.b32.xlu0 %v4159, 72
        %v5370 = vpop.permute.xlu0 %5369
        %v5371 = vsel %vm1529, %v5364, 0
        %v5373 = vsel %vm1529, %v5366, 0
        %v5375 = vsel %vm1529, %v5368, 0
        %v5377 = vsel %vm1529, %v5370, 0
        %5379 = vmatpush.xpose.msra.mxu0 0.0
        %5380 = vmatpush.xpose.msra.mxu0 0.0
        %5381 = vmatpush.xpose.msra.mxu0 0.0
        %5382 = vmatpush.xpose.msra.mxu0 0.0
        %5383 = vmatpush.xpose.msra.mxu0 0.0
        %5384 = vmatpush.xpose.msra.mxu0 0.0
        %5385 = vmatpush.xpose.msra.mxu0 0.0
        %5386 = vmatpush.xpose.msra.mxu0 0.0
        %5387 = vmatpush.xpose.msra.mxu0 0.0
        %5388 = vmatpush.xpose.msra.mxu0 0.0
        %5389 = vmatpush.xpose.msra.mxu0 0.0
        %5390 = vmatpush.xpose.msra.mxu0 0.0
        %5391 = vmatpush.xpose.msra.mxu0 0.0
        %5392 = vmatpush.xpose.msra.mxu0 0.0
        %5393 = vmatpush.xpose.msra.mxu0 %v5377
        %5394 = vmatpush.xpose.msra.mxu0 %v5375
        %5395 = vmatmul.f32.gmra.mxu0 %v5371
        %v5396 = vpop.f32.mrf.mxu0
        %v5397 = vadd.f32 %v889, %v5396
        %5398 = vmatmul.f32.gmra.mxu0 %v5373
        %v5399 = vpop.f32.mrf.mxu0
        %v5400 = vadd.f32 %v890, %v5399
        %5401 = vdwg.mxu0
        %5402 = vrot.lane.b32.xlu0 %v4168, 104
        %v5403 = vpop.permute.xlu0 %5402
        %5404 = vrot.lane.b32.xlu0 %v4169, 104
        %v5405 = vpop.permute.xlu0 %5404
        %5406 = vrot.lane.b32.xlu0 %v4160, 72
        %v5407 = vpop.permute.xlu0 %5406
        %5408 = vrot.lane.b32.xlu0 %v4161, 72
        %v5409 = vpop.permute.xlu0 %5408
        %v5410 = vsel %vm1529, %v5403, 0
        %v5412 = vsel %vm1529, %v5405, 0
        %v5414 = vsel %vm1529, %v5407, 0
        %v5416 = vsel %vm1529, %v5409, 0
        %5418 = vmatpush.xpose.msra.mxu0 0.0
        %5419 = vmatpush.xpose.msra.mxu0 0.0
        %5420 = vmatpush.xpose.msra.mxu0 0.0
        %5421 = vmatpush.xpose.msra.mxu0 0.0
        %5422 = vmatpush.xpose.msra.mxu0 0.0
        %5423 = vmatpush.xpose.msra.mxu0 0.0
        %5424 = vmatpush.xpose.msra.mxu0 0.0
        %5425 = vmatpush.xpose.msra.mxu0 0.0
        %5426 = vmatpush.xpose.msra.mxu0 0.0
        %5427 = vmatpush.xpose.msra.mxu0 0.0
        %5428 = vmatpush.xpose.msra.mxu0 0.0
        %5429 = vmatpush.xpose.msra.mxu0 0.0
        %5430 = vmatpush.xpose.msra.mxu0 0.0
        %5431 = vmatpush.xpose.msra.mxu0 0.0
        %5432 = vmatpush.xpose.msra.mxu0 %v5416
        %5433 = vmatpush.xpose.msra.mxu0 %v5414
        %5434 = vmatmul.f32.gmra.mxu0 %v5410
        %v5435 = vpop.f32.mrf.mxu0
        %v5436 = vadd.f32 %v891, %v5435
        %5437 = vmatmul.f32.gmra.mxu0 %v5412
        %v5438 = vpop.f32.mrf.mxu0
        %v5439 = vadd.f32 %v892, %v5438
        %5440 = vdwg.mxu0
        %5441 = vrot.lane.b32.xlu0 %v4170, 104
        %v5442 = vpop.permute.xlu0 %5441
        %5443 = vrot.lane.b32.xlu0 %v4171, 104
        %v5444 = vpop.permute.xlu0 %5443
        %5445 = vrot.lane.b32.xlu0 %v4162, 72
        %v5446 = vpop.permute.xlu0 %5445
        %5447 = vrot.lane.b32.xlu0 %v4163, 72
        %v5448 = vpop.permute.xlu0 %5447
        %v5449 = vsel %vm1529, %v5442, 0
        %v5451 = vsel %vm1529, %v5444, 0
        %v5453 = vsel %vm1529, %v5446, 0
        %v5455 = vsel %vm1529, %v5448, 0
        %5457 = vmatpush.xpose.msra.mxu0 0.0
        %5458 = vmatpush.xpose.msra.mxu0 0.0
        %5459 = vmatpush.xpose.msra.mxu0 0.0
        %5460 = vmatpush.xpose.msra.mxu0 0.0
        %5461 = vmatpush.xpose.msra.mxu0 0.0
        %5462 = vmatpush.xpose.msra.mxu0 0.0
        %5463 = vmatpush.xpose.msra.mxu0 0.0
        %5464 = vmatpush.xpose.msra.mxu0 0.0
        %5465 = vmatpush.xpose.msra.mxu0 0.0
        %5466 = vmatpush.xpose.msra.mxu0 0.0
        %5467 = vmatpush.xpose.msra.mxu0 0.0
        %5468 = vmatpush.xpose.msra.mxu0 0.0
        %5469 = vmatpush.xpose.msra.mxu0 0.0
        %5470 = vmatpush.xpose.msra.mxu0 0.0
        %5471 = vmatpush.xpose.msra.mxu0 %v5455
        %5472 = vmatpush.xpose.msra.mxu0 %v5453
        %5473 = vmatmul.f32.gmra.mxu0 %v5449
        %v5474 = vpop.f32.mrf.mxu0
        %v5475 = vadd.f32 %v893, %v5474
        %5476 = vmatmul.f32.gmra.mxu0 %v5451
        %v5477 = vpop.f32.mrf.mxu0
        %v5478 = vadd.f32 %v894, %v5477
        %5479 = vdwg.mxu0
        %v5480 = vsel %vm1680, %v5358, -inf
        %5481 = vmax.xlane.f32.xlu0 %v5480
        %v5482 = vpop.xlane.xlu0 %5481
        %v5483 = vsel %vm1680, %v5361, -inf
        %5484 = vmax.xlane.f32.xlu0 %v5483
        %v5485 = vpop.xlane.xlu0 %5484
        %v5486 = vsel %vm1680, %v5397, -inf
        %5487 = vmax.xlane.f32.xlu0 %v5486
        %v5488 = vpop.xlane.xlu0 %5487
        %v5489 = vsel %vm1680, %v5400, -inf
        %5490 = vmax.xlane.f32.xlu0 %v5489
        %v5491 = vpop.xlane.xlu0 %5490
        %v5492 = vsel %vm1680, %v5436, -inf
        %5493 = vmax.xlane.f32.xlu0 %v5492
        %v5494 = vpop.xlane.xlu0 %5493
        %v5495 = vsel %vm1680, %v5439, -inf
        %5496 = vmax.xlane.f32.xlu0 %v5495
        %v5497 = vpop.xlane.xlu0 %5496
        %v5498 = vsel %vm1680, %v5475, -inf
        %5499 = vmax.xlane.f32.xlu0 %v5498
        %v5500 = vpop.xlane.xlu0 %5499
        %v5501 = vsel %vm1680, %v5478, -inf
        %5502 = vmax.xlane.f32.xlu0 %v5501
        %v5503 = vpop.xlane.xlu0 %5502
        %v5504 = vsub.f32 %v5358, %v5482
        %v5505 = vsub.f32 %v5361, %v5485
        %v5506 = vsub.f32 %v5397, %v5488
        %v5507 = vsub.f32 %v5400, %v5491
        %v5508 = vsub.f32 %v5436, %v5494
        %v5509 = vsub.f32 %v5439, %v5497
        %v5510 = vsub.f32 %v5475, %v5500
        %v5511 = vsub.f32 %v5478, %v5503
        %v5512 = vmul.f32 %v5504, 1.442695
        %v5513 = vpow.pop %v5512
        %v5514 = vmul.f32 %v5505, 1.442695
        %v5515 = vpow.pop %v5514
        %v5516 = vmul.f32 %v5506, 1.442695
        %v5517 = vpow.pop %v5516
        %v5518 = vmul.f32 %v5507, 1.442695
        %v5519 = vpow.pop %v5518
        %v5520 = vmul.f32 %v5508, 1.442695
        %v5521 = vpow.pop %v5520
        %v5522 = vmul.f32 %v5509, 1.442695
        %v5523 = vpow.pop %v5522
        %v5524 = vmul.f32 %v5510, 1.442695
        %v5525 = vpow.pop %v5524
        %v5526 = vmul.f32 %v5511, 1.442695
        %v5527 = vpow.pop %v5526
        %v5528 = vsel %vm1680, %v5513, 0.0
        %5529 = vadd.xlane.f32.xlu0 %v5528
        %v5530 = vpop.xlane.xlu0 %5529
        %v5531 = vsel %vm1680, %v5515, 0.0
        %5532 = vadd.xlane.f32.xlu0 %v5531
        %v5533 = vpop.xlane.xlu0 %5532
        %v5534 = vsel %vm1680, %v5517, 0.0
        %5535 = vadd.xlane.f32.xlu0 %v5534
        %v5536 = vpop.xlane.xlu0 %5535
        %v5537 = vsel %vm1680, %v5519, 0.0
        %5538 = vadd.xlane.f32.xlu0 %v5537
        %v5539 = vpop.xlane.xlu0 %5538
        %v5540 = vsel %vm1680, %v5521, 0.0
        %5541 = vadd.xlane.f32.xlu0 %v5540
        %v5542 = vpop.xlane.xlu0 %5541
        %v5543 = vsel %vm1680, %v5523, 0.0
        %5544 = vadd.xlane.f32.xlu0 %v5543
        %v5545 = vpop.xlane.xlu0 %5544
        %v5546 = vsel %vm1680, %v5525, 0.0
        %5547 = vadd.xlane.f32.xlu0 %v5546
        %v5548 = vpop.xlane.xlu0 %5547
        %v5549 = vsel %vm1680, %v5527, 0.0
        %5550 = vadd.xlane.f32.xlu0 %v5549
        %v5551 = vpop.xlane.xlu0 %5550
        %v5552 = vrcp.pop %v5530
        %v5553 = vrcp.pop %v5533
        %v5554 = vrcp.pop %v5536
        %v5555 = vrcp.pop %v5539
        %v5556 = vrcp.pop %v5542
        %v5557 = vrcp.pop %v5545
        %v5558 = vrcp.pop %v5548
        %v5559 = vrcp.pop %v5551
        %v5560 = vmul.f32 %v5513, %v5552
        %v5561 = vmul.f32 %v5515, %v5553
        %v5562 = vmul.f32 %v5517, %v5554
        %v5563 = vmul.f32 %v5519, %v5555
        %v5564 = vmul.f32 %v5521, %v5556
        %v5565 = vmul.f32 %v5523, %v5557
        %v5566 = vmul.f32 %v5525, %v5558
        %v5567 = vmul.f32 %v5527, %v5559
        %5568 = vrot.lane.b32.xlu0 %v4156, 40
        %v5569 = vpop.permute.xlu0 %5568
        %5570 = vrot.lane.b32.xlu0 %v4157, 40
        %v5571 = vpop.permute.xlu0 %5570
        %v5575 = vsel %vm1680, %v5560, 0
        %v5578 = vsel %vm1680, %v5561, 0
        %5580 = vmatpush.msra.mxu0 0.0
        %5581 = vmatpush.msra.mxu0 0.0
        %5582 = vmatpush.msra.mxu0 0.0
        %5583 = vmatpush.msra.mxu0 0.0
        %5584 = vmatpush.msra.mxu0 0.0
        %5585 = vmatpush.msra.mxu0 0.0
        %5586 = vmatpush.msra.mxu0 0.0
        %5587 = vmatpush.msra.mxu0 0.0
        %5588 = vmatpush.msra.mxu0 0.0
        %5589 = vmatpush.msra.mxu0 0.0
        %5590 = vmatpush.msra.mxu0 0.0
        %5591 = vmatpush.msra.mxu0 0.0
        %5592 = vmatpush.msra.mxu0 0.0
        %5593 = vmatpush.msra.mxu0 0.0
        %5594 = vmatpush.msra.mxu0 %v5571
        %5595 = vmatpush.msra.mxu0 %v5569
        %5596 = vmatmul.f32.gmra.mxu0 %v5575
        %v5597 = vpop.f32.mrf.mxu0
        %v5598 = vadd.f32 0.0, %v5597
        %5599 = vmatmul.f32.gmra.mxu0 %v5578
        %v5600 = vpop.f32.mrf.mxu0
        %v5601 = vadd.f32 0.0, %v5600
        %5602 = vdwg.mxu0
        %5603 = vrot.lane.b32.xlu0 %v4158, 40
        %v5604 = vpop.permute.xlu0 %5603
        %5605 = vrot.lane.b32.xlu0 %v4159, 40
        %v5606 = vpop.permute.xlu0 %5605
        %v5610 = vsel %vm1680, %v5562, 0
        %v5613 = vsel %vm1680, %v5563, 0
        %5615 = vmatpush.msra.mxu0 0.0
        %5616 = vmatpush.msra.mxu0 0.0
        %5617 = vmatpush.msra.mxu0 0.0
        %5618 = vmatpush.msra.mxu0 0.0
        %5619 = vmatpush.msra.mxu0 0.0
        %5620 = vmatpush.msra.mxu0 0.0
        %5621 = vmatpush.msra.mxu0 0.0
        %5622 = vmatpush.msra.mxu0 0.0
        %5623 = vmatpush.msra.mxu0 0.0
        %5624 = vmatpush.msra.mxu0 0.0
        %5625 = vmatpush.msra.mxu0 0.0
        %5626 = vmatpush.msra.mxu0 0.0
        %5627 = vmatpush.msra.mxu0 0.0
        %5628 = vmatpush.msra.mxu0 0.0
        %5629 = vmatpush.msra.mxu0 %v5606
        %5630 = vmatpush.msra.mxu0 %v5604
        %5631 = vmatmul.f32.gmra.mxu0 %v5610
        %v5632 = vpop.f32.mrf.mxu0
        %v5633 = vadd.f32 0.0, %v5632
        %5634 = vmatmul.f32.gmra.mxu0 %v5613
        %v5635 = vpop.f32.mrf.mxu0
        %v5636 = vadd.f32 0.0, %v5635
        %5637 = vdwg.mxu0
        %5638 = vrot.lane.b32.xlu0 %v4160, 40
        %v5639 = vpop.permute.xlu0 %5638
        %5640 = vrot.lane.b32.xlu0 %v4161, 40
        %v5641 = vpop.permute.xlu0 %5640
        %v5645 = vsel %vm1680, %v5564, 0
        %v5648 = vsel %vm1680, %v5565, 0
        %5650 = vmatpush.msra.mxu0 0.0
        %5651 = vmatpush.msra.mxu0 0.0
        %5652 = vmatpush.msra.mxu0 0.0
        %5653 = vmatpush.msra.mxu0 0.0
        %5654 = vmatpush.msra.mxu0 0.0
        %5655 = vmatpush.msra.mxu0 0.0
        %5656 = vmatpush.msra.mxu0 0.0
        %5657 = vmatpush.msra.mxu0 0.0
        %5658 = vmatpush.msra.mxu0 0.0
        %5659 = vmatpush.msra.mxu0 0.0
        %5660 = vmatpush.msra.mxu0 0.0
        %5661 = vmatpush.msra.mxu0 0.0
        %5662 = vmatpush.msra.mxu0 0.0
        %5663 = vmatpush.msra.mxu0 0.0
        %5664 = vmatpush.msra.mxu0 %v5641
        %5665 = vmatpush.msra.mxu0 %v5639
        %5666 = vmatmul.f32.gmra.mxu0 %v5645
        %v5667 = vpop.f32.mrf.mxu0
        %v5668 = vadd.f32 0.0, %v5667
        %5669 = vmatmul.f32.gmra.mxu0 %v5648
        %v5670 = vpop.f32.mrf.mxu0
        %v5671 = vadd.f32 0.0, %v5670
        %5672 = vdwg.mxu0
        %5673 = vrot.lane.b32.xlu0 %v4162, 40
        %v5674 = vpop.permute.xlu0 %5673
        %5675 = vrot.lane.b32.xlu0 %v4163, 40
        %v5676 = vpop.permute.xlu0 %5675
        %v5680 = vsel %vm1680, %v5566, 0
        %v5683 = vsel %vm1680, %v5567, 0
        %5685 = vmatpush.msra.mxu0 0.0
        %5686 = vmatpush.msra.mxu0 0.0
        %5687 = vmatpush.msra.mxu0 0.0
        %5688 = vmatpush.msra.mxu0 0.0
        %5689 = vmatpush.msra.mxu0 0.0
        %5690 = vmatpush.msra.mxu0 0.0
        %5691 = vmatpush.msra.mxu0 0.0
        %5692 = vmatpush.msra.mxu0 0.0
        %5693 = vmatpush.msra.mxu0 0.0
        %5694 = vmatpush.msra.mxu0 0.0
        %5695 = vmatpush.msra.mxu0 0.0
        %5696 = vmatpush.msra.mxu0 0.0
        %5697 = vmatpush.msra.mxu0 0.0
        %5698 = vmatpush.msra.mxu0 0.0
        %5699 = vmatpush.msra.mxu0 %v5676
        %5700 = vmatpush.msra.mxu0 %v5674
        %5701 = vmatmul.f32.gmra.mxu0 %v5680
        %v5702 = vpop.f32.mrf.mxu0
        %v5703 = vadd.f32 0.0, %v5702
        %5704 = vmatmul.f32.gmra.mxu0 %v5683
        %v5705 = vpop.f32.mrf.mxu0
        %v5706 = vadd.f32 0.0, %v5705
        %5707 = vdwg.mxu0
        %5716 = vrot.lane.b32.xlu0 %v4830, 8
        %v5717 = vpop.permute.xlu0 %5716
        %5718 = vrot.lane.b32.xlu0 %v4833, 8
        %v5719 = vpop.permute.xlu0 %5718
        %5720 = vrot.lane.b32.xlu0 %v4865, 8
        %v5721 = vpop.permute.xlu0 %5720
        %5722 = vrot.lane.b32.xlu0 %v4868, 8
        %v5723 = vpop.permute.xlu0 %5722
        %5724 = vrot.lane.b32.xlu0 %v4900, 8
        %v5725 = vpop.permute.xlu0 %5724
        %5726 = vrot.lane.b32.xlu0 %v4903, 8
        %v5727 = vpop.permute.xlu0 %5726
        %5728 = vrot.lane.b32.xlu0 %v4935, 8
        %v5729 = vpop.permute.xlu0 %5728
        %5730 = vrot.lane.b32.xlu0 %v4938, 8
        %v5731 = vpop.permute.xlu0 %5730
        %5748 = vrot.lane.b32.xlu0 %v5214, 16
        %v5749 = vpop.permute.xlu0 %5748
        %5750 = vrot.lane.b32.xlu0 %v5217, 16
        %v5751 = vpop.permute.xlu0 %5750
        %5752 = vrot.lane.b32.xlu0 %v5249, 16
        %v5753 = vpop.permute.xlu0 %5752
        %5754 = vrot.lane.b32.xlu0 %v5252, 16
        %v5755 = vpop.permute.xlu0 %5754
        %5756 = vrot.lane.b32.xlu0 %v5284, 16
        %v5757 = vpop.permute.xlu0 %5756
        %5758 = vrot.lane.b32.xlu0 %v5287, 16
        %v5759 = vpop.permute.xlu0 %5758
        %5760 = vrot.lane.b32.xlu0 %v5319, 16
        %v5761 = vpop.permute.xlu0 %5760
        %5762 = vrot.lane.b32.xlu0 %v5322, 16
        %v5763 = vpop.permute.xlu0 %5762
        %5780 = vrot.lane.b32.xlu0 %v5598, 24
        %v5781 = vpop.permute.xlu0 %5780
        %5782 = vrot.lane.b32.xlu0 %v5601, 24
        %v5783 = vpop.permute.xlu0 %5782
        %5784 = vrot.lane.b32.xlu0 %v5633, 24
        %v5785 = vpop.permute.xlu0 %5784
        %5786 = vrot.lane.b32.xlu0 %v5636, 24
        %v5787 = vpop.permute.xlu0 %5786
        %5788 = vrot.lane.b32.xlu0 %v5668, 24
        %v5789 = vpop.permute.xlu0 %5788
        %5790 = vrot.lane.b32.xlu0 %v5671, 24
        %v5791 = vpop.permute.xlu0 %5790
        %5792 = vrot.lane.b32.xlu0 %v5703, 24
        %v5793 = vpop.permute.xlu0 %5792
        %5794 = vrot.lane.b32.xlu0 %v5706, 24
        %v5795 = vpop.permute.xlu0 %5794
        %v5804 = vsel %vm1529, %v4446, %v5717
        %v5805 = vsel %vm1529, %v4449, %v5719
        %v5806 = vsel %vm1529, %v4481, %v5721
        %v5807 = vsel %vm1529, %v4484, %v5723
        %v5808 = vsel %vm1529, %v4516, %v5725
        %v5809 = vsel %vm1529, %v4519, %v5727
        %v5810 = vsel %vm1529, %v4551, %v5729
        %v5811 = vsel %vm1529, %v4554, %v5731
        %v5812 = vsel %vm1680, %v5804, %v5749
        %v5813 = vsel %vm1680, %v5805, %v5751
        %v5814 = vsel %vm1680, %v5806, %v5753
        %v5815 = vsel %vm1680, %v5807, %v5755
        %v5816 = vsel %vm1680, %v5808, %v5757
        %v5817 = vsel %vm1680, %v5809, %v5759
        %v5818 = vsel %vm1680, %v5810, %v5761
        %v5819 = vsel %vm1680, %v5811, %v5763
        %v5820 = vsel %vm3173, %v5812, %v5781
        %v5821 = vsel %vm3173, %v5813, %v5783
        %v5822 = vsel %vm3173, %v5814, %v5785
        %v5823 = vsel %vm3173, %v5815, %v5787
        %v5824 = vsel %vm3173, %v5816, %v5789
        %v5825 = vsel %vm3173, %v5817, %v5791
        %v5826 = vsel %vm3173, %v5818, %v5793
        %v5827 = vsel %vm3173, %v5819, %v5795
        %v5829 = vperm.slane %v958, 0
        %v5832 = vsel %vm1011, %v5820, 0
        %v5835 = vsel %vm1011, %v5821, 0
        %v5838 = vsel %vm1011, %v5822, 0
        %v5841 = vsel %vm1011, %v5823, 0
        %v5844 = vsel %vm1011, %v5824, 0
        %v5847 = vsel %vm1011, %v5825, 0
        %v5850 = vsel %vm1011, %v5826, 0
        %v5853 = vsel %vm1011, %v5827, 0
        %5855 = vmatpush.msra.mxu0 0.0
        %5856 = vmatpush.msra.mxu0 0.0
        %5857 = vmatpush.msra.mxu0 0.0
        %5858 = vmatpush.msra.mxu0 0.0
        %5859 = vmatpush.msra.mxu0 0.0
        %5860 = vmatpush.msra.mxu0 0.0
        %5861 = vmatpush.msra.mxu0 0.0
        %5862 = vmatpush.msra.mxu0 0.0
        %5863 = vmatpush.msra.mxu0 0.0
        %5864 = vmatpush.msra.mxu0 0.0
        %5865 = vmatpush.msra.mxu0 0.0
        %5866 = vmatpush.msra.mxu0 0.0
        %5867 = vmatpush.msra.mxu0 %v956
        %5868 = vmatpush.msra.mxu0 %v955
        %5869 = vmatpush.msra.mxu0 %v954
        %5870 = vmatpush.msra.mxu0 %v953
        %5871 = vmatmul.f32.gmra.mxu0 %v5832
        %v5872 = vpop.f32.mrf.mxu0
        %v5873 = vadd.f32 %v5829, %v5872
        %5874 = vmatmul.f32.gmra.mxu0 %v5835
        %v5875 = vpop.f32.mrf.mxu0
        %v5876 = vadd.f32 %v5829, %v5875
        %5877 = vmatmul.f32.gmra.mxu0 %v5838
        %v5878 = vpop.f32.mrf.mxu0
        %v5879 = vadd.f32 %v5829, %v5878
        %5880 = vmatmul.f32.gmra.mxu0 %v5841
        %v5881 = vpop.f32.mrf.mxu0
        %v5882 = vadd.f32 %v5829, %v5881
        %5883 = vmatmul.f32.gmra.mxu0 %v5844
        %v5884 = vpop.f32.mrf.mxu0
        %v5885 = vadd.f32 %v5829, %v5884
        %5886 = vmatmul.f32.gmra.mxu0 %v5847
        %v5887 = vpop.f32.mrf.mxu0
        %v5888 = vadd.f32 %v5829, %v5887
        %5889 = vmatmul.f32.gmra.mxu0 %v5850
        %v5890 = vpop.f32.mrf.mxu0
        %v5891 = vadd.f32 %v5829, %v5890
        %5892 = vmatmul.f32.gmra.mxu0 %v5853
        %v5893 = vpop.f32.mrf.mxu0
        %v5894 = vadd.f32 %v5829, %v5893
        %5895 = vdwg.mxu0
        %v5897 = vperm.slane %v960, 0
        %v5899 = vmul.f32 %v5897, %v5873
        %v5900 = vmul.f32 %v5897, %v5876
        %v5901 = vmul.f32 %v5897, %v5879
        %v5902 = vmul.f32 %v5897, %v5882
        %v5903 = vmul.f32 %v5897, %v5885
        %v5904 = vmul.f32 %v5897, %v5888
        %v5905 = vmul.f32 %v5897, %v5891
        %v5906 = vmul.f32 %v5897, %v5894
        %v5907 = vadd.f32 %v3662, %v5899
        %v5908 = vadd.f32 %v3663, %v5900
        %v5909 = vadd.f32 %v3664, %v5901
        %v5910 = vadd.f32 %v3665, %v5902
        %v5911 = vadd.f32 %v3666, %v5903
        %v5912 = vadd.f32 %v3667, %v5904
        %v5913 = vadd.f32 %v3668, %v5905
        %v5914 = vadd.f32 %v3669, %v5906
        %v5915 = vsel %vm1011, %v5907, 0.0
        %5916 = vadd.xlane.f32.xlu0 %v5915
        %v5917 = vpop.xlane.xlu0 %5916
        %v5918 = vsel %vm1011, %v5908, 0.0
        %5919 = vadd.xlane.f32.xlu0 %v5918
        %v5920 = vpop.xlane.xlu0 %5919
        %v5921 = vsel %vm1011, %v5909, 0.0
        %5922 = vadd.xlane.f32.xlu0 %v5921
        %v5923 = vpop.xlane.xlu0 %5922
        %v5924 = vsel %vm1011, %v5910, 0.0
        %5925 = vadd.xlane.f32.xlu0 %v5924
        %v5926 = vpop.xlane.xlu0 %5925
        %v5927 = vsel %vm1011, %v5911, 0.0
        %5928 = vadd.xlane.f32.xlu0 %v5927
        %v5929 = vpop.xlane.xlu0 %5928
        %v5930 = vsel %vm1011, %v5912, 0.0
        %5931 = vadd.xlane.f32.xlu0 %v5930
        %v5932 = vpop.xlane.xlu0 %5931
        %v5933 = vsel %vm1011, %v5913, 0.0
        %5934 = vadd.xlane.f32.xlu0 %v5933
        %v5935 = vpop.xlane.xlu0 %5934
        %v5936 = vsel %vm1011, %v5914, 0.0
        %5937 = vadd.xlane.f32.xlu0 %v5936
        %v5938 = vpop.xlane.xlu0 %5937
        %v5939 = vmul.f32 %v5917, %v1042
        %v5940 = vmul.f32 %v5920, %v1042
        %v5941 = vmul.f32 %v5923, %v1042
        %v5942 = vmul.f32 %v5926, %v1042
        %v5943 = vmul.f32 %v5929, %v1042
        %v5944 = vmul.f32 %v5932, %v1042
        %v5945 = vmul.f32 %v5935, %v1042
        %v5946 = vmul.f32 %v5938, %v1042
        %v5947 = vsub.f32 %v5907, %v5939
        %v5948 = vsub.f32 %v5908, %v5940
        %v5949 = vsub.f32 %v5909, %v5941
        %v5950 = vsub.f32 %v5910, %v5942
        %v5951 = vsub.f32 %v5911, %v5943
        %v5952 = vsub.f32 %v5912, %v5944
        %v5953 = vsub.f32 %v5913, %v5945
        %v5954 = vsub.f32 %v5914, %v5946
        %v5955 = vmul.f32 %v5947, %v5947
        %v5956 = vmul.f32 %v5948, %v5948
        %v5957 = vmul.f32 %v5949, %v5949
        %v5958 = vmul.f32 %v5950, %v5950
        %v5959 = vmul.f32 %v5951, %v5951
        %v5960 = vmul.f32 %v5952, %v5952
        %v5961 = vmul.f32 %v5953, %v5953
        %v5962 = vmul.f32 %v5954, %v5954
        %v5963 = vsel %vm1011, %v5955, 0.0
        %5964 = vadd.xlane.f32.xlu0 %v5963
        %v5965 = vpop.xlane.xlu0 %5964
        %v5966 = vsel %vm1011, %v5956, 0.0
        %5967 = vadd.xlane.f32.xlu0 %v5966
        %v5968 = vpop.xlane.xlu0 %5967
        %v5969 = vsel %vm1011, %v5957, 0.0
        %5970 = vadd.xlane.f32.xlu0 %v5969
        %v5971 = vpop.xlane.xlu0 %5970
        %v5972 = vsel %vm1011, %v5958, 0.0
        %5973 = vadd.xlane.f32.xlu0 %v5972
        %v5974 = vpop.xlane.xlu0 %5973
        %v5975 = vsel %vm1011, %v5959, 0.0
        %5976 = vadd.xlane.f32.xlu0 %v5975
        %v5977 = vpop.xlane.xlu0 %5976
        %v5978 = vsel %vm1011, %v5960, 0.0
        %5979 = vadd.xlane.f32.xlu0 %v5978
        %v5980 = vpop.xlane.xlu0 %5979
        %v5981 = vsel %vm1011, %v5961, 0.0
        %5982 = vadd.xlane.f32.xlu0 %v5981
        %v5983 = vpop.xlane.xlu0 %5982
        %v5984 = vsel %vm1011, %v5962, 0.0
        %5985 = vadd.xlane.f32.xlu0 %v5984
        %v5986 = vpop.xlane.xlu0 %5985
        %v5987 = vmul.f32 %v5965, %v1042
        %v5988 = vmul.f32 %v5968, %v1042
        %v5989 = vmul.f32 %v5971, %v1042
        %v5990 = vmul.f32 %v5974, %v1042
        %v5991 = vmul.f32 %v5977, %v1042
        %v5992 = vmul.f32 %v5980, %v1042
        %v5993 = vmul.f32 %v5983, %v1042
        %v5994 = vmul.f32 %v5986, %v1042
        %v5995 = vadd.f32 %v5987, 1e-05
        %v5996 = vadd.f32 %v5988, 1e-05
        %v5997 = vadd.f32 %v5989, 1e-05
        %v5998 = vadd.f32 %v5990, 1e-05
        %v5999 = vadd.f32 %v5991, 1e-05
        %v6000 = vadd.f32 %v5992, 1e-05
        %v6001 = vadd.f32 %v5993, 1e-05
        %v6002 = vadd.f32 %v5994, 1e-05
        %v6003 = vrsqrt.pop %v5995
        %v6004 = vmul.f32 %v6003, %v5995
        %v6005 = vmul.f32 %v6004, %v6003
        %v6006 = vmul.f32 0.5, %v6005
        %v6007 = vsub.f32 1.5, %v6006
        %v6008 = vmul.f32 %v6003, %v6007
        %vm6009 = vweird.f32 %v5995
        %vm6010 = vweird.f32 %v6003
        %vm6011 = vmor %vm6009, %vm6010
        %v6012 = vsel %vm6011, %v6003, %v6008
        %v6013 = vrsqrt.pop %v5996
        %v6014 = vmul.f32 %v6013, %v5996
        %v6015 = vmul.f32 %v6014, %v6013
        %v6016 = vmul.f32 0.5, %v6015
        %v6017 = vsub.f32 1.5, %v6016
        %v6018 = vmul.f32 %v6013, %v6017
        %vm6019 = vweird.f32 %v5996
        %vm6020 = vweird.f32 %v6013
        %vm6021 = vmor %vm6019, %vm6020
        %v6022 = vsel %vm6021, %v6013, %v6018
        %v6023 = vrsqrt.pop %v5997
        %v6024 = vmul.f32 %v6023, %v5997
        %v6025 = vmul.f32 %v6024, %v6023
        %v6026 = vmul.f32 0.5, %v6025
        %v6027 = vsub.f32 1.5, %v6026
        %v6028 = vmul.f32 %v6023, %v6027
        %vm6029 = vweird.f32 %v5997
        %vm6030 = vweird.f32 %v6023
        %vm6031 = vmor %vm6029, %vm6030
        %v6032 = vsel %vm6031, %v6023, %v6028
        %v6033 = vrsqrt.pop %v5998
        %v6034 = vmul.f32 %v6033, %v5998
        %v6035 = vmul.f32 %v6034, %v6033
        %v6036 = vmul.f32 0.5, %v6035
        %v6037 = vsub.f32 1.5, %v6036
        %v6038 = vmul.f32 %v6033, %v6037
        %vm6039 = vweird.f32 %v5998
        %vm6040 = vweird.f32 %v6033
        %vm6041 = vmor %vm6039, %vm6040
        %v6042 = vsel %vm6041, %v6033, %v6038
        %v6043 = vrsqrt.pop %v5999
        %v6044 = vmul.f32 %v6043, %v5999
        %v6045 = vmul.f32 %v6044, %v6043
        %v6046 = vmul.f32 0.5, %v6045
        %v6047 = vsub.f32 1.5, %v6046
        %v6048 = vmul.f32 %v6043, %v6047
        %vm6049 = vweird.f32 %v5999
        %vm6050 = vweird.f32 %v6043
        %vm6051 = vmor %vm6049, %vm6050
        %v6052 = vsel %vm6051, %v6043, %v6048
        %v6053 = vrsqrt.pop %v6000
        %v6054 = vmul.f32 %v6053, %v6000
        %v6055 = vmul.f32 %v6054, %v6053
        %v6056 = vmul.f32 0.5, %v6055
        %v6057 = vsub.f32 1.5, %v6056
        %v6058 = vmul.f32 %v6053, %v6057
        %vm6059 = vweird.f32 %v6000
        %vm6060 = vweird.f32 %v6053
        %vm6061 = vmor %vm6059, %vm6060
        %v6062 = vsel %vm6061, %v6053, %v6058
        %v6063 = vrsqrt.pop %v6001
        %v6064 = vmul.f32 %v6063, %v6001
        %v6065 = vmul.f32 %v6064, %v6063
        %v6066 = vmul.f32 0.5, %v6065
        %v6067 = vsub.f32 1.5, %v6066
        %v6068 = vmul.f32 %v6063, %v6067
        %vm6069 = vweird.f32 %v6001
        %vm6070 = vweird.f32 %v6063
        %vm6071 = vmor %vm6069, %vm6070
        %v6072 = vsel %vm6071, %v6063, %v6068
        %v6073 = vrsqrt.pop %v6002
        %v6074 = vmul.f32 %v6073, %v6002
        %v6075 = vmul.f32 %v6074, %v6073
        %v6076 = vmul.f32 0.5, %v6075
        %v6077 = vsub.f32 1.5, %v6076
        %v6078 = vmul.f32 %v6073, %v6077
        %vm6079 = vweird.f32 %v6002
        %vm6080 = vweird.f32 %v6073
        %vm6081 = vmor %vm6079, %vm6080
        %v6082 = vsel %vm6081, %v6073, %v6078
        %v6083 = vmul.f32 %v5947, %v6012
        %v6084 = vmul.f32 %v5948, %v6022
        %v6085 = vmul.f32 %v5949, %v6032
        %v6086 = vmul.f32 %v5950, %v6042
        %v6087 = vmul.f32 %v5951, %v6052
        %v6088 = vmul.f32 %v5952, %v6062
        %v6089 = vmul.f32 %v5953, %v6072
        %v6090 = vmul.f32 %v5954, %v6082
        %v6092 = vperm.slane %v962, 0
        %v6094 = vmul.f32 %v6083, %v6092
        %v6095 = vmul.f32 %v6084, %v6092
        %v6096 = vmul.f32 %v6085, %v6092
        %v6097 = vmul.f32 %v6086, %v6092
        %v6098 = vmul.f32 %v6087, %v6092
        %v6099 = vmul.f32 %v6088, %v6092
        %v6100 = vmul.f32 %v6089, %v6092
        %v6101 = vmul.f32 %v6090, %v6092
        %v6103 = vperm.slane %v964, 0
        %v6105 = vadd.f32 %v6094, %v6103
        %v6106 = vadd.f32 %v6095, %v6103
        %v6107 = vadd.f32 %v6096, %v6103
        %v6108 = vadd.f32 %v6097, %v6103
        %v6109 = vadd.f32 %v6098, %v6103
        %v6110 = vadd.f32 %v6099, %v6103
        %v6111 = vadd.f32 %v6100, %v6103
        %v6112 = vadd.f32 %v6101, %v6103
        %v6114 = vperm.slane %v974, 0
        %v6117 = vsel %vm1011, %v6105, 0
        %v6120 = vsel %vm1011, %v6106, 0
        %v6123 = vsel %vm1011, %v6107, 0
        %v6126 = vsel %vm1011, %v6108, 0
        %v6129 = vsel %vm1011, %v6109, 0
        %v6132 = vsel %vm1011, %v6110, 0
        %v6135 = vsel %vm1011, %v6111, 0
        %v6138 = vsel %vm1011, %v6112, 0
        %6140 = vmatpush.msra.mxu0 0.0
        %6141 = vmatpush.msra.mxu0 0.0
        %6142 = vmatpush.msra.mxu0 0.0
        %6143 = vmatpush.msra.mxu0 0.0
        %6144 = vmatpush.msra.mxu0 0.0
        %6145 = vmatpush.msra.mxu0 0.0
        %6146 = vmatpush.msra.mxu0 0.0
        %6147 = vmatpush.msra.mxu0 0.0
        %6148 = vmatpush.msra.mxu0 0.0
        %6149 = vmatpush.msra.mxu0 0.0
        %6150 = vmatpush.msra.mxu0 0.0
        %6151 = vmatpush.msra.mxu0 0.0
        %6152 = vmatpush.msra.mxu0 %v972
        %6153 = vmatpush.msra.mxu0 %v971
        %6154 = vmatpush.msra.mxu0 %v970
        %6155 = vmatpush.msra.mxu0 %v969
        %6156 = vmatmul.f32.gmra.mxu0 %v6117
        %v6157 = vpop.f32.mrf.mxu0
        %v6158 = vadd.f32 %v6114, %v6157
        %6159 = vmatmul.f32.gmra.mxu0 %v6120
        %v6160 = vpop.f32.mrf.mxu0
        %v6161 = vadd.f32 %v6114, %v6160
        %6162 = vmatmul.f32.gmra.mxu0 %v6123
        %v6163 = vpop.f32.mrf.mxu0
        %v6164 = vadd.f32 %v6114, %v6163
        %6165 = vmatmul.f32.gmra.mxu0 %v6126
        %v6166 = vpop.f32.mrf.mxu0
        %v6167 = vadd.f32 %v6114, %v6166
        %6168 = vmatmul.f32.gmra.mxu0 %v6129
        %v6169 = vpop.f32.mrf.mxu0
        %v6170 = vadd.f32 %v6114, %v6169
        %6171 = vmatmul.f32.gmra.mxu0 %v6132
        %v6172 = vpop.f32.mrf.mxu0
        %v6173 = vadd.f32 %v6114, %v6172
        %6174 = vmatmul.f32.gmra.mxu0 %v6135
        %v6175 = vpop.f32.mrf.mxu0
        %v6176 = vadd.f32 %v6114, %v6175
        %6177 = vmatmul.f32.gmra.mxu0 %v6138
        %v6178 = vpop.f32.mrf.mxu0
        %v6179 = vadd.f32 %v6114, %v6178
        %6180 = vdwg.mxu0
        %v6181 = vmul.f32 %v6158, %v6158
        %v6182 = vmul.f32 %v6161, %v6161
        %v6183 = vmul.f32 %v6164, %v6164
        %v6184 = vmul.f32 %v6167, %v6167
        %v6185 = vmul.f32 %v6170, %v6170
        %v6186 = vmul.f32 %v6173, %v6173
        %v6187 = vmul.f32 %v6176, %v6176
        %v6188 = vmul.f32 %v6179, %v6179
        %v6189 = vmul.f32 %v6158, %v6181
        %v6190 = vmul.f32 %v6161, %v6182
        %v6191 = vmul.f32 %v6164, %v6183
        %v6192 = vmul.f32 %v6167, %v6184
        %v6193 = vmul.f32 %v6170, %v6185
        %v6194 = vmul.f32 %v6173, %v6186
        %v6195 = vmul.f32 %v6176, %v6187
        %v6196 = vmul.f32 %v6179, %v6188
        %v6197 = vmul.f32 %v6189, 0.044715
        %v6198 = vmul.f32 %v6190, 0.044715
        %v6199 = vmul.f32 %v6191, 0.044715
        %v6200 = vmul.f32 %v6192, 0.044715
        %v6201 = vmul.f32 %v6193, 0.044715
        %v6202 = vmul.f32 %v6194, 0.044715
        %v6203 = vmul.f32 %v6195, 0.044715
        %v6204 = vmul.f32 %v6196, 0.044715
        %v6205 = vadd.f32 %v6158, %v6197
        %v6206 = vadd.f32 %v6161, %v6198
        %v6207 = vadd.f32 %v6164, %v6199
        %v6208 = vadd.f32 %v6167, %v6200
        %v6209 = vadd.f32 %v6170, %v6201
        %v6210 = vadd.f32 %v6173, %v6202
        %v6211 = vadd.f32 %v6176, %v6203
        %v6212 = vadd.f32 %v6179, %v6204
        %v6213 = vmul.f32 %v6205, 0.7978846
        %v6214 = vmul.f32 %v6206, 0.7978846
        %v6215 = vmul.f32 %v6207, 0.7978846
        %v6216 = vmul.f32 %v6208, 0.7978846
        %v6217 = vmul.f32 %v6209, 0.7978846
        %v6218 = vmul.f32 %v6210, 0.7978846
        %v6219 = vmul.f32 %v6211, 0.7978846
        %v6220 = vmul.f32 %v6212, 0.7978846
        %v6221 = vtanh.pop %v6213
        %v6222 = vtanh.pop %v6214
        %v6223 = vtanh.pop %v6215
        %v6224 = vtanh.pop %v6216
        %v6225 = vtanh.pop %v6217
        %v6226 = vtanh.pop %v6218
        %v6227 = vtanh.pop %v6219
        %v6228 = vtanh.pop %v6220
        %v6229 = vadd.f32 %v6221, 1.0
        %v6230 = vadd.f32 %v6222, 1.0
        %v6231 = vadd.f32 %v6223, 1.0
        %v6232 = vadd.f32 %v6224, 1.0
        %v6233 = vadd.f32 %v6225, 1.0
        %v6234 = vadd.f32 %v6226, 1.0
        %v6235 = vadd.f32 %v6227, 1.0
        %v6236 = vadd.f32 %v6228, 1.0
        %v6237 = vmul.f32 %v6229, 0.5
        %v6238 = vmul.f32 %v6230, 0.5
        %v6239 = vmul.f32 %v6231, 0.5
        %v6240 = vmul.f32 %v6232, 0.5
        %v6241 = vmul.f32 %v6233, 0.5
        %v6242 = vmul.f32 %v6234, 0.5
        %v6243 = vmul.f32 %v6235, 0.5
        %v6244 = vmul.f32 %v6236, 0.5
        %v6245 = vmul.f32 %v6158, %v6237
        %v6246 = vmul.f32 %v6161, %v6238
        %v6247 = vmul.f32 %v6164, %v6239
        %v6248 = vmul.f32 %v6167, %v6240
        %v6249 = vmul.f32 %v6170, %v6241
        %v6250 = vmul.f32 %v6173, %v6242
        %v6251 = vmul.f32 %v6176, %v6243
        %v6252 = vmul.f32 %v6179, %v6244
        %v6254 = vperm.slane %v1008, 0
        %6256 = vmatpush.msra.mxu0 %v1006
        %6257 = vmatpush.msra.mxu0 %v1005
        %6258 = vmatpush.msra.mxu0 %v1004
        %6259 = vmatpush.msra.mxu0 %v1003
        %6260 = vmatpush.msra.mxu0 %v1002
        %6261 = vmatpush.msra.mxu0 %v1001
        %6262 = vmatpush.msra.mxu0 %v1000
        %6263 = vmatpush.msra.mxu0 %v999
        %6264 = vmatpush.msra.mxu0 %v998
        %6265 = vmatpush.msra.mxu0 %v997
        %6266 = vmatpush.msra.mxu0 %v996
        %6267 = vmatpush.msra.mxu0 %v995
        %6268 = vmatpush.msra.mxu0 %v994
        %6269 = vmatpush.msra.mxu0 %v993
        %6270 = vmatpush.msra.mxu0 %v992
        %6271 = vmatpush.msra.mxu0 %v991
        %6272 = vmatmul.f32.gmra.mxu0 %v6245
        %v6273 = vpop.f32.mrf.mxu0
        %v6274 = vadd.f32 %v6254, %v6273
        %6275 = vmatmul.f32.gmra.mxu0 %v6246
        %v6276 = vpop.f32.mrf.mxu0
        %v6277 = vadd.f32 %v6254, %v6276
        %6278 = vmatmul.f32.gmra.mxu0 %v6247
        %v6279 = vpop.f32.mrf.mxu0
        %v6280 = vadd.f32 %v6254, %v6279
        %6281 = vmatmul.f32.gmra.mxu0 %v6248
        %v6282 = vpop.f32.mrf.mxu0
        %v6283 = vadd.f32 %v6254, %v6282
        %6284 = vmatmul.f32.gmra.mxu0 %v6249
        %v6285 = vpop.f32.mrf.mxu0
        %v6286 = vadd.f32 %v6254, %v6285
        %6287 = vmatmul.f32.gmra.mxu0 %v6250
        %v6288 = vpop.f32.mrf.mxu0
        %v6289 = vadd.f32 %v6254, %v6288
        %6290 = vmatmul.f32.gmra.mxu0 %v6251
        %v6291 = vpop.f32.mrf.mxu0
        %v6292 = vadd.f32 %v6254, %v6291
        %6293 = vmatmul.f32.gmra.mxu0 %v6252
        %v6294 = vpop.f32.mrf.mxu0
        %v6295 = vadd.f32 %v6254, %v6294
        %6296 = vdwg.mxu0
        %v6298 = vperm.slane %v1010, 0
        %v6300 = vmul.f32 %v6298, %v6274
        %v6301 = vmul.f32 %v6298, %v6277
        %v6302 = vmul.f32 %v6298, %v6280
        %v6303 = vmul.f32 %v6298, %v6283
        %v6304 = vmul.f32 %v6298, %v6286
        %v6305 = vmul.f32 %v6298, %v6289
        %v6306 = vmul.f32 %v6298, %v6292
        %v6307 = vmul.f32 %v6298, %v6295
        %v6308 = vadd.f32 %v5907, %v6300
        %v6309 = vadd.f32 %v5908, %v6301
        %v6310 = vadd.f32 %v5909, %v6302
        %v6311 = vadd.f32 %v5910, %v6303
        %v6312 = vadd.f32 %v5911, %v6304
        %v6313 = vadd.f32 %v5912, %v6305
        %v6314 = vadd.f32 %v5913, %v6306
        %v6315 = vadd.f32 %v5914, %v6307
        %6316 = vst.msk [vmem:[%s877] sm:$0xff] %vm1011, %v6308
        %6317 = vst.msk [vmem:[%s877 + $0x8] sm:$0xff] %vm1011, %v6309
        %6318 = vst.msk [vmem:[%s877 + $0x10] sm:$0xff] %vm1011, %v6310
        %6319 = vst.msk [vmem:[%s877 + $0x18] sm:$0xff] %vm1011, %v6311
        %6320 = vst.msk [vmem:[%s877 + $0x20] sm:$0xff] %vm1011, %v6312
        %6321 = vst.msk [vmem:[%s877 + $0x28] sm:$0xff] %vm1011, %v6313
        %6322 = vst.msk [vmem:[%s877 + $0x30] sm:$0xff] %vm1011, %v6314
        %6323 = vst.msk [vmem:[%s877 + $0x38] sm:$0xff] %vm1011, %v6315
        %s6324 = smul.u32 8, %s29
        %p6325 = scmp.lt.s32.totalorder %s6324, 15
        %s6326 = scalar_select %p6325, %s6324, 15
        %s6327 = smul.addr %s6326, 8
        %s6328 = scalar_lea.vmem %s18, %s6327
        // Predicated region
        $region172: #{control_transformer_forward.1} parent=162 // pred_check
          %p6329 = pneg %p445
        $region173: #{control_transformer_forward.1} parent=162 // pred_check_branch
          %6331 = sbr.rel (%p6329) target = $region175
        $region174: #{control_transformer_forward.1} parent=162 // pred_region
          %s6332 = smul.u32 8, %s29
        $region175: #{control_transformer_forward.1} parent=162 // pred_fallthru
          _
      $region163: #{control_transformer_forward.1} parent=5 // pred_fallthru
        _
      %p6333 = scmp.le.s32.totalorder 2, %s24
      // Predicated region
      $region176: #{control_transformer_forward.1} parent=5 // pred_check
        %p6334 = pneg %p6333
      $region177: #{control_transformer_forward.1} parent=5 // pred_check_branch
        %6336 = sbr.rel (%p6334) target = $region179
      $region178: #{control_transformer_forward.1} parent=5 // pred_region
        %s6337 = ssub.s32 %s24, 2
        // Predicated region
        $region180: #{control_transformer_forward.1} parent=178 // pred_check
          %p6338 = pneg %p451
        $region181: #{control_transformer_forward.1} parent=178 // pred_check_branch
          %6340 = sbr.rel (%p6338) target = $region183
        $region182: #{control_transformer_forward.1} parent=178 // pred_region
          %s6341 = smul.u32 8, %s30
          %p6342 = scmp.lt.s32.totalorder %s6341, 15
          %s6343 = scalar_select %p6342, %s6341, 15
          %s6344 = smul.addr %s6343, 8
          %s6345 = scalar_lea.vmem %s18, %s6344
        $region183: #{control_transformer_forward.1} parent=178 // pred_fallthru
          _
      $region179: #{control_transformer_forward.1} parent=5 // pred_fallthru
        _
    $region6: #{control_transformer_forward.1} parent=1 // loop_footer
      %s28 = sadd.s32 1, %s24
    $region7: #{control_transformer_forward.1} parent=1 // loop_footer_branch
      %23 = sbr.rel target = $region3
    $region8: #{control_transformer_forward.1} parent=1 // loop_exit
      _

</llo_original>
